<compile_context>
chip_gen: v7x
topology: tpu7x:2x2x1
jax: 0.10.0
libtpu: 0.0.40
codegen_flags: <defaults>
</compile_context>

<pallas_src>
import functools

import numpy as np

import jax
import jax.numpy as jnp
from jax.experimental import pallas as pl
from jax.experimental.pallas import tpu as pltpu


FC_PAD = 128  # lane-dense logits width (sliced back to 10 outside the kernel)

_WEIGHT_ORDER = (
    "e1", "t1", "b1", "p1r", "p1c",
    "erb1", "trb1a", "brb1a", "trb1b", "brb1b",
    "e2", "t2", "b2", "p2r", "p2c",
    "erb2", "trb2a", "brb2a", "trb2b", "brb2b",
    "efc", "wfc", "bfc",
)


# ----------------------------------------------------------------------------
# In-kernel helpers (pure value math: full-block ref reads + MXU dots only)
# ----------------------------------------------------------------------------
def _dotf32(a, b):
    return jnp.dot(a, b, preferred_element_type=jnp.float32)


def _conv(x_bf, e_ref, t_ref, b_ref, relu, residual=None):
    """Stride-1 conv on one image in (H, W*Cin) layout.

    out = sum_kh (E_kh @ x) @ T_kh + bias [+ residual] [-> ReLU]
    E_kh: (Ho, Hin) 0/1 row shift/selection (vertical offset + zero pad).
    T_kh: (Win*Cin, Wo*Cout) block-Toeplitz weights (horizontal offset + pad).
    """
    acc = None
    for k in range(t_ref.shape[0]):
        rows = _dotf32(e_ref[k], x_bf).astype(x_bf.dtype)   # exact bf16 row copies
        term = _dotf32(rows, t_ref[k])                       # f32 accumulate
        acc = term if acc is None else acc + term
    acc = acc + b_ref[...]                                   # f32 bias (1, Wo*Cout)
    if residual is not None:
        acc = acc + residual                                 # f32 residual add
    if relu:
        acc = jnp.maximum(acc, 0.0)
    return acc                                               # f32 (Ho, Wo*Cout)


def _maxpool2x2(x_bf, pr_ref, pc_ref):
    """2x2 max pool in (H, W*C) layout via 0/1 selection matmuls (exact)."""
    m = jnp.maximum(_dotf32(pr_ref[0], x_bf),
                    _dotf32(pr_ref[1], x_bf)).astype(x_bf.dtype)
    return jnp.maximum(_dotf32(m, pc_ref[0]), _dotf32(m, pc_ref[1]))  # f32


def _resnet_kernel(imb, x_ref,
                   e1, t1, b1, p1r, p1c,
                   erb1, trb1a, brb1a, trb1b, brb1b,
                   e2, t2, b2, p2r, p2c,
                   erb2, trb2a, brb2a, trb2b, brb2b,
                   efc, wfc, bfc,
                   out_ref):
    for b in range(imb):                                   # static, small
        x = x_ref[b]                                       # (28, 28) bf16

        # conv1 block: Conv2d(1,16,5) + ReLU + MaxPool2d(2) + ResidualBolck(16)
        a = _conv(x, e1, t1, b1, relu=True)                # (24, 384) f32
        a = _maxpool2x2(a.astype(jnp.bfloat16), p1r, p1c)  # (12, 192) f32
        y = _conv(a.astype(jnp.bfloat16), erb1, trb1a, brb1a, relu=True)
        a = _conv(y.astype(jnp.bfloat16), erb1, trb1b, brb1b,
                  relu=True, residual=a)                   # relu(x + conv2(y))

        # conv2 block: Conv2d(16,32,5) + ReLU + MaxPool2d(2) + ResidualBolck(32)
        a = _conv(a.astype(jnp.bfloat16), e2, t2, b2, relu=True)      # (8, 256)
        a = _maxpool2x2(a.astype(jnp.bfloat16), p2r, p2c)             # (4, 128)
        y = _conv(a.astype(jnp.bfloat16), erb2, trb2a, brb2a, relu=True)
        a = _conv(y.astype(jnp.bfloat16), erb2, trb2b, brb2b,
                  relu=True, residual=a)                              # (4, 128)

        # fc as a "KH=4, Ho=1" conv: flatten permutation folded into wfc.
        out_ref[b] = _conv(a.astype(jnp.bfloat16), efc, wfc, bfc, relu=False)


# ----------------------------------------------------------------------------
# Forward wrapper
# ----------------------------------------------------------------------------
def resnet_forward(x_nchw, packed, images_per_step=1):
    n = x_nchw.shape[0]
    imb = max(1, min(images_per_step, n))
    x = x_nchw.reshape(n, 28, 28).astype(jnp.bfloat16)     # (H, W*Cin), Cin=1
    n_pad = pl.cdiv(n, imb) * imb
    if n_pad != n:
        x = jnp.pad(x, ((0, n_pad - n), (0, 0), (0, 0)))

    weights = [packed[k] for k in _WEIGHT_ORDER]

    def _const_map(nd):
        return lambda i: (0,) * nd

    w_specs = [pl.BlockSpec(tuple(w.shape), _const_map(w.ndim)) for w in weights]

    out = pl.pallas_call(
        functools.partial(_resnet_kernel, imb),
        out_shape=jax.ShapeDtypeStruct((n_pad, 1, FC_PAD), jnp.float32),
        grid=(n_pad // imb,),
        in_specs=[pl.BlockSpec((imb, 28, 28), lambda i: (i, 0, 0))] + w_specs,
        out_specs=pl.BlockSpec((imb, 1, FC_PAD), lambda i: (i, 0, 0)),
        compiler_params=pltpu.CompilerParams(
            dimension_semantics=("parallel",)),            # split images over TCs
    )(x, *weights)
    return out.reshape(n_pad, FC_PAD)[:n, :10]


# ----------------------------------------------------------------------------
# Parameter init + one-time repack (all host-side, done once)
# ----------------------------------------------------------------------------
def init_params(key):
    """Deterministic synthetic params matching the PyTorch module's shapes."""
    def conv_p(key, cout, cin, k):
        kw_, kb_ = jax.random.split(key)
        scale = 1.0 / jnp.sqrt(cin * k * k)
        w = jax.random.normal(kw_, (cout, cin, k, k), jnp.float32) * scale
        b = jax.random.normal(kb_, (cout,), jnp.float32) * scale
        return w, b

    keys = jax.random.split(key, 8)
    p = {}
    p["c1_w"], p["c1_b"] = conv_p(keys[0], 16, 1, 5)        # Conv2d(1, 16, 5)
    p["rb1_w1"], p["rb1_b1"] = conv_p(keys[1], 16, 16, 3)   # ResidualBolck(16)
    p["rb1_w2"], p["rb1_b2"] = conv_p(keys[2], 16, 16, 3)
    p["c2_w"], p["c2_b"] = conv_p(keys[3], 32, 16, 5)       # Conv2d(16, 32, 5)
    p["rb2_w1"], p["rb2_b1"] = conv_p(keys[4], 32, 32, 3)   # ResidualBolck(32)
    p["rb2_w2"], p["rb2_b2"] = conv_p(keys[5], 32, 32, 3)
    fc_scale = 1.0 / jnp.sqrt(512.0)
    p["fc_w"] = jax.random.normal(keys[6], (10, 512), jnp.float32) * fc_scale
    p["fc_b"] = jax.random.normal(keys[7], (10,), jnp.float32) * fc_scale
    return p


def _toeplitz(w, win, padding):
    """OIHW conv weight -> (KH, Win*Cin, Wo*Cout) bf16 block-Toeplitz stack."""
    w = np.asarray(w, np.float32)                 # (cout, cin, kh, kw)
    cout, cin, khs, kws = w.shape
    wo = win + 2 * padding - kws + 1
    t = np.zeros((khs, win * cin, wo * cout), np.float32)
    for a in range(khs):
        for b in range(kws):
            blk = w[:, :, a, b].T                 # (cin, cout)
            for j in range(wo):
                jin = j + b - padding
                if 0 <= jin < win:
                    t[a, jin * cin:(jin + 1) * cin, j * cout:(j + 1) * cout] = blk
    return jnp.asarray(t, jnp.bfloat16)


def _row_select(hin, khs, padding):
    """(KH, Ho, Hin) 0/1 row shift matrices (vertical offset + zero pad)."""
    ho = hin + 2 * padding - khs + 1
    e = np.zeros((khs, ho, hin), np.float32)
    for k in range(khs):
        for i in range(ho):
            r = i + k - padding
            if 0 <= r < hin:
                e[k, i, r] = 1.0
    return jnp.asarray(e, jnp.bfloat16)


def _pool_rows(hin):
    """(2, Hin//2, Hin) row selectors for the 2x2 maxpool."""
    ho = hin // 2
    r = np.zeros((2, ho, hin), np.float32)
    for d in range(2):
        r[d, np.arange(ho), 2 * np.arange(ho) + d] = 1.0
    return jnp.asarray(r, jnp.bfloat16)


def _pool_cols(win, c):
    """(2, Win*C, (Win//2)*C) column selectors for the 2x2 maxpool."""
    wo = win // 2
    s = np.zeros((2, win * c, wo * c), np.float32)
    for d in range(2):
        for j in range(wo):
            s[d, (2 * j + d) * c + np.arange(c), j * c + np.arange(c)] = 1.0
    return jnp.asarray(s, jnp.bfloat16)


def _tile_bias(b, wo):
    """Per-channel bias -> (1, Wo*Cout) row in the (w, c) lane layout."""
    b = np.asarray(b, np.float32)
    return jnp.asarray(np.tile(b, wo).reshape(1, -1), jnp.float32)


def _pack_fc(w, b):
    """fc (10,512) in NCHW-flatten order -> (4, 128, 128) bf16 per-row slabs
    in the kernel's (h, w, c) layout, output padded to 128 lanes."""
    w = np.asarray(w, np.float32).reshape(10, 32, 4, 4)      # (o, c, h, w)
    wt = np.transpose(w, (2, 3, 1, 0)).reshape(4, 4 * 32, 10)  # [h, w*32+c, o]
    wt = np.pad(wt, ((0, 0), (0, 0), (0, FC_PAD - 10)))
    bp = np.zeros((1, FC_PAD), np.float32)
    bp[0, :10] = np.asarray(b, np.float32)
    return jnp.asarray(wt, jnp.bfloat16), jnp.asarray(bp, jnp.float32)


def prepare_params(p):
    """One-time repack of all weights into the kernel's matmul operands."""
    q = {}
    # conv1: 5x5, Cin=1, Win=28 -> Wo=24, Cout=16
    q["e1"] = _row_select(28, 5, 0)
    q["t1"] = _toeplitz(p["c1_w"], 28, 0)
    q["b1"] = _tile_bias(p["c1_b"], 24)
    q["p1r"] = _pool_rows(24)
    q["p1c"] = _pool_cols(24, 16)
    # ResidualBolck(16): 3x3 pad 1 on 12x12x16
    q["erb1"] = _row_select(12, 3, 1)
    q["trb1a"] = _toeplitz(p["rb1_w1"], 12, 1)
    q["brb1a"] = _tile_bias(p["rb1_b1"], 12)
    q["trb1b"] = _toeplitz(p["rb1_w2"], 12, 1)
    q["brb1b"] = _tile_bias(p["rb1_b2"], 12)
    # conv2: 5x5, Cin=16, Win=12 -> Wo=8, Cout=32
    q["e2"] = _row_select(12, 5, 0)
    q["t2"] = _toeplitz(p["c2_w"], 12, 0)
    q["b2"] = _tile_bias(p["c2_b"], 8)
    q["p2r"] = _pool_rows(8)
    q["p2c"] = _pool_cols(8, 32)
    # ResidualBolck(32): 3x3 pad 1 on 4x4x32
    q["erb2"] = _row_select(4, 3, 1)
    q["trb2a"] = _toeplitz(p["rb2_w1"], 4, 1)
    q["brb2a"] = _tile_bias(p["rb2_b1"], 4)
    q["trb2b"] = _toeplitz(p["rb2_w2"], 4, 1)
    q["brb2b"] = _tile_bias(p["rb2_b2"], 4)
    # fc
    q["efc"] = _row_select(4, 4, 0)
    q["wfc"], q["bfc"] = _pack_fc(p["fc_w"], p["fc_b"])
    return q


# ----------------------------------------------------------------------------
# Pure-JAX f32 reference (for correctness check only)
# ----------------------------------------------------------------------------
def _reference_forward(x_nchw, p):
    dn = ("NCHW", "OIHW", "NCHW")
    hi = jax.lax.Precision.HIGHEST

    def conv(x, w, b, pad):
        y = jax.lax.conv_general_dilated(x, w, (1, 1), [(pad, pad), (pad, pad)],
                                         dimension_numbers=dn, precision=hi)
        return y + b.reshape(1, -1, 1, 1)

    def pool(x):
        return jax.lax.reduce_window(x, -jnp.inf, jax.lax.max,
                                     (1, 1, 2, 2), (1, 1, 2, 2), "VALID")

    def block(x, w1, b1, w2, b2):
        y = jax.nn.relu(conv(x, w1, b1, 1))
        y = conv(y, w2, b2, 1)
        return jax.nn.relu(x + y)

    x = jax.nn.relu(conv(x_nchw, p["c1_w"], p["c1_b"], 0))
    x = pool(x)
    x = block(x, p["rb1_w1"], p["rb1_b1"], p["rb1_w2"], p["rb1_b2"])
    x = jax.nn.relu(conv(x, p["c2_w"], p["c2_b"], 0))
    x = pool(x)
    x = block(x, p["rb2_w1"], p["rb2_b1"], p["rb2_w2"], p["rb2_b2"])
    x = x.reshape(x.shape[0], -1)
    return jnp.dot(x, p["fc_w"].T, precision=hi) + p["fc_b"]


if __name__ == "__main__":
    key = jax.random.PRNGKey(0)
    k_x, k_p = jax.random.split(key)
    # MNIST-shaped input: the fc layer (512 = 32*4*4) implies 1x28x28 inputs.
    x = jax.random.normal(k_x, (2, 1, 28, 28), jnp.float32)
    params = init_params(k_p)
    packed = prepare_params(params)          # one-time weight repack

    fwd = jax.jit(resnet_forward)
    logits = jax.block_until_ready(fwd(x, packed))
    assert logits.shape == (2, 10)
    assert bool(jnp.all(jnp.isfinite(logits)))

    # Correctness vs. an f32 XLA reference (bf16 operands -> loose tolerance).
    ref = jax.jit(_reference_forward)(x, params)
    err = float(jnp.max(jnp.abs(logits - ref)))
    assert err < 0.3, f"max |kernel - reference| = {err:.4f}"

    print("KERNEL_OK")
</pallas_src>

<mosaic_0001>
module attributes {stable_mosaic.version = 11 : i64} {
  func.func @_resnet_kernel(%arg0: i32, %arg1: memref<1x28x28xbf16, #tpu.memory_space<vmem>>, %arg2: memref<5x24x28xbf16, #tpu.memory_space<vmem>>, %arg3: memref<5x28x384xbf16, #tpu.memory_space<vmem>>, %arg4: memref<1x384xf32, #tpu.memory_space<vmem>>, %arg5: memref<2x12x24xbf16, #tpu.memory_space<vmem>>, %arg6: memref<2x384x192xbf16, #tpu.memory_space<vmem>>, %arg7: memref<3x12x12xbf16, #tpu.memory_space<vmem>>, %arg8: memref<3x192x192xbf16, #tpu.memory_space<vmem>>, %arg9: memref<1x192xf32, #tpu.memory_space<vmem>>, %arg10: memref<3x192x192xbf16, #tpu.memory_space<vmem>>, %arg11: memref<1x192xf32, #tpu.memory_space<vmem>>, %arg12: memref<5x8x12xbf16, #tpu.memory_space<vmem>>, %arg13: memref<5x192x256xbf16, #tpu.memory_space<vmem>>, %arg14: memref<1x256xf32, #tpu.memory_space<vmem>>, %arg15: memref<2x4x8xbf16, #tpu.memory_space<vmem>>, %arg16: memref<2x256x128xbf16, #tpu.memory_space<vmem>>, %arg17: memref<3x4x4xbf16, #tpu.memory_space<vmem>>, %arg18: memref<3x128x128xbf16, #tpu.memory_space<vmem>>, %arg19: memref<1x128xf32, #tpu.memory_space<vmem>>, %arg20: memref<3x128x128xbf16, #tpu.memory_space<vmem>>, %arg21: memref<1x128xf32, #tpu.memory_space<vmem>>, %arg22: memref<4x1x4xbf16, #tpu.memory_space<vmem>>, %arg23: memref<4x128x128xbf16, #tpu.memory_space<vmem>>, %arg24: memref<1x128xf32, #tpu.memory_space<vmem>>, %arg25: memref<1x1x128xf32, #tpu.memory_space<vmem>>) attributes {dimension_semantics = [#tpu.dimension_semantics<parallel>], iteration_bounds = array<i64: 2>, scalar_prefetch = 0 : i64, scratch_operands = 0 : i64, tpu.core_type = #tpu.core_type<tc>, window_params = [{transform_indices = @transform_0, window_bounds = array<i64: 1, 28, 28>}, {pipeline_mode = #tpu.pipeline_mode<synchronous>, transform_indices = @transform_1, window_bounds = array<i64: 5, 24, 28>}, {pipeline_mode = #tpu.pipeline_mode<synchronous>, transform_indices = @transform_2, window_bounds = array<i64: 5, 28, 384>}, {pipeline_mode = #tpu.pipeline_mode<synchronous>, transform_indices = @transform_3, window_bounds = array<i64: 1, 384>}, {pipeline_mode = #tpu.pipeline_mode<synchronous>, transform_indices = @transform_4, window_bounds = array<i64: 2, 12, 24>}, {pipeline_mode = #tpu.pipeline_mode<synchronous>, transform_indices = @transform_5, window_bounds = array<i64: 2, 384, 192>}, {pipeline_mode = #tpu.pipeline_mode<synchronous>, transform_indices = @transform_6, window_bounds = array<i64: 3, 12, 12>}, {pipeline_mode = #tpu.pipeline_mode<synchronous>, transform_indices = @transform_7, window_bounds = array<i64: 3, 192, 192>}, {pipeline_mode = #tpu.pipeline_mode<synchronous>, transform_indices = @transform_8, window_bounds = array<i64: 1, 192>}, {pipeline_mode = #tpu.pipeline_mode<synchronous>, transform_indices = @transform_9, window_bounds = array<i64: 3, 192, 192>}, {pipeline_mode = #tpu.pipeline_mode<synchronous>, transform_indices = @transform_10, window_bounds = array<i64: 1, 192>}, {pipeline_mode = #tpu.pipeline_mode<synchronous>, transform_indices = @transform_11, window_bounds = array<i64: 5, 8, 12>}, {pipeline_mode = #tpu.pipeline_mode<synchronous>, transform_indices = @transform_12, window_bounds = array<i64: 5, 192, 256>}, {pipeline_mode = #tpu.pipeline_mode<synchronous>, transform_indices = @transform_13, window_bounds = array<i64: 1, 256>}, {pipeline_mode = #tpu.pipeline_mode<synchronous>, transform_indices = @transform_14, window_bounds = array<i64: 2, 4, 8>}, {pipeline_mode = #tpu.pipeline_mode<synchronous>, transform_indices = @transform_15, window_bounds = array<i64: 2, 256, 128>}, {pipeline_mode = #tpu.pipeline_mode<synchronous>, transform_indices = @transform_16, window_bounds = array<i64: 3, 4, 4>}, {pipeline_mode = #tpu.pipeline_mode<synchronous>, transform_indices = @transform_17, window_bounds = array<i64: 3, 128, 128>}, {pipeline_mode = #tpu.pipeline_mode<synchronous>, transform_indices = @transform_18, window_bounds = array<i64: 1, 128>}, {pipeline_mode = #tpu.pipeline_mode<synchronous>, transform_indices = @transform_19, window_bounds = array<i64: 3, 128, 128>}, {pipeline_mode = #tpu.pipeline_mode<synchronous>, transform_indices = @transform_20, window_bounds = array<i64: 1, 128>}, {pipeline_mode = #tpu.pipeline_mode<synchronous>, transform_indices = @transform_21, window_bounds = array<i64: 4, 1, 4>}, {pipeline_mode = #tpu.pipeline_mode<synchronous>, transform_indices = @transform_22, window_bounds = array<i64: 4, 128, 128>}, {pipeline_mode = #tpu.pipeline_mode<synchronous>, transform_indices = @transform_23, window_bounds = array<i64: 1, 128>}, {transform_indices = @transform_24, window_bounds = array<i64: 1, 1, 128>}]} {
    %c0 = arith.constant 0 : index
    %c0_0 = arith.constant 0 : index
    %c0_1 = arith.constant 0 : index
    %0 = vector.load %arg1[%c0, %c0_0, %c0_1] : memref<1x28x28xbf16, #tpu.memory_space<vmem>>, vector<1x28x28xbf16>
    %1 = vector.shape_cast %0 : vector<1x28x28xbf16> to vector<28x28xbf16>
    %c0_2 = arith.constant 0 : index
    %c0_3 = arith.constant 0 : index
    %c0_4 = arith.constant 0 : index
    %2 = vector.load %arg2[%c0_2, %c0_3, %c0_4] : memref<5x24x28xbf16, #tpu.memory_space<vmem>>, vector<1x24x28xbf16>
    %3 = vector.shape_cast %2 : vector<1x24x28xbf16> to vector<24x28xbf16>
    %cst = arith.constant dense<0.000000e+00> : vector<24x28xf32>
    %4 = tpu.matmul %3, %1, %cst {dimension_numbers = #tpu.dot_dimension_numbers<[1], [0], [0], [1], [0, 0, 1, 1], [], []>} : vector<24x28xbf16>, vector<28x28xbf16>, vector<24x28xf32> -> vector<24x28xf32>
    %5 = arith.truncf %4 : vector<24x28xf32> to vector<24x28xbf16>
    %c0_5 = arith.constant 0 : index
    %c0_6 = arith.constant 0 : index
    %c0_7 = arith.constant 0 : index
    %6 = vector.load %arg3[%c0_5, %c0_6, %c0_7] : memref<5x28x384xbf16, #tpu.memory_space<vmem>>, vector<1x28x384xbf16>
    %7 = vector.shape_cast %6 : vector<1x28x384xbf16> to vector<28x384xbf16>
    %cst_8 = arith.constant dense<0.000000e+00> : vector<24x384xf32>
    %8 = tpu.matmul %5, %7, %cst_8 {dimension_numbers = #tpu.dot_dimension_numbers<[1], [0], [0], [1], [0, 0, 1, 1], [], []>} : vector<24x28xbf16>, vector<28x384xbf16>, vector<24x384xf32> -> vector<24x384xf32>
    %c1 = arith.constant 1 : index
    %c0_9 = arith.constant 0 : index
    %c0_10 = arith.constant 0 : index
    %9 = vector.load %arg2[%c1, %c0_9, %c0_10] : memref<5x24x28xbf16, #tpu.memory_space<vmem>>, vector<1x24x28xbf16>
    %10 = vector.shape_cast %9 : vector<1x24x28xbf16> to vector<24x28xbf16>
    %cst_11 = arith.constant dense<0.000000e+00> : vector<24x28xf32>
    %11 = tpu.matmul %10, %1, %cst_11 {dimension_numbers = #tpu.dot_dimension_numbers<[1], [0], [0], [1], [0, 0, 1, 1], [], []>} : vector<24x28xbf16>, vector<28x28xbf16>, vector<24x28xf32> -> vector<24x28xf32>
    %12 = arith.truncf %11 : vector<24x28xf32> to vector<24x28xbf16>
    %c1_12 = arith.constant 1 : index
    %c0_13 = arith.constant 0 : index
    %c0_14 = arith.constant 0 : index
    %13 = vector.load %arg3[%c1_12, %c0_13, %c0_14] : memref<5x28x384xbf16, #tpu.memory_space<vmem>>, vector<1x28x384xbf16>
    %14 = vector.shape_cast %13 : vector<1x28x384xbf16> to vector<28x384xbf16>
    %cst_15 = arith.constant dense<0.000000e+00> : vector<24x384xf32>
    %15 = tpu.matmul %12, %14, %cst_15 {dimension_numbers = #tpu.dot_dimension_numbers<[1], [0], [0], [1], [0, 0, 1, 1], [], []>} : vector<24x28xbf16>, vector<28x384xbf16>, vector<24x384xf32> -> vector<24x384xf32>
    %16 = arith.addf %8, %15 : vector<24x384xf32>
    %c2 = arith.constant 2 : index
    %c0_16 = arith.constant 0 : index
    %c0_17 = arith.constant 0 : index
    %17 = vector.load %arg2[%c2, %c0_16, %c0_17] : memref<5x24x28xbf16, #tpu.memory_space<vmem>>, vector<1x24x28xbf16>
    %18 = vector.shape_cast %17 : vector<1x24x28xbf16> to vector<24x28xbf16>
    %cst_18 = arith.constant dense<0.000000e+00> : vector<24x28xf32>
    %19 = tpu.matmul %18, %1, %cst_18 {dimension_numbers = #tpu.dot_dimension_numbers<[1], [0], [0], [1], [0, 0, 1, 1], [], []>} : vector<24x28xbf16>, vector<28x28xbf16>, vector<24x28xf32> -> vector<24x28xf32>
    %20 = arith.truncf %19 : vector<24x28xf32> to vector<24x28xbf16>
    %c2_19 = arith.constant 2 : index
    %c0_20 = arith.constant 0 : index
    %c0_21 = arith.constant 0 : index
    %21 = vector.load %arg3[%c2_19, %c0_20, %c0_21] : memref<5x28x384xbf16, #tpu.memory_space<vmem>>, vector<1x28x384xbf16>
    %22 = vector.shape_cast %21 : vector<1x28x384xbf16> to vector<28x384xbf16>
    %cst_22 = arith.constant dense<0.000000e+00> : vector<24x384xf32>
    %23 = tpu.matmul %20, %22, %cst_22 {dimension_numbers = #tpu.dot_dimension_numbers<[1], [0], [0], [1], [0, 0, 1, 1], [], []>} : vector<24x28xbf16>, vector<28x384xbf16>, vector<24x384xf32> -> vector<24x384xf32>
    %24 = arith.addf %16, %23 : vector<24x384xf32>
    %c3 = arith.constant 3 : index
    %c0_23 = arith.constant 0 : index
    %c0_24 = arith.constant 0 : index
    %25 = vector.load %arg2[%c3, %c0_23, %c0_24] : memref<5x24x28xbf16, #tpu.memory_space<vmem>>, vector<1x24x28xbf16>
    %26 = vector.shape_cast %25 : vector<1x24x28xbf16> to vector<24x28xbf16>
    %cst_25 = arith.constant dense<0.000000e+00> : vector<24x28xf32>
    %27 = tpu.matmul %26, %1, %cst_25 {dimension_numbers = #tpu.dot_dimension_numbers<[1], [0], [0], [1], [0, 0, 1, 1], [], []>} : vector<24x28xbf16>, vector<28x28xbf16>, vector<24x28xf32> -> vector<24x28xf32>
    %28 = arith.truncf %27 : vector<24x28xf32> to vector<24x28xbf16>
    %c3_26 = arith.constant 3 : index
    %c0_27 = arith.constant 0 : index
    %c0_28 = arith.constant 0 : index
    %29 = vector.load %arg3[%c3_26, %c0_27, %c0_28] : memref<5x28x384xbf16, #tpu.memory_space<vmem>>, vector<1x28x384xbf16>
    %30 = vector.shape_cast %29 : vector<1x28x384xbf16> to vector<28x384xbf16>
    %cst_29 = arith.constant dense<0.000000e+00> : vector<24x384xf32>
    %31 = tpu.matmul %28, %30, %cst_29 {dimension_numbers = #tpu.dot_dimension_numbers<[1], [0], [0], [1], [0, 0, 1, 1], [], []>} : vector<24x28xbf16>, vector<28x384xbf16>, vector<24x384xf32> -> vector<24x384xf32>
    %32 = arith.addf %24, %31 : vector<24x384xf32>
    %c4 = arith.constant 4 : index
    %c0_30 = arith.constant 0 : index
    %c0_31 = arith.constant 0 : index
    %33 = vector.load %arg2[%c4, %c0_30, %c0_31] : memref<5x24x28xbf16, #tpu.memory_space<vmem>>, vector<1x24x28xbf16>
    %34 = vector.shape_cast %33 : vector<1x24x28xbf16> to vector<24x28xbf16>
    %cst_32 = arith.constant dense<0.000000e+00> : vector<24x28xf32>
    %35 = tpu.matmul %34, %1, %cst_32 {dimension_numbers = #tpu.dot_dimension_numbers<[1], [0], [0], [1], [0, 0, 1, 1], [], []>} : vector<24x28xbf16>, vector<28x28xbf16>, vector<24x28xf32> -> vector<24x28xf32>
    %36 = arith.truncf %35 : vector<24x28xf32> to vector<24x28xbf16>
    %c4_33 = arith.constant 4 : index
    %c0_34 = arith.constant 0 : index
    %c0_35 = arith.constant 0 : index
    %37 = vector.load %arg3[%c4_33, %c0_34, %c0_35] : memref<5x28x384xbf16, #tpu.memory_space<vmem>>, vector<1x28x384xbf16>
    %38 = vector.shape_cast %37 : vector<1x28x384xbf16> to vector<28x384xbf16>
    %cst_36 = arith.constant dense<0.000000e+00> : vector<24x384xf32>
    %39 = tpu.matmul %36, %38, %cst_36 {dimension_numbers = #tpu.dot_dimension_numbers<[1], [0], [0], [1], [0, 0, 1, 1], [], []>} : vector<24x28xbf16>, vector<28x384xbf16>, vector<24x384xf32> -> vector<24x384xf32>
    %40 = arith.addf %32, %39 : vector<24x384xf32>
    %c0_37 = arith.constant 0 : index
    %c0_38 = arith.constant 0 : index
    %41 = vector.load %arg4[%c0_37, %c0_38] : memref<1x384xf32, #tpu.memory_space<vmem>>, vector<1x384xf32>
    %42 = vector.broadcast %41 : vector<1x384xf32> to vector<24x384xf32>
    %43 = arith.addf %40, %42 : vector<24x384xf32>
    %cst_39 = arith.constant 0.000000e+00 : f32
    %44 = vector.broadcast %cst_39 : f32 to vector<24x384xf32>
    %45 = arith.maximumf %43, %44 : vector<24x384xf32>
    %46 = arith.truncf %45 : vector<24x384xf32> to vector<24x384xbf16>
    %c0_40 = arith.constant 0 : index
    %c0_41 = arith.constant 0 : index
    %c0_42 = arith.constant 0 : index
    %47 = vector.load %arg5[%c0_40, %c0_41, %c0_42] : memref<2x12x24xbf16, #tpu.memory_space<vmem>>, vector<1x12x24xbf16>
    %48 = vector.shape_cast %47 : vector<1x12x24xbf16> to vector<12x24xbf16>
    %cst_43 = arith.constant dense<0.000000e+00> : vector<12x384xf32>
    %49 = tpu.matmul %48, %46, %cst_43 {dimension_numbers = #tpu.dot_dimension_numbers<[1], [0], [0], [1], [0, 0, 1, 1], [], []>} : vector<12x24xbf16>, vector<24x384xbf16>, vector<12x384xf32> -> vector<12x384xf32>
    %c1_44 = arith.constant 1 : index
    %c0_45 = arith.constant 0 : index
    %c0_46 = arith.constant 0 : index
    %50 = vector.load %arg5[%c1_44, %c0_45, %c0_46] : memref<2x12x24xbf16, #tpu.memory_space<vmem>>, vector<1x12x24xbf16>
    %51 = vector.shape_cast %50 : vector<1x12x24xbf16> to vector<12x24xbf16>
    %cst_47 = arith.constant dense<0.000000e+00> : vector<12x384xf32>
    %52 = tpu.matmul %51, %46, %cst_47 {dimension_numbers = #tpu.dot_dimension_numbers<[1], [0], [0], [1], [0, 0, 1, 1], [], []>} : vector<12x24xbf16>, vector<24x384xbf16>, vector<12x384xf32> -> vector<12x384xf32>
    %53 = arith.maximumf %49, %52 : vector<12x384xf32>
    %54 = arith.truncf %53 : vector<12x384xf32> to vector<12x384xbf16>
    %c0_48 = arith.constant 0 : index
    %c0_49 = arith.constant 0 : index
    %c0_50 = arith.constant 0 : index
    %55 = vector.load %arg6[%c0_48, %c0_49, %c0_50] : memref<2x384x192xbf16, #tpu.memory_space<vmem>>, vector<1x384x192xbf16>
    %56 = vector.shape_cast %55 : vector<1x384x192xbf16> to vector<384x192xbf16>
    %cst_51 = arith.constant dense<0.000000e+00> : vector<12x192xf32>
    %57 = tpu.matmul %54, %56, %cst_51 {dimension_numbers = #tpu.dot_dimension_numbers<[1], [0], [0], [1], [0, 0, 1, 1], [], []>} : vector<12x384xbf16>, vector<384x192xbf16>, vector<12x192xf32> -> vector<12x192xf32>
    %c1_52 = arith.constant 1 : index
    %c0_53 = arith.constant 0 : index
    %c0_54 = arith.constant 0 : index
    %58 = vector.load %arg6[%c1_52, %c0_53, %c0_54] : memref<2x384x192xbf16, #tpu.memory_space<vmem>>, vector<1x384x192xbf16>
    %59 = vector.shape_cast %58 : vector<1x384x192xbf16> to vector<384x192xbf16>
    %cst_55 = arith.constant dense<0.000000e+00> : vector<12x192xf32>
    %60 = tpu.matmul %54, %59, %cst_55 {dimension_numbers = #tpu.dot_dimension_numbers<[1], [0], [0], [1], [0, 0, 1, 1], [], []>} : vector<12x384xbf16>, vector<384x192xbf16>, vector<12x192xf32> -> vector<12x192xf32>
    %61 = arith.maximumf %57, %60 : vector<12x192xf32>
    %62 = arith.truncf %61 : vector<12x192xf32> to vector<12x192xbf16>
    %c0_56 = arith.constant 0 : index
    %c0_57 = arith.constant 0 : index
    %c0_58 = arith.constant 0 : index
    %63 = vector.load %arg7[%c0_56, %c0_57, %c0_58] : memref<3x12x12xbf16, #tpu.memory_space<vmem>>, vector<1x12x12xbf16>
    %64 = vector.shape_cast %63 : vector<1x12x12xbf16> to vector<12x12xbf16>
    %cst_59 = arith.constant dense<0.000000e+00> : vector<12x192xf32>
    %65 = tpu.matmul %64, %62, %cst_59 {dimension_numbers = #tpu.dot_dimension_numbers<[1], [0], [0], [1], [0, 0, 1, 1], [], []>} : vector<12x12xbf16>, vector<12x192xbf16>, vector<12x192xf32> -> vector<12x192xf32>
    %66 = arith.truncf %65 : vector<12x192xf32> to vector<12x192xbf16>
    %c0_60 = arith.constant 0 : index
    %c0_61 = arith.constant 0 : index
    %c0_62 = arith.constant 0 : index
    %67 = vector.load %arg8[%c0_60, %c0_61, %c0_62] : memref<3x192x192xbf16, #tpu.memory_space<vmem>>, vector<1x192x192xbf16>
    %68 = vector.shape_cast %67 : vector<1x192x192xbf16> to vector<192x192xbf16>
    %cst_63 = arith.constant dense<0.000000e+00> : vector<12x192xf32>
    %69 = tpu.matmul %66, %68, %cst_63 {dimension_numbers = #tpu.dot_dimension_numbers<[1], [0], [0], [1], [0, 0, 1, 1], [], []>} : vector<12x192xbf16>, vector<192x192xbf16>, vector<12x192xf32> -> vector<12x192xf32>
    %c1_64 = arith.constant 1 : index
    %c0_65 = arith.constant 0 : index
    %c0_66 = arith.constant 0 : index
    %70 = vector.load %arg7[%c1_64, %c0_65, %c0_66] : memref<3x12x12xbf16, #tpu.memory_space<vmem>>, vector<1x12x12xbf16>
    %71 = vector.shape_cast %70 : vector<1x12x12xbf16> to vector<12x12xbf16>
    %cst_67 = arith.constant dense<0.000000e+00> : vector<12x192xf32>
    %72 = tpu.matmul %71, %62, %cst_67 {dimension_numbers = #tpu.dot_dimension_numbers<[1], [0], [0], [1], [0, 0, 1, 1], [], []>} : vector<12x12xbf16>, vector<12x192xbf16>, vector<12x192xf32> -> vector<12x192xf32>
    %73 = arith.truncf %72 : vector<12x192xf32> to vector<12x192xbf16>
    %c1_68 = arith.constant 1 : index
    %c0_69 = arith.constant 0 : index
    %c0_70 = arith.constant 0 : index
    %74 = vector.load %arg8[%c1_68, %c0_69, %c0_70] : memref<3x192x192xbf16, #tpu.memory_space<vmem>>, vector<1x192x192xbf16>
    %75 = vector.shape_cast %74 : vector<1x192x192xbf16> to vector<192x192xbf16>
    %cst_71 = arith.constant dense<0.000000e+00> : vector<12x192xf32>
    %76 = tpu.matmul %73, %75, %cst_71 {dimension_numbers = #tpu.dot_dimension_numbers<[1], [0], [0], [1], [0, 0, 1, 1], [], []>} : vector<12x192xbf16>, vector<192x192xbf16>, vector<12x192xf32> -> vector<12x192xf32>
    %77 = arith.addf %69, %76 : vector<12x192xf32>
    %c2_72 = arith.constant 2 : index
    %c0_73 = arith.constant 0 : index
    %c0_74 = arith.constant 0 : index
    %78 = vector.load %arg7[%c2_72, %c0_73, %c0_74] : memref<3x12x12xbf16, #tpu.memory_space<vmem>>, vector<1x12x12xbf16>
    %79 = vector.shape_cast %78 : vector<1x12x12xbf16> to vector<12x12xbf16>
    %cst_75 = arith.constant dense<0.000000e+00> : vector<12x192xf32>
    %80 = tpu.matmul %79, %62, %cst_75 {dimension_numbers = #tpu.dot_dimension_numbers<[1], [0], [0], [1], [0, 0, 1, 1], [], []>} : vector<12x12xbf16>, vector<12x192xbf16>, vector<12x192xf32> -> vector<12x192xf32>
    %81 = arith.truncf %80 : vector<12x192xf32> to vector<12x192xbf16>
    %c2_76 = arith.constant 2 : index
    %c0_77 = arith.constant 0 : index
    %c0_78 = arith.constant 0 : index
    %82 = vector.load %arg8[%c2_76, %c0_77, %c0_78] : memref<3x192x192xbf16, #tpu.memory_space<vmem>>, vector<1x192x192xbf16>
    %83 = vector.shape_cast %82 : vector<1x192x192xbf16> to vector<192x192xbf16>
    %cst_79 = arith.constant dense<0.000000e+00> : vector<12x192xf32>
    %84 = tpu.matmul %81, %83, %cst_79 {dimension_numbers = #tpu.dot_dimension_numbers<[1], [0], [0], [1], [0, 0, 1, 1], [], []>} : vector<12x192xbf16>, vector<192x192xbf16>, vector<12x192xf32> -> vector<12x192xf32>
    %85 = arith.addf %77, %84 : vector<12x192xf32>
    %c0_80 = arith.constant 0 : index
    %c0_81 = arith.constant 0 : index
    %86 = vector.load %arg9[%c0_80, %c0_81] : memref<1x192xf32, #tpu.memory_space<vmem>>, vector<1x192xf32>
    %87 = vector.broadcast %86 : vector<1x192xf32> to vector<12x192xf32>
    %88 = arith.addf %85, %87 : vector<12x192xf32>
    %cst_82 = arith.constant 0.000000e+00 : f32
    %89 = vector.broadcast %cst_82 : f32 to vector<12x192xf32>
    %90 = arith.maximumf %88, %89 : vector<12x192xf32>
    %91 = arith.truncf %90 : vector<12x192xf32> to vector<12x192xbf16>
    %c0_83 = arith.constant 0 : index
    %c0_84 = arith.constant 0 : index
    %c0_85 = arith.constant 0 : index
    %92 = vector.load %arg7[%c0_83, %c0_84, %c0_85] : memref<3x12x12xbf16, #tpu.memory_space<vmem>>, vector<1x12x12xbf16>
    %93 = vector.shape_cast %92 : vector<1x12x12xbf16> to vector<12x12xbf16>
    %cst_86 = arith.constant dense<0.000000e+00> : vector<12x192xf32>
    %94 = tpu.matmul %93, %91, %cst_86 {dimension_numbers = #tpu.dot_dimension_numbers<[1], [0], [0], [1], [0, 0, 1, 1], [], []>} : vector<12x12xbf16>, vector<12x192xbf16>, vector<12x192xf32> -> vector<12x192xf32>
    %95 = arith.truncf %94 : vector<12x192xf32> to vector<12x192xbf16>
    %c0_87 = arith.constant 0 : index
    %c0_88 = arith.constant 0 : index
    %c0_89 = arith.constant 0 : index
    %96 = vector.load %arg10[%c0_87, %c0_88, %c0_89] : memref<3x192x192xbf16, #tpu.memory_space<vmem>>, vector<1x192x192xbf16>
    %97 = vector.shape_cast %96 : vector<1x192x192xbf16> to vector<192x192xbf16>
    %cst_90 = arith.constant dense<0.000000e+00> : vector<12x192xf32>
    %98 = tpu.matmul %95, %97, %cst_90 {dimension_numbers = #tpu.dot_dimension_numbers<[1], [0], [0], [1], [0, 0, 1, 1], [], []>} : vector<12x192xbf16>, vector<192x192xbf16>, vector<12x192xf32> -> vector<12x192xf32>
    %c1_91 = arith.constant 1 : index
    %c0_92 = arith.constant 0 : index
    %c0_93 = arith.constant 0 : index
    %99 = vector.load %arg7[%c1_91, %c0_92, %c0_93] : memref<3x12x12xbf16, #tpu.memory_space<vmem>>, vector<1x12x12xbf16>
    %100 = vector.shape_cast %99 : vector<1x12x12xbf16> to vector<12x12xbf16>
    %cst_94 = arith.constant dense<0.000000e+00> : vector<12x192xf32>
    %101 = tpu.matmul %100, %91, %cst_94 {dimension_numbers = #tpu.dot_dimension_numbers<[1], [0], [0], [1], [0, 0, 1, 1], [], []>} : vector<12x12xbf16>, vector<12x192xbf16>, vector<12x192xf32> -> vector<12x192xf32>
    %102 = arith.truncf %101 : vector<12x192xf32> to vector<12x192xbf16>
    %c1_95 = arith.constant 1 : index
    %c0_96 = arith.constant 0 : index
    %c0_97 = arith.constant 0 : index
    %103 = vector.load %arg10[%c1_95, %c0_96, %c0_97] : memref<3x192x192xbf16, #tpu.memory_space<vmem>>, vector<1x192x192xbf16>
    %104 = vector.shape_cast %103 : vector<1x192x192xbf16> to vector<192x192xbf16>
    %cst_98 = arith.constant dense<0.000000e+00> : vector<12x192xf32>
    %105 = tpu.matmul %102, %104, %cst_98 {dimension_numbers = #tpu.dot_dimension_numbers<[1], [0], [0], [1], [0, 0, 1, 1], [], []>} : vector<12x192xbf16>, vector<192x192xbf16>, vector<12x192xf32> -> vector<12x192xf32>
    %106 = arith.addf %98, %105 : vector<12x192xf32>
    %c2_99 = arith.constant 2 : index
    %c0_100 = arith.constant 0 : index
    %c0_101 = arith.constant 0 : index
    %107 = vector.load %arg7[%c2_99, %c0_100, %c0_101] : memref<3x12x12xbf16, #tpu.memory_space<vmem>>, vector<1x12x12xbf16>
    %108 = vector.shape_cast %107 : vector<1x12x12xbf16> to vector<12x12xbf16>
    %cst_102 = arith.constant dense<0.000000e+00> : vector<12x192xf32>
    %109 = tpu.matmul %108, %91, %cst_102 {dimension_numbers = #tpu.dot_dimension_numbers<[1], [0], [0], [1], [0, 0, 1, 1], [], []>} : vector<12x12xbf16>, vector<12x192xbf16>, vector<12x192xf32> -> vector<12x192xf32>
    %110 = arith.truncf %109 : vector<12x192xf32> to vector<12x192xbf16>
    %c2_103 = arith.constant 2 : index
    %c0_104 = arith.constant 0 : index
    %c0_105 = arith.constant 0 : index
    %111 = vector.load %arg10[%c2_103, %c0_104, %c0_105] : memref<3x192x192xbf16, #tpu.memory_space<vmem>>, vector<1x192x192xbf16>
    %112 = vector.shape_cast %111 : vector<1x192x192xbf16> to vector<192x192xbf16>
    %cst_106 = arith.constant dense<0.000000e+00> : vector<12x192xf32>
    %113 = tpu.matmul %110, %112, %cst_106 {dimension_numbers = #tpu.dot_dimension_numbers<[1], [0], [0], [1], [0, 0, 1, 1], [], []>} : vector<12x192xbf16>, vector<192x192xbf16>, vector<12x192xf32> -> vector<12x192xf32>
    %114 = arith.addf %106, %113 : vector<12x192xf32>
    %c0_107 = arith.constant 0 : index
    %c0_108 = arith.constant 0 : index
    %115 = vector.load %arg11[%c0_107, %c0_108] : memref<1x192xf32, #tpu.memory_space<vmem>>, vector<1x192xf32>
    %116 = vector.broadcast %115 : vector<1x192xf32> to vector<12x192xf32>
    %117 = arith.addf %114, %116 : vector<12x192xf32>
    %118 = arith.addf %117, %61 : vector<12x192xf32>
    %cst_109 = arith.constant 0.000000e+00 : f32
    %119 = vector.broadcast %cst_109 : f32 to vector<12x192xf32>
    %120 = arith.maximumf %118, %119 : vector<12x192xf32>
    %121 = arith.truncf %120 : vector<12x192xf32> to vector<12x192xbf16>
    %c0_110 = arith.constant 0 : index
    %c0_111 = arith.constant 0 : index
    %c0_112 = arith.constant 0 : index
    %122 = vector.load %arg12[%c0_110, %c0_111, %c0_112] : memref<5x8x12xbf16, #tpu.memory_space<vmem>>, vector<1x8x12xbf16>
    %123 = vector.shape_cast %122 : vector<1x8x12xbf16> to vector<8x12xbf16>
    %cst_113 = arith.constant dense<0.000000e+00> : vector<8x192xf32>
    %124 = tpu.matmul %123, %121, %cst_113 {dimension_numbers = #tpu.dot_dimension_numbers<[1], [0], [0], [1], [0, 0, 1, 1], [], []>} : vector<8x12xbf16>, vector<12x192xbf16>, vector<8x192xf32> -> vector<8x192xf32>
    %125 = arith.truncf %124 : vector<8x192xf32> to vector<8x192xbf16>
    %c0_114 = arith.constant 0 : index
    %c0_115 = arith.constant 0 : index
    %c0_116 = arith.constant 0 : index
    %126 = vector.load %arg13[%c0_114, %c0_115, %c0_116] : memref<5x192x256xbf16, #tpu.memory_space<vmem>>, vector<1x192x256xbf16>
    %127 = vector.shape_cast %126 : vector<1x192x256xbf16> to vector<192x256xbf16>
    %cst_117 = arith.constant dense<0.000000e+00> : vector<8x256xf32>
    %128 = tpu.matmul %125, %127, %cst_117 {dimension_numbers = #tpu.dot_dimension_numbers<[1], [0], [0], [1], [0, 0, 1, 1], [], []>} : vector<8x192xbf16>, vector<192x256xbf16>, vector<8x256xf32> -> vector<8x256xf32>
    %c1_118 = arith.constant 1 : index
    %c0_119 = arith.constant 0 : index
    %c0_120 = arith.constant 0 : index
    %129 = vector.load %arg12[%c1_118, %c0_119, %c0_120] : memref<5x8x12xbf16, #tpu.memory_space<vmem>>, vector<1x8x12xbf16>
    %130 = vector.shape_cast %129 : vector<1x8x12xbf16> to vector<8x12xbf16>
    %cst_121 = arith.constant dense<0.000000e+00> : vector<8x192xf32>
    %131 = tpu.matmul %130, %121, %cst_121 {dimension_numbers = #tpu.dot_dimension_numbers<[1], [0], [0], [1], [0, 0, 1, 1], [], []>} : vector<8x12xbf16>, vector<12x192xbf16>, vector<8x192xf32> -> vector<8x192xf32>
    %132 = arith.truncf %131 : vector<8x192xf32> to vector<8x192xbf16>
    %c1_122 = arith.constant 1 : index
    %c0_123 = arith.constant 0 : index
    %c0_124 = arith.constant 0 : index
    %133 = vector.load %arg13[%c1_122, %c0_123, %c0_124] : memref<5x192x256xbf16, #tpu.memory_space<vmem>>, vector<1x192x256xbf16>
    %134 = vector.shape_cast %133 : vector<1x192x256xbf16> to vector<192x256xbf16>
    %cst_125 = arith.constant dense<0.000000e+00> : vector<8x256xf32>
    %135 = tpu.matmul %132, %134, %cst_125 {dimension_numbers = #tpu.dot_dimension_numbers<[1], [0], [0], [1], [0, 0, 1, 1], [], []>} : vector<8x192xbf16>, vector<192x256xbf16>, vector<8x256xf32> -> vector<8x256xf32>
    %136 = arith.addf %128, %135 : vector<8x256xf32>
    %c2_126 = arith.constant 2 : index
    %c0_127 = arith.constant 0 : index
    %c0_128 = arith.constant 0 : index
    %137 = vector.load %arg12[%c2_126, %c0_127, %c0_128] : memref<5x8x12xbf16, #tpu.memory_space<vmem>>, vector<1x8x12xbf16>
    %138 = vector.shape_cast %137 : vector<1x8x12xbf16> to vector<8x12xbf16>
    %cst_129 = arith.constant dense<0.000000e+00> : vector<8x192xf32>
    %139 = tpu.matmul %138, %121, %cst_129 {dimension_numbers = #tpu.dot_dimension_numbers<[1], [0], [0], [1], [0, 0, 1, 1], [], []>} : vector<8x12xbf16>, vector<12x192xbf16>, vector<8x192xf32> -> vector<8x192xf32>
    %140 = arith.truncf %139 : vector<8x192xf32> to vector<8x192xbf16>
    %c2_130 = arith.constant 2 : index
    %c0_131 = arith.constant 0 : index
    %c0_132 = arith.constant 0 : index
    %141 = vector.load %arg13[%c2_130, %c0_131, %c0_132] : memref<5x192x256xbf16, #tpu.memory_space<vmem>>, vector<1x192x256xbf16>
    %142 = vector.shape_cast %141 : vector<1x192x256xbf16> to vector<192x256xbf16>
    %cst_133 = arith.constant dense<0.000000e+00> : vector<8x256xf32>
    %143 = tpu.matmul %140, %142, %cst_133 {dimension_numbers = #tpu.dot_dimension_numbers<[1], [0], [0], [1], [0, 0, 1, 1], [], []>} : vector<8x192xbf16>, vector<192x256xbf16>, vector<8x256xf32> -> vector<8x256xf32>
    %144 = arith.addf %136, %143 : vector<8x256xf32>
    %c3_134 = arith.constant 3 : index
    %c0_135 = arith.constant 0 : index
    %c0_136 = arith.constant 0 : index
    %145 = vector.load %arg12[%c3_134, %c0_135, %c0_136] : memref<5x8x12xbf16, #tpu.memory_space<vmem>>, vector<1x8x12xbf16>
    %146 = vector.shape_cast %145 : vector<1x8x12xbf16> to vector<8x12xbf16>
    %cst_137 = arith.constant dense<0.000000e+00> : vector<8x192xf32>
    %147 = tpu.matmul %146, %121, %cst_137 {dimension_numbers = #tpu.dot_dimension_numbers<[1], [0], [0], [1], [0, 0, 1, 1], [], []>} : vector<8x12xbf16>, vector<12x192xbf16>, vector<8x192xf32> -> vector<8x192xf32>
    %148 = arith.truncf %147 : vector<8x192xf32> to vector<8x192xbf16>
    %c3_138 = arith.constant 3 : index
    %c0_139 = arith.constant 0 : index
    %c0_140 = arith.constant 0 : index
    %149 = vector.load %arg13[%c3_138, %c0_139, %c0_140] : memref<5x192x256xbf16, #tpu.memory_space<vmem>>, vector<1x192x256xbf16>
    %150 = vector.shape_cast %149 : vector<1x192x256xbf16> to vector<192x256xbf16>
    %cst_141 = arith.constant dense<0.000000e+00> : vector<8x256xf32>
    %151 = tpu.matmul %148, %150, %cst_141 {dimension_numbers = #tpu.dot_dimension_numbers<[1], [0], [0], [1], [0, 0, 1, 1], [], []>} : vector<8x192xbf16>, vector<192x256xbf16>, vector<8x256xf32> -> vector<8x256xf32>
    %152 = arith.addf %144, %151 : vector<8x256xf32>
    %c4_142 = arith.constant 4 : index
    %c0_143 = arith.constant 0 : index
    %c0_144 = arith.constant 0 : index
    %153 = vector.load %arg12[%c4_142, %c0_143, %c0_144] : memref<5x8x12xbf16, #tpu.memory_space<vmem>>, vector<1x8x12xbf16>
    %154 = vector.shape_cast %153 : vector<1x8x12xbf16> to vector<8x12xbf16>
    %cst_145 = arith.constant dense<0.000000e+00> : vector<8x192xf32>
    %155 = tpu.matmul %154, %121, %cst_145 {dimension_numbers = #tpu.dot_dimension_numbers<[1], [0], [0], [1], [0, 0, 1, 1], [], []>} : vector<8x12xbf16>, vector<12x192xbf16>, vector<8x192xf32> -> vector<8x192xf32>
    %156 = arith.truncf %155 : vector<8x192xf32> to vector<8x192xbf16>
    %c4_146 = arith.constant 4 : index
    %c0_147 = arith.constant 0 : index
    %c0_148 = arith.constant 0 : index
    %157 = vector.load %arg13[%c4_146, %c0_147, %c0_148] : memref<5x192x256xbf16, #tpu.memory_space<vmem>>, vector<1x192x256xbf16>
    %158 = vector.shape_cast %157 : vector<1x192x256xbf16> to vector<192x256xbf16>
    %cst_149 = arith.constant dense<0.000000e+00> : vector<8x256xf32>
    %159 = tpu.matmul %156, %158, %cst_149 {dimension_numbers = #tpu.dot_dimension_numbers<[1], [0], [0], [1], [0, 0, 1, 1], [], []>} : vector<8x192xbf16>, vector<192x256xbf16>, vector<8x256xf32> -> vector<8x256xf32>
    %160 = arith.addf %152, %159 : vector<8x256xf32>
    %c0_150 = arith.constant 0 : index
    %c0_151 = arith.constant 0 : index
    %161 = vector.load %arg14[%c0_150, %c0_151] : memref<1x256xf32, #tpu.memory_space<vmem>>, vector<1x256xf32>
    %162 = vector.broadcast %161 : vector<1x256xf32> to vector<8x256xf32>
    %163 = arith.addf %160, %162 : vector<8x256xf32>
    %cst_152 = arith.constant 0.000000e+00 : f32
    %164 = vector.broadcast %cst_152 : f32 to vector<8x256xf32>
    %165 = arith.maximumf %163, %164 : vector<8x256xf32>
    %166 = arith.truncf %165 : vector<8x256xf32> to vector<8x256xbf16>
    %c0_153 = arith.constant 0 : index
    %c0_154 = arith.constant 0 : index
    %c0_155 = arith.constant 0 : index
    %167 = vector.load %arg15[%c0_153, %c0_154, %c0_155] : memref<2x4x8xbf16, #tpu.memory_space<vmem>>, vector<1x4x8xbf16>
    %168 = vector.shape_cast %167 : vector<1x4x8xbf16> to vector<4x8xbf16>
    %cst_156 = arith.constant dense<0.000000e+00> : vector<4x256xf32>
    %169 = tpu.matmul %168, %166, %cst_156 {dimension_numbers = #tpu.dot_dimension_numbers<[1], [0], [0], [1], [0, 0, 1, 1], [], []>} : vector<4x8xbf16>, vector<8x256xbf16>, vector<4x256xf32> -> vector<4x256xf32>
    %c1_157 = arith.constant 1 : index
    %c0_158 = arith.constant 0 : index
    %c0_159 = arith.constant 0 : index
    %170 = vector.load %arg15[%c1_157, %c0_158, %c0_159] : memref<2x4x8xbf16, #tpu.memory_space<vmem>>, vector<1x4x8xbf16>
    %171 = vector.shape_cast %170 : vector<1x4x8xbf16> to vector<4x8xbf16>
    %cst_160 = arith.constant dense<0.000000e+00> : vector<4x256xf32>
    %172 = tpu.matmul %171, %166, %cst_160 {dimension_numbers = #tpu.dot_dimension_numbers<[1], [0], [0], [1], [0, 0, 1, 1], [], []>} : vector<4x8xbf16>, vector<8x256xbf16>, vector<4x256xf32> -> vector<4x256xf32>
    %173 = arith.maximumf %169, %172 : vector<4x256xf32>
    %174 = arith.truncf %173 : vector<4x256xf32> to vector<4x256xbf16>
    %c0_161 = arith.constant 0 : index
    %c0_162 = arith.constant 0 : index
    %c0_163 = arith.constant 0 : index
    %175 = vector.load %arg16[%c0_161, %c0_162, %c0_163] : memref<2x256x128xbf16, #tpu.memory_space<vmem>>, vector<1x256x128xbf16>
    %176 = vector.shape_cast %175 : vector<1x256x128xbf16> to vector<256x128xbf16>
    %cst_164 = arith.constant dense<0.000000e+00> : vector<4x128xf32>
    %177 = tpu.matmul %174, %176, %cst_164 {dimension_numbers = #tpu.dot_dimension_numbers<[1], [0], [0], [1], [0, 0, 1, 1], [], []>} : vector<4x256xbf16>, vector<256x128xbf16>, vector<4x128xf32> -> vector<4x128xf32>
    %c1_165 = arith.constant 1 : index
    %c0_166 = arith.constant 0 : index
    %c0_167 = arith.constant 0 : index
    %178 = vector.load %arg16[%c1_165, %c0_166, %c0_167] : memref<2x256x128xbf16, #tpu.memory_space<vmem>>, vector<1x256x128xbf16>
    %179 = vector.shape_cast %178 : vector<1x256x128xbf16> to vector<256x128xbf16>
    %cst_168 = arith.constant dense<0.000000e+00> : vector<4x128xf32>
    %180 = tpu.matmul %174, %179, %cst_168 {dimension_numbers = #tpu.dot_dimension_numbers<[1], [0], [0], [1], [0, 0, 1, 1], [], []>} : vector<4x256xbf16>, vector<256x128xbf16>, vector<4x128xf32> -> vector<4x128xf32>
    %181 = arith.maximumf %177, %180 : vector<4x128xf32>
    %182 = arith.truncf %181 : vector<4x128xf32> to vector<4x128xbf16>
    %c0_169 = arith.constant 0 : index
    %c0_170 = arith.constant 0 : index
    %c0_171 = arith.constant 0 : index
    %183 = vector.load %arg17[%c0_169, %c0_170, %c0_171] : memref<3x4x4xbf16, #tpu.memory_space<vmem>>, vector<1x4x4xbf16>
    %184 = vector.shape_cast %183 : vector<1x4x4xbf16> to vector<4x4xbf16>
    %cst_172 = arith.constant dense<0.000000e+00> : vector<4x128xf32>
    %185 = tpu.matmul %184, %182, %cst_172 {dimension_numbers = #tpu.dot_dimension_numbers<[1], [0], [0], [1], [0, 0, 1, 1], [], []>} : vector<4x4xbf16>, vector<4x128xbf16>, vector<4x128xf32> -> vector<4x128xf32>
    %186 = arith.truncf %185 : vector<4x128xf32> to vector<4x128xbf16>
    %c0_173 = arith.constant 0 : index
    %c0_174 = arith.constant 0 : index
    %c0_175 = arith.constant 0 : index
    %187 = vector.load %arg18[%c0_173, %c0_174, %c0_175] : memref<3x128x128xbf16, #tpu.memory_space<vmem>>, vector<1x128x128xbf16>
    %188 = vector.shape_cast %187 : vector<1x128x128xbf16> to vector<128x128xbf16>
    %cst_176 = arith.constant dense<0.000000e+00> : vector<4x128xf32>
    %189 = tpu.matmul %186, %188, %cst_176 {dimension_numbers = #tpu.dot_dimension_numbers<[1], [0], [0], [1], [0, 0, 1, 1], [], []>} : vector<4x128xbf16>, vector<128x128xbf16>, vector<4x128xf32> -> vector<4x128xf32>
    %c1_177 = arith.constant 1 : index
    %c0_178 = arith.constant 0 : index
    %c0_179 = arith.constant 0 : index
    %190 = vector.load %arg17[%c1_177, %c0_178, %c0_179] : memref<3x4x4xbf16, #tpu.memory_space<vmem>>, vector<1x4x4xbf16>
    %191 = vector.shape_cast %190 : vector<1x4x4xbf16> to vector<4x4xbf16>
    %cst_180 = arith.constant dense<0.000000e+00> : vector<4x128xf32>
    %192 = tpu.matmul %191, %182, %cst_180 {dimension_numbers = #tpu.dot_dimension_numbers<[1], [0], [0], [1], [0, 0, 1, 1], [], []>} : vector<4x4xbf16>, vector<4x128xbf16>, vector<4x128xf32> -> vector<4x128xf32>
    %193 = arith.truncf %192 : vector<4x128xf32> to vector<4x128xbf16>
    %c1_181 = arith.constant 1 : index
    %c0_182 = arith.constant 0 : index
    %c0_183 = arith.constant 0 : index
    %194 = vector.load %arg18[%c1_181, %c0_182, %c0_183] : memref<3x128x128xbf16, #tpu.memory_space<vmem>>, vector<1x128x128xbf16>
    %195 = vector.shape_cast %194 : vector<1x128x128xbf16> to vector<128x128xbf16>
    %cst_184 = arith.constant dense<0.000000e+00> : vector<4x128xf32>
    %196 = tpu.matmul %193, %195, %cst_184 {dimension_numbers = #tpu.dot_dimension_numbers<[1], [0], [0], [1], [0, 0, 1, 1], [], []>} : vector<4x128xbf16>, vector<128x128xbf16>, vector<4x128xf32> -> vector<4x128xf32>
    %197 = arith.addf %189, %196 : vector<4x128xf32>
    %c2_185 = arith.constant 2 : index
    %c0_186 = arith.constant 0 : index
    %c0_187 = arith.constant 0 : index
    %198 = vector.load %arg17[%c2_185, %c0_186, %c0_187] : memref<3x4x4xbf16, #tpu.memory_space<vmem>>, vector<1x4x4xbf16>
    %199 = vector.shape_cast %198 : vector<1x4x4xbf16> to vector<4x4xbf16>
    %cst_188 = arith.constant dense<0.000000e+00> : vector<4x128xf32>
    %200 = tpu.matmul %199, %182, %cst_188 {dimension_numbers = #tpu.dot_dimension_numbers<[1], [0], [0], [1], [0, 0, 1, 1], [], []>} : vector<4x4xbf16>, vector<4x128xbf16>, vector<4x128xf32> -> vector<4x128xf32>
    %201 = arith.truncf %200 : vector<4x128xf32> to vector<4x128xbf16>
    %c2_189 = arith.constant 2 : index
    %c0_190 = arith.constant 0 : index
    %c0_191 = arith.constant 0 : index
    %202 = vector.load %arg18[%c2_189, %c0_190, %c0_191] : memref<3x128x128xbf16, #tpu.memory_space<vmem>>, vector<1x128x128xbf16>
    %203 = vector.shape_cast %202 : vector<1x128x128xbf16> to vector<128x128xbf16>
    %cst_192 = arith.constant dense<0.000000e+00> : vector<4x128xf32>
    %204 = tpu.matmul %201, %203, %cst_192 {dimension_numbers = #tpu.dot_dimension_numbers<[1], [0], [0], [1], [0, 0, 1, 1], [], []>} : vector<4x128xbf16>, vector<128x128xbf16>, vector<4x128xf32> -> vector<4x128xf32>
    %205 = arith.addf %197, %204 : vector<4x128xf32>
    %c0_193 = arith.constant 0 : index
    %c0_194 = arith.constant 0 : index
    %206 = vector.load %arg19[%c0_193, %c0_194] : memref<1x128xf32, #tpu.memory_space<vmem>>, vector<1x128xf32>
    %207 = vector.broadcast %206 : vector<1x128xf32> to vector<4x128xf32>
    %208 = arith.addf %205, %207 : vector<4x128xf32>
    %cst_195 = arith.constant 0.000000e+00 : f32
    %209 = vector.broadcast %cst_195 : f32 to vector<4x128xf32>
    %210 = arith.maximumf %208, %209 : vector<4x128xf32>
    %211 = arith.truncf %210 : vector<4x128xf32> to vector<4x128xbf16>
    %c0_196 = arith.constant 0 : index
    %c0_197 = arith.constant 0 : index
    %c0_198 = arith.constant 0 : index
    %212 = vector.load %arg17[%c0_196, %c0_197, %c0_198] : memref<3x4x4xbf16, #tpu.memory_space<vmem>>, vector<1x4x4xbf16>
    %213 = vector.shape_cast %212 : vector<1x4x4xbf16> to vector<4x4xbf16>
    %cst_199 = arith.constant dense<0.000000e+00> : vector<4x128xf32>
    %214 = tpu.matmul %213, %211, %cst_199 {dimension_numbers = #tpu.dot_dimension_numbers<[1], [0], [0], [1], [0, 0, 1, 1], [], []>} : vector<4x4xbf16>, vector<4x128xbf16>, vector<4x128xf32> -> vector<4x128xf32>
    %215 = arith.truncf %214 : vector<4x128xf32> to vector<4x128xbf16>
    %c0_200 = arith.constant 0 : index
    %c0_201 = arith.constant 0 : index
    %c0_202 = arith.constant 0 : index
    %216 = vector.load %arg20[%c0_200, %c0_201, %c0_202] : memref<3x128x128xbf16, #tpu.memory_space<vmem>>, vector<1x128x128xbf16>
    %217 = vector.shape_cast %216 : vector<1x128x128xbf16> to vector<128x128xbf16>
    %cst_203 = arith.constant dense<0.000000e+00> : vector<4x128xf32>
    %218 = tpu.matmul %215, %217, %cst_203 {dimension_numbers = #tpu.dot_dimension_numbers<[1], [0], [0], [1], [0, 0, 1, 1], [], []>} : vector<4x128xbf16>, vector<128x128xbf16>, vector<4x128xf32> -> vector<4x128xf32>
    %c1_204 = arith.constant 1 : index
    %c0_205 = arith.constant 0 : index
    %c0_206 = arith.constant 0 : index
    %219 = vector.load %arg17[%c1_204, %c0_205, %c0_206] : memref<3x4x4xbf16, #tpu.memory_space<vmem>>, vector<1x4x4xbf16>
    %220 = vector.shape_cast %219 : vector<1x4x4xbf16> to vector<4x4xbf16>
    %cst_207 = arith.constant dense<0.000000e+00> : vector<4x128xf32>
    %221 = tpu.matmul %220, %211, %cst_207 {dimension_numbers = #tpu.dot_dimension_numbers<[1], [0], [0], [1], [0, 0, 1, 1], [], []>} : vector<4x4xbf16>, vector<4x128xbf16>, vector<4x128xf32> -> vector<4x128xf32>
    %222 = arith.truncf %221 : vector<4x128xf32> to vector<4x128xbf16>
    %c1_208 = arith.constant 1 : index
    %c0_209 = arith.constant 0 : index
    %c0_210 = arith.constant 0 : index
    %223 = vector.load %arg20[%c1_208, %c0_209, %c0_210] : memref<3x128x128xbf16, #tpu.memory_space<vmem>>, vector<1x128x128xbf16>
    %224 = vector.shape_cast %223 : vector<1x128x128xbf16> to vector<128x128xbf16>
    %cst_211 = arith.constant dense<0.000000e+00> : vector<4x128xf32>
    %225 = tpu.matmul %222, %224, %cst_211 {dimension_numbers = #tpu.dot_dimension_numbers<[1], [0], [0], [1], [0, 0, 1, 1], [], []>} : vector<4x128xbf16>, vector<128x128xbf16>, vector<4x128xf32> -> vector<4x128xf32>
    %226 = arith.addf %218, %225 : vector<4x128xf32>
    %c2_212 = arith.constant 2 : index
    %c0_213 = arith.constant 0 : index
    %c0_214 = arith.constant 0 : index
    %227 = vector.load %arg17[%c2_212, %c0_213, %c0_214] : memref<3x4x4xbf16, #tpu.memory_space<vmem>>, vector<1x4x4xbf16>
    %228 = vector.shape_cast %227 : vector<1x4x4xbf16> to vector<4x4xbf16>
    %cst_215 = arith.constant dense<0.000000e+00> : vector<4x128xf32>
    %229 = tpu.matmul %228, %211, %cst_215 {dimension_numbers = #tpu.dot_dimension_numbers<[1], [0], [0], [1], [0, 0, 1, 1], [], []>} : vector<4x4xbf16>, vector<4x128xbf16>, vector<4x128xf32> -> vector<4x128xf32>
    %230 = arith.truncf %229 : vector<4x128xf32> to vector<4x128xbf16>
    %c2_216 = arith.constant 2 : index
    %c0_217 = arith.constant 0 : index
    %c0_218 = arith.constant 0 : index
    %231 = vector.load %arg20[%c2_216, %c0_217, %c0_218] : memref<3x128x128xbf16, #tpu.memory_space<vmem>>, vector<1x128x128xbf16>
    %232 = vector.shape_cast %231 : vector<1x128x128xbf16> to vector<128x128xbf16>
    %cst_219 = arith.constant dense<0.000000e+00> : vector<4x128xf32>
    %233 = tpu.matmul %230, %232, %cst_219 {dimension_numbers = #tpu.dot_dimension_numbers<[1], [0], [0], [1], [0, 0, 1, 1], [], []>} : vector<4x128xbf16>, vector<128x128xbf16>, vector<4x128xf32> -> vector<4x128xf32>
    %234 = arith.addf %226, %233 : vector<4x128xf32>
    %c0_220 = arith.constant 0 : index
    %c0_221 = arith.constant 0 : index
    %235 = vector.load %arg21[%c0_220, %c0_221] : memref<1x128xf32, #tpu.memory_space<vmem>>, vector<1x128xf32>
    %236 = vector.broadcast %235 : vector<1x128xf32> to vector<4x128xf32>
    %237 = arith.addf %234, %236 : vector<4x128xf32>
    %238 = arith.addf %237, %181 : vector<4x128xf32>
    %cst_222 = arith.constant 0.000000e+00 : f32
    %239 = vector.broadcast %cst_222 : f32 to vector<4x128xf32>
    %240 = arith.maximumf %238, %239 : vector<4x128xf32>
    %241 = arith.truncf %240 : vector<4x128xf32> to vector<4x128xbf16>
    %c0_223 = arith.constant 0 : index
    %c0_224 = arith.constant 0 : index
    %c0_225 = arith.constant 0 : index
    %242 = vector.load %arg22[%c0_223, %c0_224, %c0_225] : memref<4x1x4xbf16, #tpu.memory_space<vmem>>, vector<1x1x4xbf16>
    %243 = vector.shape_cast %242 : vector<1x1x4xbf16> to vector<1x4xbf16>
    %cst_226 = arith.constant dense<0.000000e+00> : vector<1x128xf32>
    %244 = tpu.matmul %243, %241, %cst_226 {dimension_numbers = #tpu.dot_dimension_numbers<[1], [0], [0], [1], [0, 0, 1, 1], [], []>} : vector<1x4xbf16>, vector<4x128xbf16>, vector<1x128xf32> -> vector<1x128xf32>
    %245 = arith.truncf %244 : vector<1x128xf32> to vector<1x128xbf16>
    %c0_227 = arith.constant 0 : index
    %c0_228 = arith.constant 0 : index
    %c0_229 = arith.constant 0 : index
    %246 = vector.load %arg23[%c0_227, %c0_228, %c0_229] : memref<4x128x128xbf16, #tpu.memory_space<vmem>>, vector<1x128x128xbf16>
    %247 = vector.shape_cast %246 : vector<1x128x128xbf16> to vector<128x128xbf16>
    %cst_230 = arith.constant dense<0.000000e+00> : vector<1x128xf32>
    %248 = tpu.matmul %245, %247, %cst_230 {dimension_numbers = #tpu.dot_dimension_numbers<[1], [0], [0], [1], [0, 0, 1, 1], [], []>} : vector<1x128xbf16>, vector<128x128xbf16>, vector<1x128xf32> -> vector<1x128xf32>
    %c1_231 = arith.constant 1 : index
    %c0_232 = arith.constant 0 : index
    %c0_233 = arith.constant 0 : index
    %249 = vector.load %arg22[%c1_231, %c0_232, %c0_233] : memref<4x1x4xbf16, #tpu.memory_space<vmem>>, vector<1x1x4xbf16>
    %250 = vector.shape_cast %249 : vector<1x1x4xbf16> to vector<1x4xbf16>
    %cst_234 = arith.constant dense<0.000000e+00> : vector<1x128xf32>
    %251 = tpu.matmul %250, %241, %cst_234 {dimension_numbers = #tpu.dot_dimension_numbers<[1], [0], [0], [1], [0, 0, 1, 1], [], []>} : vector<1x4xbf16>, vector<4x128xbf16>, vector<1x128xf32> -> vector<1x128xf32>
    %252 = arith.truncf %251 : vector<1x128xf32> to vector<1x128xbf16>
    %c1_235 = arith.constant 1 : index
    %c0_236 = arith.constant 0 : index
    %c0_237 = arith.constant 0 : index
    %253 = vector.load %arg23[%c1_235, %c0_236, %c0_237] : memref<4x128x128xbf16, #tpu.memory_space<vmem>>, vector<1x128x128xbf16>
    %254 = vector.shape_cast %253 : vector<1x128x128xbf16> to vector<128x128xbf16>
    %cst_238 = arith.constant dense<0.000000e+00> : vector<1x128xf32>
    %255 = tpu.matmul %252, %254, %cst_238 {dimension_numbers = #tpu.dot_dimension_numbers<[1], [0], [0], [1], [0, 0, 1, 1], [], []>} : vector<1x128xbf16>, vector<128x128xbf16>, vector<1x128xf32> -> vector<1x128xf32>
    %256 = arith.addf %248, %255 : vector<1x128xf32>
    %c2_239 = arith.constant 2 : index
    %c0_240 = arith.constant 0 : index
    %c0_241 = arith.constant 0 : index
    %257 = vector.load %arg22[%c2_239, %c0_240, %c0_241] : memref<4x1x4xbf16, #tpu.memory_space<vmem>>, vector<1x1x4xbf16>
    %258 = vector.shape_cast %257 : vector<1x1x4xbf16> to vector<1x4xbf16>
    %cst_242 = arith.constant dense<0.000000e+00> : vector<1x128xf32>
    %259 = tpu.matmul %258, %241, %cst_242 {dimension_numbers = #tpu.dot_dimension_numbers<[1], [0], [0], [1], [0, 0, 1, 1], [], []>} : vector<1x4xbf16>, vector<4x128xbf16>, vector<1x128xf32> -> vector<1x128xf32>
    %260 = arith.truncf %259 : vector<1x128xf32> to vector<1x128xbf16>
    %c2_243 = arith.constant 2 : index
    %c0_244 = arith.constant 0 : index
    %c0_245 = arith.constant 0 : index
    %261 = vector.load %arg23[%c2_243, %c0_244, %c0_245] : memref<4x128x128xbf16, #tpu.memory_space<vmem>>, vector<1x128x128xbf16>
    %262 = vector.shape_cast %261 : vector<1x128x128xbf16> to vector<128x128xbf16>
    %cst_246 = arith.constant dense<0.000000e+00> : vector<1x128xf32>
    %263 = tpu.matmul %260, %262, %cst_246 {dimension_numbers = #tpu.dot_dimension_numbers<[1], [0], [0], [1], [0, 0, 1, 1], [], []>} : vector<1x128xbf16>, vector<128x128xbf16>, vector<1x128xf32> -> vector<1x128xf32>
    %264 = arith.addf %256, %263 : vector<1x128xf32>
    %c3_247 = arith.constant 3 : index
    %c0_248 = arith.constant 0 : index
    %c0_249 = arith.constant 0 : index
    %265 = vector.load %arg22[%c3_247, %c0_248, %c0_249] : memref<4x1x4xbf16, #tpu.memory_space<vmem>>, vector<1x1x4xbf16>
    %266 = vector.shape_cast %265 : vector<1x1x4xbf16> to vector<1x4xbf16>
    %cst_250 = arith.constant dense<0.000000e+00> : vector<1x128xf32>
    %267 = tpu.matmul %266, %241, %cst_250 {dimension_numbers = #tpu.dot_dimension_numbers<[1], [0], [0], [1], [0, 0, 1, 1], [], []>} : vector<1x4xbf16>, vector<4x128xbf16>, vector<1x128xf32> -> vector<1x128xf32>
    %268 = arith.truncf %267 : vector<1x128xf32> to vector<1x128xbf16>
    %c3_251 = arith.constant 3 : index
    %c0_252 = arith.constant 0 : index
    %c0_253 = arith.constant 0 : index
    %269 = vector.load %arg23[%c3_251, %c0_252, %c0_253] : memref<4x128x128xbf16, #tpu.memory_space<vmem>>, vector<1x128x128xbf16>
    %270 = vector.shape_cast %269 : vector<1x128x128xbf16> to vector<128x128xbf16>
    %cst_254 = arith.constant dense<0.000000e+00> : vector<1x128xf32>
    %271 = tpu.matmul %268, %270, %cst_254 {dimension_numbers = #tpu.dot_dimension_numbers<[1], [0], [0], [1], [0, 0, 1, 1], [], []>} : vector<1x128xbf16>, vector<128x128xbf16>, vector<1x128xf32> -> vector<1x128xf32>
    %272 = arith.addf %264, %271 : vector<1x128xf32>
    %c0_255 = arith.constant 0 : index
    %c0_256 = arith.constant 0 : index
    %273 = vector.load %arg24[%c0_255, %c0_256] : memref<1x128xf32, #tpu.memory_space<vmem>>, vector<1x128xf32>
    %274 = arith.addf %272, %273 : vector<1x128xf32>
    %c0_257 = arith.constant 0 : index
    %c0_258 = arith.constant 0 : index
    %c0_259 = arith.constant 0 : index
    %275 = vector.load %arg25[%c0_257, %c0_258, %c0_259] : memref<1x1x128xf32, #tpu.memory_space<vmem>>, vector<1x1x128xf32>
    %276 = vector.shape_cast %275 : vector<1x1x128xf32> to vector<1x128xf32>
    %277 = vector.shape_cast %274 : vector<1x128xf32> to vector<1x1x128xf32>
    tpu.vector_store %arg25[%c0_257, %c0_258, %c0_259], %277 {strides = array<i32>} : memref<1x1x128xf32, #tpu.memory_space<vmem>>, vector<1x1x128xf32>,
    return
  }
  func.func @transform_0(%arg0: i32) -> (i32, i32, i32) {
    %c0_i32 = arith.constant 0 : i32
    %c0_i32_0 = arith.constant 0 : i32
    %c0_i32_1 = arith.constant 0 : i32
    return %arg0, %c0_i32, %c0_i32_0 : i32, i32, i32
  }
  func.func @transform_1(%arg0: i32) -> (i32, i32, i32) {
    %c0_i32 = arith.constant 0 : i32
    %c0_i32_0 = arith.constant 0 : i32
    %c0_i32_1 = arith.constant 0 : i32
    %c0_i32_2 = arith.constant 0 : i32
    return %c0_i32, %c0_i32_0, %c0_i32_1 : i32, i32, i32
  }
  func.func @transform_2(%arg0: i32) -> (i32, i32, i32) {
    %c0_i32 = arith.constant 0 : i32
    %c0_i32_0 = arith.constant 0 : i32
    %c0_i32_1 = arith.constant 0 : i32
    %c0_i32_2 = arith.constant 0 : i32
    return %c0_i32, %c0_i32_0, %c0_i32_1 : i32, i32, i32
  }
  func.func @transform_3(%arg0: i32) -> (i32, i32) {
    %c0_i32 = arith.constant 0 : i32
    %c0_i32_0 = arith.constant 0 : i32
    %c0_i32_1 = arith.constant 0 : i32
    return %c0_i32, %c0_i32_0 : i32, i32
  }
  func.func @transform_4(%arg0: i32) -> (i32, i32, i32) {
    %c0_i32 = arith.constant 0 : i32
    %c0_i32_0 = arith.constant 0 : i32
    %c0_i32_1 = arith.constant 0 : i32
    %c0_i32_2 = arith.constant 0 : i32
    return %c0_i32, %c0_i32_0, %c0_i32_1 : i32, i32, i32
  }
  func.func @transform_5(%arg0: i32) -> (i32, i32, i32) {
    %c0_i32 = arith.constant 0 : i32
    %c0_i32_0 = arith.constant 0 : i32
    %c0_i32_1 = arith.constant 0 : i32
    %c0_i32_2 = arith.constant 0 : i32
    return %c0_i32, %c0_i32_0, %c0_i32_1 : i32, i32, i32
  }
  func.func @transform_6(%arg0: i32) -> (i32, i32, i32) {
    %c0_i32 = arith.constant 0 : i32
    %c0_i32_0 = arith.constant 0 : i32
    %c0_i32_1 = arith.constant 0 : i32
    %c0_i32_2 = arith.constant 0 : i32
    return %c0_i32, %c0_i32_0, %c0_i32_1 : i32, i32, i32
  }
  func.func @transform_7(%arg0: i32) -> (i32, i32, i32) {
    %c0_i32 = arith.constant 0 : i32
    %c0_i32_0 = arith.constant 0 : i32
    %c0_i32_1 = arith.constant 0 : i32
    %c0_i32_2 = arith.constant 0 : i32
    return %c0_i32, %c0_i32_0, %c0_i32_1 : i32, i32, i32
  }
  func.func @transform_8(%arg0: i32) -> (i32, i32) {
    %c0_i32 = arith.constant 0 : i32
    %c0_i32_0 = arith.constant 0 : i32
    %c0_i32_1 = arith.constant 0 : i32
    return %c0_i32, %c0_i32_0 : i32, i32
  }
  func.func @transform_9(%arg0: i32) -> (i32, i32, i32) {
    %c0_i32 = arith.constant 0 : i32
    %c0_i32_0 = arith.constant 0 : i32
    %c0_i32_1 = arith.constant 0 : i32
    %c0_i32_2 = arith.constant 0 : i32
    return %c0_i32, %c0_i32_0, %c0_i32_1 : i32, i32, i32
  }
  func.func @transform_10(%arg0: i32) -> (i32, i32) {
    %c0_i32 = arith.constant 0 : i32
    %c0_i32_0 = arith.constant 0 : i32
    %c0_i32_1 = arith.constant 0 : i32
    return %c0_i32, %c0_i32_0 : i32, i32
  }
  func.func @transform_11(%arg0: i32) -> (i32, i32, i32) {
    %c0_i32 = arith.constant 0 : i32
    %c0_i32_0 = arith.constant 0 : i32
    %c0_i32_1 = arith.constant 0 : i32
    %c0_i32_2 = arith.constant 0 : i32
    return %c0_i32, %c0_i32_0, %c0_i32_1 : i32, i32, i32
  }
  func.func @transform_12(%arg0: i32) -> (i32, i32, i32) {
    %c0_i32 = arith.constant 0 : i32
    %c0_i32_0 = arith.constant 0 : i32
    %c0_i32_1 = arith.constant 0 : i32
    %c0_i32_2 = arith.constant 0 : i32
    return %c0_i32, %c0_i32_0, %c0_i32_1 : i32, i32, i32
  }
  func.func @transform_13(%arg0: i32) -> (i32, i32) {
    %c0_i32 = arith.constant 0 : i32
    %c0_i32_0 = arith.constant 0 : i32
    %c0_i32_1 = arith.constant 0 : i32
    return %c0_i32, %c0_i32_0 : i32, i32
  }
  func.func @transform_14(%arg0: i32) -> (i32, i32, i32) {
    %c0_i32 = arith.constant 0 : i32
    %c0_i32_0 = arith.constant 0 : i32
    %c0_i32_1 = arith.constant 0 : i32
    %c0_i32_2 = arith.constant 0 : i32
    return %c0_i32, %c0_i32_0, %c0_i32_1 : i32, i32, i32
  }
  func.func @transform_15(%arg0: i32) -> (i32, i32, i32) {
    %c0_i32 = arith.constant 0 : i32
    %c0_i32_0 = arith.constant 0 : i32
    %c0_i32_1 = arith.constant 0 : i32
    %c0_i32_2 = arith.constant 0 : i32
    return %c0_i32, %c0_i32_0, %c0_i32_1 : i32, i32, i32
  }
  func.func @transform_16(%arg0: i32) -> (i32, i32, i32) {
    %c0_i32 = arith.constant 0 : i32
    %c0_i32_0 = arith.constant 0 : i32
    %c0_i32_1 = arith.constant 0 : i32
    %c0_i32_2 = arith.constant 0 : i32
    return %c0_i32, %c0_i32_0, %c0_i32_1 : i32, i32, i32
  }
  func.func @transform_17(%arg0: i32) -> (i32, i32, i32) {
    %c0_i32 = arith.constant 0 : i32
    %c0_i32_0 = arith.constant 0 : i32
    %c0_i32_1 = arith.constant 0 : i32
    %c0_i32_2 = arith.constant 0 : i32
    return %c0_i32, %c0_i32_0, %c0_i32_1 : i32, i32, i32
  }
  func.func @transform_18(%arg0: i32) -> (i32, i32) {
    %c0_i32 = arith.constant 0 : i32
    %c0_i32_0 = arith.constant 0 : i32
    %c0_i32_1 = arith.constant 0 : i32
    return %c0_i32, %c0_i32_0 : i32, i32
  }
  func.func @transform_19(%arg0: i32) -> (i32, i32, i32) {
    %c0_i32 = arith.constant 0 : i32
    %c0_i32_0 = arith.constant 0 : i32
    %c0_i32_1 = arith.constant 0 : i32
    %c0_i32_2 = arith.constant 0 : i32
    return %c0_i32, %c0_i32_0, %c0_i32_1 : i32, i32, i32
  }
  func.func @transform_20(%arg0: i32) -> (i32, i32) {
    %c0_i32 = arith.constant 0 : i32
    %c0_i32_0 = arith.constant 0 : i32
    %c0_i32_1 = arith.constant 0 : i32
    return %c0_i32, %c0_i32_0 : i32, i32
  }
  func.func @transform_21(%arg0: i32) -> (i32, i32, i32) {
    %c0_i32 = arith.constant 0 : i32
    %c0_i32_0 = arith.constant 0 : i32
    %c0_i32_1 = arith.constant 0 : i32
    %c0_i32_2 = arith.constant 0 : i32
    return %c0_i32, %c0_i32_0, %c0_i32_1 : i32, i32, i32
  }
  func.func @transform_22(%arg0: i32) -> (i32, i32, i32) {
    %c0_i32 = arith.constant 0 : i32
    %c0_i32_0 = arith.constant 0 : i32
    %c0_i32_1 = arith.constant 0 : i32
    %c0_i32_2 = arith.constant 0 : i32
    return %c0_i32, %c0_i32_0, %c0_i32_1 : i32, i32, i32
  }
  func.func @transform_23(%arg0: i32) -> (i32, i32) {
    %c0_i32 = arith.constant 0 : i32
    %c0_i32_0 = arith.constant 0 : i32
    %c0_i32_1 = arith.constant 0 : i32
    return %c0_i32, %c0_i32_0 : i32, i32
  }
  func.func @transform_24(%arg0: i32) -> (i32, i32, i32) {
    %c0_i32 = arith.constant 0 : i32
    %c0_i32_0 = arith.constant 0 : i32
    %c0_i32_1 = arith.constant 0 : i32
    return %arg0, %c0_i32, %c0_i32_0 : i32, i32, i32
  }
}

</mosaic_0001>

<llo_original>
// kernel: resnet_forward.1
$region0: #{resnet_forward.1}
  #allocation0 [shape = 'u32[]', space=smem, size = 0x4, offset = 0x4, fixed_abs, tag = 'smem constant byte address 0x4 - core index']
  #allocation1 [shape = 'u32[144,128]{1,0:T(1,128)}', space=vmem, size = 0x12000, scoped, tag = 'internal scratch']
  %s0 = inlined_call_operand.vmem [shape: bf16[2,28,28], index: 0, kind: input, shape index: {}]
  %s1 = inlined_call_operand.vmem [shape: bf16[5,24,28], index: 1, kind: input, shape index: {}]
  %s2 = inlined_call_operand.hbm [shape: bf16[5,28,384], index: 2, kind: input, shape index: {}]
  %s3 = inlined_call_operand.hbm [shape: f32[1,384], index: 3, kind: input, shape index: {}]
  %s4 = inlined_call_operand.vmem [shape: bf16[2,12,24], index: 4, kind: input, shape index: {}]
  %s5 = inlined_call_operand.vmem [shape: bf16[2,384,192], index: 5, kind: input, shape index: {}]
  %s6 = inlined_call_operand.hbm [shape: bf16[3,12,12], index: 6, kind: input, shape index: {}]
  %s7 = inlined_call_operand.hbm [shape: bf16[3,192,192], index: 7, kind: input, shape index: {}]
  %s8 = inlined_call_operand.vmem [shape: f32[1,192], index: 8, kind: input, shape index: {}]
  %s9 = inlined_call_operand.hbm [shape: bf16[3,192,192], index: 9, kind: input, shape index: {}]
  %s10 = inlined_call_operand.hbm [shape: f32[1,192], index: 10, kind: input, shape index: {}]
  %s11 = inlined_call_operand.hbm [shape: bf16[5,8,12], index: 11, kind: input, shape index: {}]
  %s12 = inlined_call_operand.vmem [shape: bf16[5,192,256], index: 12, kind: input, shape index: {}]
  %s13 = inlined_call_operand.hbm [shape: f32[1,256], index: 13, kind: input, shape index: {}]
  %s14 = inlined_call_operand.hbm [shape: bf16[2,4,8], index: 14, kind: input, shape index: {}]
  %s15 = inlined_call_operand.vmem [shape: bf16[2,256,128], index: 15, kind: input, shape index: {}]
  %s16 = inlined_call_operand.hbm [shape: bf16[3,4,4], index: 16, kind: input, shape index: {}]
  %s17 = inlined_call_operand.hbm [shape: bf16[3,128,128], index: 17, kind: input, shape index: {}]
  %s18 = inlined_call_operand.hbm [shape: f32[1,128], index: 18, kind: input, shape index: {}]
  %s19 = inlined_call_operand.hbm [shape: bf16[3,128,128], index: 19, kind: input, shape index: {}]
  %s20 = inlined_call_operand.hbm [shape: f32[1,128], index: 20, kind: input, shape index: {}]
  %s21 = inlined_call_operand.vmem [shape: bf16[4,1,4], index: 21, kind: input, shape index: {}]
  %s22 = inlined_call_operand.vmem [shape: bf16[4,128,128], index: 22, kind: input, shape index: {}]
  %s23 = inlined_call_operand.hbm [shape: f32[1,128], index: 23, kind: input, shape index: {}]
  %s24 = inlined_call_operand.hbm [shape: f32[2,1,128], index: 24, kind: output, shape index: {}]
  %s25 = sld [smem:[#allocation0]]
  $region189: #{resnet_forward.1} parent=0
    _
  %s27 = ssub.s32 1, %s25
  %s28 = scalar_select 0, %s27, %s25
  $region1: #{resnet_forward.1} parent=0
    #allocation2 [shape = 'u8[122880]{0}', space=vmem, size = 0x1e000, scoped, tag = 'input window, operand 2, single buffered']
    #allocation3 [shape = 's32[2]{0}', space=sflag, size = 0x8, scoped, tag = 'scoped memory for resnet_forward.1']
    #allocation4 [shape = 's32[2]{0}', space=sflag, size = 0x8, scoped, tag = 'scoped memory for resnet_forward.1']
    #allocation5 [shape = 'u8[1536]{0}', space=vmem, size = 0x800, scoped, tag = 'input window, operand 3, single buffered']
    #allocation6 [shape = 's32[1]{0}', space=sflag, size = 0x4, scoped, tag = 'scoped memory for resnet_forward.1']
    #allocation7 [shape = 'u8[12288]{0}', space=vmem, size = 0x3000, scoped, tag = 'input window, operand 6, single buffered']
    #allocation8 [shape = 'u8[294912]{0}', space=vmem, size = 0x48000, scoped, tag = 'input window, operand 7, single buffered']
    #allocation9 [shape = 's32[1]{0}', space=sflag, size = 0x4, scoped, tag = 'scoped memory for resnet_forward.1']
    #allocation10 [shape = 'u8[294912]{0}', space=vmem, size = 0x48000, scoped, tag = 'input window, operand 9, single buffered']
    #allocation11 [shape = 'u8[1024]{0}', space=vmem, size = 0x400, scoped, tag = 'input window, operand 10, single buffered']
    #allocation12 [shape = 's32[1]{0}', space=sflag, size = 0x4, scoped, tag = 'scoped memory for resnet_forward.1']
    #allocation13 [shape = 'u8[10240]{0}', space=vmem, size = 0x2800, scoped, tag = 'input window, operand 11, single buffered']
    #allocation14 [shape = 'u8[1024]{0}', space=vmem, size = 0x400, scoped, tag = 'input window, operand 13, single buffered']
    #allocation15 [shape = 's32[1]{0}', space=sflag, size = 0x4, scoped, tag = 'scoped memory for resnet_forward.1']
    #allocation16 [shape = 'u8[2048]{0}', space=vmem, size = 0x800, scoped, tag = 'input window, operand 14, single buffered']
    #allocation17 [shape = 'u8[3072]{0}', space=vmem, size = 0xc00, scoped, tag = 'input window, operand 16, single buffered']
    #allocation18 [shape = 's32[1]{0}', space=sflag, size = 0x4, scoped, tag = 'scoped memory for resnet_forward.1']
    #allocation19 [shape = 'u8[98304]{0}', space=vmem, size = 0x18000, scoped, tag = 'input window, operand 17, single buffered']
    #allocation20 [shape = 'u8[512]{0}', space=vmem, size = 0x400, scoped, tag = 'input window, operand 18, single buffered']
    #allocation21 [shape = 's32[1]{0}', space=sflag, size = 0x4, scoped, tag = 'scoped memory for resnet_forward.1']
    #allocation22 [shape = 'u8[98304]{0}', space=vmem, size = 0x18000, scoped, tag = 'input window, operand 19, single buffered']
    #allocation23 [shape = 'u8[512]{0}', space=vmem, size = 0x400, scoped, tag = 'input window, operand 20, single buffered']
    #allocation24 [shape = 's32[1]{0}', space=sflag, size = 0x4, scoped, tag = 'scoped memory for resnet_forward.1']
    #allocation25 [shape = 'u8[512]{0}', space=vmem, size = 0x400, scoped, tag = 'input window, operand 23, single buffered']
    #allocation26 [shape = 'u8[1024]{0}', space=vmem, size = 0x400, scoped, tag = 'output window, operand 0']
    %29 = vsyncpa [#allocation3], 0
    %30 = vsyncpa [#allocation6], 0
    %31 = vsyncpa [#allocation9], 0
    %32 = vsyncpa [#allocation12], 0
    %33 = vsyncpa [#allocation15], 0
    %34 = vsyncpa [#allocation18], 0
    %35 = vsyncpa [#allocation21], 0
    %36 = vsyncpa [#allocation24], 0
    %37 = vsyncpa [#allocation4], 0
    %s38 = scalar_lea.sflag [#allocation4], 1
    %39 = vsyncpa %s38, 0
    loop: start=0, step=1, limit=4
    $region2: #{resnet_forward.1} parent=1 // loop_pre_header
      _
    $region3: #{resnet_forward.1} parent=1 // loop_header
      %s41 = sphi 0, %s45
      %p42 = scmp.ge.s32.totalorder %s41, 4
      %s51 = sphi 0, %s53
      %s54 = sphi 0, %s51
      %s55 = sphi 0, %s54
      %s71 = sphi 0, %s55
      %s75 = sphi 0, %s75
      %s77 = sphi 0, %s75
      %s78 = sphi 0, %s77
      %s92 = sphi 0, %s78
      %s96 = sphi 0, %s96
      %s98 = sphi 0, %s96
      %s99 = sphi 0, %s98
      %s113 = sphi 0, %s99
      %s117 = sphi 0, %s117
      %s119 = sphi 0, %s117
      %s120 = sphi 0, %s119
      %s134 = sphi 0, %s120
      %s138 = sphi 0, %s138
      %s140 = sphi 0, %s138
      %s141 = sphi 0, %s140
      %s155 = sphi 0, %s141
      %s159 = sphi 0, %s159
      %s161 = sphi 0, %s159
      %s162 = sphi 0, %s161
      %s176 = sphi 0, %s162
      %s180 = sphi 0, %s180
      %s182 = sphi 0, %s180
      %s183 = sphi 0, %s182
      %s197 = sphi 0, %s183
      %s201 = sphi 0, %s201
      %s203 = sphi 0, %s201
      %s204 = sphi 0, %s203
      %s218 = sphi 0, %s204
      %s222 = sphi 0, %s222
      %s224 = sphi 0, %s222
      %s225 = sphi 0, %s224
      %s239 = sphi 0, %s225
      %s243 = sphi 0, %s243
      %s245 = sphi 0, %s243
      %s246 = sphi 0, %s245
      %s260 = sphi 0, %s246
      %s264 = sphi 0, %s264
      %s266 = sphi 0, %s264
      %s267 = sphi 0, %s266
      %s281 = sphi 0, %s267
      %s285 = sphi 0, %s285
      %s287 = sphi 0, %s285
      %s288 = sphi 0, %s287
      %s302 = sphi 0, %s288
      %s306 = sphi 0, %s306
      %s308 = sphi 0, %s306
      %s309 = sphi 0, %s308
      %s323 = sphi 0, %s309
      %s327 = sphi 0, %s327
      %s329 = sphi 0, %s327
      %s330 = sphi 0, %s329
      %s344 = sphi 0, %s330
      %s348 = sphi 0, %s348
      %s350 = sphi 0, %s348
      %s351 = sphi 0, %s350
      %s365 = sphi 0, %s351
      %s369 = sphi 0, %s369
      %s371 = sphi 0, %s369
      %s372 = sphi 0, %s371
      %s386 = sphi 0, %s372
      %s390 = sphi 0, %s390
      %s392 = sphi 0, %s390
      %s393 = sphi 0, %s392
      %s407 = sphi 0, %s393
      %s411 = sphi 0, %s411
      %s413 = sphi 0, %s411
      %s414 = sphi 0, %s413
      %s428 = sphi 0, %s414
      %s432 = sphi 0, %s432
      %s434 = sphi 0, %s432
      %s435 = sphi 0, %s434
      %s449 = sphi 0, %s435
      %s453 = sphi 0, %s453
      %s455 = sphi 0, %s453
      %s456 = sphi 0, %s455
      %s470 = sphi 0, %s456
      %s474 = sphi 0, %s474
      %s476 = sphi 0, %s474
      %s477 = sphi 0, %s476
      %s491 = sphi 0, %s477
      %s495 = sphi 0, %s495
      %s497 = sphi 0, %s495
      %s498 = sphi 0, %s497
      %s512 = sphi 0, %s498
      %s516 = sphi 0, %s516
      %s518 = sphi 0, %s516
      %s519 = sphi 0, %s518
      %s533 = sphi 0, %s519
      %s537 = sphi 0, %s537
      %s539 = sphi 0, %s537
      %s540 = sphi 0, %s539
      %s554 = sphi 0, %s540
      %s560 = sphi 0, %s562
      %s563 = sphi 0, %s560
      %s564 = sphi 0, %s563
      %s580 = sphi 0, %s564
    $region4: #{resnet_forward.1} parent=1 // loop_header_branch
      %44 = sbr.rel (%p42) target = $region8
    $region5: #{resnet_forward.1} parent=1 // loop_body
      %s46 = ssub.s32 %s41, 1
      %s47 = ssub.s32 %s41, 2
      %s48 = sadd.s32 %s41, 1
      %s49 = ssub.s32 %s41, %s48
      %p50 = scmp.eq.s32.totalorder %s49, 0
      %s52 = sadd.s32 %s51, 1
      %s53 = scalar_select %p50, %s51, %s52
      %p56 = pneg %p50
      %p57 = scmp.eq.s32.totalorder %s41, 1
      %p58 = por %p56, %p57
      %p59 = scmp.ne.s32.totalorder %s51, %s54
      %p60 = scmp.eq.s32.totalorder %s41, 0
      %p61 = por %p59, %p60
      %p62 = scmp.ne.s32.totalorder %s51, %s54
      %p63 = scmp.eq.s32.totalorder %s46, 1
      %p64 = por %p62, %p63
      %p65 = scmp.ne.s32.totalorder %s54, %s55
      %p66 = scmp.eq.s32.totalorder %s46, 0
      %p67 = por %p65, %p66
      %p68 = scmp.ne.s32.totalorder %s54, %s55
      %p69 = scmp.eq.s32.totalorder %s47, 1
      %p70 = por %p68, %p69
      %p72 = scmp.ne.s32.totalorder %s55, %s71
      %p73 = scmp.eq.s32.totalorder %s47, 0
      %p74 = por %p72, %p73
      %s76 = sadd.s32 %s75, 1
      %p79 = scmp.eq.s32.totalorder %s41, 1
      %p80 = scmp.ne.s32.totalorder %s75, %s77
      %p81 = scmp.eq.s32.totalorder %s41, 0
      %p82 = por %p80, %p81
      %p83 = scmp.ne.s32.totalorder %s75, %s77
      %p84 = scmp.eq.s32.totalorder %s46, 1
      %p85 = por %p83, %p84
      %p86 = scmp.ne.s32.totalorder %s77, %s78
      %p87 = scmp.eq.s32.totalorder %s46, 0
      %p88 = por %p86, %p87
      %p89 = scmp.ne.s32.totalorder %s77, %s78
      %p90 = scmp.eq.s32.totalorder %s47, 1
      %p91 = por %p89, %p90
      %p93 = scmp.ne.s32.totalorder %s78, %s92
      %p94 = scmp.eq.s32.totalorder %s47, 0
      %p95 = por %p93, %p94
      %s97 = sadd.s32 %s96, 1
      %p100 = scmp.eq.s32.totalorder %s41, 1
      %p101 = scmp.ne.s32.totalorder %s96, %s98
      %p102 = scmp.eq.s32.totalorder %s41, 0
      %p103 = por %p101, %p102
      %p104 = scmp.ne.s32.totalorder %s96, %s98
      %p105 = scmp.eq.s32.totalorder %s46, 1
      %p106 = por %p104, %p105
      %p107 = scmp.ne.s32.totalorder %s98, %s99
      %p108 = scmp.eq.s32.totalorder %s46, 0
      %p109 = por %p107, %p108
      %p110 = scmp.ne.s32.totalorder %s98, %s99
      %p111 = scmp.eq.s32.totalorder %s47, 1
      %p112 = por %p110, %p111
      %p114 = scmp.ne.s32.totalorder %s99, %s113
      %p115 = scmp.eq.s32.totalorder %s47, 0
      %p116 = por %p114, %p115
      %s118 = sadd.s32 %s117, 1
      %p121 = scmp.eq.s32.totalorder %s41, 1
      %p122 = scmp.ne.s32.totalorder %s117, %s119
      %p123 = scmp.eq.s32.totalorder %s41, 0
      %p124 = por %p122, %p123
      %p125 = scmp.ne.s32.totalorder %s117, %s119
      %p126 = scmp.eq.s32.totalorder %s46, 1
      %p127 = por %p125, %p126
      %p128 = scmp.ne.s32.totalorder %s119, %s120
      %p129 = scmp.eq.s32.totalorder %s46, 0
      %p130 = por %p128, %p129
      %p131 = scmp.ne.s32.totalorder %s119, %s120
      %p132 = scmp.eq.s32.totalorder %s47, 1
      %p133 = por %p131, %p132
      %p135 = scmp.ne.s32.totalorder %s120, %s134
      %p136 = scmp.eq.s32.totalorder %s47, 0
      %p137 = por %p135, %p136
      %s139 = sadd.s32 %s138, 1
      %p142 = scmp.eq.s32.totalorder %s41, 1
      %p143 = scmp.ne.s32.totalorder %s138, %s140
      %p144 = scmp.eq.s32.totalorder %s41, 0
      %p145 = por %p143, %p144
      %p146 = scmp.ne.s32.totalorder %s138, %s140
      %p147 = scmp.eq.s32.totalorder %s46, 1
      %p148 = por %p146, %p147
      %p149 = scmp.ne.s32.totalorder %s140, %s141
      %p150 = scmp.eq.s32.totalorder %s46, 0
      %p151 = por %p149, %p150
      %p152 = scmp.ne.s32.totalorder %s140, %s141
      %p153 = scmp.eq.s32.totalorder %s47, 1
      %p154 = por %p152, %p153
      %p156 = scmp.ne.s32.totalorder %s141, %s155
      %p157 = scmp.eq.s32.totalorder %s47, 0
      %p158 = por %p156, %p157
      %s160 = sadd.s32 %s159, 1
      %p163 = scmp.eq.s32.totalorder %s41, 1
      %p164 = scmp.ne.s32.totalorder %s159, %s161
      %p165 = scmp.eq.s32.totalorder %s41, 0
      %p166 = por %p164, %p165
      %p167 = scmp.ne.s32.totalorder %s159, %s161
      %p168 = scmp.eq.s32.totalorder %s46, 1
      %p169 = por %p167, %p168
      %p170 = scmp.ne.s32.totalorder %s161, %s162
      %p171 = scmp.eq.s32.totalorder %s46, 0
      %p172 = por %p170, %p171
      %p173 = scmp.ne.s32.totalorder %s161, %s162
      %p174 = scmp.eq.s32.totalorder %s47, 1
      %p175 = por %p173, %p174
      %p177 = scmp.ne.s32.totalorder %s162, %s176
      %p178 = scmp.eq.s32.totalorder %s47, 0
      %p179 = por %p177, %p178
      %s181 = sadd.s32 %s180, 1
      %p184 = scmp.eq.s32.totalorder %s41, 1
      %p185 = scmp.ne.s32.totalorder %s180, %s182
      %p186 = scmp.eq.s32.totalorder %s41, 0
      %p187 = por %p185, %p186
      %p188 = scmp.ne.s32.totalorder %s180, %s182
      %p189 = scmp.eq.s32.totalorder %s46, 1
      %p190 = por %p188, %p189
      %p191 = scmp.ne.s32.totalorder %s182, %s183
      %p192 = scmp.eq.s32.totalorder %s46, 0
      %p193 = por %p191, %p192
      %p194 = scmp.ne.s32.totalorder %s182, %s183
      %p195 = scmp.eq.s32.totalorder %s47, 1
      %p196 = por %p194, %p195
      %p198 = scmp.ne.s32.totalorder %s183, %s197
      %p199 = scmp.eq.s32.totalorder %s47, 0
      %p200 = por %p198, %p199
      %s202 = sadd.s32 %s201, 1
      %p205 = scmp.eq.s32.totalorder %s41, 1
      %p206 = scmp.ne.s32.totalorder %s201, %s203
      %p207 = scmp.eq.s32.totalorder %s41, 0
      %p208 = por %p206, %p207
      %p209 = scmp.ne.s32.totalorder %s201, %s203
      %p210 = scmp.eq.s32.totalorder %s46, 1
      %p211 = por %p209, %p210
      %p212 = scmp.ne.s32.totalorder %s203, %s204
      %p213 = scmp.eq.s32.totalorder %s46, 0
      %p214 = por %p212, %p213
      %p215 = scmp.ne.s32.totalorder %s203, %s204
      %p216 = scmp.eq.s32.totalorder %s47, 1
      %p217 = por %p215, %p216
      %p219 = scmp.ne.s32.totalorder %s204, %s218
      %p220 = scmp.eq.s32.totalorder %s47, 0
      %p221 = por %p219, %p220
      %s223 = sadd.s32 %s222, 1
      %p226 = scmp.eq.s32.totalorder %s41, 1
      %p227 = scmp.ne.s32.totalorder %s222, %s224
      %p228 = scmp.eq.s32.totalorder %s41, 0
      %p229 = por %p227, %p228
      %p230 = scmp.ne.s32.totalorder %s222, %s224
      %p231 = scmp.eq.s32.totalorder %s46, 1
      %p232 = por %p230, %p231
      %p233 = scmp.ne.s32.totalorder %s224, %s225
      %p234 = scmp.eq.s32.totalorder %s46, 0
      %p235 = por %p233, %p234
      %p236 = scmp.ne.s32.totalorder %s224, %s225
      %p237 = scmp.eq.s32.totalorder %s47, 1
      %p238 = por %p236, %p237
      %p240 = scmp.ne.s32.totalorder %s225, %s239
      %p241 = scmp.eq.s32.totalorder %s47, 0
      %p242 = por %p240, %p241
      %s244 = sadd.s32 %s243, 1
      %p247 = scmp.eq.s32.totalorder %s41, 1
      %p248 = scmp.ne.s32.totalorder %s243, %s245
      %p249 = scmp.eq.s32.totalorder %s41, 0
      %p250 = por %p248, %p249
      %p251 = scmp.ne.s32.totalorder %s243, %s245
      %p252 = scmp.eq.s32.totalorder %s46, 1
      %p253 = por %p251, %p252
      %p254 = scmp.ne.s32.totalorder %s245, %s246
      %p255 = scmp.eq.s32.totalorder %s46, 0
      %p256 = por %p254, %p255
      %p257 = scmp.ne.s32.totalorder %s245, %s246
      %p258 = scmp.eq.s32.totalorder %s47, 1
      %p259 = por %p257, %p258
      %p261 = scmp.ne.s32.totalorder %s246, %s260
      %p262 = scmp.eq.s32.totalorder %s47, 0
      %p263 = por %p261, %p262
      %s265 = sadd.s32 %s264, 1
      %p268 = scmp.eq.s32.totalorder %s41, 1
      %p269 = scmp.ne.s32.totalorder %s264, %s266
      %p270 = scmp.eq.s32.totalorder %s41, 0
      %p271 = por %p269, %p270
      %p272 = scmp.ne.s32.totalorder %s264, %s266
      %p273 = scmp.eq.s32.totalorder %s46, 1
      %p274 = por %p272, %p273
      %p275 = scmp.ne.s32.totalorder %s266, %s267
      %p276 = scmp.eq.s32.totalorder %s46, 0
      %p277 = por %p275, %p276
      %p278 = scmp.ne.s32.totalorder %s266, %s267
      %p279 = scmp.eq.s32.totalorder %s47, 1
      %p280 = por %p278, %p279
      %p282 = scmp.ne.s32.totalorder %s267, %s281
      %p283 = scmp.eq.s32.totalorder %s47, 0
      %p284 = por %p282, %p283
      %s286 = sadd.s32 %s285, 1
      %p289 = scmp.eq.s32.totalorder %s41, 1
      %p290 = scmp.ne.s32.totalorder %s285, %s287
      %p291 = scmp.eq.s32.totalorder %s41, 0
      %p292 = por %p290, %p291
      %p293 = scmp.ne.s32.totalorder %s285, %s287
      %p294 = scmp.eq.s32.totalorder %s46, 1
      %p295 = por %p293, %p294
      %p296 = scmp.ne.s32.totalorder %s287, %s288
      %p297 = scmp.eq.s32.totalorder %s46, 0
      %p298 = por %p296, %p297
      %p299 = scmp.ne.s32.totalorder %s287, %s288
      %p300 = scmp.eq.s32.totalorder %s47, 1
      %p301 = por %p299, %p300
      %p303 = scmp.ne.s32.totalorder %s288, %s302
      %p304 = scmp.eq.s32.totalorder %s47, 0
      %p305 = por %p303, %p304
      %s307 = sadd.s32 %s306, 1
      %p310 = scmp.eq.s32.totalorder %s41, 1
      %p311 = scmp.ne.s32.totalorder %s306, %s308
      %p312 = scmp.eq.s32.totalorder %s41, 0
      %p313 = por %p311, %p312
      %p314 = scmp.ne.s32.totalorder %s306, %s308
      %p315 = scmp.eq.s32.totalorder %s46, 1
      %p316 = por %p314, %p315
      %p317 = scmp.ne.s32.totalorder %s308, %s309
      %p318 = scmp.eq.s32.totalorder %s46, 0
      %p319 = por %p317, %p318
      %p320 = scmp.ne.s32.totalorder %s308, %s309
      %p321 = scmp.eq.s32.totalorder %s47, 1
      %p322 = por %p320, %p321
      %p324 = scmp.ne.s32.totalorder %s309, %s323
      %p325 = scmp.eq.s32.totalorder %s47, 0
      %p326 = por %p324, %p325
      %s328 = sadd.s32 %s327, 1
      %p331 = scmp.eq.s32.totalorder %s41, 1
      %p332 = scmp.ne.s32.totalorder %s327, %s329
      %p333 = scmp.eq.s32.totalorder %s41, 0
      %p334 = por %p332, %p333
      %p335 = scmp.ne.s32.totalorder %s327, %s329
      %p336 = scmp.eq.s32.totalorder %s46, 1
      %p337 = por %p335, %p336
      %p338 = scmp.ne.s32.totalorder %s329, %s330
      %p339 = scmp.eq.s32.totalorder %s46, 0
      %p340 = por %p338, %p339
      %p341 = scmp.ne.s32.totalorder %s329, %s330
      %p342 = scmp.eq.s32.totalorder %s47, 1
      %p343 = por %p341, %p342
      %p345 = scmp.ne.s32.totalorder %s330, %s344
      %p346 = scmp.eq.s32.totalorder %s47, 0
      %p347 = por %p345, %p346
      %s349 = sadd.s32 %s348, 1
      %p352 = scmp.eq.s32.totalorder %s41, 1
      %p353 = scmp.ne.s32.totalorder %s348, %s350
      %p354 = scmp.eq.s32.totalorder %s41, 0
      %p355 = por %p353, %p354
      %p356 = scmp.ne.s32.totalorder %s348, %s350
      %p357 = scmp.eq.s32.totalorder %s46, 1
      %p358 = por %p356, %p357
      %p359 = scmp.ne.s32.totalorder %s350, %s351
      %p360 = scmp.eq.s32.totalorder %s46, 0
      %p361 = por %p359, %p360
      %p362 = scmp.ne.s32.totalorder %s350, %s351
      %p363 = scmp.eq.s32.totalorder %s47, 1
      %p364 = por %p362, %p363
      %p366 = scmp.ne.s32.totalorder %s351, %s365
      %p367 = scmp.eq.s32.totalorder %s47, 0
      %p368 = por %p366, %p367
      %s370 = sadd.s32 %s369, 1
      %p373 = scmp.eq.s32.totalorder %s41, 1
      %p374 = scmp.ne.s32.totalorder %s369, %s371
      %p375 = scmp.eq.s32.totalorder %s41, 0
      %p376 = por %p374, %p375
      %p377 = scmp.ne.s32.totalorder %s369, %s371
      %p378 = scmp.eq.s32.totalorder %s46, 1
      %p379 = por %p377, %p378
      %p380 = scmp.ne.s32.totalorder %s371, %s372
      %p381 = scmp.eq.s32.totalorder %s46, 0
      %p382 = por %p380, %p381
      %p383 = scmp.ne.s32.totalorder %s371, %s372
      %p384 = scmp.eq.s32.totalorder %s47, 1
      %p385 = por %p383, %p384
      %p387 = scmp.ne.s32.totalorder %s372, %s386
      %p388 = scmp.eq.s32.totalorder %s47, 0
      %p389 = por %p387, %p388
      %s391 = sadd.s32 %s390, 1
      %p394 = scmp.eq.s32.totalorder %s41, 1
      %p395 = scmp.ne.s32.totalorder %s390, %s392
      %p396 = scmp.eq.s32.totalorder %s41, 0
      %p397 = por %p395, %p396
      %p398 = scmp.ne.s32.totalorder %s390, %s392
      %p399 = scmp.eq.s32.totalorder %s46, 1
      %p400 = por %p398, %p399
      %p401 = scmp.ne.s32.totalorder %s392, %s393
      %p402 = scmp.eq.s32.totalorder %s46, 0
      %p403 = por %p401, %p402
      %p404 = scmp.ne.s32.totalorder %s392, %s393
      %p405 = scmp.eq.s32.totalorder %s47, 1
      %p406 = por %p404, %p405
      %p408 = scmp.ne.s32.totalorder %s393, %s407
      %p409 = scmp.eq.s32.totalorder %s47, 0
      %p410 = por %p408, %p409
      %s412 = sadd.s32 %s411, 1
      %p415 = scmp.eq.s32.totalorder %s41, 1
      %p416 = scmp.ne.s32.totalorder %s411, %s413
      %p417 = scmp.eq.s32.totalorder %s41, 0
      %p418 = por %p416, %p417
      %p419 = scmp.ne.s32.totalorder %s411, %s413
      %p420 = scmp.eq.s32.totalorder %s46, 1
      %p421 = por %p419, %p420
      %p422 = scmp.ne.s32.totalorder %s413, %s414
      %p423 = scmp.eq.s32.totalorder %s46, 0
      %p424 = por %p422, %p423
      %p425 = scmp.ne.s32.totalorder %s413, %s414
      %p426 = scmp.eq.s32.totalorder %s47, 1
      %p427 = por %p425, %p426
      %p429 = scmp.ne.s32.totalorder %s414, %s428
      %p430 = scmp.eq.s32.totalorder %s47, 0
      %p431 = por %p429, %p430
      %s433 = sadd.s32 %s432, 1
      %p436 = scmp.eq.s32.totalorder %s41, 1
      %p437 = scmp.ne.s32.totalorder %s432, %s434
      %p438 = scmp.eq.s32.totalorder %s41, 0
      %p439 = por %p437, %p438
      %p440 = scmp.ne.s32.totalorder %s432, %s434
      %p441 = scmp.eq.s32.totalorder %s46, 1
      %p442 = por %p440, %p441
      %p443 = scmp.ne.s32.totalorder %s434, %s435
      %p444 = scmp.eq.s32.totalorder %s46, 0
      %p445 = por %p443, %p444
      %p446 = scmp.ne.s32.totalorder %s434, %s435
      %p447 = scmp.eq.s32.totalorder %s47, 1
      %p448 = por %p446, %p447
      %p450 = scmp.ne.s32.totalorder %s435, %s449
      %p451 = scmp.eq.s32.totalorder %s47, 0
      %p452 = por %p450, %p451
      %s454 = sadd.s32 %s453, 1
      %p457 = scmp.eq.s32.totalorder %s41, 1
      %p458 = scmp.ne.s32.totalorder %s453, %s455
      %p459 = scmp.eq.s32.totalorder %s41, 0
      %p460 = por %p458, %p459
      %p461 = scmp.ne.s32.totalorder %s453, %s455
      %p462 = scmp.eq.s32.totalorder %s46, 1
      %p463 = por %p461, %p462
      %p464 = scmp.ne.s32.totalorder %s455, %s456
      %p465 = scmp.eq.s32.totalorder %s46, 0
      %p466 = por %p464, %p465
      %p467 = scmp.ne.s32.totalorder %s455, %s456
      %p468 = scmp.eq.s32.totalorder %s47, 1
      %p469 = por %p467, %p468
      %p471 = scmp.ne.s32.totalorder %s456, %s470
      %p472 = scmp.eq.s32.totalorder %s47, 0
      %p473 = por %p471, %p472
      %s475 = sadd.s32 %s474, 1
      %p478 = scmp.eq.s32.totalorder %s41, 1
      %p479 = scmp.ne.s32.totalorder %s474, %s476
      %p480 = scmp.eq.s32.totalorder %s41, 0
      %p481 = por %p479, %p480
      %p482 = scmp.ne.s32.totalorder %s474, %s476
      %p483 = scmp.eq.s32.totalorder %s46, 1
      %p484 = por %p482, %p483
      %p485 = scmp.ne.s32.totalorder %s476, %s477
      %p486 = scmp.eq.s32.totalorder %s46, 0
      %p487 = por %p485, %p486
      %p488 = scmp.ne.s32.totalorder %s476, %s477
      %p489 = scmp.eq.s32.totalorder %s47, 1
      %p490 = por %p488, %p489
      %p492 = scmp.ne.s32.totalorder %s477, %s491
      %p493 = scmp.eq.s32.totalorder %s47, 0
      %p494 = por %p492, %p493
      %s496 = sadd.s32 %s495, 1
      %p499 = scmp.eq.s32.totalorder %s41, 1
      %p500 = scmp.ne.s32.totalorder %s495, %s497
      %p501 = scmp.eq.s32.totalorder %s41, 0
      %p502 = por %p500, %p501
      %p503 = scmp.ne.s32.totalorder %s495, %s497
      %p504 = scmp.eq.s32.totalorder %s46, 1
      %p505 = por %p503, %p504
      %p506 = scmp.ne.s32.totalorder %s497, %s498
      %p507 = scmp.eq.s32.totalorder %s46, 0
      %p508 = por %p506, %p507
      %p509 = scmp.ne.s32.totalorder %s497, %s498
      %p510 = scmp.eq.s32.totalorder %s47, 1
      %p511 = por %p509, %p510
      %p513 = scmp.ne.s32.totalorder %s498, %s512
      %p514 = scmp.eq.s32.totalorder %s47, 0
      %p515 = por %p513, %p514
      %s517 = sadd.s32 %s516, 1
      %p520 = scmp.eq.s32.totalorder %s41, 1
      %p521 = scmp.ne.s32.totalorder %s516, %s518
      %p522 = scmp.eq.s32.totalorder %s41, 0
      %p523 = por %p521, %p522
      %p524 = scmp.ne.s32.totalorder %s516, %s518
      %p525 = scmp.eq.s32.totalorder %s46, 1
      %p526 = por %p524, %p525
      %p527 = scmp.ne.s32.totalorder %s518, %s519
      %p528 = scmp.eq.s32.totalorder %s46, 0
      %p529 = por %p527, %p528
      %p530 = scmp.ne.s32.totalorder %s518, %s519
      %p531 = scmp.eq.s32.totalorder %s47, 1
      %p532 = por %p530, %p531
      %p534 = scmp.ne.s32.totalorder %s519, %s533
      %p535 = scmp.eq.s32.totalorder %s47, 0
      %p536 = por %p534, %p535
      %s538 = sadd.s32 %s537, 1
      %p541 = scmp.eq.s32.totalorder %s41, 1
      %p542 = scmp.ne.s32.totalorder %s537, %s539
      %p543 = scmp.eq.s32.totalorder %s41, 0
      %p544 = por %p542, %p543
      %p545 = scmp.ne.s32.totalorder %s537, %s539
      %p546 = scmp.eq.s32.totalorder %s46, 1
      %p547 = por %p545, %p546
      %p548 = scmp.ne.s32.totalorder %s539, %s540
      %p549 = scmp.eq.s32.totalorder %s46, 0
      %p550 = por %p548, %p549
      %p551 = scmp.ne.s32.totalorder %s539, %s540
      %p552 = scmp.eq.s32.totalorder %s47, 1
      %p553 = por %p551, %p552
      %p555 = scmp.ne.s32.totalorder %s540, %s554
      %p556 = scmp.eq.s32.totalorder %s47, 0
      %p557 = por %p555, %p556
      %s558 = ssub.s32 %s41, %s48
      %p559 = scmp.eq.s32.totalorder %s558, 0
      %s561 = sadd.s32 %s560, 1
      %s562 = scalar_select %p559, %s560, %s561
      %p565 = pneg %p559
      %p566 = scmp.eq.s32.totalorder %s41, 1
      %p567 = por %p565, %p566
      %p568 = scmp.ne.s32.totalorder %s560, %s563
      %p569 = scmp.eq.s32.totalorder %s41, 0
      %p570 = por %p568, %p569
      %p571 = scmp.ne.s32.totalorder %s560, %s563
      %p572 = scmp.eq.s32.totalorder %s46, 1
      %p573 = por %p571, %p572
      %p574 = scmp.ne.s32.totalorder %s563, %s564
      %p575 = scmp.eq.s32.totalorder %s46, 0
      %p576 = por %p574, %p575
      %p577 = scmp.ne.s32.totalorder %s563, %s564
      %p578 = scmp.eq.s32.totalorder %s47, 1
      %p579 = por %p577, %p578
      %p581 = scmp.ne.s32.totalorder %s564, %s580
      %p582 = scmp.eq.s32.totalorder %s47, 0
      %p583 = por %p581, %p582
      %p584 = scmp.le.s32.totalorder 1, %s41
      %p585 = scmp.lt.s32.totalorder %s41, 3
      %p586 = pnand %p584, %p585
      %p587 = pneg %p586
      // Predicated region
      $region9: #{resnet_forward.1} parent=5 // pred_check
        _
      $region10: #{resnet_forward.1} parent=5 // pred_check_branch
        %589 = sbr.rel (%p586) target = $region12
      $region11: #{resnet_forward.1} parent=5 // pred_region
        %s590 = ssub.s32 %s41, 1
        // Predicated region
        $region13: #{resnet_forward.1} parent=11 // pred_check
          %p591 = pneg %p88
        $region14: #{resnet_forward.1} parent=11 // pred_check_branch
          %593 = sbr.rel (%p591) target = $region16
        $region15: #{resnet_forward.1} parent=11 // pred_region
          _
        $region16: #{resnet_forward.1} parent=11 // pred_fallthru
          _
        // Predicated region
        $region17: #{resnet_forward.1} parent=11 // pred_check
          %p594 = pneg %p109
        $region18: #{resnet_forward.1} parent=11 // pred_check_branch
          %596 = sbr.rel (%p594) target = $region20
        $region19: #{resnet_forward.1} parent=11 // pred_region
          %s598 = ssub.s32 3840, 3840
          %599 = vsyncadd [#allocation3], %s598
          %s600 = sshll.u32 [#allocation2], 4
          %s601 = int_to_ptr.vmem [resolvable:$true] %s600
          %606 = dma.hbm_to_vmem [thread:$0]  %s2, 3840, %s601, [#allocation3], 192, 192, 12
        $region20: #{resnet_forward.1} parent=11 // pred_fallthru
          _
        // Predicated region
        $region21: #{resnet_forward.1} parent=11 // pred_check
          %p607 = pneg %p130
        $region22: #{resnet_forward.1} parent=11 // pred_check_branch
          %609 = sbr.rel (%p607) target = $region24
        $region23: #{resnet_forward.1} parent=11 // pred_region
          %s611 = ssub.s32 48, 48
          %612 = vsyncadd [#allocation6], %s611
          %s614 = sshll.u32 [#allocation5], 4
          %s615 = int_to_ptr.vmem [resolvable:$true] %s614
          %617 = dma.hbm_to_vmem [thread:$0]  %s3, 48, %s615, [#allocation6]
        $region24: #{resnet_forward.1} parent=11 // pred_fallthru
          _
        // Predicated region
        $region25: #{resnet_forward.1} parent=11 // pred_check
          %p618 = pneg %p151
        $region26: #{resnet_forward.1} parent=11 // pred_check_branch
          %620 = sbr.rel (%p618) target = $region28
        $region27: #{resnet_forward.1} parent=11 // pred_region
          _
        $region28: #{resnet_forward.1} parent=11 // pred_fallthru
          _
        // Predicated region
        $region29: #{resnet_forward.1} parent=11 // pred_check
          %p621 = pneg %p172
        $region30: #{resnet_forward.1} parent=11 // pred_check_branch
          %623 = sbr.rel (%p621) target = $region32
        $region31: #{resnet_forward.1} parent=11 // pred_region
          _
        $region32: #{resnet_forward.1} parent=11 // pred_fallthru
          _
        // Predicated region
        $region33: #{resnet_forward.1} parent=11 // pred_check
          %p624 = pneg %p193
        $region34: #{resnet_forward.1} parent=11 // pred_check_branch
          %626 = sbr.rel (%p624) target = $region36
        $region35: #{resnet_forward.1} parent=11 // pred_region
          %s628 = ssub.s32 384, 384
          %629 = vsyncadd [#allocation6], %s628
          %s630 = sshll.u32 [#allocation7], 4
          %s631 = int_to_ptr.vmem [resolvable:$true] %s630
          %636 = dma.hbm_to_vmem [thread:$0]  %s6, 384, %s631, [#allocation6], 64, 64, 4
        $region36: #{resnet_forward.1} parent=11 // pred_fallthru
          _
        // Predicated region
        $region37: #{resnet_forward.1} parent=11 // pred_check
          %p637 = pneg %p214
        $region38: #{resnet_forward.1} parent=11 // pred_check_branch
          %639 = sbr.rel (%p637) target = $region40
        $region39: #{resnet_forward.1} parent=11 // pred_region
          %s641 = ssub.s32 9216, 9216
          %642 = vsyncadd [#allocation9], %s641
          %s643 = sshll.u32 [#allocation8], 4
          %s644 = int_to_ptr.vmem [resolvable:$true] %s643
          %649 = dma.hbm_to_vmem [thread:$0]  %s7, 9216, %s644, [#allocation9], 128, 128, 8
        $region40: #{resnet_forward.1} parent=11 // pred_fallthru
          _
        // Predicated region
        $region41: #{resnet_forward.1} parent=11 // pred_check
          %p650 = pneg %p235
        $region42: #{resnet_forward.1} parent=11 // pred_check_branch
          %652 = sbr.rel (%p650) target = $region44
        $region43: #{resnet_forward.1} parent=11 // pred_region
          _
        $region44: #{resnet_forward.1} parent=11 // pred_fallthru
          _
        // Predicated region
        $region45: #{resnet_forward.1} parent=11 // pred_check
          %p653 = pneg %p256
        $region46: #{resnet_forward.1} parent=11 // pred_check_branch
          %655 = sbr.rel (%p653) target = $region48
        $region47: #{resnet_forward.1} parent=11 // pred_region
          %s657 = ssub.s32 9216, 9216
          %658 = vsyncadd [#allocation9], %s657
          %s659 = sshll.u32 [#allocation10], 4
          %s660 = int_to_ptr.vmem [resolvable:$true] %s659
          %665 = dma.hbm_to_vmem [thread:$0]  %s9, 9216, %s660, [#allocation9], 128, 128, 8
        $region48: #{resnet_forward.1} parent=11 // pred_fallthru
          _
        // Predicated region
        $region49: #{resnet_forward.1} parent=11 // pred_check
          %p666 = pneg %p277
        $region50: #{resnet_forward.1} parent=11 // pred_check_branch
          %668 = sbr.rel (%p666) target = $region52
        $region51: #{resnet_forward.1} parent=11 // pred_region
          %s670 = ssub.s32 32, 32
          %671 = vsyncadd [#allocation12], %s670
          %s673 = sshll.u32 [#allocation11], 4
          %s674 = int_to_ptr.vmem [resolvable:$true] %s673
          %676 = dma.hbm_to_vmem [thread:$0]  %s10, 32, %s674, [#allocation12]
        $region52: #{resnet_forward.1} parent=11 // pred_fallthru
          _
        // Predicated region
        $region53: #{resnet_forward.1} parent=11 // pred_check
          %p677 = pneg %p298
        $region54: #{resnet_forward.1} parent=11 // pred_check_branch
          %679 = sbr.rel (%p677) target = $region56
        $region55: #{resnet_forward.1} parent=11 // pred_region
          %s681 = ssub.s32 320, 320
          %682 = vsyncadd [#allocation12], %s681
          %s683 = sshll.u32 [#allocation13], 4
          %s684 = int_to_ptr.vmem [resolvable:$true] %s683
          %689 = dma.hbm_to_vmem [thread:$0]  %s11, 320, %s684, [#allocation12], 64, 64, 4
        $region56: #{resnet_forward.1} parent=11 // pred_fallthru
          _
        // Predicated region
        $region57: #{resnet_forward.1} parent=11 // pred_check
          %p690 = pneg %p319
        $region58: #{resnet_forward.1} parent=11 // pred_check_branch
          %692 = sbr.rel (%p690) target = $region60
        $region59: #{resnet_forward.1} parent=11 // pred_region
          _
        $region60: #{resnet_forward.1} parent=11 // pred_fallthru
          _
        // Predicated region
        $region61: #{resnet_forward.1} parent=11 // pred_check
          %p693 = pneg %p340
        $region62: #{resnet_forward.1} parent=11 // pred_check_branch
          %695 = sbr.rel (%p693) target = $region64
        $region63: #{resnet_forward.1} parent=11 // pred_region
          %s697 = ssub.s32 32, 32
          %698 = vsyncadd [#allocation15], %s697
          %s700 = sshll.u32 [#allocation14], 4
          %s701 = int_to_ptr.vmem [resolvable:$true] %s700
          %703 = dma.hbm_to_vmem [thread:$0]  %s13, 32, %s701, [#allocation15]
        $region64: #{resnet_forward.1} parent=11 // pred_fallthru
          _
        // Predicated region
        $region65: #{resnet_forward.1} parent=11 // pred_check
          %p704 = pneg %p361
        $region66: #{resnet_forward.1} parent=11 // pred_check_branch
          %706 = sbr.rel (%p704) target = $region68
        $region67: #{resnet_forward.1} parent=11 // pred_region
          %s708 = ssub.s32 64, 64
          %709 = vsyncadd [#allocation15], %s708
          %s710 = sshll.u32 [#allocation16], 4
          %s711 = int_to_ptr.vmem [resolvable:$true] %s710
          %716 = dma.hbm_to_vmem [thread:$0]  %s14, 64, %s711, [#allocation15], 32, 32, 2
        $region68: #{resnet_forward.1} parent=11 // pred_fallthru
          _
        // Predicated region
        $region69: #{resnet_forward.1} parent=11 // pred_check
          %p717 = pneg %p382
        $region70: #{resnet_forward.1} parent=11 // pred_check_branch
          %719 = sbr.rel (%p717) target = $region72
        $region71: #{resnet_forward.1} parent=11 // pred_region
          _
        $region72: #{resnet_forward.1} parent=11 // pred_fallthru
          _
        // Predicated region
        $region73: #{resnet_forward.1} parent=11 // pred_check
          %p720 = pneg %p403
        $region74: #{resnet_forward.1} parent=11 // pred_check_branch
          %722 = sbr.rel (%p720) target = $region76
        $region75: #{resnet_forward.1} parent=11 // pred_region
          %s724 = ssub.s32 96, 96
          %725 = vsyncadd [#allocation18], %s724
          %s726 = sshll.u32 [#allocation17], 4
          %s727 = int_to_ptr.vmem [resolvable:$true] %s726
          %732 = dma.hbm_to_vmem [thread:$0]  %s16, 96, %s727, [#allocation18], 32, 32, 2
        $region76: #{resnet_forward.1} parent=11 // pred_fallthru
          _
        // Predicated region
        $region77: #{resnet_forward.1} parent=11 // pred_check
          %p733 = pneg %p424
        $region78: #{resnet_forward.1} parent=11 // pred_check_branch
          %735 = sbr.rel (%p733) target = $region80
        $region79: #{resnet_forward.1} parent=11 // pred_region
          %s737 = ssub.s32 3072, 3072
          %738 = vsyncadd [#allocation18], %s737
          %s739 = sshll.u32 [#allocation19], 4
          %s740 = int_to_ptr.vmem [resolvable:$true] %s739
          %745 = dma.hbm_to_vmem [thread:$0]  %s17, 3072, %s740, [#allocation18], 64, 64, 4
        $region80: #{resnet_forward.1} parent=11 // pred_fallthru
          _
        // Predicated region
        $region81: #{resnet_forward.1} parent=11 // pred_check
          %p746 = pneg %p445
        $region82: #{resnet_forward.1} parent=11 // pred_check_branch
          %748 = sbr.rel (%p746) target = $region84
        $region83: #{resnet_forward.1} parent=11 // pred_region
          %s750 = ssub.s32 16, 16
          %751 = vsyncadd [#allocation21], %s750
          %s753 = sshll.u32 [#allocation20], 4
          %s754 = int_to_ptr.vmem [resolvable:$true] %s753
          %756 = dma.hbm_to_vmem [thread:$0]  %s18, 16, %s754, [#allocation21]
        $region84: #{resnet_forward.1} parent=11 // pred_fallthru
          _
        // Predicated region
        $region85: #{resnet_forward.1} parent=11 // pred_check
          %p757 = pneg %p466
        $region86: #{resnet_forward.1} parent=11 // pred_check_branch
          %759 = sbr.rel (%p757) target = $region88
        $region87: #{resnet_forward.1} parent=11 // pred_region
          %s761 = ssub.s32 3072, 3072
          %762 = vsyncadd [#allocation21], %s761
          %s763 = sshll.u32 [#allocation22], 4
          %s764 = int_to_ptr.vmem [resolvable:$true] %s763
          %769 = dma.hbm_to_vmem [thread:$0]  %s19, 3072, %s764, [#allocation21], 64, 64, 4
        $region88: #{resnet_forward.1} parent=11 // pred_fallthru
          _
        // Predicated region
        $region89: #{resnet_forward.1} parent=11 // pred_check
          %p770 = pneg %p487
        $region90: #{resnet_forward.1} parent=11 // pred_check_branch
          %772 = sbr.rel (%p770) target = $region92
        $region91: #{resnet_forward.1} parent=11 // pred_region
          %s774 = ssub.s32 16, 16
          %775 = vsyncadd [#allocation24], %s774
          %s777 = sshll.u32 [#allocation23], 4
          %s778 = int_to_ptr.vmem [resolvable:$true] %s777
          %780 = dma.hbm_to_vmem [thread:$0]  %s20, 16, %s778, [#allocation24]
        $region92: #{resnet_forward.1} parent=11 // pred_fallthru
          _
        // Predicated region
        $region93: #{resnet_forward.1} parent=11 // pred_check
          %p781 = pneg %p508
        $region94: #{resnet_forward.1} parent=11 // pred_check_branch
          %783 = sbr.rel (%p781) target = $region96
        $region95: #{resnet_forward.1} parent=11 // pred_region
          _
        $region96: #{resnet_forward.1} parent=11 // pred_fallthru
          _
        // Predicated region
        $region97: #{resnet_forward.1} parent=11 // pred_check
          %p784 = pneg %p529
        $region98: #{resnet_forward.1} parent=11 // pred_check_branch
          %786 = sbr.rel (%p784) target = $region100
        $region99: #{resnet_forward.1} parent=11 // pred_region
          _
        $region100: #{resnet_forward.1} parent=11 // pred_fallthru
          _
        // Predicated region
        $region101: #{resnet_forward.1} parent=11 // pred_check
          %p787 = pneg %p550
        $region102: #{resnet_forward.1} parent=11 // pred_check_branch
          %789 = sbr.rel (%p787) target = $region104
        $region103: #{resnet_forward.1} parent=11 // pred_region
          %s791 = ssub.s32 16, 16
          %792 = vsyncadd [#allocation24], %s791
          %s794 = sshll.u32 [#allocation25], 4
          %s795 = int_to_ptr.vmem [resolvable:$true] %s794
          %797 = dma.hbm_to_vmem [thread:$0]  %s23, 16, %s795, [#allocation24]
        $region104: #{resnet_forward.1} parent=11 // pred_fallthru
          _
      $region12: #{resnet_forward.1} parent=5 // pred_fallthru
        _
      %p798 = scmp.lt.s32.totalorder %s41, 2
      // Predicated region
      $region105: #{resnet_forward.1} parent=5 // pred_check
        %p799 = pneg %p798
      $region106: #{resnet_forward.1} parent=5 // pred_check_branch
        %801 = sbr.rel (%p799) target = $region108
      $region107: #{resnet_forward.1} parent=5 // pred_region
        // Predicated region
        $region109: #{resnet_forward.1} parent=107 // pred_check
          %p802 = pneg %p61
        $region110: #{resnet_forward.1} parent=107 // pred_check_branch
          %804 = sbr.rel (%p802) target = $region112
        $region111: #{resnet_forward.1} parent=107 // pred_region
          %p805 = scmp.lt.s32.totalorder %s41, 1
          %s806 = scalar_select %p805, %s41, 1
          %s807 = smul.addr %s806, 4
          %s808 = smul.addr %s807, 4
          %s809 = scalar_lea.vmem %s0, %s808
        $region112: #{resnet_forward.1} parent=107 // pred_fallthru
          _
      $region108: #{resnet_forward.1} parent=5 // pred_fallthru
        _
      %p810 = scmp.le.s32.totalorder 1, %s41
      %p811 = scmp.lt.s32.totalorder %s41, 3
      %p812 = pnand %p810, %p811
      %p813 = pneg %p812
      // Predicated region
      $region113: #{resnet_forward.1} parent=5 // pred_check
        _
      $region114: #{resnet_forward.1} parent=5 // pred_check_branch
        %815 = sbr.rel (%p812) target = $region116
      $region115: #{resnet_forward.1} parent=5 // pred_region
        %s816 = ssub.s32 %s41, 1
        // Predicated region
        $region117: #{resnet_forward.1} parent=115 // pred_check
          %p817 = pneg %p109
        $region118: #{resnet_forward.1} parent=115 // pred_check_branch
          %819 = sbr.rel (%p817) target = $region120
        $region119: #{resnet_forward.1} parent=115 // pred_region
          %820 = dma.done [#allocation3], 3840
        $region120: #{resnet_forward.1} parent=115 // pred_fallthru
          _
        // Predicated region
        $region121: #{resnet_forward.1} parent=115 // pred_check
          %p821 = pneg %p130
        $region122: #{resnet_forward.1} parent=115 // pred_check_branch
          %823 = sbr.rel (%p821) target = $region124
        $region123: #{resnet_forward.1} parent=115 // pred_region
          %824 = dma.done [#allocation6], 48
        $region124: #{resnet_forward.1} parent=115 // pred_fallthru
          _
        // Predicated region
        $region125: #{resnet_forward.1} parent=115 // pred_check
          %p825 = pneg %p193
        $region126: #{resnet_forward.1} parent=115 // pred_check_branch
          %827 = sbr.rel (%p825) target = $region128
        $region127: #{resnet_forward.1} parent=115 // pred_region
          %828 = dma.done [#allocation6], 384
        $region128: #{resnet_forward.1} parent=115 // pred_fallthru
          _
        // Predicated region
        $region129: #{resnet_forward.1} parent=115 // pred_check
          %p829 = pneg %p214
        $region130: #{resnet_forward.1} parent=115 // pred_check_branch
          %831 = sbr.rel (%p829) target = $region132
        $region131: #{resnet_forward.1} parent=115 // pred_region
          %832 = dma.done [#allocation9], 9216
        $region132: #{resnet_forward.1} parent=115 // pred_fallthru
          _
        // Predicated region
        $region133: #{resnet_forward.1} parent=115 // pred_check
          %p833 = pneg %p256
        $region134: #{resnet_forward.1} parent=115 // pred_check_branch
          %835 = sbr.rel (%p833) target = $region136
        $region135: #{resnet_forward.1} parent=115 // pred_region
          %836 = dma.done [#allocation9], 9216
        $region136: #{resnet_forward.1} parent=115 // pred_fallthru
          _
        // Predicated region
        $region137: #{resnet_forward.1} parent=115 // pred_check
          %p837 = pneg %p277
        $region138: #{resnet_forward.1} parent=115 // pred_check_branch
          %839 = sbr.rel (%p837) target = $region140
        $region139: #{resnet_forward.1} parent=115 // pred_region
          %840 = dma.done [#allocation12], 32
        $region140: #{resnet_forward.1} parent=115 // pred_fallthru
          _
        // Predicated region
        $region141: #{resnet_forward.1} parent=115 // pred_check
          %p841 = pneg %p298
        $region142: #{resnet_forward.1} parent=115 // pred_check_branch
          %843 = sbr.rel (%p841) target = $region144
        $region143: #{resnet_forward.1} parent=115 // pred_region
          %844 = dma.done [#allocation12], 320
        $region144: #{resnet_forward.1} parent=115 // pred_fallthru
          _
        // Predicated region
        $region145: #{resnet_forward.1} parent=115 // pred_check
          %p845 = pneg %p340
        $region146: #{resnet_forward.1} parent=115 // pred_check_branch
          %847 = sbr.rel (%p845) target = $region148
        $region147: #{resnet_forward.1} parent=115 // pred_region
          %848 = dma.done [#allocation15], 32
        $region148: #{resnet_forward.1} parent=115 // pred_fallthru
          _
        // Predicated region
        $region149: #{resnet_forward.1} parent=115 // pred_check
          %p849 = pneg %p361
        $region150: #{resnet_forward.1} parent=115 // pred_check_branch
          %851 = sbr.rel (%p849) target = $region152
        $region151: #{resnet_forward.1} parent=115 // pred_region
          %852 = dma.done [#allocation15], 64
        $region152: #{resnet_forward.1} parent=115 // pred_fallthru
          _
        // Predicated region
        $region153: #{resnet_forward.1} parent=115 // pred_check
          %p853 = pneg %p403
        $region154: #{resnet_forward.1} parent=115 // pred_check_branch
          %855 = sbr.rel (%p853) target = $region156
        $region155: #{resnet_forward.1} parent=115 // pred_region
          %856 = dma.done [#allocation18], 96
        $region156: #{resnet_forward.1} parent=115 // pred_fallthru
          _
        // Predicated region
        $region157: #{resnet_forward.1} parent=115 // pred_check
          %p857 = pneg %p424
        $region158: #{resnet_forward.1} parent=115 // pred_check_branch
          %859 = sbr.rel (%p857) target = $region160
        $region159: #{resnet_forward.1} parent=115 // pred_region
          %860 = dma.done [#allocation18], 3072
        $region160: #{resnet_forward.1} parent=115 // pred_fallthru
          _
        // Predicated region
        $region161: #{resnet_forward.1} parent=115 // pred_check
          %p861 = pneg %p445
        $region162: #{resnet_forward.1} parent=115 // pred_check_branch
          %863 = sbr.rel (%p861) target = $region164
        $region163: #{resnet_forward.1} parent=115 // pred_region
          %864 = dma.done [#allocation21], 16
        $region164: #{resnet_forward.1} parent=115 // pred_fallthru
          _
        // Predicated region
        $region165: #{resnet_forward.1} parent=115 // pred_check
          %p865 = pneg %p466
        $region166: #{resnet_forward.1} parent=115 // pred_check_branch
          %867 = sbr.rel (%p865) target = $region168
        $region167: #{resnet_forward.1} parent=115 // pred_region
          %868 = dma.done [#allocation21], 3072
        $region168: #{resnet_forward.1} parent=115 // pred_fallthru
          _
        // Predicated region
        $region169: #{resnet_forward.1} parent=115 // pred_check
          %p869 = pneg %p487
        $region170: #{resnet_forward.1} parent=115 // pred_check_branch
          %871 = sbr.rel (%p869) target = $region172
        $region171: #{resnet_forward.1} parent=115 // pred_region
          %872 = dma.done [#allocation24], 16
        $region172: #{resnet_forward.1} parent=115 // pred_fallthru
          _
        // Predicated region
        $region173: #{resnet_forward.1} parent=115 // pred_check
          %p873 = pneg %p550
        $region174: #{resnet_forward.1} parent=115 // pred_check_branch
          %875 = sbr.rel (%p873) target = $region176
        $region175: #{resnet_forward.1} parent=115 // pred_region
          %876 = dma.done [#allocation24], 16
        $region176: #{resnet_forward.1} parent=115 // pred_fallthru
          _
        %p877 = scmp.lt.s32.totalorder %s46, 1
        %s878 = scalar_select %p877, %s46, 1
        %s879 = smul.addr %s878, 4
        %s880 = smul.addr %s879, 4
        %s881 = scalar_lea.vmem %s0, %s880
        %p882 = pneg %p67
        %p883 = pneg %p64
        %p884 = pneg %p88
        %p885 = pneg %p85
        %p886 = pneg %p109
        %p887 = pneg %p106
        %p888 = pneg %p130
        %p889 = pneg %p127
        %p890 = pneg %p151
        %p891 = pneg %p148
        %p892 = pneg %p172
        %p893 = pneg %p169
        %p894 = pneg %p193
        %p895 = pneg %p190
        %p896 = pneg %p214
        %p897 = pneg %p211
        %p898 = pneg %p235
        %p899 = pneg %p232
        %p900 = pneg %p256
        %p901 = pneg %p253
        %p902 = pneg %p277
        %p903 = pneg %p274
        %p904 = pneg %p298
        %p905 = pneg %p295
        %p906 = pneg %p319
        %p907 = pneg %p316
        %p908 = pneg %p340
        %p909 = pneg %p337
        %p910 = pneg %p361
        %p911 = pneg %p358
        %p912 = pneg %p382
        %p913 = pneg %p379
        %p914 = pneg %p403
        %p915 = pneg %p400
        %p916 = pneg %p424
        %p917 = pneg %p421
        %p918 = pneg %p445
        %p919 = pneg %p442
        %p920 = pneg %p466
        %p921 = pneg %p463
        %p922 = pneg %p487
        %p923 = pneg %p484
        %p924 = pneg %p508
        %p925 = pneg %p505
        %p926 = pneg %p529
        %p927 = pneg %p526
        %p928 = pneg %p550
        %p929 = pneg %p547
        %p930 = pneg %p576
        %p931 = pneg %p573
        %s932 = sand.u32 %s563, 1
        %s933 = scalar_lea.sflag [#allocation4], %s932
        %s934 = sand.u32 %s563, 1
        %s935 = scalar_lea.vmem [#allocation26], %s934
        %p936 = scmp.lt.s32.totalorder %s46, 1
        %s937 = scalar_select %p936, %s46, 1
        %s938 = smul.addr %s937, 4
        %s939 = smul.addr %s938, 4
        %s940 = scalar_lea.vmem %s0, %s939
        %v942 = vld [vmem:[%s940] sm:$0xf]
        %v943 = vld [vmem:[%s940 + $0x4] sm:$0xf]
        %v944 = vld [vmem:[%s940 + $0x8] sm:$0xf]
        %v945 = vld [vmem:[%s940 + $0xc] sm:$0x3]
        %v946 = vld [vmem:[%s1] sm:$0xf]
        %v947 = vld [vmem:[%s1 + $0x4] sm:$0xf]
        %v948 = vld [vmem:[%s1 + $0x8] sm:$0xf]
        %v952 = vunpack.c.l.b16 %v946
        %v953 = vunpack.c.l.b16 %v947
        %v954 = vunpack.c.l.b16 %v948
        %v955 = vpack.c.b16 %v953, %v952
        %v956 = vpack.c.b16 %v954, %v954
        %v961 = vunpack.c.l.b16 %v942
        %v962 = vunpack.c.l.b16 %v943
        %v963 = vunpack.c.l.b16 %v944
        %v964 = vunpack.c.l.b16 %v945
        %v965 = vpack.c.b16 %v962, %v961
        %v966 = vpack.c.b16 %v964, %v963
        %vm968 = vcmask 228352
        %v970 = vsel %vm968, %v955, 0
        %v973 = vsel %vm968, %v956, 0
        %vm975 = vcmask 1045504
        %v977 = vsel %vm975, %v966, 0
        %979 = vmatprep.subr.bf16.mxu0 0
        %980 = vmatpush1.bf16.msra.mxu0 %v965
        %981 = vmatprep.subr.bf16.mxu0 0
        %982 = vmatpush1.bf16.msra.mxu0 %v977
        %983 = vmatprep.subr.bf16.mxu0 0
        %984 = vmatpush1.bf16.msra.mxu0 0
        %985 = vmatprep.subr.bf16.mxu0 0
        %986 = vmatpush1.bf16.msra.mxu0 0
        %987 = vmatprep.subr.bf16.mxu0 0
        %988 = vmatpush1.bf16.msra.mxu0 0
        %989 = vmatprep.subr.bf16.mxu0 0
        %990 = vmatpush1.bf16.msra.mxu0 0
        %991 = vmatprep.subr.bf16.mxu0 0
        %992 = vmatpush1.bf16.msra.mxu0 0
        %993 = vmatprep.subr.bf16.mxu0 0
        %994 = vmatpush1.bf16.msra.mxu0 0
        %995 = vmatprep.subr.bf16.mxu0 0
        %996 = vmatpush1.bf16.msra.mxu0 0
        %997 = vmatprep.subr.bf16.mxu0 0
        %998 = vmatpush1.bf16.msra.mxu0 0
        %999 = vmatprep.subr.bf16.mxu0 0
        %1000 = vmatpush1.bf16.msra.mxu0 0
        %1001 = vmatprep.subr.bf16.mxu0 0
        %1002 = vmatpush1.bf16.msra.mxu0 0
        %1003 = vmatprep.subr.bf16.mxu0 0
        %1004 = vmatpush1.bf16.msra.mxu0 0
        %1005 = vmatprep.subr.bf16.mxu0 0
        %1006 = vmatpush1.bf16.msra.mxu0 0
        %1007 = vmatprep.subr.bf16.mxu0 0
        %1008 = vmatpush1.bf16.msra.mxu0 0
        %1009 = vmatprep.subr.bf16.mxu0 0
        %1010 = vmatpush1.bf16.msra.mxu0 0
        %1011 = vmatprep.mubr.bf16.mxu0 0
        %1012 = vmatmul.mubr.bf16.gmra.mrb[0].mxu0 %v970
        %v1013 = vpop.f32.mrb[0].mxu0
        %v1014 = vadd.f32 0.0, %v1013
        %v1015 = vpop.f32.mrb[0].mxu0
        %v1016 = vpop.f32.mrb[0].mxu0
        %v1017 = vadd.f32 0.0, %v1016
        %v1018 = vpop.f32.mrb[0].mxu0
        %1019 = vmatprep.mubr.bf16.mxu0 0
        %1020 = vmatmul.mubr.bf16.gmra.mrb[0].mxu0 %v973
        %v1021 = vpop.f32.mrb[0].mxu0
        %v1022 = vadd.f32 0.0, %v1021
        %v1023 = vpop.f32.mrb[0].mxu0
        %v1024 = vpop.f32.mrb[0].mxu0
        %v1025 = vpop.f32.mrb[0].mxu0
        %1026 = vdwg.mxu0
        %v1027 = vpack.c.bf16 %v1017, %v1014
        %v1028 = vpack.c.bf16 %v1022, %v1022
        %v1029 = vld [vmem:[#allocation2] sm:$0xff]
        %v1030 = vld [vmem:[#allocation2 + $0x8] sm:$0xf]
        %v1031 = vld [vmem:[#allocation2 + $0xc] sm:$0xff]
        %v1032 = vld [vmem:[#allocation2 + $0x14] sm:$0xf]
        %v1033 = vld [vmem:[#allocation2 + $0x18] sm:$0xff]
        %v1034 = vld [vmem:[#allocation2 + $0x20] sm:$0xf]
        %v1035 = vld [vmem:[#allocation2 + $0x24] sm:$0x33]
        %v1036 = vld [vmem:[#allocation2 + $0x2c] sm:$0x3]
        %s1037 = scalar_lea.vmem %s1, 12
        %v1038 = vld [vmem:[%s1037] sm:$0xf]
        %v1039 = vld [vmem:[%s1037 + $0x4] sm:$0xf]
        %v1040 = vld [vmem:[%s1037 + $0x8] sm:$0xf]
        %v1044 = vunpack.c.l.b16 %v1038
        %v1045 = vunpack.c.l.b16 %v1039
        %v1046 = vunpack.c.l.b16 %v1040
        %v1047 = vpack.c.b16 %v1045, %v1044
        %v1048 = vpack.c.b16 %v1046, %v1046
        %v1050 = vsel %vm968, %v1047, 0
        %v1053 = vsel %vm968, %v1048, 0
        %1055 = vmatprep.subr.bf16.mxu0 0
        %1056 = vmatpush1.bf16.msra.mxu0 %v965
        %1057 = vmatprep.subr.bf16.mxu0 0
        %1058 = vmatpush1.bf16.msra.mxu0 %v977
        %1059 = vmatprep.subr.bf16.mxu0 0
        %1060 = vmatpush1.bf16.msra.mxu0 0
        %1061 = vmatprep.subr.bf16.mxu0 0
        %1062 = vmatpush1.bf16.msra.mxu0 0
        %1063 = vmatprep.subr.bf16.mxu0 0
        %1064 = vmatpush1.bf16.msra.mxu0 0
        %1065 = vmatprep.subr.bf16.mxu0 0
        %1066 = vmatpush1.bf16.msra.mxu0 0
        %1067 = vmatprep.subr.bf16.mxu0 0
        %1068 = vmatpush1.bf16.msra.mxu0 0
        %1069 = vmatprep.subr.bf16.mxu0 0
        %1070 = vmatpush1.bf16.msra.mxu0 0
        %1071 = vmatprep.subr.bf16.mxu0 0
        %1072 = vmatpush1.bf16.msra.mxu0 0
        %1073 = vmatprep.subr.bf16.mxu0 0
        %1074 = vmatpush1.bf16.msra.mxu0 0
        %1075 = vmatprep.subr.bf16.mxu0 0
        %1076 = vmatpush1.bf16.msra.mxu0 0
        %1077 = vmatprep.subr.bf16.mxu0 0
        %1078 = vmatpush1.bf16.msra.mxu0 0
        %1079 = vmatprep.subr.bf16.mxu0 0
        %1080 = vmatpush1.bf16.msra.mxu0 0
        %1081 = vmatprep.subr.bf16.mxu0 0
        %1082 = vmatpush1.bf16.msra.mxu0 0
        %1083 = vmatprep.subr.bf16.mxu0 0
        %1084 = vmatpush1.bf16.msra.mxu0 0
        %1085 = vmatprep.subr.bf16.mxu0 0
        %1086 = vmatpush1.bf16.msra.mxu0 0
        %1087 = vmatprep.mubr.bf16.mxu0 0
        %1088 = vmatmul.mubr.bf16.gmra.mrb[0].mxu0 %v1050
        %v1089 = vpop.f32.mrb[0].mxu0
        %v1090 = vadd.f32 0.0, %v1089
        %v1091 = vpop.f32.mrb[0].mxu0
        %v1092 = vpop.f32.mrb[0].mxu0
        %v1093 = vadd.f32 0.0, %v1092
        %v1094 = vpop.f32.mrb[0].mxu0
        %1095 = vmatprep.mubr.bf16.mxu0 0
        %1096 = vmatmul.mubr.bf16.gmra.mrb[0].mxu0 %v1053
        %v1097 = vpop.f32.mrb[0].mxu0
        %v1098 = vadd.f32 0.0, %v1097
        %v1099 = vpop.f32.mrb[0].mxu0
        %v1100 = vpop.f32.mrb[0].mxu0
        %v1101 = vpop.f32.mrb[0].mxu0
        %1102 = vdwg.mxu0
        %v1103 = vpack.c.bf16 %v1093, %v1090
        %v1104 = vpack.c.bf16 %v1098, %v1098
        %s1105 = scalar_lea.vmem [#allocation2], 48
        %v1106 = vld [vmem:[%s1105] sm:$0xff]
        %v1107 = vld [vmem:[%s1105 + $0x8] sm:$0xf]
        %v1108 = vld [vmem:[%s1105 + $0xc] sm:$0xff]
        %v1109 = vld [vmem:[%s1105 + $0x14] sm:$0xf]
        %v1110 = vld [vmem:[%s1105 + $0x18] sm:$0xff]
        %v1111 = vld [vmem:[%s1105 + $0x20] sm:$0xf]
        %v1112 = vld [vmem:[%s1105 + $0x24] sm:$0x33]
        %v1113 = vld [vmem:[%s1105 + $0x2c] sm:$0x3]
        %v1122 = vunpack.c.l.b16 %v1106
        %v1123 = vunpack.c.h.b16 %v1106
        %v1124 = vunpack.c.l.b16 %v1107
        %v1125 = vunpack.c.l.b16 %v1108
        %v1126 = vunpack.c.h.b16 %v1108
        %v1127 = vunpack.c.l.b16 %v1109
        %v1128 = vunpack.c.l.b16 %v1110
        %v1129 = vunpack.c.h.b16 %v1110
        %v1130 = vunpack.c.l.b16 %v1111
        %v1131 = vunpack.c.l.b16 %v1112
        %v1132 = vunpack.c.h.b16 %v1112
        %v1133 = vunpack.c.l.b16 %v1113
        %v1134 = vpack.c.b16 %v1125, %v1122
        %v1135 = vpack.c.b16 %v1126, %v1123
        %v1136 = vpack.c.b16 %v1127, %v1124
        %v1137 = vpack.c.b16 %v1131, %v1128
        %v1138 = vpack.c.b16 %v1132, %v1129
        %v1139 = vpack.c.b16 %v1133, %v1130
        %v1144 = vsel %vm968, %v1103, 0
        %v1147 = vsel %vm968, %v1104, 0
        %v1150 = vsel %vm975, %v1137, 0
        %v1153 = vsel %vm975, %v1138, 0
        %v1156 = vsel %vm975, %v1139, 0
        %1158 = vmatprep.subr.bf16.mxu0 %v1135
        %1159 = vmatpush1.bf16.msra.mxu0 %v1134
        %1160 = vmatprep.subr.bf16.mxu0 %v1153
        %1161 = vmatpush1.bf16.msra.mxu0 %v1150
        %1162 = vmatprep.subr.bf16.mxu0 0
        %1163 = vmatpush1.bf16.msra.mxu0 0
        %1164 = vmatprep.subr.bf16.mxu0 0
        %1165 = vmatpush1.bf16.msra.mxu0 0
        %1166 = vmatprep.subr.bf16.mxu0 0
        %1167 = vmatpush1.bf16.msra.mxu0 0
        %1168 = vmatprep.subr.bf16.mxu0 0
        %1169 = vmatpush1.bf16.msra.mxu0 0
        %1170 = vmatprep.subr.bf16.mxu0 0
        %1171 = vmatpush1.bf16.msra.mxu0 0
        %1172 = vmatprep.subr.bf16.mxu0 0
        %1173 = vmatpush1.bf16.msra.mxu0 0
        %1174 = vmatprep.subr.bf16.mxu0 0
        %1175 = vmatpush1.bf16.msra.mxu0 0
        %1176 = vmatprep.subr.bf16.mxu0 0
        %1177 = vmatpush1.bf16.msra.mxu0 0
        %1178 = vmatprep.subr.bf16.mxu0 0
        %1179 = vmatpush1.bf16.msra.mxu0 0
        %1180 = vmatprep.subr.bf16.mxu0 0
        %1181 = vmatpush1.bf16.msra.mxu0 0
        %1182 = vmatprep.subr.bf16.mxu0 0
        %1183 = vmatpush1.bf16.msra.mxu0 0
        %1184 = vmatprep.subr.bf16.mxu0 0
        %1185 = vmatpush1.bf16.msra.mxu0 0
        %1186 = vmatprep.subr.bf16.mxu0 0
        %1187 = vmatpush1.bf16.msra.mxu0 0
        %1188 = vmatprep.subr.bf16.mxu0 0
        %1189 = vmatpush1.bf16.msra.mxu0 0
        %1190 = vmatprep.mubr.bf16.mxu0 0
        %1191 = vmatmul.mubr.bf16.gmra.mrb[0].mxu0 %v1144
        %v1192 = vpop.f32.mrb[0].mxu0
        %v1193 = vadd.f32 0.0, %v1192
        %v1194 = vpop.f32.mrb[0].mxu0
        %v1195 = vadd.f32 0.0, %v1194
        %v1196 = vpop.f32.mrb[0].mxu0
        %v1197 = vadd.f32 0.0, %v1196
        %v1198 = vpop.f32.mrb[0].mxu0
        %v1199 = vadd.f32 0.0, %v1198
        %1200 = vmatprep.mubr.bf16.mxu0 0
        %1201 = vmatmul.mubr.bf16.gmra.mrb[0].mxu0 %v1147
        %v1202 = vpop.f32.mrb[0].mxu0
        %v1203 = vadd.f32 0.0, %v1202
        %v1204 = vpop.f32.mrb[0].mxu0
        %v1205 = vadd.f32 0.0, %v1204
        %v1206 = vpop.f32.mrb[0].mxu0
        %v1207 = vpop.f32.mrb[0].mxu0
        %1208 = vdwg.mxu0
        %1209 = vmatprep.subr.bf16.mxu0 0
        %1210 = vmatpush1.bf16.msra.mxu0 %v1136
        %1211 = vmatprep.subr.bf16.mxu0 0
        %1212 = vmatpush1.bf16.msra.mxu0 %v1156
        %1213 = vmatprep.subr.bf16.mxu0 0
        %1214 = vmatpush1.bf16.msra.mxu0 0
        %1215 = vmatprep.subr.bf16.mxu0 0
        %1216 = vmatpush1.bf16.msra.mxu0 0
        %1217 = vmatprep.subr.bf16.mxu0 0
        %1218 = vmatpush1.bf16.msra.mxu0 0
        %1219 = vmatprep.subr.bf16.mxu0 0
        %1220 = vmatpush1.bf16.msra.mxu0 0
        %1221 = vmatprep.subr.bf16.mxu0 0
        %1222 = vmatpush1.bf16.msra.mxu0 0
        %1223 = vmatprep.subr.bf16.mxu0 0
        %1224 = vmatpush1.bf16.msra.mxu0 0
        %1225 = vmatprep.subr.bf16.mxu0 0
        %1226 = vmatpush1.bf16.msra.mxu0 0
        %1227 = vmatprep.subr.bf16.mxu0 0
        %1228 = vmatpush1.bf16.msra.mxu0 0
        %1229 = vmatprep.subr.bf16.mxu0 0
        %1230 = vmatpush1.bf16.msra.mxu0 0
        %1231 = vmatprep.subr.bf16.mxu0 0
        %1232 = vmatpush1.bf16.msra.mxu0 0
        %1233 = vmatprep.subr.bf16.mxu0 0
        %1234 = vmatpush1.bf16.msra.mxu0 0
        %1235 = vmatprep.subr.bf16.mxu0 0
        %1236 = vmatpush1.bf16.msra.mxu0 0
        %1237 = vmatprep.subr.bf16.mxu0 0
        %1238 = vmatpush1.bf16.msra.mxu0 0
        %1239 = vmatprep.subr.bf16.mxu0 0
        %1240 = vmatpush1.bf16.msra.mxu0 0
        %1241 = vmatprep.mubr.bf16.mxu0 0
        %1242 = vmatmul.mubr.bf16.gmra.mrb[0].mxu0 %v1144
        %v1243 = vpop.f32.mrb[0].mxu0
        %v1244 = vadd.f32 0.0, %v1243
        %v1245 = vpop.f32.mrb[0].mxu0
        %v1246 = vpop.f32.mrb[0].mxu0
        %v1247 = vadd.f32 0.0, %v1246
        %v1248 = vpop.f32.mrb[0].mxu0
        %1249 = vmatprep.mubr.bf16.mxu0 0
        %1250 = vmatmul.mubr.bf16.gmra.mrb[0].mxu0 %v1147
        %v1251 = vpop.f32.mrb[0].mxu0
        %v1252 = vadd.f32 0.0, %v1251
        %v1253 = vpop.f32.mrb[0].mxu0
        %v1254 = vpop.f32.mrb[0].mxu0
        %v1255 = vpop.f32.mrb[0].mxu0
        %1256 = vdwg.mxu0
        %v1265 = vunpack.c.l.b16 %v1029
        %v1266 = vunpack.c.h.b16 %v1029
        %v1267 = vunpack.c.l.b16 %v1030
        %v1268 = vunpack.c.l.b16 %v1031
        %v1269 = vunpack.c.h.b16 %v1031
        %v1270 = vunpack.c.l.b16 %v1032
        %v1271 = vunpack.c.l.b16 %v1033
        %v1272 = vunpack.c.h.b16 %v1033
        %v1273 = vunpack.c.l.b16 %v1034
        %v1274 = vunpack.c.l.b16 %v1035
        %v1275 = vunpack.c.h.b16 %v1035
        %v1276 = vunpack.c.l.b16 %v1036
        %v1277 = vpack.c.b16 %v1268, %v1265
        %v1278 = vpack.c.b16 %v1269, %v1266
        %v1279 = vpack.c.b16 %v1270, %v1267
        %v1280 = vpack.c.b16 %v1274, %v1271
        %v1281 = vpack.c.b16 %v1275, %v1272
        %v1282 = vpack.c.b16 %v1276, %v1273
        %v1287 = vsel %vm968, %v1027, 0
        %v1290 = vsel %vm968, %v1028, 0
        %v1293 = vsel %vm975, %v1280, 0
        %v1296 = vsel %vm975, %v1281, 0
        %v1299 = vsel %vm975, %v1282, 0
        %1301 = vmatprep.subr.bf16.mxu0 %v1278
        %1302 = vmatpush1.bf16.msra.mxu0 %v1277
        %1303 = vmatprep.subr.bf16.mxu0 %v1296
        %1304 = vmatpush1.bf16.msra.mxu0 %v1293
        %1305 = vmatprep.subr.bf16.mxu0 0
        %1306 = vmatpush1.bf16.msra.mxu0 0
        %1307 = vmatprep.subr.bf16.mxu0 0
        %1308 = vmatpush1.bf16.msra.mxu0 0
        %1309 = vmatprep.subr.bf16.mxu0 0
        %1310 = vmatpush1.bf16.msra.mxu0 0
        %1311 = vmatprep.subr.bf16.mxu0 0
        %1312 = vmatpush1.bf16.msra.mxu0 0
        %1313 = vmatprep.subr.bf16.mxu0 0
        %1314 = vmatpush1.bf16.msra.mxu0 0
        %1315 = vmatprep.subr.bf16.mxu0 0
        %1316 = vmatpush1.bf16.msra.mxu0 0
        %1317 = vmatprep.subr.bf16.mxu0 0
        %1318 = vmatpush1.bf16.msra.mxu0 0
        %1319 = vmatprep.subr.bf16.mxu0 0
        %1320 = vmatpush1.bf16.msra.mxu0 0
        %1321 = vmatprep.subr.bf16.mxu0 0
        %1322 = vmatpush1.bf16.msra.mxu0 0
        %1323 = vmatprep.subr.bf16.mxu0 0
        %1324 = vmatpush1.bf16.msra.mxu0 0
        %1325 = vmatprep.subr.bf16.mxu0 0
        %1326 = vmatpush1.bf16.msra.mxu0 0
        %1327 = vmatprep.subr.bf16.mxu0 0
        %1328 = vmatpush1.bf16.msra.mxu0 0
        %1329 = vmatprep.subr.bf16.mxu0 0
        %1330 = vmatpush1.bf16.msra.mxu0 0
        %1331 = vmatprep.subr.bf16.mxu0 0
        %1332 = vmatpush1.bf16.msra.mxu0 0
        %1333 = vmatprep.mubr.bf16.mxu0 0
        %1334 = vmatmul.mubr.bf16.gmra.mrb[0].mxu0 %v1287
        %v1335 = vpop.f32.mrb[0].mxu0
        %v1336 = vadd.f32 %v1193, %v1335
        %v1337 = vpop.f32.mrb[0].mxu0
        %v1338 = vadd.f32 %v1195, %v1337
        %v1339 = vpop.f32.mrb[0].mxu0
        %v1340 = vadd.f32 %v1197, %v1339
        %v1341 = vpop.f32.mrb[0].mxu0
        %v1342 = vadd.f32 %v1199, %v1341
        %1343 = vmatprep.mubr.bf16.mxu0 0
        %1344 = vmatmul.mubr.bf16.gmra.mrb[0].mxu0 %v1290
        %v1345 = vpop.f32.mrb[0].mxu0
        %v1346 = vadd.f32 %v1203, %v1345
        %v1347 = vpop.f32.mrb[0].mxu0
        %v1348 = vadd.f32 %v1205, %v1347
        %v1349 = vpop.f32.mrb[0].mxu0
        %v1350 = vpop.f32.mrb[0].mxu0
        %1351 = vdwg.mxu0
        %1352 = vmatprep.subr.bf16.mxu0 0
        %1353 = vmatpush1.bf16.msra.mxu0 %v1279
        %1354 = vmatprep.subr.bf16.mxu0 0
        %1355 = vmatpush1.bf16.msra.mxu0 %v1299
        %1356 = vmatprep.subr.bf16.mxu0 0
        %1357 = vmatpush1.bf16.msra.mxu0 0
        %1358 = vmatprep.subr.bf16.mxu0 0
        %1359 = vmatpush1.bf16.msra.mxu0 0
        %1360 = vmatprep.subr.bf16.mxu0 0
        %1361 = vmatpush1.bf16.msra.mxu0 0
        %1362 = vmatprep.subr.bf16.mxu0 0
        %1363 = vmatpush1.bf16.msra.mxu0 0
        %1364 = vmatprep.subr.bf16.mxu0 0
        %1365 = vmatpush1.bf16.msra.mxu0 0
        %1366 = vmatprep.subr.bf16.mxu0 0
        %1367 = vmatpush1.bf16.msra.mxu0 0
        %1368 = vmatprep.subr.bf16.mxu0 0
        %1369 = vmatpush1.bf16.msra.mxu0 0
        %1370 = vmatprep.subr.bf16.mxu0 0
        %1371 = vmatpush1.bf16.msra.mxu0 0
        %1372 = vmatprep.subr.bf16.mxu0 0
        %1373 = vmatpush1.bf16.msra.mxu0 0
        %1374 = vmatprep.subr.bf16.mxu0 0
        %1375 = vmatpush1.bf16.msra.mxu0 0
        %1376 = vmatprep.subr.bf16.mxu0 0
        %1377 = vmatpush1.bf16.msra.mxu0 0
        %1378 = vmatprep.subr.bf16.mxu0 0
        %1379 = vmatpush1.bf16.msra.mxu0 0
        %1380 = vmatprep.subr.bf16.mxu0 0
        %1381 = vmatpush1.bf16.msra.mxu0 0
        %1382 = vmatprep.subr.bf16.mxu0 0
        %1383 = vmatpush1.bf16.msra.mxu0 0
        %1384 = vmatprep.mubr.bf16.mxu0 0
        %1385 = vmatmul.mubr.bf16.gmra.mrb[0].mxu0 %v1287
        %v1386 = vpop.f32.mrb[0].mxu0
        %v1387 = vadd.f32 %v1244, %v1386
        %v1388 = vpop.f32.mrb[0].mxu0
        %v1389 = vpop.f32.mrb[0].mxu0
        %v1390 = vadd.f32 %v1247, %v1389
        %v1391 = vpop.f32.mrb[0].mxu0
        %1392 = vmatprep.mubr.bf16.mxu0 0
        %1393 = vmatmul.mubr.bf16.gmra.mrb[0].mxu0 %v1290
        %v1394 = vpop.f32.mrb[0].mxu0
        %v1395 = vadd.f32 %v1252, %v1394
        %v1396 = vpop.f32.mrb[0].mxu0
        %v1397 = vpop.f32.mrb[0].mxu0
        %v1398 = vpop.f32.mrb[0].mxu0
        %1399 = vdwg.mxu0
        %s1400 = scalar_lea.vmem %s1, 24
        %v1401 = vld [vmem:[%s1400] sm:$0xf]
        %v1402 = vld [vmem:[%s1400 + $0x4] sm:$0xf]
        %v1403 = vld [vmem:[%s1400 + $0x8] sm:$0xf]
        %v1407 = vunpack.c.l.b16 %v1401
        %v1408 = vunpack.c.l.b16 %v1402
        %v1409 = vunpack.c.l.b16 %v1403
        %v1410 = vpack.c.b16 %v1408, %v1407
        %v1411 = vpack.c.b16 %v1409, %v1409
        %v1413 = vsel %vm968, %v1410, 0
        %v1416 = vsel %vm968, %v1411, 0
        %1418 = vmatprep.subr.bf16.mxu0 0
        %1419 = vmatpush1.bf16.msra.mxu0 %v965
        %1420 = vmatprep.subr.bf16.mxu0 0
        %1421 = vmatpush1.bf16.msra.mxu0 %v977
        %1422 = vmatprep.subr.bf16.mxu0 0
        %1423 = vmatpush1.bf16.msra.mxu0 0
        %1424 = vmatprep.subr.bf16.mxu0 0
        %1425 = vmatpush1.bf16.msra.mxu0 0
        %1426 = vmatprep.subr.bf16.mxu0 0
        %1427 = vmatpush1.bf16.msra.mxu0 0
        %1428 = vmatprep.subr.bf16.mxu0 0
        %1429 = vmatpush1.bf16.msra.mxu0 0
        %1430 = vmatprep.subr.bf16.mxu0 0
        %1431 = vmatpush1.bf16.msra.mxu0 0
        %1432 = vmatprep.subr.bf16.mxu0 0
        %1433 = vmatpush1.bf16.msra.mxu0 0
        %1434 = vmatprep.subr.bf16.mxu0 0
        %1435 = vmatpush1.bf16.msra.mxu0 0
        %1436 = vmatprep.subr.bf16.mxu0 0
        %1437 = vmatpush1.bf16.msra.mxu0 0
        %1438 = vmatprep.subr.bf16.mxu0 0
        %1439 = vmatpush1.bf16.msra.mxu0 0
        %1440 = vmatprep.subr.bf16.mxu0 0
        %1441 = vmatpush1.bf16.msra.mxu0 0
        %1442 = vmatprep.subr.bf16.mxu0 0
        %1443 = vmatpush1.bf16.msra.mxu0 0
        %1444 = vmatprep.subr.bf16.mxu0 0
        %1445 = vmatpush1.bf16.msra.mxu0 0
        %1446 = vmatprep.subr.bf16.mxu0 0
        %1447 = vmatpush1.bf16.msra.mxu0 0
        %1448 = vmatprep.subr.bf16.mxu0 0
        %1449 = vmatpush1.bf16.msra.mxu0 0
        %1450 = vmatprep.mubr.bf16.mxu0 0
        %1451 = vmatmul.mubr.bf16.gmra.mrb[0].mxu0 %v1413
        %v1452 = vpop.f32.mrb[0].mxu0
        %v1453 = vadd.f32 0.0, %v1452
        %v1454 = vpop.f32.mrb[0].mxu0
        %v1455 = vpop.f32.mrb[0].mxu0
        %v1456 = vadd.f32 0.0, %v1455
        %v1457 = vpop.f32.mrb[0].mxu0
        %1458 = vmatprep.mubr.bf16.mxu0 0
        %1459 = vmatmul.mubr.bf16.gmra.mrb[0].mxu0 %v1416
        %v1460 = vpop.f32.mrb[0].mxu0
        %v1461 = vadd.f32 0.0, %v1460
        %v1462 = vpop.f32.mrb[0].mxu0
        %v1463 = vpop.f32.mrb[0].mxu0
        %v1464 = vpop.f32.mrb[0].mxu0
        %1465 = vdwg.mxu0
        %v1466 = vpack.c.bf16 %v1456, %v1453
        %v1467 = vpack.c.bf16 %v1461, %v1461
        %s1468 = scalar_lea.vmem [#allocation2], 96
        %v1469 = vld [vmem:[%s1468] sm:$0xff]
        %v1470 = vld [vmem:[%s1468 + $0x8] sm:$0xf]
        %v1471 = vld [vmem:[%s1468 + $0xc] sm:$0xff]
        %v1472 = vld [vmem:[%s1468 + $0x14] sm:$0xf]
        %v1473 = vld [vmem:[%s1468 + $0x18] sm:$0xff]
        %v1474 = vld [vmem:[%s1468 + $0x20] sm:$0xf]
        %v1475 = vld [vmem:[%s1468 + $0x24] sm:$0x33]
        %v1476 = vld [vmem:[%s1468 + $0x2c] sm:$0x3]
        %v1485 = vunpack.c.l.b16 %v1469
        %v1486 = vunpack.c.h.b16 %v1469
        %v1487 = vunpack.c.l.b16 %v1470
        %v1488 = vunpack.c.l.b16 %v1471
        %v1489 = vunpack.c.h.b16 %v1471
        %v1490 = vunpack.c.l.b16 %v1472
        %v1491 = vunpack.c.l.b16 %v1473
        %v1492 = vunpack.c.h.b16 %v1473
        %v1493 = vunpack.c.l.b16 %v1474
        %v1494 = vunpack.c.l.b16 %v1475
        %v1495 = vunpack.c.h.b16 %v1475
        %v1496 = vunpack.c.l.b16 %v1476
        %v1497 = vpack.c.b16 %v1488, %v1485
        %v1498 = vpack.c.b16 %v1489, %v1486
        %v1499 = vpack.c.b16 %v1490, %v1487
        %v1500 = vpack.c.b16 %v1494, %v1491
        %v1501 = vpack.c.b16 %v1495, %v1492
        %v1502 = vpack.c.b16 %v1496, %v1493
        %v1507 = vsel %vm968, %v1466, 0
        %v1510 = vsel %vm968, %v1467, 0
        %v1513 = vsel %vm975, %v1500, 0
        %v1516 = vsel %vm975, %v1501, 0
        %v1519 = vsel %vm975, %v1502, 0
        %1521 = vmatprep.subr.bf16.mxu0 %v1498
        %1522 = vmatpush1.bf16.msra.mxu0 %v1497
        %1523 = vmatprep.subr.bf16.mxu0 %v1516
        %1524 = vmatpush1.bf16.msra.mxu0 %v1513
        %1525 = vmatprep.subr.bf16.mxu0 0
        %1526 = vmatpush1.bf16.msra.mxu0 0
        %1527 = vmatprep.subr.bf16.mxu0 0
        %1528 = vmatpush1.bf16.msra.mxu0 0
        %1529 = vmatprep.subr.bf16.mxu0 0
        %1530 = vmatpush1.bf16.msra.mxu0 0
        %1531 = vmatprep.subr.bf16.mxu0 0
        %1532 = vmatpush1.bf16.msra.mxu0 0
        %1533 = vmatprep.subr.bf16.mxu0 0
        %1534 = vmatpush1.bf16.msra.mxu0 0
        %1535 = vmatprep.subr.bf16.mxu0 0
        %1536 = vmatpush1.bf16.msra.mxu0 0
        %1537 = vmatprep.subr.bf16.mxu0 0
        %1538 = vmatpush1.bf16.msra.mxu0 0
        %1539 = vmatprep.subr.bf16.mxu0 0
        %1540 = vmatpush1.bf16.msra.mxu0 0
        %1541 = vmatprep.subr.bf16.mxu0 0
        %1542 = vmatpush1.bf16.msra.mxu0 0
        %1543 = vmatprep.subr.bf16.mxu0 0
        %1544 = vmatpush1.bf16.msra.mxu0 0
        %1545 = vmatprep.subr.bf16.mxu0 0
        %1546 = vmatpush1.bf16.msra.mxu0 0
        %1547 = vmatprep.subr.bf16.mxu0 0
        %1548 = vmatpush1.bf16.msra.mxu0 0
        %1549 = vmatprep.subr.bf16.mxu0 0
        %1550 = vmatpush1.bf16.msra.mxu0 0
        %1551 = vmatprep.subr.bf16.mxu0 0
        %1552 = vmatpush1.bf16.msra.mxu0 0
        %1553 = vmatprep.mubr.bf16.mxu0 0
        %1554 = vmatmul.mubr.bf16.gmra.mrb[0].mxu0 %v1507
        %v1555 = vpop.f32.mrb[0].mxu0
        %v1556 = vadd.f32 0.0, %v1555
        %v1557 = vpop.f32.mrb[0].mxu0
        %v1558 = vadd.f32 0.0, %v1557
        %v1559 = vpop.f32.mrb[0].mxu0
        %v1560 = vadd.f32 0.0, %v1559
        %v1561 = vpop.f32.mrb[0].mxu0
        %v1562 = vadd.f32 0.0, %v1561
        %1563 = vmatprep.mubr.bf16.mxu0 0
        %1564 = vmatmul.mubr.bf16.gmra.mrb[0].mxu0 %v1510
        %v1565 = vpop.f32.mrb[0].mxu0
        %v1566 = vadd.f32 0.0, %v1565
        %v1567 = vpop.f32.mrb[0].mxu0
        %v1568 = vadd.f32 0.0, %v1567
        %v1569 = vpop.f32.mrb[0].mxu0
        %v1570 = vpop.f32.mrb[0].mxu0
        %1571 = vdwg.mxu0
        %1572 = vmatprep.subr.bf16.mxu0 0
        %1573 = vmatpush1.bf16.msra.mxu0 %v1499
        %1574 = vmatprep.subr.bf16.mxu0 0
        %1575 = vmatpush1.bf16.msra.mxu0 %v1519
        %1576 = vmatprep.subr.bf16.mxu0 0
        %1577 = vmatpush1.bf16.msra.mxu0 0
        %1578 = vmatprep.subr.bf16.mxu0 0
        %1579 = vmatpush1.bf16.msra.mxu0 0
        %1580 = vmatprep.subr.bf16.mxu0 0
        %1581 = vmatpush1.bf16.msra.mxu0 0
        %1582 = vmatprep.subr.bf16.mxu0 0
        %1583 = vmatpush1.bf16.msra.mxu0 0
        %1584 = vmatprep.subr.bf16.mxu0 0
        %1585 = vmatpush1.bf16.msra.mxu0 0
        %1586 = vmatprep.subr.bf16.mxu0 0
        %1587 = vmatpush1.bf16.msra.mxu0 0
        %1588 = vmatprep.subr.bf16.mxu0 0
        %1589 = vmatpush1.bf16.msra.mxu0 0
        %1590 = vmatprep.subr.bf16.mxu0 0
        %1591 = vmatpush1.bf16.msra.mxu0 0
        %1592 = vmatprep.subr.bf16.mxu0 0
        %1593 = vmatpush1.bf16.msra.mxu0 0
        %1594 = vmatprep.subr.bf16.mxu0 0
        %1595 = vmatpush1.bf16.msra.mxu0 0
        %1596 = vmatprep.subr.bf16.mxu0 0
        %1597 = vmatpush1.bf16.msra.mxu0 0
        %1598 = vmatprep.subr.bf16.mxu0 0
        %1599 = vmatpush1.bf16.msra.mxu0 0
        %1600 = vmatprep.subr.bf16.mxu0 0
        %1601 = vmatpush1.bf16.msra.mxu0 0
        %1602 = vmatprep.subr.bf16.mxu0 0
        %1603 = vmatpush1.bf16.msra.mxu0 0
        %1604 = vmatprep.mubr.bf16.mxu0 0
        %1605 = vmatmul.mubr.bf16.gmra.mrb[0].mxu0 %v1507
        %v1606 = vpop.f32.mrb[0].mxu0
        %v1607 = vadd.f32 0.0, %v1606
        %v1608 = vpop.f32.mrb[0].mxu0
        %v1609 = vpop.f32.mrb[0].mxu0
        %v1610 = vadd.f32 0.0, %v1609
        %v1611 = vpop.f32.mrb[0].mxu0
        %1612 = vmatprep.mubr.bf16.mxu0 0
        %1613 = vmatmul.mubr.bf16.gmra.mrb[0].mxu0 %v1510
        %v1614 = vpop.f32.mrb[0].mxu0
        %v1615 = vadd.f32 0.0, %v1614
        %v1616 = vpop.f32.mrb[0].mxu0
        %v1617 = vpop.f32.mrb[0].mxu0
        %v1618 = vpop.f32.mrb[0].mxu0
        %1619 = vdwg.mxu0
        %v1620 = vadd.f32 %v1336, %v1556
        %v1621 = vadd.f32 %v1338, %v1558
        %v1622 = vadd.f32 %v1387, %v1607
        %v1623 = vadd.f32 %v1340, %v1560
        %v1624 = vadd.f32 %v1342, %v1562
        %v1625 = vadd.f32 %v1390, %v1610
        %v1626 = vadd.f32 %v1346, %v1566
        %v1627 = vadd.f32 %v1348, %v1568
        %v1628 = vadd.f32 %v1395, %v1615
        %s1629 = scalar_lea.vmem %s1, 36
        %v1630 = vld [vmem:[%s1629] sm:$0xf]
        %v1631 = vld [vmem:[%s1629 + $0x4] sm:$0xf]
        %v1632 = vld [vmem:[%s1629 + $0x8] sm:$0xf]
        %v1636 = vunpack.c.l.b16 %v1630
        %v1637 = vunpack.c.l.b16 %v1631
        %v1638 = vunpack.c.l.b16 %v1632
        %v1639 = vpack.c.b16 %v1637, %v1636
        %v1640 = vpack.c.b16 %v1638, %v1638
        %v1642 = vsel %vm968, %v1639, 0
        %v1645 = vsel %vm968, %v1640, 0
        %1647 = vmatprep.subr.bf16.mxu0 0
        %1648 = vmatpush1.bf16.msra.mxu0 %v965
        %1649 = vmatprep.subr.bf16.mxu0 0
        %1650 = vmatpush1.bf16.msra.mxu0 %v977
        %1651 = vmatprep.subr.bf16.mxu0 0
        %1652 = vmatpush1.bf16.msra.mxu0 0
        %1653 = vmatprep.subr.bf16.mxu0 0
        %1654 = vmatpush1.bf16.msra.mxu0 0
        %1655 = vmatprep.subr.bf16.mxu0 0
        %1656 = vmatpush1.bf16.msra.mxu0 0
        %1657 = vmatprep.subr.bf16.mxu0 0
        %1658 = vmatpush1.bf16.msra.mxu0 0
        %1659 = vmatprep.subr.bf16.mxu0 0
        %1660 = vmatpush1.bf16.msra.mxu0 0
        %1661 = vmatprep.subr.bf16.mxu0 0
        %1662 = vmatpush1.bf16.msra.mxu0 0
        %1663 = vmatprep.subr.bf16.mxu0 0
        %1664 = vmatpush1.bf16.msra.mxu0 0
        %1665 = vmatprep.subr.bf16.mxu0 0
        %1666 = vmatpush1.bf16.msra.mxu0 0
        %1667 = vmatprep.subr.bf16.mxu0 0
        %1668 = vmatpush1.bf16.msra.mxu0 0
        %1669 = vmatprep.subr.bf16.mxu0 0
        %1670 = vmatpush1.bf16.msra.mxu0 0
        %1671 = vmatprep.subr.bf16.mxu0 0
        %1672 = vmatpush1.bf16.msra.mxu0 0
        %1673 = vmatprep.subr.bf16.mxu0 0
        %1674 = vmatpush1.bf16.msra.mxu0 0
        %1675 = vmatprep.subr.bf16.mxu0 0
        %1676 = vmatpush1.bf16.msra.mxu0 0
        %1677 = vmatprep.subr.bf16.mxu0 0
        %1678 = vmatpush1.bf16.msra.mxu0 0
        %1679 = vmatprep.mubr.bf16.mxu0 0
        %1680 = vmatmul.mubr.bf16.gmra.mrb[0].mxu0 %v1642
        %v1681 = vpop.f32.mrb[0].mxu0
        %v1682 = vadd.f32 0.0, %v1681
        %v1683 = vpop.f32.mrb[0].mxu0
        %v1684 = vpop.f32.mrb[0].mxu0
        %v1685 = vadd.f32 0.0, %v1684
        %v1686 = vpop.f32.mrb[0].mxu0
        %1687 = vmatprep.mubr.bf16.mxu0 0
        %1688 = vmatmul.mubr.bf16.gmra.mrb[0].mxu0 %v1645
        %v1689 = vpop.f32.mrb[0].mxu0
        %v1690 = vadd.f32 0.0, %v1689
        %v1691 = vpop.f32.mrb[0].mxu0
        %v1692 = vpop.f32.mrb[0].mxu0
        %v1693 = vpop.f32.mrb[0].mxu0
        %1694 = vdwg.mxu0
        %v1695 = vpack.c.bf16 %v1685, %v1682
        %v1696 = vpack.c.bf16 %v1690, %v1690
        %s1697 = scalar_lea.vmem [#allocation2], 144
        %v1698 = vld [vmem:[%s1697] sm:$0xff]
        %v1699 = vld [vmem:[%s1697 + $0x8] sm:$0xf]
        %v1700 = vld [vmem:[%s1697 + $0xc] sm:$0xff]
        %v1701 = vld [vmem:[%s1697 + $0x14] sm:$0xf]
        %v1702 = vld [vmem:[%s1697 + $0x18] sm:$0xff]
        %v1703 = vld [vmem:[%s1697 + $0x20] sm:$0xf]
        %v1704 = vld [vmem:[%s1697 + $0x24] sm:$0x33]
        %v1705 = vld [vmem:[%s1697 + $0x2c] sm:$0x3]
        %v1714 = vunpack.c.l.b16 %v1698
        %v1715 = vunpack.c.h.b16 %v1698
        %v1716 = vunpack.c.l.b16 %v1699
        %v1717 = vunpack.c.l.b16 %v1700
        %v1718 = vunpack.c.h.b16 %v1700
        %v1719 = vunpack.c.l.b16 %v1701
        %v1720 = vunpack.c.l.b16 %v1702
        %v1721 = vunpack.c.h.b16 %v1702
        %v1722 = vunpack.c.l.b16 %v1703
        %v1723 = vunpack.c.l.b16 %v1704
        %v1724 = vunpack.c.h.b16 %v1704
        %v1725 = vunpack.c.l.b16 %v1705
        %v1726 = vpack.c.b16 %v1717, %v1714
        %v1727 = vpack.c.b16 %v1718, %v1715
        %v1728 = vpack.c.b16 %v1719, %v1716
        %v1729 = vpack.c.b16 %v1723, %v1720
        %v1730 = vpack.c.b16 %v1724, %v1721
        %v1731 = vpack.c.b16 %v1725, %v1722
        %v1736 = vsel %vm968, %v1695, 0
        %v1739 = vsel %vm968, %v1696, 0
        %v1742 = vsel %vm975, %v1729, 0
        %v1745 = vsel %vm975, %v1730, 0
        %v1748 = vsel %vm975, %v1731, 0
        %1750 = vmatprep.subr.bf16.mxu0 %v1727
        %1751 = vmatpush1.bf16.msra.mxu0 %v1726
        %1752 = vmatprep.subr.bf16.mxu0 %v1745
        %1753 = vmatpush1.bf16.msra.mxu0 %v1742
        %1754 = vmatprep.subr.bf16.mxu0 0
        %1755 = vmatpush1.bf16.msra.mxu0 0
        %1756 = vmatprep.subr.bf16.mxu0 0
        %1757 = vmatpush1.bf16.msra.mxu0 0
        %1758 = vmatprep.subr.bf16.mxu0 0
        %1759 = vmatpush1.bf16.msra.mxu0 0
        %1760 = vmatprep.subr.bf16.mxu0 0
        %1761 = vmatpush1.bf16.msra.mxu0 0
        %1762 = vmatprep.subr.bf16.mxu0 0
        %1763 = vmatpush1.bf16.msra.mxu0 0
        %1764 = vmatprep.subr.bf16.mxu0 0
        %1765 = vmatpush1.bf16.msra.mxu0 0
        %1766 = vmatprep.subr.bf16.mxu0 0
        %1767 = vmatpush1.bf16.msra.mxu0 0
        %1768 = vmatprep.subr.bf16.mxu0 0
        %1769 = vmatpush1.bf16.msra.mxu0 0
        %1770 = vmatprep.subr.bf16.mxu0 0
        %1771 = vmatpush1.bf16.msra.mxu0 0
        %1772 = vmatprep.subr.bf16.mxu0 0
        %1773 = vmatpush1.bf16.msra.mxu0 0
        %1774 = vmatprep.subr.bf16.mxu0 0
        %1775 = vmatpush1.bf16.msra.mxu0 0
        %1776 = vmatprep.subr.bf16.mxu0 0
        %1777 = vmatpush1.bf16.msra.mxu0 0
        %1778 = vmatprep.subr.bf16.mxu0 0
        %1779 = vmatpush1.bf16.msra.mxu0 0
        %1780 = vmatprep.subr.bf16.mxu0 0
        %1781 = vmatpush1.bf16.msra.mxu0 0
        %1782 = vmatprep.mubr.bf16.mxu0 0
        %1783 = vmatmul.mubr.bf16.gmra.mrb[0].mxu0 %v1736
        %v1784 = vpop.f32.mrb[0].mxu0
        %v1785 = vadd.f32 0.0, %v1784
        %v1786 = vpop.f32.mrb[0].mxu0
        %v1787 = vadd.f32 0.0, %v1786
        %v1788 = vpop.f32.mrb[0].mxu0
        %v1789 = vadd.f32 0.0, %v1788
        %v1790 = vpop.f32.mrb[0].mxu0
        %v1791 = vadd.f32 0.0, %v1790
        %1792 = vmatprep.mubr.bf16.mxu0 0
        %1793 = vmatmul.mubr.bf16.gmra.mrb[0].mxu0 %v1739
        %v1794 = vpop.f32.mrb[0].mxu0
        %v1795 = vadd.f32 0.0, %v1794
        %v1796 = vpop.f32.mrb[0].mxu0
        %v1797 = vadd.f32 0.0, %v1796
        %v1798 = vpop.f32.mrb[0].mxu0
        %v1799 = vpop.f32.mrb[0].mxu0
        %1800 = vdwg.mxu0
        %1801 = vmatprep.subr.bf16.mxu0 0
        %1802 = vmatpush1.bf16.msra.mxu0 %v1728
        %1803 = vmatprep.subr.bf16.mxu0 0
        %1804 = vmatpush1.bf16.msra.mxu0 %v1748
        %1805 = vmatprep.subr.bf16.mxu0 0
        %1806 = vmatpush1.bf16.msra.mxu0 0
        %1807 = vmatprep.subr.bf16.mxu0 0
        %1808 = vmatpush1.bf16.msra.mxu0 0
        %1809 = vmatprep.subr.bf16.mxu0 0
        %1810 = vmatpush1.bf16.msra.mxu0 0
        %1811 = vmatprep.subr.bf16.mxu0 0
        %1812 = vmatpush1.bf16.msra.mxu0 0
        %1813 = vmatprep.subr.bf16.mxu0 0
        %1814 = vmatpush1.bf16.msra.mxu0 0
        %1815 = vmatprep.subr.bf16.mxu0 0
        %1816 = vmatpush1.bf16.msra.mxu0 0
        %1817 = vmatprep.subr.bf16.mxu0 0
        %1818 = vmatpush1.bf16.msra.mxu0 0
        %1819 = vmatprep.subr.bf16.mxu0 0
        %1820 = vmatpush1.bf16.msra.mxu0 0
        %1821 = vmatprep.subr.bf16.mxu0 0
        %1822 = vmatpush1.bf16.msra.mxu0 0
        %1823 = vmatprep.subr.bf16.mxu0 0
        %1824 = vmatpush1.bf16.msra.mxu0 0
        %1825 = vmatprep.subr.bf16.mxu0 0
        %1826 = vmatpush1.bf16.msra.mxu0 0
        %1827 = vmatprep.subr.bf16.mxu0 0
        %1828 = vmatpush1.bf16.msra.mxu0 0
        %1829 = vmatprep.subr.bf16.mxu0 0
        %1830 = vmatpush1.bf16.msra.mxu0 0
        %1831 = vmatprep.subr.bf16.mxu0 0
        %1832 = vmatpush1.bf16.msra.mxu0 0
        %1833 = vmatprep.mubr.bf16.mxu0 0
        %1834 = vmatmul.mubr.bf16.gmra.mrb[0].mxu0 %v1736
        %v1835 = vpop.f32.mrb[0].mxu0
        %v1836 = vadd.f32 0.0, %v1835
        %v1837 = vpop.f32.mrb[0].mxu0
        %v1838 = vpop.f32.mrb[0].mxu0
        %v1839 = vadd.f32 0.0, %v1838
        %v1840 = vpop.f32.mrb[0].mxu0
        %1841 = vmatprep.mubr.bf16.mxu0 0
        %1842 = vmatmul.mubr.bf16.gmra.mrb[0].mxu0 %v1739
        %v1843 = vpop.f32.mrb[0].mxu0
        %v1844 = vadd.f32 0.0, %v1843
        %v1845 = vpop.f32.mrb[0].mxu0
        %v1846 = vpop.f32.mrb[0].mxu0
        %v1847 = vpop.f32.mrb[0].mxu0
        %1848 = vdwg.mxu0
        %v1849 = vadd.f32 %v1620, %v1785
        %v1850 = vadd.f32 %v1621, %v1787
        %v1851 = vadd.f32 %v1622, %v1836
        %v1852 = vadd.f32 %v1623, %v1789
        %v1853 = vadd.f32 %v1624, %v1791
        %v1854 = vadd.f32 %v1625, %v1839
        %v1855 = vadd.f32 %v1626, %v1795
        %v1856 = vadd.f32 %v1627, %v1797
        %v1857 = vadd.f32 %v1628, %v1844
        %s1858 = scalar_lea.vmem %s1, 48
        %v1859 = vld [vmem:[%s1858] sm:$0xf]
        %v1860 = vld [vmem:[%s1858 + $0x4] sm:$0xf]
        %v1861 = vld [vmem:[%s1858 + $0x8] sm:$0xf]
        %v1865 = vunpack.c.l.b16 %v1859
        %v1866 = vunpack.c.l.b16 %v1860
        %v1867 = vunpack.c.l.b16 %v1861
        %v1868 = vpack.c.b16 %v1866, %v1865
        %v1869 = vpack.c.b16 %v1867, %v1867
        %v1871 = vsel %vm968, %v1868, 0
        %v1874 = vsel %vm968, %v1869, 0
        %1876 = vmatprep.subr.bf16.mxu0 0
        %1877 = vmatpush1.bf16.msra.mxu0 %v965
        %1878 = vmatprep.subr.bf16.mxu0 0
        %1879 = vmatpush1.bf16.msra.mxu0 %v977
        %1880 = vmatprep.subr.bf16.mxu0 0
        %1881 = vmatpush1.bf16.msra.mxu0 0
        %1882 = vmatprep.subr.bf16.mxu0 0
        %1883 = vmatpush1.bf16.msra.mxu0 0
        %1884 = vmatprep.subr.bf16.mxu0 0
        %1885 = vmatpush1.bf16.msra.mxu0 0
        %1886 = vmatprep.subr.bf16.mxu0 0
        %1887 = vmatpush1.bf16.msra.mxu0 0
        %1888 = vmatprep.subr.bf16.mxu0 0
        %1889 = vmatpush1.bf16.msra.mxu0 0
        %1890 = vmatprep.subr.bf16.mxu0 0
        %1891 = vmatpush1.bf16.msra.mxu0 0
        %1892 = vmatprep.subr.bf16.mxu0 0
        %1893 = vmatpush1.bf16.msra.mxu0 0
        %1894 = vmatprep.subr.bf16.mxu0 0
        %1895 = vmatpush1.bf16.msra.mxu0 0
        %1896 = vmatprep.subr.bf16.mxu0 0
        %1897 = vmatpush1.bf16.msra.mxu0 0
        %1898 = vmatprep.subr.bf16.mxu0 0
        %1899 = vmatpush1.bf16.msra.mxu0 0
        %1900 = vmatprep.subr.bf16.mxu0 0
        %1901 = vmatpush1.bf16.msra.mxu0 0
        %1902 = vmatprep.subr.bf16.mxu0 0
        %1903 = vmatpush1.bf16.msra.mxu0 0
        %1904 = vmatprep.subr.bf16.mxu0 0
        %1905 = vmatpush1.bf16.msra.mxu0 0
        %1906 = vmatprep.subr.bf16.mxu0 0
        %1907 = vmatpush1.bf16.msra.mxu0 0
        %1908 = vmatprep.mubr.bf16.mxu0 0
        %1909 = vmatmul.mubr.bf16.gmra.mrb[0].mxu0 %v1871
        %v1910 = vpop.f32.mrb[0].mxu0
        %v1911 = vadd.f32 0.0, %v1910
        %v1912 = vpop.f32.mrb[0].mxu0
        %v1913 = vpop.f32.mrb[0].mxu0
        %v1914 = vadd.f32 0.0, %v1913
        %v1915 = vpop.f32.mrb[0].mxu0
        %1916 = vmatprep.mubr.bf16.mxu0 0
        %1917 = vmatmul.mubr.bf16.gmra.mrb[0].mxu0 %v1874
        %v1918 = vpop.f32.mrb[0].mxu0
        %v1919 = vadd.f32 0.0, %v1918
        %v1920 = vpop.f32.mrb[0].mxu0
        %v1921 = vpop.f32.mrb[0].mxu0
        %v1922 = vpop.f32.mrb[0].mxu0
        %1923 = vdwg.mxu0
        %v1924 = vpack.c.bf16 %v1914, %v1911
        %v1925 = vpack.c.bf16 %v1919, %v1919
        %s1926 = scalar_lea.vmem [#allocation2], 192
        %v1927 = vld [vmem:[%s1926] sm:$0xff]
        %v1928 = vld [vmem:[%s1926 + $0x8] sm:$0xf]
        %v1929 = vld [vmem:[%s1926 + $0xc] sm:$0xff]
        %v1930 = vld [vmem:[%s1926 + $0x14] sm:$0xf]
        %v1931 = vld [vmem:[%s1926 + $0x18] sm:$0xff]
        %v1932 = vld [vmem:[%s1926 + $0x20] sm:$0xf]
        %v1933 = vld [vmem:[%s1926 + $0x24] sm:$0x33]
        %v1934 = vld [vmem:[%s1926 + $0x2c] sm:$0x3]
        %v1943 = vunpack.c.l.b16 %v1927
        %v1944 = vunpack.c.h.b16 %v1927
        %v1945 = vunpack.c.l.b16 %v1928
        %v1946 = vunpack.c.l.b16 %v1929
        %v1947 = vunpack.c.h.b16 %v1929
        %v1948 = vunpack.c.l.b16 %v1930
        %v1949 = vunpack.c.l.b16 %v1931
        %v1950 = vunpack.c.h.b16 %v1931
        %v1951 = vunpack.c.l.b16 %v1932
        %v1952 = vunpack.c.l.b16 %v1933
        %v1953 = vunpack.c.h.b16 %v1933
        %v1954 = vunpack.c.l.b16 %v1934
        %v1955 = vpack.c.b16 %v1946, %v1943
        %v1956 = vpack.c.b16 %v1947, %v1944
        %v1957 = vpack.c.b16 %v1948, %v1945
        %v1958 = vpack.c.b16 %v1952, %v1949
        %v1959 = vpack.c.b16 %v1953, %v1950
        %v1960 = vpack.c.b16 %v1954, %v1951
        %v1965 = vsel %vm968, %v1924, 0
        %v1968 = vsel %vm968, %v1925, 0
        %v1971 = vsel %vm975, %v1958, 0
        %v1974 = vsel %vm975, %v1959, 0
        %v1977 = vsel %vm975, %v1960, 0
        %1979 = vmatprep.subr.bf16.mxu0 %v1956
        %1980 = vmatpush1.bf16.msra.mxu0 %v1955
        %1981 = vmatprep.subr.bf16.mxu0 %v1974
        %1982 = vmatpush1.bf16.msra.mxu0 %v1971
        %1983 = vmatprep.subr.bf16.mxu0 0
        %1984 = vmatpush1.bf16.msra.mxu0 0
        %1985 = vmatprep.subr.bf16.mxu0 0
        %1986 = vmatpush1.bf16.msra.mxu0 0
        %1987 = vmatprep.subr.bf16.mxu0 0
        %1988 = vmatpush1.bf16.msra.mxu0 0
        %1989 = vmatprep.subr.bf16.mxu0 0
        %1990 = vmatpush1.bf16.msra.mxu0 0
        %1991 = vmatprep.subr.bf16.mxu0 0
        %1992 = vmatpush1.bf16.msra.mxu0 0
        %1993 = vmatprep.subr.bf16.mxu0 0
        %1994 = vmatpush1.bf16.msra.mxu0 0
        %1995 = vmatprep.subr.bf16.mxu0 0
        %1996 = vmatpush1.bf16.msra.mxu0 0
        %1997 = vmatprep.subr.bf16.mxu0 0
        %1998 = vmatpush1.bf16.msra.mxu0 0
        %1999 = vmatprep.subr.bf16.mxu0 0
        %2000 = vmatpush1.bf16.msra.mxu0 0
        %2001 = vmatprep.subr.bf16.mxu0 0
        %2002 = vmatpush1.bf16.msra.mxu0 0
        %2003 = vmatprep.subr.bf16.mxu0 0
        %2004 = vmatpush1.bf16.msra.mxu0 0
        %2005 = vmatprep.subr.bf16.mxu0 0
        %2006 = vmatpush1.bf16.msra.mxu0 0
        %2007 = vmatprep.subr.bf16.mxu0 0
        %2008 = vmatpush1.bf16.msra.mxu0 0
        %2009 = vmatprep.subr.bf16.mxu0 0
        %2010 = vmatpush1.bf16.msra.mxu0 0
        %2011 = vmatprep.mubr.bf16.mxu0 0
        %2012 = vmatmul.mubr.bf16.gmra.mrb[0].mxu0 %v1965
        %v2013 = vpop.f32.mrb[0].mxu0
        %v2014 = vadd.f32 0.0, %v2013
        %v2015 = vpop.f32.mrb[0].mxu0
        %v2016 = vadd.f32 0.0, %v2015
        %v2017 = vpop.f32.mrb[0].mxu0
        %v2018 = vadd.f32 0.0, %v2017
        %v2019 = vpop.f32.mrb[0].mxu0
        %v2020 = vadd.f32 0.0, %v2019
        %2021 = vmatprep.mubr.bf16.mxu0 0
        %2022 = vmatmul.mubr.bf16.gmra.mrb[0].mxu0 %v1968
        %v2023 = vpop.f32.mrb[0].mxu0
        %v2024 = vadd.f32 0.0, %v2023
        %v2025 = vpop.f32.mrb[0].mxu0
        %v2026 = vadd.f32 0.0, %v2025
        %v2027 = vpop.f32.mrb[0].mxu0
        %v2028 = vpop.f32.mrb[0].mxu0
        %2029 = vdwg.mxu0
        %2030 = vmatprep.subr.bf16.mxu0 0
        %2031 = vmatpush1.bf16.msra.mxu0 %v1957
        %2032 = vmatprep.subr.bf16.mxu0 0
        %2033 = vmatpush1.bf16.msra.mxu0 %v1977
        %2034 = vmatprep.subr.bf16.mxu0 0
        %2035 = vmatpush1.bf16.msra.mxu0 0
        %2036 = vmatprep.subr.bf16.mxu0 0
        %2037 = vmatpush1.bf16.msra.mxu0 0
        %2038 = vmatprep.subr.bf16.mxu0 0
        %2039 = vmatpush1.bf16.msra.mxu0 0
        %2040 = vmatprep.subr.bf16.mxu0 0
        %2041 = vmatpush1.bf16.msra.mxu0 0
        %2042 = vmatprep.subr.bf16.mxu0 0
        %2043 = vmatpush1.bf16.msra.mxu0 0
        %2044 = vmatprep.subr.bf16.mxu0 0
        %2045 = vmatpush1.bf16.msra.mxu0 0
        %2046 = vmatprep.subr.bf16.mxu0 0
        %2047 = vmatpush1.bf16.msra.mxu0 0
        %2048 = vmatprep.subr.bf16.mxu0 0
        %2049 = vmatpush1.bf16.msra.mxu0 0
        %2050 = vmatprep.subr.bf16.mxu0 0
        %2051 = vmatpush1.bf16.msra.mxu0 0
        %2052 = vmatprep.subr.bf16.mxu0 0
        %2053 = vmatpush1.bf16.msra.mxu0 0
        %2054 = vmatprep.subr.bf16.mxu0 0
        %2055 = vmatpush1.bf16.msra.mxu0 0
        %2056 = vmatprep.subr.bf16.mxu0 0
        %2057 = vmatpush1.bf16.msra.mxu0 0
        %2058 = vmatprep.subr.bf16.mxu0 0
        %2059 = vmatpush1.bf16.msra.mxu0 0
        %2060 = vmatprep.subr.bf16.mxu0 0
        %2061 = vmatpush1.bf16.msra.mxu0 0
        %2062 = vmatprep.mubr.bf16.mxu0 0
        %2063 = vmatmul.mubr.bf16.gmra.mrb[0].mxu0 %v1965
        %v2064 = vpop.f32.mrb[0].mxu0
        %v2065 = vadd.f32 0.0, %v2064
        %v2066 = vpop.f32.mrb[0].mxu0
        %v2067 = vpop.f32.mrb[0].mxu0
        %v2068 = vadd.f32 0.0, %v2067
        %v2069 = vpop.f32.mrb[0].mxu0
        %2070 = vmatprep.mubr.bf16.mxu0 0
        %2071 = vmatmul.mubr.bf16.gmra.mrb[0].mxu0 %v1968
        %v2072 = vpop.f32.mrb[0].mxu0
        %v2073 = vadd.f32 0.0, %v2072
        %v2074 = vpop.f32.mrb[0].mxu0
        %v2075 = vpop.f32.mrb[0].mxu0
        %v2076 = vpop.f32.mrb[0].mxu0
        %2077 = vdwg.mxu0
        %v2078 = vadd.f32 %v1849, %v2014
        %v2079 = vadd.f32 %v1850, %v2016
        %v2080 = vadd.f32 %v1851, %v2065
        %v2081 = vadd.f32 %v1852, %v2018
        %v2082 = vadd.f32 %v1853, %v2020
        %v2083 = vadd.f32 %v1854, %v2068
        %v2084 = vadd.f32 %v1855, %v2024
        %v2085 = vadd.f32 %v1856, %v2026
        %v2086 = vadd.f32 %v1857, %v2073
        %v2087 = vld [vmem:[#allocation5] sm:$0x7]
        %v2089 = vlaneseq
        %v2090 = vshrl.u32 %v2089, 7
        %v2091 = vsub.s32 0, %v2090
        %v2092 = vrot.slane %v2087, %v2091
        %v2093 = vlaneseq
        %v2094 = vshrl.u32 %v2093, 7
        %v2095 = vsub.s32 1, %v2094
        %v2096 = vrot.slane %v2087, %v2095
        %v2097 = vlaneseq
        %v2098 = vshrl.u32 %v2097, 7
        %v2099 = vsub.s32 2, %v2098
        %v2100 = vrot.slane %v2087, %v2099
        %v2104 = vadd.f32 %v2078, %v2092
        %v2105 = vadd.f32 %v2079, %v2096
        %v2106 = vadd.f32 %v2080, %v2100
        %v2107 = vadd.f32 %v2081, %v2092
        %v2108 = vadd.f32 %v2082, %v2096
        %v2109 = vadd.f32 %v2083, %v2100
        %v2110 = vadd.f32 %v2084, %v2092
        %v2111 = vadd.f32 %v2085, %v2096
        %v2112 = vadd.f32 %v2086, %v2100
        %v2113 = vmax.f32 %v2104, 0.0
        %v2114 = vmax.f32 %v2105, 0.0
        %v2115 = vmax.f32 %v2106, 0.0
        %v2116 = vmax.f32 %v2107, 0.0
        %v2117 = vmax.f32 %v2108, 0.0
        %v2118 = vmax.f32 %v2109, 0.0
        %v2119 = vmax.f32 %v2110, 0.0
        %v2120 = vmax.f32 %v2111, 0.0
        %v2121 = vmax.f32 %v2112, 0.0
        %v2122 = vpack.c.bf16 %v2116, %v2113
        %v2123 = vpack.c.bf16 %v2117, %v2114
        %v2124 = vpack.c.bf16 %v2118, %v2115
        %v2125 = vpack.c.bf16 %v2119, %v2119
        %v2126 = vpack.c.bf16 %v2120, %v2120
        %v2127 = vpack.c.bf16 %v2121, %v2121
        %v2128 = vld [vmem:[%s4] sm:$0xf]
        %v2129 = vld [vmem:[%s4 + $0x4] sm:$0x3]
        %v2132 = vunpack.c.l.b16 %v2128
        %v2133 = vunpack.c.l.b16 %v2129
        %v2134 = vpack.c.b16 %v2133, %v2132
        %vm2135 = vcmask 195584
        %v2137 = vsel %vm2135, %v2134, 0
        %vm2139 = vcmask 1043456
        %v2141 = vsel %vm2139, %v2125, 0
        %v2144 = vsel %vm2139, %v2126, 0
        %v2147 = vsel %vm2139, %v2127, 0
        %2149 = vmatprep.subr.bf16.mxu0 %v2123
        %2150 = vmatpush1.bf16.msra.mxu0 %v2122
        %2151 = vmatprep.subr.bf16.mxu0 %v2144
        %2152 = vmatpush1.bf16.msra.mxu0 %v2141
        %2153 = vmatprep.subr.bf16.mxu0 0
        %2154 = vmatpush1.bf16.msra.mxu0 0
        %2155 = vmatprep.subr.bf16.mxu0 0
        %2156 = vmatpush1.bf16.msra.mxu0 0
        %2157 = vmatprep.subr.bf16.mxu0 0
        %2158 = vmatpush1.bf16.msra.mxu0 0
        %2159 = vmatprep.subr.bf16.mxu0 0
        %2160 = vmatpush1.bf16.msra.mxu0 0
        %2161 = vmatprep.subr.bf16.mxu0 0
        %2162 = vmatpush1.bf16.msra.mxu0 0
        %2163 = vmatprep.subr.bf16.mxu0 0
        %2164 = vmatpush1.bf16.msra.mxu0 0
        %2165 = vmatprep.subr.bf16.mxu0 0
        %2166 = vmatpush1.bf16.msra.mxu0 0
        %2167 = vmatprep.subr.bf16.mxu0 0
        %2168 = vmatpush1.bf16.msra.mxu0 0
        %2169 = vmatprep.subr.bf16.mxu0 0
        %2170 = vmatpush1.bf16.msra.mxu0 0
        %2171 = vmatprep.subr.bf16.mxu0 0
        %2172 = vmatpush1.bf16.msra.mxu0 0
        %2173 = vmatprep.subr.bf16.mxu0 0
        %2174 = vmatpush1.bf16.msra.mxu0 0
        %2175 = vmatprep.subr.bf16.mxu0 0
        %2176 = vmatpush1.bf16.msra.mxu0 0
        %2177 = vmatprep.subr.bf16.mxu0 0
        %2178 = vmatpush1.bf16.msra.mxu0 0
        %2179 = vmatprep.subr.bf16.mxu0 0
        %2180 = vmatpush1.bf16.msra.mxu0 0
        %2181 = vmatprep.mubr.bf16.mxu0 0
        %2182 = vmatmul.mubr.bf16.gmra.mrb[0].mxu0 %v2137
        %v2183 = vpop.f32.mrb[0].mxu0
        %v2184 = vadd.f32 0.0, %v2183
        %v2185 = vpop.f32.mrb[0].mxu0
        %v2186 = vadd.f32 0.0, %v2185
        %v2187 = vpop.f32.mrb[0].mxu0
        %v2188 = vadd.f32 0.0, %v2187
        %v2189 = vpop.f32.mrb[0].mxu0
        %v2190 = vadd.f32 0.0, %v2189
        %2191 = vdwg.mxu0
        %2192 = vmatprep.subr.bf16.mxu0 0
        %2193 = vmatpush1.bf16.msra.mxu0 %v2124
        %2194 = vmatprep.subr.bf16.mxu0 0
        %2195 = vmatpush1.bf16.msra.mxu0 %v2147
        %2196 = vmatprep.subr.bf16.mxu0 0
        %2197 = vmatpush1.bf16.msra.mxu0 0
        %2198 = vmatprep.subr.bf16.mxu0 0
        %2199 = vmatpush1.bf16.msra.mxu0 0
        %2200 = vmatprep.subr.bf16.mxu0 0
        %2201 = vmatpush1.bf16.msra.mxu0 0
        %2202 = vmatprep.subr.bf16.mxu0 0
        %2203 = vmatpush1.bf16.msra.mxu0 0
        %2204 = vmatprep.subr.bf16.mxu0 0
        %2205 = vmatpush1.bf16.msra.mxu0 0
        %2206 = vmatprep.subr.bf16.mxu0 0
        %2207 = vmatpush1.bf16.msra.mxu0 0
        %2208 = vmatprep.subr.bf16.mxu0 0
        %2209 = vmatpush1.bf16.msra.mxu0 0
        %2210 = vmatprep.subr.bf16.mxu0 0
        %2211 = vmatpush1.bf16.msra.mxu0 0
        %2212 = vmatprep.subr.bf16.mxu0 0
        %2213 = vmatpush1.bf16.msra.mxu0 0
        %2214 = vmatprep.subr.bf16.mxu0 0
        %2215 = vmatpush1.bf16.msra.mxu0 0
        %2216 = vmatprep.subr.bf16.mxu0 0
        %2217 = vmatpush1.bf16.msra.mxu0 0
        %2218 = vmatprep.subr.bf16.mxu0 0
        %2219 = vmatpush1.bf16.msra.mxu0 0
        %2220 = vmatprep.subr.bf16.mxu0 0
        %2221 = vmatpush1.bf16.msra.mxu0 0
        %2222 = vmatprep.subr.bf16.mxu0 0
        %2223 = vmatpush1.bf16.msra.mxu0 0
        %2224 = vmatprep.mubr.bf16.mxu0 0
        %2225 = vmatmul.mubr.bf16.gmra.mrb[0].mxu0 %v2137
        %v2226 = vpop.f32.mrb[0].mxu0
        %v2227 = vadd.f32 0.0, %v2226
        %v2228 = vpop.f32.mrb[0].mxu0
        %v2229 = vpop.f32.mrb[0].mxu0
        %v2230 = vadd.f32 0.0, %v2229
        %v2231 = vpop.f32.mrb[0].mxu0
        %2232 = vdwg.mxu0
        %s2233 = scalar_lea.vmem %s4, 8
        %v2234 = vld [vmem:[%s2233] sm:$0xf]
        %v2235 = vld [vmem:[%s2233 + $0x4] sm:$0x3]
        %v2238 = vunpack.c.l.b16 %v2234
        %v2239 = vunpack.c.l.b16 %v2235
        %v2240 = vpack.c.b16 %v2239, %v2238
        %v2242 = vsel %vm2135, %v2240, 0
        %2244 = vmatprep.subr.bf16.mxu0 %v2123
        %2245 = vmatpush1.bf16.msra.mxu0 %v2122
        %2246 = vmatprep.subr.bf16.mxu0 %v2144
        %2247 = vmatpush1.bf16.msra.mxu0 %v2141
        %2248 = vmatprep.subr.bf16.mxu0 0
        %2249 = vmatpush1.bf16.msra.mxu0 0
        %2250 = vmatprep.subr.bf16.mxu0 0
        %2251 = vmatpush1.bf16.msra.mxu0 0
        %2252 = vmatprep.subr.bf16.mxu0 0
        %2253 = vmatpush1.bf16.msra.mxu0 0
        %2254 = vmatprep.subr.bf16.mxu0 0
        %2255 = vmatpush1.bf16.msra.mxu0 0
        %2256 = vmatprep.subr.bf16.mxu0 0
        %2257 = vmatpush1.bf16.msra.mxu0 0
        %2258 = vmatprep.subr.bf16.mxu0 0
        %2259 = vmatpush1.bf16.msra.mxu0 0
        %2260 = vmatprep.subr.bf16.mxu0 0
        %2261 = vmatpush1.bf16.msra.mxu0 0
        %2262 = vmatprep.subr.bf16.mxu0 0
        %2263 = vmatpush1.bf16.msra.mxu0 0
        %2264 = vmatprep.subr.bf16.mxu0 0
        %2265 = vmatpush1.bf16.msra.mxu0 0
        %2266 = vmatprep.subr.bf16.mxu0 0
        %2267 = vmatpush1.bf16.msra.mxu0 0
        %2268 = vmatprep.subr.bf16.mxu0 0
        %2269 = vmatpush1.bf16.msra.mxu0 0
        %2270 = vmatprep.subr.bf16.mxu0 0
        %2271 = vmatpush1.bf16.msra.mxu0 0
        %2272 = vmatprep.subr.bf16.mxu0 0
        %2273 = vmatpush1.bf16.msra.mxu0 0
        %2274 = vmatprep.subr.bf16.mxu0 0
        %2275 = vmatpush1.bf16.msra.mxu0 0
        %2276 = vmatprep.mubr.bf16.mxu0 0
        %2277 = vmatmul.mubr.bf16.gmra.mrb[0].mxu0 %v2242
        %v2278 = vpop.f32.mrb[0].mxu0
        %v2279 = vadd.f32 0.0, %v2278
        %v2280 = vpop.f32.mrb[0].mxu0
        %v2281 = vadd.f32 0.0, %v2280
        %v2282 = vpop.f32.mrb[0].mxu0
        %v2283 = vadd.f32 0.0, %v2282
        %v2284 = vpop.f32.mrb[0].mxu0
        %v2285 = vadd.f32 0.0, %v2284
        %2286 = vdwg.mxu0
        %2287 = vmatprep.subr.bf16.mxu0 0
        %2288 = vmatpush1.bf16.msra.mxu0 %v2124
        %2289 = vmatprep.subr.bf16.mxu0 0
        %2290 = vmatpush1.bf16.msra.mxu0 %v2147
        %2291 = vmatprep.subr.bf16.mxu0 0
        %2292 = vmatpush1.bf16.msra.mxu0 0
        %2293 = vmatprep.subr.bf16.mxu0 0
        %2294 = vmatpush1.bf16.msra.mxu0 0
        %2295 = vmatprep.subr.bf16.mxu0 0
        %2296 = vmatpush1.bf16.msra.mxu0 0
        %2297 = vmatprep.subr.bf16.mxu0 0
        %2298 = vmatpush1.bf16.msra.mxu0 0
        %2299 = vmatprep.subr.bf16.mxu0 0
        %2300 = vmatpush1.bf16.msra.mxu0 0
        %2301 = vmatprep.subr.bf16.mxu0 0
        %2302 = vmatpush1.bf16.msra.mxu0 0
        %2303 = vmatprep.subr.bf16.mxu0 0
        %2304 = vmatpush1.bf16.msra.mxu0 0
        %2305 = vmatprep.subr.bf16.mxu0 0
        %2306 = vmatpush1.bf16.msra.mxu0 0
        %2307 = vmatprep.subr.bf16.mxu0 0
        %2308 = vmatpush1.bf16.msra.mxu0 0
        %2309 = vmatprep.subr.bf16.mxu0 0
        %2310 = vmatpush1.bf16.msra.mxu0 0
        %2311 = vmatprep.subr.bf16.mxu0 0
        %2312 = vmatpush1.bf16.msra.mxu0 0
        %2313 = vmatprep.subr.bf16.mxu0 0
        %2314 = vmatpush1.bf16.msra.mxu0 0
        %2315 = vmatprep.subr.bf16.mxu0 0
        %2316 = vmatpush1.bf16.msra.mxu0 0
        %2317 = vmatprep.subr.bf16.mxu0 0
        %2318 = vmatpush1.bf16.msra.mxu0 0
        %2319 = vmatprep.mubr.bf16.mxu0 0
        %2320 = vmatmul.mubr.bf16.gmra.mrb[0].mxu0 %v2242
        %v2321 = vpop.f32.mrb[0].mxu0
        %v2322 = vadd.f32 0.0, %v2321
        %v2323 = vpop.f32.mrb[0].mxu0
        %v2324 = vpop.f32.mrb[0].mxu0
        %v2325 = vadd.f32 0.0, %v2324
        %v2326 = vpop.f32.mrb[0].mxu0
        %2327 = vdwg.mxu0
        %v2328 = vmax.f32 %v2184, %v2279
        %v2329 = vmax.f32 %v2186, %v2281
        %v2330 = vmax.f32 %v2227, %v2322
        %v2331 = vmax.f32 %v2188, %v2283
        %v2332 = vmax.f32 %v2190, %v2285
        %v2333 = vmax.f32 %v2230, %v2325
        %v2334 = vpack.c.bf16 %v2331, %v2328
        %v2335 = vpack.c.bf16 %v2332, %v2329
        %v2336 = vpack.c.bf16 %v2333, %v2330
        %v2337 = vld [vmem:[%s5] sm:$0xff]
        %v2338 = vld [vmem:[%s5 + $0x8] sm:$0xff]
        %v2339 = vld [vmem:[%s5 + $0x10] sm:$0xff]
        %v2340 = vld [vmem:[%s5 + $0x18] sm:$0xff]
        %v2341 = vld [vmem:[%s5 + $0x20] sm:$0xff]
        %v2342 = vld [vmem:[%s5 + $0x28] sm:$0xff]
        %v2343 = vld [vmem:[%s5 + $0x30] sm:$0xff]
        %v2344 = vld [vmem:[%s5 + $0x38] sm:$0xff]
        %v2345 = vld [vmem:[%s5 + $0x40] sm:$0xff]
        %v2346 = vld [vmem:[%s5 + $0x48] sm:$0xff]
        %v2347 = vld [vmem:[%s5 + $0x50] sm:$0xff]
        %v2348 = vld [vmem:[%s5 + $0x58] sm:$0xff]
        %v2349 = vld [vmem:[%s5 + $0x60] sm:$0xff]
        %v2350 = vld [vmem:[%s5 + $0x68] sm:$0xff]
        %v2351 = vld [vmem:[%s5 + $0x70] sm:$0xff]
        %v2352 = vld [vmem:[%s5 + $0x78] sm:$0xff]
        %v2353 = vld [vmem:[%s5 + $0x80] sm:$0xff]
        %v2354 = vld [vmem:[%s5 + $0x88] sm:$0xff]
        %v2355 = vld [vmem:[%s5 + $0x90] sm:$0xff]
        %v2356 = vld [vmem:[%s5 + $0x98] sm:$0xff]
        %v2357 = vld [vmem:[%s5 + $0xa0] sm:$0xff]
        %v2358 = vld [vmem:[%s5 + $0xa8] sm:$0xff]
        %v2359 = vld [vmem:[%s5 + $0xb0] sm:$0xff]
        %v2360 = vld [vmem:[%s5 + $0xb8] sm:$0xff]
        %v2361 = vld [vmem:[%s5 + $0xc0] sm:$0xff]
        %v2362 = vld [vmem:[%s5 + $0xc8] sm:$0xff]
        %v2363 = vld [vmem:[%s5 + $0xd0] sm:$0xff]
        %v2364 = vld [vmem:[%s5 + $0xd8] sm:$0xff]
        %v2365 = vld [vmem:[%s5 + $0xe0] sm:$0xff]
        %v2366 = vld [vmem:[%s5 + $0xe8] sm:$0xff]
        %v2367 = vld [vmem:[%s5 + $0xf0] sm:$0xff]
        %v2368 = vld [vmem:[%s5 + $0xf8] sm:$0xff]
        %v2369 = vld [vmem:[%s5 + $0x100] sm:$0xff]
        %v2370 = vld [vmem:[%s5 + $0x108] sm:$0xff]
        %v2371 = vld [vmem:[%s5 + $0x110] sm:$0xff]
        %v2372 = vld [vmem:[%s5 + $0x118] sm:$0xff]
        %v2373 = vld [vmem:[%s5 + $0x120] sm:$0xff]
        %v2374 = vld [vmem:[%s5 + $0x128] sm:$0xff]
        %v2375 = vld [vmem:[%s5 + $0x130] sm:$0xff]
        %v2376 = vld [vmem:[%s5 + $0x138] sm:$0xff]
        %v2377 = vld [vmem:[%s5 + $0x140] sm:$0xff]
        %v2378 = vld [vmem:[%s5 + $0x148] sm:$0xff]
        %v2379 = vld [vmem:[%s5 + $0x150] sm:$0xff]
        %v2380 = vld [vmem:[%s5 + $0x158] sm:$0xff]
        %v2381 = vld [vmem:[%s5 + $0x160] sm:$0xff]
        %v2382 = vld [vmem:[%s5 + $0x168] sm:$0xff]
        %v2383 = vld [vmem:[%s5 + $0x170] sm:$0xff]
        %v2384 = vld [vmem:[%s5 + $0x178] sm:$0xff]
        %v2433 = vunpack.c.l.b16 %v2337
        %v2434 = vunpack.c.h.b16 %v2337
        %v2435 = vunpack.c.l.b16 %v2338
        %v2436 = vunpack.c.h.b16 %v2338
        %v2437 = vunpack.c.l.b16 %v2339
        %v2438 = vunpack.c.h.b16 %v2339
        %v2439 = vunpack.c.l.b16 %v2340
        %v2440 = vunpack.c.h.b16 %v2340
        %v2441 = vunpack.c.l.b16 %v2341
        %v2442 = vunpack.c.h.b16 %v2341
        %v2443 = vunpack.c.l.b16 %v2342
        %v2444 = vunpack.c.h.b16 %v2342
        %v2445 = vunpack.c.l.b16 %v2343
        %v2446 = vunpack.c.h.b16 %v2343
        %v2447 = vunpack.c.l.b16 %v2344
        %v2448 = vunpack.c.h.b16 %v2344
        %v2449 = vunpack.c.l.b16 %v2345
        %v2450 = vunpack.c.h.b16 %v2345
        %v2451 = vunpack.c.l.b16 %v2346
        %v2452 = vunpack.c.h.b16 %v2346
        %v2453 = vunpack.c.l.b16 %v2347
        %v2454 = vunpack.c.h.b16 %v2347
        %v2455 = vunpack.c.l.b16 %v2348
        %v2456 = vunpack.c.h.b16 %v2348
        %v2457 = vunpack.c.l.b16 %v2349
        %v2458 = vunpack.c.h.b16 %v2349
        %v2459 = vunpack.c.l.b16 %v2350
        %v2460 = vunpack.c.h.b16 %v2350
        %v2461 = vunpack.c.l.b16 %v2351
        %v2462 = vunpack.c.h.b16 %v2351
        %v2463 = vunpack.c.l.b16 %v2352
        %v2464 = vunpack.c.h.b16 %v2352
        %v2465 = vunpack.c.l.b16 %v2353
        %v2466 = vunpack.c.h.b16 %v2353
        %v2467 = vunpack.c.l.b16 %v2354
        %v2468 = vunpack.c.h.b16 %v2354
        %v2469 = vunpack.c.l.b16 %v2355
        %v2470 = vunpack.c.h.b16 %v2355
        %v2471 = vunpack.c.l.b16 %v2356
        %v2472 = vunpack.c.h.b16 %v2356
        %v2473 = vunpack.c.l.b16 %v2357
        %v2474 = vunpack.c.h.b16 %v2357
        %v2475 = vunpack.c.l.b16 %v2358
        %v2476 = vunpack.c.h.b16 %v2358
        %v2477 = vunpack.c.l.b16 %v2359
        %v2478 = vunpack.c.h.b16 %v2359
        %v2479 = vunpack.c.l.b16 %v2360
        %v2480 = vunpack.c.h.b16 %v2360
        %v2481 = vunpack.c.l.b16 %v2361
        %v2482 = vunpack.c.h.b16 %v2361
        %v2483 = vunpack.c.l.b16 %v2362
        %v2484 = vunpack.c.h.b16 %v2362
        %v2485 = vunpack.c.l.b16 %v2363
        %v2486 = vunpack.c.h.b16 %v2363
        %v2487 = vunpack.c.l.b16 %v2364
        %v2488 = vunpack.c.h.b16 %v2364
        %v2489 = vunpack.c.l.b16 %v2365
        %v2490 = vunpack.c.h.b16 %v2365
        %v2491 = vunpack.c.l.b16 %v2366
        %v2492 = vunpack.c.h.b16 %v2366
        %v2493 = vunpack.c.l.b16 %v2367
        %v2494 = vunpack.c.h.b16 %v2367
        %v2495 = vunpack.c.l.b16 %v2368
        %v2496 = vunpack.c.h.b16 %v2368
        %v2497 = vunpack.c.l.b16 %v2369
        %v2498 = vunpack.c.h.b16 %v2369
        %v2499 = vunpack.c.l.b16 %v2370
        %v2500 = vunpack.c.h.b16 %v2370
        %v2501 = vunpack.c.l.b16 %v2371
        %v2502 = vunpack.c.h.b16 %v2371
        %v2503 = vunpack.c.l.b16 %v2372
        %v2504 = vunpack.c.h.b16 %v2372
        %v2505 = vunpack.c.l.b16 %v2373
        %v2506 = vunpack.c.h.b16 %v2373
        %v2507 = vunpack.c.l.b16 %v2374
        %v2508 = vunpack.c.h.b16 %v2374
        %v2509 = vunpack.c.l.b16 %v2375
        %v2510 = vunpack.c.h.b16 %v2375
        %v2511 = vunpack.c.l.b16 %v2376
        %v2512 = vunpack.c.h.b16 %v2376
        %v2513 = vunpack.c.l.b16 %v2377
        %v2514 = vunpack.c.h.b16 %v2377
        %v2515 = vunpack.c.l.b16 %v2378
        %v2516 = vunpack.c.h.b16 %v2378
        %v2517 = vunpack.c.l.b16 %v2379
        %v2518 = vunpack.c.h.b16 %v2379
        %v2519 = vunpack.c.l.b16 %v2380
        %v2520 = vunpack.c.h.b16 %v2380
        %v2521 = vunpack.c.l.b16 %v2381
        %v2522 = vunpack.c.h.b16 %v2381
        %v2523 = vunpack.c.l.b16 %v2382
        %v2524 = vunpack.c.h.b16 %v2382
        %v2525 = vunpack.c.l.b16 %v2383
        %v2526 = vunpack.c.h.b16 %v2383
        %v2527 = vunpack.c.l.b16 %v2384
        %v2528 = vunpack.c.h.b16 %v2384
        %v2529 = vpack.c.b16 %v2435, %v2433
        %v2530 = vpack.c.b16 %v2436, %v2434
        %v2531 = vpack.c.b16 %v2439, %v2437
        %v2532 = vpack.c.b16 %v2440, %v2438
        %v2533 = vpack.c.b16 %v2443, %v2441
        %v2534 = vpack.c.b16 %v2444, %v2442
        %v2535 = vpack.c.b16 %v2447, %v2445
        %v2536 = vpack.c.b16 %v2448, %v2446
        %v2537 = vpack.c.b16 %v2451, %v2449
        %v2538 = vpack.c.b16 %v2452, %v2450
        %v2539 = vpack.c.b16 %v2455, %v2453
        %v2540 = vpack.c.b16 %v2456, %v2454
        %v2541 = vpack.c.b16 %v2459, %v2457
        %v2542 = vpack.c.b16 %v2460, %v2458
        %v2543 = vpack.c.b16 %v2463, %v2461
        %v2544 = vpack.c.b16 %v2464, %v2462
        %v2545 = vpack.c.b16 %v2467, %v2465
        %v2546 = vpack.c.b16 %v2468, %v2466
        %v2547 = vpack.c.b16 %v2471, %v2469
        %v2548 = vpack.c.b16 %v2472, %v2470
        %v2549 = vpack.c.b16 %v2475, %v2473
        %v2550 = vpack.c.b16 %v2476, %v2474
        %v2551 = vpack.c.b16 %v2479, %v2477
        %v2552 = vpack.c.b16 %v2480, %v2478
        %v2553 = vpack.c.b16 %v2483, %v2481
        %v2554 = vpack.c.b16 %v2484, %v2482
        %v2555 = vpack.c.b16 %v2487, %v2485
        %v2556 = vpack.c.b16 %v2488, %v2486
        %v2557 = vpack.c.b16 %v2491, %v2489
        %v2558 = vpack.c.b16 %v2492, %v2490
        %v2559 = vpack.c.b16 %v2495, %v2493
        %v2560 = vpack.c.b16 %v2496, %v2494
        %v2561 = vpack.c.b16 %v2499, %v2497
        %v2562 = vpack.c.b16 %v2500, %v2498
        %v2563 = vpack.c.b16 %v2503, %v2501
        %v2564 = vpack.c.b16 %v2504, %v2502
        %v2565 = vpack.c.b16 %v2507, %v2505
        %v2566 = vpack.c.b16 %v2508, %v2506
        %v2567 = vpack.c.b16 %v2511, %v2509
        %v2568 = vpack.c.b16 %v2512, %v2510
        %v2569 = vpack.c.b16 %v2515, %v2513
        %v2570 = vpack.c.b16 %v2516, %v2514
        %v2571 = vpack.c.b16 %v2519, %v2517
        %v2572 = vpack.c.b16 %v2520, %v2518
        %v2573 = vpack.c.b16 %v2523, %v2521
        %v2574 = vpack.c.b16 %v2524, %v2522
        %v2575 = vpack.c.b16 %v2527, %v2525
        %v2576 = vpack.c.b16 %v2528, %v2526
        %2625 = vmatprep.subr.bf16.mxu0 %v2530
        %2626 = vmatpush1.bf16.msra.mxu0 %v2529
        %2627 = vmatprep.subr.bf16.mxu0 %v2532
        %2628 = vmatpush1.bf16.msra.mxu0 %v2531
        %2629 = vmatprep.subr.bf16.mxu0 %v2534
        %2630 = vmatpush1.bf16.msra.mxu0 %v2533
        %2631 = vmatprep.subr.bf16.mxu0 %v2536
        %2632 = vmatpush1.bf16.msra.mxu0 %v2535
        %2633 = vmatprep.subr.bf16.mxu0 %v2538
        %2634 = vmatpush1.bf16.msra.mxu0 %v2537
        %2635 = vmatprep.subr.bf16.mxu0 %v2540
        %2636 = vmatpush1.bf16.msra.mxu0 %v2539
        %2637 = vmatprep.subr.bf16.mxu0 %v2542
        %2638 = vmatpush1.bf16.msra.mxu0 %v2541
        %2639 = vmatprep.subr.bf16.mxu0 %v2544
        %2640 = vmatpush1.bf16.msra.mxu0 %v2543
        %2641 = vmatprep.subr.bf16.mxu0 %v2546
        %2642 = vmatpush1.bf16.msra.mxu0 %v2545
        %2643 = vmatprep.subr.bf16.mxu0 %v2548
        %2644 = vmatpush1.bf16.msra.mxu0 %v2547
        %2645 = vmatprep.subr.bf16.mxu0 %v2550
        %2646 = vmatpush1.bf16.msra.mxu0 %v2549
        %2647 = vmatprep.subr.bf16.mxu0 %v2552
        %2648 = vmatpush1.bf16.msra.mxu0 %v2551
        %2649 = vmatprep.subr.bf16.mxu0 %v2554
        %2650 = vmatpush1.bf16.msra.mxu0 %v2553
        %2651 = vmatprep.subr.bf16.mxu0 %v2556
        %2652 = vmatpush1.bf16.msra.mxu0 %v2555
        %2653 = vmatprep.subr.bf16.mxu0 %v2558
        %2654 = vmatpush1.bf16.msra.mxu0 %v2557
        %2655 = vmatprep.subr.bf16.mxu0 %v2560
        %2656 = vmatpush1.bf16.msra.mxu0 %v2559
        %2657 = vmatprep.mubr.bf16.mxu0 %v2335
        %2658 = vmatmul.mubr.bf16.gmra.mrb[0].mxu0 %v2334
        %v2659 = vpop.f32.mrb[0].mxu0
        %v2660 = vadd.f32 0.0, %v2659
        %v2661 = vpop.f32.mrb[0].mxu0
        %v2662 = vadd.f32 0.0, %v2661
        %v2663 = vpop.f32.mrb[0].mxu0
        %v2664 = vadd.f32 0.0, %v2663
        %v2665 = vpop.f32.mrb[0].mxu0
        %v2666 = vadd.f32 0.0, %v2665
        %2667 = vdwg.mxu0
        %2668 = vmatprep.subr.bf16.mxu0 %v2562
        %2669 = vmatpush1.bf16.msra.mxu0 %v2561
        %2670 = vmatprep.subr.bf16.mxu0 %v2564
        %2671 = vmatpush1.bf16.msra.mxu0 %v2563
        %2672 = vmatprep.subr.bf16.mxu0 %v2566
        %2673 = vmatpush1.bf16.msra.mxu0 %v2565
        %2674 = vmatprep.subr.bf16.mxu0 %v2568
        %2675 = vmatpush1.bf16.msra.mxu0 %v2567
        %2676 = vmatprep.subr.bf16.mxu0 %v2570
        %2677 = vmatpush1.bf16.msra.mxu0 %v2569
        %2678 = vmatprep.subr.bf16.mxu0 %v2572
        %2679 = vmatpush1.bf16.msra.mxu0 %v2571
        %2680 = vmatprep.subr.bf16.mxu0 %v2574
        %2681 = vmatpush1.bf16.msra.mxu0 %v2573
        %2682 = vmatprep.subr.bf16.mxu0 %v2576
        %2683 = vmatpush1.bf16.msra.mxu0 %v2575
        %2684 = vmatprep.subr.bf16.mxu0 0
        %2685 = vmatpush1.bf16.msra.mxu0 0
        %2686 = vmatprep.subr.bf16.mxu0 0
        %2687 = vmatpush1.bf16.msra.mxu0 0
        %2688 = vmatprep.subr.bf16.mxu0 0
        %2689 = vmatpush1.bf16.msra.mxu0 0
        %2690 = vmatprep.subr.bf16.mxu0 0
        %2691 = vmatpush1.bf16.msra.mxu0 0
        %2692 = vmatprep.subr.bf16.mxu0 0
        %2693 = vmatpush1.bf16.msra.mxu0 0
        %2694 = vmatprep.subr.bf16.mxu0 0
        %2695 = vmatpush1.bf16.msra.mxu0 0
        %2696 = vmatprep.subr.bf16.mxu0 0
        %2697 = vmatpush1.bf16.msra.mxu0 0
        %2698 = vmatprep.subr.bf16.mxu0 0
        %2699 = vmatpush1.bf16.msra.mxu0 0
        %2700 = vmatprep.mubr.bf16.mxu0 0
        %2701 = vmatmul.mubr.bf16.gmra.mrb[0].mxu0 %v2336
        %v2702 = vpop.f32.mrb[0].mxu0
        %v2703 = vadd.f32 %v2660, %v2702
        %v2704 = vpop.f32.mrb[0].mxu0
        %v2705 = vadd.f32 %v2662, %v2704
        %v2706 = vpop.f32.mrb[0].mxu0
        %v2707 = vadd.f32 %v2664, %v2706
        %v2708 = vpop.f32.mrb[0].mxu0
        %v2709 = vadd.f32 %v2666, %v2708
        %2710 = vdwg.mxu0
        %s2711 = scalar_lea.vmem %s5, 384
        %v2712 = vld [vmem:[%s2711] sm:$0xff]
        %v2713 = vld [vmem:[%s2711 + $0x8] sm:$0xff]
        %v2714 = vld [vmem:[%s2711 + $0x10] sm:$0xff]
        %v2715 = vld [vmem:[%s2711 + $0x18] sm:$0xff]
        %v2716 = vld [vmem:[%s2711 + $0x20] sm:$0xff]
        %v2717 = vld [vmem:[%s2711 + $0x28] sm:$0xff]
        %v2718 = vld [vmem:[%s2711 + $0x30] sm:$0xff]
        %v2719 = vld [vmem:[%s2711 + $0x38] sm:$0xff]
        %v2720 = vld [vmem:[%s2711 + $0x40] sm:$0xff]
        %v2721 = vld [vmem:[%s2711 + $0x48] sm:$0xff]
        %v2722 = vld [vmem:[%s2711 + $0x50] sm:$0xff]
        %v2723 = vld [vmem:[%s2711 + $0x58] sm:$0xff]
        %v2724 = vld [vmem:[%s2711 + $0x60] sm:$0xff]
        %v2725 = vld [vmem:[%s2711 + $0x68] sm:$0xff]
        %v2726 = vld [vmem:[%s2711 + $0x70] sm:$0xff]
        %v2727 = vld [vmem:[%s2711 + $0x78] sm:$0xff]
        %v2728 = vld [vmem:[%s2711 + $0x80] sm:$0xff]
        %v2729 = vld [vmem:[%s2711 + $0x88] sm:$0xff]
        %v2730 = vld [vmem:[%s2711 + $0x90] sm:$0xff]
        %v2731 = vld [vmem:[%s2711 + $0x98] sm:$0xff]
        %v2732 = vld [vmem:[%s2711 + $0xa0] sm:$0xff]
        %v2733 = vld [vmem:[%s2711 + $0xa8] sm:$0xff]
        %v2734 = vld [vmem:[%s2711 + $0xb0] sm:$0xff]
        %v2735 = vld [vmem:[%s2711 + $0xb8] sm:$0xff]
        %v2736 = vld [vmem:[%s2711 + $0xc0] sm:$0xff]
        %v2737 = vld [vmem:[%s2711 + $0xc8] sm:$0xff]
        %v2738 = vld [vmem:[%s2711 + $0xd0] sm:$0xff]
        %v2739 = vld [vmem:[%s2711 + $0xd8] sm:$0xff]
        %v2740 = vld [vmem:[%s2711 + $0xe0] sm:$0xff]
        %v2741 = vld [vmem:[%s2711 + $0xe8] sm:$0xff]
        %v2742 = vld [vmem:[%s2711 + $0xf0] sm:$0xff]
        %v2743 = vld [vmem:[%s2711 + $0xf8] sm:$0xff]
        %v2744 = vld [vmem:[%s2711 + $0x100] sm:$0xff]
        %v2745 = vld [vmem:[%s2711 + $0x108] sm:$0xff]
        %v2746 = vld [vmem:[%s2711 + $0x110] sm:$0xff]
        %v2747 = vld [vmem:[%s2711 + $0x118] sm:$0xff]
        %v2748 = vld [vmem:[%s2711 + $0x120] sm:$0xff]
        %v2749 = vld [vmem:[%s2711 + $0x128] sm:$0xff]
        %v2750 = vld [vmem:[%s2711 + $0x130] sm:$0xff]
        %v2751 = vld [vmem:[%s2711 + $0x138] sm:$0xff]
        %v2752 = vld [vmem:[%s2711 + $0x140] sm:$0xff]
        %v2753 = vld [vmem:[%s2711 + $0x148] sm:$0xff]
        %v2754 = vld [vmem:[%s2711 + $0x150] sm:$0xff]
        %v2755 = vld [vmem:[%s2711 + $0x158] sm:$0xff]
        %v2756 = vld [vmem:[%s2711 + $0x160] sm:$0xff]
        %v2757 = vld [vmem:[%s2711 + $0x168] sm:$0xff]
        %v2758 = vld [vmem:[%s2711 + $0x170] sm:$0xff]
        %v2759 = vld [vmem:[%s2711 + $0x178] sm:$0xff]
        %v2808 = vunpack.c.l.b16 %v2712
        %v2809 = vunpack.c.h.b16 %v2712
        %v2810 = vunpack.c.l.b16 %v2713
        %v2811 = vunpack.c.h.b16 %v2713
        %v2812 = vunpack.c.l.b16 %v2714
        %v2813 = vunpack.c.h.b16 %v2714
        %v2814 = vunpack.c.l.b16 %v2715
        %v2815 = vunpack.c.h.b16 %v2715
        %v2816 = vunpack.c.l.b16 %v2716
        %v2817 = vunpack.c.h.b16 %v2716
        %v2818 = vunpack.c.l.b16 %v2717
        %v2819 = vunpack.c.h.b16 %v2717
        %v2820 = vunpack.c.l.b16 %v2718
        %v2821 = vunpack.c.h.b16 %v2718
        %v2822 = vunpack.c.l.b16 %v2719
        %v2823 = vunpack.c.h.b16 %v2719
        %v2824 = vunpack.c.l.b16 %v2720
        %v2825 = vunpack.c.h.b16 %v2720
        %v2826 = vunpack.c.l.b16 %v2721
        %v2827 = vunpack.c.h.b16 %v2721
        %v2828 = vunpack.c.l.b16 %v2722
        %v2829 = vunpack.c.h.b16 %v2722
        %v2830 = vunpack.c.l.b16 %v2723
        %v2831 = vunpack.c.h.b16 %v2723
        %v2832 = vunpack.c.l.b16 %v2724
        %v2833 = vunpack.c.h.b16 %v2724
        %v2834 = vunpack.c.l.b16 %v2725
        %v2835 = vunpack.c.h.b16 %v2725
        %v2836 = vunpack.c.l.b16 %v2726
        %v2837 = vunpack.c.h.b16 %v2726
        %v2838 = vunpack.c.l.b16 %v2727
        %v2839 = vunpack.c.h.b16 %v2727
        %v2840 = vunpack.c.l.b16 %v2728
        %v2841 = vunpack.c.h.b16 %v2728
        %v2842 = vunpack.c.l.b16 %v2729
        %v2843 = vunpack.c.h.b16 %v2729
        %v2844 = vunpack.c.l.b16 %v2730
        %v2845 = vunpack.c.h.b16 %v2730
        %v2846 = vunpack.c.l.b16 %v2731
        %v2847 = vunpack.c.h.b16 %v2731
        %v2848 = vunpack.c.l.b16 %v2732
        %v2849 = vunpack.c.h.b16 %v2732
        %v2850 = vunpack.c.l.b16 %v2733
        %v2851 = vunpack.c.h.b16 %v2733
        %v2852 = vunpack.c.l.b16 %v2734
        %v2853 = vunpack.c.h.b16 %v2734
        %v2854 = vunpack.c.l.b16 %v2735
        %v2855 = vunpack.c.h.b16 %v2735
        %v2856 = vunpack.c.l.b16 %v2736
        %v2857 = vunpack.c.h.b16 %v2736
        %v2858 = vunpack.c.l.b16 %v2737
        %v2859 = vunpack.c.h.b16 %v2737
        %v2860 = vunpack.c.l.b16 %v2738
        %v2861 = vunpack.c.h.b16 %v2738
        %v2862 = vunpack.c.l.b16 %v2739
        %v2863 = vunpack.c.h.b16 %v2739
        %v2864 = vunpack.c.l.b16 %v2740
        %v2865 = vunpack.c.h.b16 %v2740
        %v2866 = vunpack.c.l.b16 %v2741
        %v2867 = vunpack.c.h.b16 %v2741
        %v2868 = vunpack.c.l.b16 %v2742
        %v2869 = vunpack.c.h.b16 %v2742
        %v2870 = vunpack.c.l.b16 %v2743
        %v2871 = vunpack.c.h.b16 %v2743
        %v2872 = vunpack.c.l.b16 %v2744
        %v2873 = vunpack.c.h.b16 %v2744
        %v2874 = vunpack.c.l.b16 %v2745
        %v2875 = vunpack.c.h.b16 %v2745
        %v2876 = vunpack.c.l.b16 %v2746
        %v2877 = vunpack.c.h.b16 %v2746
        %v2878 = vunpack.c.l.b16 %v2747
        %v2879 = vunpack.c.h.b16 %v2747
        %v2880 = vunpack.c.l.b16 %v2748
        %v2881 = vunpack.c.h.b16 %v2748
        %v2882 = vunpack.c.l.b16 %v2749
        %v2883 = vunpack.c.h.b16 %v2749
        %v2884 = vunpack.c.l.b16 %v2750
        %v2885 = vunpack.c.h.b16 %v2750
        %v2886 = vunpack.c.l.b16 %v2751
        %v2887 = vunpack.c.h.b16 %v2751
        %v2888 = vunpack.c.l.b16 %v2752
        %v2889 = vunpack.c.h.b16 %v2752
        %v2890 = vunpack.c.l.b16 %v2753
        %v2891 = vunpack.c.h.b16 %v2753
        %v2892 = vunpack.c.l.b16 %v2754
        %v2893 = vunpack.c.h.b16 %v2754
        %v2894 = vunpack.c.l.b16 %v2755
        %v2895 = vunpack.c.h.b16 %v2755
        %v2896 = vunpack.c.l.b16 %v2756
        %v2897 = vunpack.c.h.b16 %v2756
        %v2898 = vunpack.c.l.b16 %v2757
        %v2899 = vunpack.c.h.b16 %v2757
        %v2900 = vunpack.c.l.b16 %v2758
        %v2901 = vunpack.c.h.b16 %v2758
        %v2902 = vunpack.c.l.b16 %v2759
        %v2903 = vunpack.c.h.b16 %v2759
        %v2904 = vpack.c.b16 %v2810, %v2808
        %v2905 = vpack.c.b16 %v2811, %v2809
        %v2906 = vpack.c.b16 %v2814, %v2812
        %v2907 = vpack.c.b16 %v2815, %v2813
        %v2908 = vpack.c.b16 %v2818, %v2816
        %v2909 = vpack.c.b16 %v2819, %v2817
        %v2910 = vpack.c.b16 %v2822, %v2820
        %v2911 = vpack.c.b16 %v2823, %v2821
        %v2912 = vpack.c.b16 %v2826, %v2824
        %v2913 = vpack.c.b16 %v2827, %v2825
        %v2914 = vpack.c.b16 %v2830, %v2828
        %v2915 = vpack.c.b16 %v2831, %v2829
        %v2916 = vpack.c.b16 %v2834, %v2832
        %v2917 = vpack.c.b16 %v2835, %v2833
        %v2918 = vpack.c.b16 %v2838, %v2836
        %v2919 = vpack.c.b16 %v2839, %v2837
        %v2920 = vpack.c.b16 %v2842, %v2840
        %v2921 = vpack.c.b16 %v2843, %v2841
        %v2922 = vpack.c.b16 %v2846, %v2844
        %v2923 = vpack.c.b16 %v2847, %v2845
        %v2924 = vpack.c.b16 %v2850, %v2848
        %v2925 = vpack.c.b16 %v2851, %v2849
        %v2926 = vpack.c.b16 %v2854, %v2852
        %v2927 = vpack.c.b16 %v2855, %v2853
        %v2928 = vpack.c.b16 %v2858, %v2856
        %v2929 = vpack.c.b16 %v2859, %v2857
        %v2930 = vpack.c.b16 %v2862, %v2860
        %v2931 = vpack.c.b16 %v2863, %v2861
        %v2932 = vpack.c.b16 %v2866, %v2864
        %v2933 = vpack.c.b16 %v2867, %v2865
        %v2934 = vpack.c.b16 %v2870, %v2868
        %v2935 = vpack.c.b16 %v2871, %v2869
        %v2936 = vpack.c.b16 %v2874, %v2872
        %v2937 = vpack.c.b16 %v2875, %v2873
        %v2938 = vpack.c.b16 %v2878, %v2876
        %v2939 = vpack.c.b16 %v2879, %v2877
        %v2940 = vpack.c.b16 %v2882, %v2880
        %v2941 = vpack.c.b16 %v2883, %v2881
        %v2942 = vpack.c.b16 %v2886, %v2884
        %v2943 = vpack.c.b16 %v2887, %v2885
        %v2944 = vpack.c.b16 %v2890, %v2888
        %v2945 = vpack.c.b16 %v2891, %v2889
        %v2946 = vpack.c.b16 %v2894, %v2892
        %v2947 = vpack.c.b16 %v2895, %v2893
        %v2948 = vpack.c.b16 %v2898, %v2896
        %v2949 = vpack.c.b16 %v2899, %v2897
        %v2950 = vpack.c.b16 %v2902, %v2900
        %v2951 = vpack.c.b16 %v2903, %v2901
        %3000 = vmatprep.subr.bf16.mxu0 %v2905
        %3001 = vmatpush1.bf16.msra.mxu0 %v2904
        %3002 = vmatprep.subr.bf16.mxu0 %v2907
        %3003 = vmatpush1.bf16.msra.mxu0 %v2906
        %3004 = vmatprep.subr.bf16.mxu0 %v2909
        %3005 = vmatpush1.bf16.msra.mxu0 %v2908
        %3006 = vmatprep.subr.bf16.mxu0 %v2911
        %3007 = vmatpush1.bf16.msra.mxu0 %v2910
        %3008 = vmatprep.subr.bf16.mxu0 %v2913
        %3009 = vmatpush1.bf16.msra.mxu0 %v2912
        %3010 = vmatprep.subr.bf16.mxu0 %v2915
        %3011 = vmatpush1.bf16.msra.mxu0 %v2914
        %3012 = vmatprep.subr.bf16.mxu0 %v2917
        %3013 = vmatpush1.bf16.msra.mxu0 %v2916
        %3014 = vmatprep.subr.bf16.mxu0 %v2919
        %3015 = vmatpush1.bf16.msra.mxu0 %v2918
        %3016 = vmatprep.subr.bf16.mxu0 %v2921
        %3017 = vmatpush1.bf16.msra.mxu0 %v2920
        %3018 = vmatprep.subr.bf16.mxu0 %v2923
        %3019 = vmatpush1.bf16.msra.mxu0 %v2922
        %3020 = vmatprep.subr.bf16.mxu0 %v2925
        %3021 = vmatpush1.bf16.msra.mxu0 %v2924
        %3022 = vmatprep.subr.bf16.mxu0 %v2927
        %3023 = vmatpush1.bf16.msra.mxu0 %v2926
        %3024 = vmatprep.subr.bf16.mxu0 %v2929
        %3025 = vmatpush1.bf16.msra.mxu0 %v2928
        %3026 = vmatprep.subr.bf16.mxu0 %v2931
        %3027 = vmatpush1.bf16.msra.mxu0 %v2930
        %3028 = vmatprep.subr.bf16.mxu0 %v2933
        %3029 = vmatpush1.bf16.msra.mxu0 %v2932
        %3030 = vmatprep.subr.bf16.mxu0 %v2935
        %3031 = vmatpush1.bf16.msra.mxu0 %v2934
        %3032 = vmatprep.mubr.bf16.mxu0 %v2335
        %3033 = vmatmul.mubr.bf16.gmra.mrb[0].mxu0 %v2334
        %v3034 = vpop.f32.mrb[0].mxu0
        %v3035 = vadd.f32 0.0, %v3034
        %v3036 = vpop.f32.mrb[0].mxu0
        %v3037 = vadd.f32 0.0, %v3036
        %v3038 = vpop.f32.mrb[0].mxu0
        %v3039 = vadd.f32 0.0, %v3038
        %v3040 = vpop.f32.mrb[0].mxu0
        %v3041 = vadd.f32 0.0, %v3040
        %3042 = vdwg.mxu0
        %3043 = vmatprep.subr.bf16.mxu0 %v2937
        %3044 = vmatpush1.bf16.msra.mxu0 %v2936
        %3045 = vmatprep.subr.bf16.mxu0 %v2939
        %3046 = vmatpush1.bf16.msra.mxu0 %v2938
        %3047 = vmatprep.subr.bf16.mxu0 %v2941
        %3048 = vmatpush1.bf16.msra.mxu0 %v2940
        %3049 = vmatprep.subr.bf16.mxu0 %v2943
        %3050 = vmatpush1.bf16.msra.mxu0 %v2942
        %3051 = vmatprep.subr.bf16.mxu0 %v2945
        %3052 = vmatpush1.bf16.msra.mxu0 %v2944
        %3053 = vmatprep.subr.bf16.mxu0 %v2947
        %3054 = vmatpush1.bf16.msra.mxu0 %v2946
        %3055 = vmatprep.subr.bf16.mxu0 %v2949
        %3056 = vmatpush1.bf16.msra.mxu0 %v2948
        %3057 = vmatprep.subr.bf16.mxu0 %v2951
        %3058 = vmatpush1.bf16.msra.mxu0 %v2950
        %3059 = vmatprep.subr.bf16.mxu0 0
        %3060 = vmatpush1.bf16.msra.mxu0 0
        %3061 = vmatprep.subr.bf16.mxu0 0
        %3062 = vmatpush1.bf16.msra.mxu0 0
        %3063 = vmatprep.subr.bf16.mxu0 0
        %3064 = vmatpush1.bf16.msra.mxu0 0
        %3065 = vmatprep.subr.bf16.mxu0 0
        %3066 = vmatpush1.bf16.msra.mxu0 0
        %3067 = vmatprep.subr.bf16.mxu0 0
        %3068 = vmatpush1.bf16.msra.mxu0 0
        %3069 = vmatprep.subr.bf16.mxu0 0
        %3070 = vmatpush1.bf16.msra.mxu0 0
        %3071 = vmatprep.subr.bf16.mxu0 0
        %3072 = vmatpush1.bf16.msra.mxu0 0
        %3073 = vmatprep.subr.bf16.mxu0 0
        %3074 = vmatpush1.bf16.msra.mxu0 0
        %3075 = vmatprep.mubr.bf16.mxu0 0
        %3076 = vmatmul.mubr.bf16.gmra.mrb[0].mxu0 %v2336
        %v3077 = vpop.f32.mrb[0].mxu0
        %v3078 = vadd.f32 %v3035, %v3077
        %v3079 = vpop.f32.mrb[0].mxu0
        %v3080 = vadd.f32 %v3037, %v3079
        %v3081 = vpop.f32.mrb[0].mxu0
        %v3082 = vadd.f32 %v3039, %v3081
        %v3083 = vpop.f32.mrb[0].mxu0
        %v3084 = vadd.f32 %v3041, %v3083
        %3085 = vdwg.mxu0
        %v3086 = vmax.f32 %v2703, %v3078
        %v3087 = vmax.f32 %v2705, %v3080
        %v3088 = vmax.f32 %v2707, %v3082
        %v3089 = vmax.f32 %v2709, %v3084
        %v3090 = vpack.c.bf16 %v3088, %v3086
        %v3091 = vpack.c.bf16 %v3089, %v3087
        %v3092 = vld [vmem:[#allocation7] sm:$0xf]
        %v3093 = vld [vmem:[#allocation7 + $0x4] sm:$0x3]
        %v3096 = vunpack.c.l.b16 %v3092
        %v3097 = vunpack.c.l.b16 %v3093
        %v3098 = vpack.c.b16 %v3097, %v3096
        %vm3099 = vcmask 97280
        %v3101 = vsel %vm3099, %v3098, 0
        %v3104 = vsel %vm975, %v3090, 0
        %v3107 = vsel %vm975, %v3091, 0
        %3109 = vmatprep.subr.bf16.mxu0 %v3107
        %3110 = vmatpush1.bf16.msra.mxu0 %v3104
        %3111 = vmatprep.subr.bf16.mxu0 0
        %3112 = vmatpush1.bf16.msra.mxu0 0
        %3113 = vmatprep.subr.bf16.mxu0 0
        %3114 = vmatpush1.bf16.msra.mxu0 0
        %3115 = vmatprep.subr.bf16.mxu0 0
        %3116 = vmatpush1.bf16.msra.mxu0 0
        %3117 = vmatprep.subr.bf16.mxu0 0
        %3118 = vmatpush1.bf16.msra.mxu0 0
        %3119 = vmatprep.subr.bf16.mxu0 0
        %3120 = vmatpush1.bf16.msra.mxu0 0
        %3121 = vmatprep.subr.bf16.mxu0 0
        %3122 = vmatpush1.bf16.msra.mxu0 0
        %3123 = vmatprep.subr.bf16.mxu0 0
        %3124 = vmatpush1.bf16.msra.mxu0 0
        %3125 = vmatprep.subr.bf16.mxu0 0
        %3126 = vmatpush1.bf16.msra.mxu0 0
        %3127 = vmatprep.subr.bf16.mxu0 0
        %3128 = vmatpush1.bf16.msra.mxu0 0
        %3129 = vmatprep.subr.bf16.mxu0 0
        %3130 = vmatpush1.bf16.msra.mxu0 0
        %3131 = vmatprep.subr.bf16.mxu0 0
        %3132 = vmatpush1.bf16.msra.mxu0 0
        %3133 = vmatprep.subr.bf16.mxu0 0
        %3134 = vmatpush1.bf16.msra.mxu0 0
        %3135 = vmatprep.subr.bf16.mxu0 0
        %3136 = vmatpush1.bf16.msra.mxu0 0
        %3137 = vmatprep.subr.bf16.mxu0 0
        %3138 = vmatpush1.bf16.msra.mxu0 0
        %3139 = vmatprep.subr.bf16.mxu0 0
        %3140 = vmatpush1.bf16.msra.mxu0 0
        %3141 = vmatprep.mubr.bf16.mxu0 0
        %3142 = vmatmul.mubr.bf16.gmra.mrb[0].mxu0 %v3101
        %v3143 = vpop.f32.mrb[0].mxu0
        %v3144 = vadd.f32 0.0, %v3143
        %v3145 = vpop.f32.mrb[0].mxu0
        %v3146 = vadd.f32 0.0, %v3145
        %v3147 = vpop.f32.mrb[0].mxu0
        %v3148 = vadd.f32 0.0, %v3147
        %v3149 = vpop.f32.mrb[0].mxu0
        %v3150 = vadd.f32 0.0, %v3149
        %3151 = vdwg.mxu0
        %v3152 = vpack.c.bf16 %v3148, %v3144
        %v3153 = vpack.c.bf16 %v3150, %v3146
        %v3154 = vld [vmem:[#allocation8] sm:$0xff]
        %v3155 = vld [vmem:[#allocation8 + $0x8] sm:$0xff]
        %v3156 = vld [vmem:[#allocation8 + $0x10] sm:$0xff]
        %v3157 = vld [vmem:[#allocation8 + $0x18] sm:$0xff]
        %v3158 = vld [vmem:[#allocation8 + $0x20] sm:$0xff]
        %v3159 = vld [vmem:[#allocation8 + $0x28] sm:$0xff]
        %v3160 = vld [vmem:[#allocation8 + $0x30] sm:$0xff]
        %v3161 = vld [vmem:[#allocation8 + $0x38] sm:$0xff]
        %v3162 = vld [vmem:[#allocation8 + $0x40] sm:$0xff]
        %v3163 = vld [vmem:[#allocation8 + $0x48] sm:$0xff]
        %v3164 = vld [vmem:[#allocation8 + $0x50] sm:$0xff]
        %v3165 = vld [vmem:[#allocation8 + $0x58] sm:$0xff]
        %v3166 = vld [vmem:[#allocation8 + $0x60] sm:$0xff]
        %v3167 = vld [vmem:[#allocation8 + $0x68] sm:$0xff]
        %v3168 = vld [vmem:[#allocation8 + $0x70] sm:$0xff]
        %v3169 = vld [vmem:[#allocation8 + $0x78] sm:$0xff]
        %v3170 = vld [vmem:[#allocation8 + $0x80] sm:$0xff]
        %v3171 = vld [vmem:[#allocation8 + $0x88] sm:$0xff]
        %v3172 = vld [vmem:[#allocation8 + $0x90] sm:$0xff]
        %v3173 = vld [vmem:[#allocation8 + $0x98] sm:$0xff]
        %v3174 = vld [vmem:[#allocation8 + $0xa0] sm:$0xff]
        %v3175 = vld [vmem:[#allocation8 + $0xa8] sm:$0xff]
        %v3176 = vld [vmem:[#allocation8 + $0xb0] sm:$0xff]
        %v3177 = vld [vmem:[#allocation8 + $0xb8] sm:$0xff]
        %s3178 = scalar_lea.vmem [#allocation7], 8
        %v3179 = vld [vmem:[%s3178] sm:$0xf]
        %v3180 = vld [vmem:[%s3178 + $0x4] sm:$0x3]
        %v3183 = vunpack.c.l.b16 %v3179
        %v3184 = vunpack.c.l.b16 %v3180
        %v3185 = vpack.c.b16 %v3184, %v3183
        %v3187 = vsel %vm3099, %v3185, 0
        %3189 = vmatprep.subr.bf16.mxu0 %v3107
        %3190 = vmatpush1.bf16.msra.mxu0 %v3104
        %3191 = vmatprep.subr.bf16.mxu0 0
        %3192 = vmatpush1.bf16.msra.mxu0 0
        %3193 = vmatprep.subr.bf16.mxu0 0
        %3194 = vmatpush1.bf16.msra.mxu0 0
        %3195 = vmatprep.subr.bf16.mxu0 0
        %3196 = vmatpush1.bf16.msra.mxu0 0
        %3197 = vmatprep.subr.bf16.mxu0 0
        %3198 = vmatpush1.bf16.msra.mxu0 0
        %3199 = vmatprep.subr.bf16.mxu0 0
        %3200 = vmatpush1.bf16.msra.mxu0 0
        %3201 = vmatprep.subr.bf16.mxu0 0
        %3202 = vmatpush1.bf16.msra.mxu0 0
        %3203 = vmatprep.subr.bf16.mxu0 0
        %3204 = vmatpush1.bf16.msra.mxu0 0
        %3205 = vmatprep.subr.bf16.mxu0 0
        %3206 = vmatpush1.bf16.msra.mxu0 0
        %3207 = vmatprep.subr.bf16.mxu0 0
        %3208 = vmatpush1.bf16.msra.mxu0 0
        %3209 = vmatprep.subr.bf16.mxu0 0
        %3210 = vmatpush1.bf16.msra.mxu0 0
        %3211 = vmatprep.subr.bf16.mxu0 0
        %3212 = vmatpush1.bf16.msra.mxu0 0
        %3213 = vmatprep.subr.bf16.mxu0 0
        %3214 = vmatpush1.bf16.msra.mxu0 0
        %3215 = vmatprep.subr.bf16.mxu0 0
        %3216 = vmatpush1.bf16.msra.mxu0 0
        %3217 = vmatprep.subr.bf16.mxu0 0
        %3218 = vmatpush1.bf16.msra.mxu0 0
        %3219 = vmatprep.subr.bf16.mxu0 0
        %3220 = vmatpush1.bf16.msra.mxu0 0
        %3221 = vmatprep.mubr.bf16.mxu0 0
        %3222 = vmatmul.mubr.bf16.gmra.mrb[0].mxu0 %v3187
        %v3223 = vpop.f32.mrb[0].mxu0
        %v3224 = vadd.f32 0.0, %v3223
        %v3225 = vpop.f32.mrb[0].mxu0
        %v3226 = vadd.f32 0.0, %v3225
        %v3227 = vpop.f32.mrb[0].mxu0
        %v3228 = vadd.f32 0.0, %v3227
        %v3229 = vpop.f32.mrb[0].mxu0
        %v3230 = vadd.f32 0.0, %v3229
        %3231 = vdwg.mxu0
        %v3232 = vpack.c.bf16 %v3228, %v3224
        %v3233 = vpack.c.bf16 %v3230, %v3226
        %s3234 = scalar_lea.vmem [#allocation8], 192
        %v3235 = vld [vmem:[%s3234] sm:$0xff]
        %v3236 = vld [vmem:[%s3234 + $0x8] sm:$0xff]
        %v3237 = vld [vmem:[%s3234 + $0x10] sm:$0xff]
        %v3238 = vld [vmem:[%s3234 + $0x18] sm:$0xff]
        %v3239 = vld [vmem:[%s3234 + $0x20] sm:$0xff]
        %v3240 = vld [vmem:[%s3234 + $0x28] sm:$0xff]
        %v3241 = vld [vmem:[%s3234 + $0x30] sm:$0xff]
        %v3242 = vld [vmem:[%s3234 + $0x38] sm:$0xff]
        %v3243 = vld [vmem:[%s3234 + $0x40] sm:$0xff]
        %v3244 = vld [vmem:[%s3234 + $0x48] sm:$0xff]
        %v3245 = vld [vmem:[%s3234 + $0x50] sm:$0xff]
        %v3246 = vld [vmem:[%s3234 + $0x58] sm:$0xff]
        %v3247 = vld [vmem:[%s3234 + $0x60] sm:$0xff]
        %v3248 = vld [vmem:[%s3234 + $0x68] sm:$0xff]
        %v3249 = vld [vmem:[%s3234 + $0x70] sm:$0xff]
        %v3250 = vld [vmem:[%s3234 + $0x78] sm:$0xff]
        %v3251 = vld [vmem:[%s3234 + $0x80] sm:$0xff]
        %v3252 = vld [vmem:[%s3234 + $0x88] sm:$0xff]
        %v3253 = vld [vmem:[%s3234 + $0x90] sm:$0xff]
        %v3254 = vld [vmem:[%s3234 + $0x98] sm:$0xff]
        %v3255 = vld [vmem:[%s3234 + $0xa0] sm:$0xff]
        %v3256 = vld [vmem:[%s3234 + $0xa8] sm:$0xff]
        %v3257 = vld [vmem:[%s3234 + $0xb0] sm:$0xff]
        %v3258 = vld [vmem:[%s3234 + $0xb8] sm:$0xff]
        %v3283 = vunpack.c.l.b16 %v3235
        %v3284 = vunpack.c.h.b16 %v3235
        %v3285 = vunpack.c.l.b16 %v3236
        %v3286 = vunpack.c.h.b16 %v3236
        %v3287 = vunpack.c.l.b16 %v3237
        %v3288 = vunpack.c.h.b16 %v3237
        %v3289 = vunpack.c.l.b16 %v3238
        %v3290 = vunpack.c.h.b16 %v3238
        %v3291 = vunpack.c.l.b16 %v3239
        %v3292 = vunpack.c.h.b16 %v3239
        %v3293 = vunpack.c.l.b16 %v3240
        %v3294 = vunpack.c.h.b16 %v3240
        %v3295 = vunpack.c.l.b16 %v3241
        %v3296 = vunpack.c.h.b16 %v3241
        %v3297 = vunpack.c.l.b16 %v3242
        %v3298 = vunpack.c.h.b16 %v3242
        %v3299 = vunpack.c.l.b16 %v3243
        %v3300 = vunpack.c.h.b16 %v3243
        %v3301 = vunpack.c.l.b16 %v3244
        %v3302 = vunpack.c.h.b16 %v3244
        %v3303 = vunpack.c.l.b16 %v3245
        %v3304 = vunpack.c.h.b16 %v3245
        %v3305 = vunpack.c.l.b16 %v3246
        %v3306 = vunpack.c.h.b16 %v3246
        %v3307 = vunpack.c.l.b16 %v3247
        %v3308 = vunpack.c.h.b16 %v3247
        %v3309 = vunpack.c.l.b16 %v3248
        %v3310 = vunpack.c.h.b16 %v3248
        %v3311 = vunpack.c.l.b16 %v3249
        %v3312 = vunpack.c.h.b16 %v3249
        %v3313 = vunpack.c.l.b16 %v3250
        %v3314 = vunpack.c.h.b16 %v3250
        %v3315 = vunpack.c.l.b16 %v3251
        %v3316 = vunpack.c.h.b16 %v3251
        %v3317 = vunpack.c.l.b16 %v3252
        %v3318 = vunpack.c.h.b16 %v3252
        %v3319 = vunpack.c.l.b16 %v3253
        %v3320 = vunpack.c.h.b16 %v3253
        %v3321 = vunpack.c.l.b16 %v3254
        %v3322 = vunpack.c.h.b16 %v3254
        %v3323 = vunpack.c.l.b16 %v3255
        %v3324 = vunpack.c.h.b16 %v3255
        %v3325 = vunpack.c.l.b16 %v3256
        %v3326 = vunpack.c.h.b16 %v3256
        %v3327 = vunpack.c.l.b16 %v3257
        %v3328 = vunpack.c.h.b16 %v3257
        %v3329 = vunpack.c.l.b16 %v3258
        %v3330 = vunpack.c.h.b16 %v3258
        %v3331 = vpack.c.b16 %v3285, %v3283
        %v3332 = vpack.c.b16 %v3286, %v3284
        %v3333 = vpack.c.b16 %v3289, %v3287
        %v3334 = vpack.c.b16 %v3290, %v3288
        %v3335 = vpack.c.b16 %v3293, %v3291
        %v3336 = vpack.c.b16 %v3294, %v3292
        %v3337 = vpack.c.b16 %v3297, %v3295
        %v3338 = vpack.c.b16 %v3298, %v3296
        %v3339 = vpack.c.b16 %v3301, %v3299
        %v3340 = vpack.c.b16 %v3302, %v3300
        %v3341 = vpack.c.b16 %v3305, %v3303
        %v3342 = vpack.c.b16 %v3306, %v3304
        %v3343 = vpack.c.b16 %v3309, %v3307
        %v3344 = vpack.c.b16 %v3310, %v3308
        %v3345 = vpack.c.b16 %v3313, %v3311
        %v3346 = vpack.c.b16 %v3314, %v3312
        %v3347 = vpack.c.b16 %v3317, %v3315
        %v3348 = vpack.c.b16 %v3318, %v3316
        %v3349 = vpack.c.b16 %v3321, %v3319
        %v3350 = vpack.c.b16 %v3322, %v3320
        %v3351 = vpack.c.b16 %v3325, %v3323
        %v3352 = vpack.c.b16 %v3326, %v3324
        %v3353 = vpack.c.b16 %v3329, %v3327
        %v3354 = vpack.c.b16 %v3330, %v3328
        %vm3379 = vcmask 523264
        %v3381 = vsel %vm3379, %v3233, 0
        %3383 = vmatprep.subr.bf16.mxu0 %v3332
        %3384 = vmatpush1.bf16.msra.mxu0 %v3331
        %3385 = vmatprep.subr.bf16.mxu0 %v3334
        %3386 = vmatpush1.bf16.msra.mxu0 %v3333
        %3387 = vmatprep.subr.bf16.mxu0 %v3336
        %3388 = vmatpush1.bf16.msra.mxu0 %v3335
        %3389 = vmatprep.subr.bf16.mxu0 %v3338
        %3390 = vmatpush1.bf16.msra.mxu0 %v3337
        %3391 = vmatprep.subr.bf16.mxu0 %v3340
        %3392 = vmatpush1.bf16.msra.mxu0 %v3339
        %3393 = vmatprep.subr.bf16.mxu0 %v3342
        %3394 = vmatpush1.bf16.msra.mxu0 %v3341
        %3395 = vmatprep.subr.bf16.mxu0 %v3344
        %3396 = vmatpush1.bf16.msra.mxu0 %v3343
        %3397 = vmatprep.subr.bf16.mxu0 %v3346
        %3398 = vmatpush1.bf16.msra.mxu0 %v3345
        %3399 = vmatprep.subr.bf16.mxu0 %v3348
        %3400 = vmatpush1.bf16.msra.mxu0 %v3347
        %3401 = vmatprep.subr.bf16.mxu0 %v3350
        %3402 = vmatpush1.bf16.msra.mxu0 %v3349
        %3403 = vmatprep.subr.bf16.mxu0 %v3352
        %3404 = vmatpush1.bf16.msra.mxu0 %v3351
        %3405 = vmatprep.subr.bf16.mxu0 %v3354
        %3406 = vmatpush1.bf16.msra.mxu0 %v3353
        %3407 = vmatprep.subr.bf16.mxu0 0
        %3408 = vmatpush1.bf16.msra.mxu0 0
        %3409 = vmatprep.subr.bf16.mxu0 0
        %3410 = vmatpush1.bf16.msra.mxu0 0
        %3411 = vmatprep.subr.bf16.mxu0 0
        %3412 = vmatpush1.bf16.msra.mxu0 0
        %3413 = vmatprep.subr.bf16.mxu0 0
        %3414 = vmatpush1.bf16.msra.mxu0 0
        %3415 = vmatprep.mubr.bf16.mxu0 %v3381
        %3416 = vmatmul.mubr.bf16.gmra.mrb[0].mxu0 %v3232
        %v3417 = vpop.f32.mrb[0].mxu0
        %v3418 = vadd.f32 0.0, %v3417
        %v3419 = vpop.f32.mrb[0].mxu0
        %v3420 = vadd.f32 0.0, %v3419
        %v3421 = vpop.f32.mrb[0].mxu0
        %v3422 = vadd.f32 0.0, %v3421
        %v3423 = vpop.f32.mrb[0].mxu0
        %v3424 = vadd.f32 0.0, %v3423
        %3425 = vdwg.mxu0
        %v3450 = vunpack.c.l.b16 %v3154
        %v3451 = vunpack.c.h.b16 %v3154
        %v3452 = vunpack.c.l.b16 %v3155
        %v3453 = vunpack.c.h.b16 %v3155
        %v3454 = vunpack.c.l.b16 %v3156
        %v3455 = vunpack.c.h.b16 %v3156
        %v3456 = vunpack.c.l.b16 %v3157
        %v3457 = vunpack.c.h.b16 %v3157
        %v3458 = vunpack.c.l.b16 %v3158
        %v3459 = vunpack.c.h.b16 %v3158
        %v3460 = vunpack.c.l.b16 %v3159
        %v3461 = vunpack.c.h.b16 %v3159
        %v3462 = vunpack.c.l.b16 %v3160
        %v3463 = vunpack.c.h.b16 %v3160
        %v3464 = vunpack.c.l.b16 %v3161
        %v3465 = vunpack.c.h.b16 %v3161
        %v3466 = vunpack.c.l.b16 %v3162
        %v3467 = vunpack.c.h.b16 %v3162
        %v3468 = vunpack.c.l.b16 %v3163
        %v3469 = vunpack.c.h.b16 %v3163
        %v3470 = vunpack.c.l.b16 %v3164
        %v3471 = vunpack.c.h.b16 %v3164
        %v3472 = vunpack.c.l.b16 %v3165
        %v3473 = vunpack.c.h.b16 %v3165
        %v3474 = vunpack.c.l.b16 %v3166
        %v3475 = vunpack.c.h.b16 %v3166
        %v3476 = vunpack.c.l.b16 %v3167
        %v3477 = vunpack.c.h.b16 %v3167
        %v3478 = vunpack.c.l.b16 %v3168
        %v3479 = vunpack.c.h.b16 %v3168
        %v3480 = vunpack.c.l.b16 %v3169
        %v3481 = vunpack.c.h.b16 %v3169
        %v3482 = vunpack.c.l.b16 %v3170
        %v3483 = vunpack.c.h.b16 %v3170
        %v3484 = vunpack.c.l.b16 %v3171
        %v3485 = vunpack.c.h.b16 %v3171
        %v3486 = vunpack.c.l.b16 %v3172
        %v3487 = vunpack.c.h.b16 %v3172
        %v3488 = vunpack.c.l.b16 %v3173
        %v3489 = vunpack.c.h.b16 %v3173
        %v3490 = vunpack.c.l.b16 %v3174
        %v3491 = vunpack.c.h.b16 %v3174
        %v3492 = vunpack.c.l.b16 %v3175
        %v3493 = vunpack.c.h.b16 %v3175
        %v3494 = vunpack.c.l.b16 %v3176
        %v3495 = vunpack.c.h.b16 %v3176
        %v3496 = vunpack.c.l.b16 %v3177
        %v3497 = vunpack.c.h.b16 %v3177
        %v3498 = vpack.c.b16 %v3452, %v3450
        %v3499 = vpack.c.b16 %v3453, %v3451
        %v3500 = vpack.c.b16 %v3456, %v3454
        %v3501 = vpack.c.b16 %v3457, %v3455
        %v3502 = vpack.c.b16 %v3460, %v3458
        %v3503 = vpack.c.b16 %v3461, %v3459
        %v3504 = vpack.c.b16 %v3464, %v3462
        %v3505 = vpack.c.b16 %v3465, %v3463
        %v3506 = vpack.c.b16 %v3468, %v3466
        %v3507 = vpack.c.b16 %v3469, %v3467
        %v3508 = vpack.c.b16 %v3472, %v3470
        %v3509 = vpack.c.b16 %v3473, %v3471
        %v3510 = vpack.c.b16 %v3476, %v3474
        %v3511 = vpack.c.b16 %v3477, %v3475
        %v3512 = vpack.c.b16 %v3480, %v3478
        %v3513 = vpack.c.b16 %v3481, %v3479
        %v3514 = vpack.c.b16 %v3484, %v3482
        %v3515 = vpack.c.b16 %v3485, %v3483
        %v3516 = vpack.c.b16 %v3488, %v3486
        %v3517 = vpack.c.b16 %v3489, %v3487
        %v3518 = vpack.c.b16 %v3492, %v3490
        %v3519 = vpack.c.b16 %v3493, %v3491
        %v3520 = vpack.c.b16 %v3496, %v3494
        %v3521 = vpack.c.b16 %v3497, %v3495
        %v3547 = vsel %vm3379, %v3153, 0
        %3549 = vmatprep.subr.bf16.mxu0 %v3499
        %3550 = vmatpush1.bf16.msra.mxu0 %v3498
        %3551 = vmatprep.subr.bf16.mxu0 %v3501
        %3552 = vmatpush1.bf16.msra.mxu0 %v3500
        %3553 = vmatprep.subr.bf16.mxu0 %v3503
        %3554 = vmatpush1.bf16.msra.mxu0 %v3502
        %3555 = vmatprep.subr.bf16.mxu0 %v3505
        %3556 = vmatpush1.bf16.msra.mxu0 %v3504
        %3557 = vmatprep.subr.bf16.mxu0 %v3507
        %3558 = vmatpush1.bf16.msra.mxu0 %v3506
        %3559 = vmatprep.subr.bf16.mxu0 %v3509
        %3560 = vmatpush1.bf16.msra.mxu0 %v3508
        %3561 = vmatprep.subr.bf16.mxu0 %v3511
        %3562 = vmatpush1.bf16.msra.mxu0 %v3510
        %3563 = vmatprep.subr.bf16.mxu0 %v3513
        %3564 = vmatpush1.bf16.msra.mxu0 %v3512
        %3565 = vmatprep.subr.bf16.mxu0 %v3515
        %3566 = vmatpush1.bf16.msra.mxu0 %v3514
        %3567 = vmatprep.subr.bf16.mxu0 %v3517
        %3568 = vmatpush1.bf16.msra.mxu0 %v3516
        %3569 = vmatprep.subr.bf16.mxu0 %v3519
        %3570 = vmatpush1.bf16.msra.mxu0 %v3518
        %3571 = vmatprep.subr.bf16.mxu0 %v3521
        %3572 = vmatpush1.bf16.msra.mxu0 %v3520
        %3573 = vmatprep.subr.bf16.mxu0 0
        %3574 = vmatpush1.bf16.msra.mxu0 0
        %3575 = vmatprep.subr.bf16.mxu0 0
        %3576 = vmatpush1.bf16.msra.mxu0 0
        %3577 = vmatprep.subr.bf16.mxu0 0
        %3578 = vmatpush1.bf16.msra.mxu0 0
        %3579 = vmatprep.subr.bf16.mxu0 0
        %3580 = vmatpush1.bf16.msra.mxu0 0
        %3581 = vmatprep.mubr.bf16.mxu0 %v3547
        %3582 = vmatmul.mubr.bf16.gmra.mrb[0].mxu0 %v3152
        %v3583 = vpop.f32.mrb[0].mxu0
        %v3584 = vadd.f32 %v3418, %v3583
        %v3585 = vpop.f32.mrb[0].mxu0
        %v3586 = vadd.f32 %v3420, %v3585
        %v3587 = vpop.f32.mrb[0].mxu0
        %v3588 = vadd.f32 %v3422, %v3587
        %v3589 = vpop.f32.mrb[0].mxu0
        %v3590 = vadd.f32 %v3424, %v3589
        %3591 = vdwg.mxu0
        %s3592 = scalar_lea.vmem [#allocation7], 16
        %v3593 = vld [vmem:[%s3592] sm:$0xf]
        %v3594 = vld [vmem:[%s3592 + $0x4] sm:$0x3]
        %v3597 = vunpack.c.l.b16 %v3593
        %v3598 = vunpack.c.l.b16 %v3594
        %v3599 = vpack.c.b16 %v3598, %v3597
        %v3601 = vsel %vm3099, %v3599, 0
        %3603 = vmatprep.subr.bf16.mxu0 %v3107
        %3604 = vmatpush1.bf16.msra.mxu0 %v3104
        %3605 = vmatprep.subr.bf16.mxu0 0
        %3606 = vmatpush1.bf16.msra.mxu0 0
        %3607 = vmatprep.subr.bf16.mxu0 0
        %3608 = vmatpush1.bf16.msra.mxu0 0
        %3609 = vmatprep.subr.bf16.mxu0 0
        %3610 = vmatpush1.bf16.msra.mxu0 0
        %3611 = vmatprep.subr.bf16.mxu0 0
        %3612 = vmatpush1.bf16.msra.mxu0 0
        %3613 = vmatprep.subr.bf16.mxu0 0
        %3614 = vmatpush1.bf16.msra.mxu0 0
        %3615 = vmatprep.subr.bf16.mxu0 0
        %3616 = vmatpush1.bf16.msra.mxu0 0
        %3617 = vmatprep.subr.bf16.mxu0 0
        %3618 = vmatpush1.bf16.msra.mxu0 0
        %3619 = vmatprep.subr.bf16.mxu0 0
        %3620 = vmatpush1.bf16.msra.mxu0 0
        %3621 = vmatprep.subr.bf16.mxu0 0
        %3622 = vmatpush1.bf16.msra.mxu0 0
        %3623 = vmatprep.subr.bf16.mxu0 0
        %3624 = vmatpush1.bf16.msra.mxu0 0
        %3625 = vmatprep.subr.bf16.mxu0 0
        %3626 = vmatpush1.bf16.msra.mxu0 0
        %3627 = vmatprep.subr.bf16.mxu0 0
        %3628 = vmatpush1.bf16.msra.mxu0 0
        %3629 = vmatprep.subr.bf16.mxu0 0
        %3630 = vmatpush1.bf16.msra.mxu0 0
        %3631 = vmatprep.subr.bf16.mxu0 0
        %3632 = vmatpush1.bf16.msra.mxu0 0
        %3633 = vmatprep.subr.bf16.mxu0 0
        %3634 = vmatpush1.bf16.msra.mxu0 0
        %3635 = vmatprep.mubr.bf16.mxu0 0
        %3636 = vmatmul.mubr.bf16.gmra.mrb[0].mxu0 %v3601
        %v3637 = vpop.f32.mrb[0].mxu0
        %v3638 = vadd.f32 0.0, %v3637
        %v3639 = vpop.f32.mrb[0].mxu0
        %v3640 = vadd.f32 0.0, %v3639
        %v3641 = vpop.f32.mrb[0].mxu0
        %v3642 = vadd.f32 0.0, %v3641
        %v3643 = vpop.f32.mrb[0].mxu0
        %v3644 = vadd.f32 0.0, %v3643
        %3645 = vdwg.mxu0
        %v3646 = vpack.c.bf16 %v3642, %v3638
        %v3647 = vpack.c.bf16 %v3644, %v3640
        %s3648 = scalar_lea.vmem [#allocation8], 384
        %v3649 = vld [vmem:[%s3648] sm:$0xff]
        %v3650 = vld [vmem:[%s3648 + $0x8] sm:$0xff]
        %v3651 = vld [vmem:[%s3648 + $0x10] sm:$0xff]
        %v3652 = vld [vmem:[%s3648 + $0x18] sm:$0xff]
        %v3653 = vld [vmem:[%s3648 + $0x20] sm:$0xff]
        %v3654 = vld [vmem:[%s3648 + $0x28] sm:$0xff]
        %v3655 = vld [vmem:[%s3648 + $0x30] sm:$0xff]
        %v3656 = vld [vmem:[%s3648 + $0x38] sm:$0xff]
        %v3657 = vld [vmem:[%s3648 + $0x40] sm:$0xff]
        %v3658 = vld [vmem:[%s3648 + $0x48] sm:$0xff]
        %v3659 = vld [vmem:[%s3648 + $0x50] sm:$0xff]
        %v3660 = vld [vmem:[%s3648 + $0x58] sm:$0xff]
        %v3661 = vld [vmem:[%s3648 + $0x60] sm:$0xff]
        %v3662 = vld [vmem:[%s3648 + $0x68] sm:$0xff]
        %v3663 = vld [vmem:[%s3648 + $0x70] sm:$0xff]
        %v3664 = vld [vmem:[%s3648 + $0x78] sm:$0xff]
        %v3665 = vld [vmem:[%s3648 + $0x80] sm:$0xff]
        %v3666 = vld [vmem:[%s3648 + $0x88] sm:$0xff]
        %v3667 = vld [vmem:[%s3648 + $0x90] sm:$0xff]
        %v3668 = vld [vmem:[%s3648 + $0x98] sm:$0xff]
        %v3669 = vld [vmem:[%s3648 + $0xa0] sm:$0xff]
        %v3670 = vld [vmem:[%s3648 + $0xa8] sm:$0xff]
        %v3671 = vld [vmem:[%s3648 + $0xb0] sm:$0xff]
        %v3672 = vld [vmem:[%s3648 + $0xb8] sm:$0xff]
        %v3697 = vunpack.c.l.b16 %v3649
        %v3698 = vunpack.c.h.b16 %v3649
        %v3699 = vunpack.c.l.b16 %v3650
        %v3700 = vunpack.c.h.b16 %v3650
        %v3701 = vunpack.c.l.b16 %v3651
        %v3702 = vunpack.c.h.b16 %v3651
        %v3703 = vunpack.c.l.b16 %v3652
        %v3704 = vunpack.c.h.b16 %v3652
        %v3705 = vunpack.c.l.b16 %v3653
        %v3706 = vunpack.c.h.b16 %v3653
        %v3707 = vunpack.c.l.b16 %v3654
        %v3708 = vunpack.c.h.b16 %v3654
        %v3709 = vunpack.c.l.b16 %v3655
        %v3710 = vunpack.c.h.b16 %v3655
        %v3711 = vunpack.c.l.b16 %v3656
        %v3712 = vunpack.c.h.b16 %v3656
        %v3713 = vunpack.c.l.b16 %v3657
        %v3714 = vunpack.c.h.b16 %v3657
        %v3715 = vunpack.c.l.b16 %v3658
        %v3716 = vunpack.c.h.b16 %v3658
        %v3717 = vunpack.c.l.b16 %v3659
        %v3718 = vunpack.c.h.b16 %v3659
        %v3719 = vunpack.c.l.b16 %v3660
        %v3720 = vunpack.c.h.b16 %v3660
        %v3721 = vunpack.c.l.b16 %v3661
        %v3722 = vunpack.c.h.b16 %v3661
        %v3723 = vunpack.c.l.b16 %v3662
        %v3724 = vunpack.c.h.b16 %v3662
        %v3725 = vunpack.c.l.b16 %v3663
        %v3726 = vunpack.c.h.b16 %v3663
        %v3727 = vunpack.c.l.b16 %v3664
        %v3728 = vunpack.c.h.b16 %v3664
        %v3729 = vunpack.c.l.b16 %v3665
        %v3730 = vunpack.c.h.b16 %v3665
        %v3731 = vunpack.c.l.b16 %v3666
        %v3732 = vunpack.c.h.b16 %v3666
        %v3733 = vunpack.c.l.b16 %v3667
        %v3734 = vunpack.c.h.b16 %v3667
        %v3735 = vunpack.c.l.b16 %v3668
        %v3736 = vunpack.c.h.b16 %v3668
        %v3737 = vunpack.c.l.b16 %v3669
        %v3738 = vunpack.c.h.b16 %v3669
        %v3739 = vunpack.c.l.b16 %v3670
        %v3740 = vunpack.c.h.b16 %v3670
        %v3741 = vunpack.c.l.b16 %v3671
        %v3742 = vunpack.c.h.b16 %v3671
        %v3743 = vunpack.c.l.b16 %v3672
        %v3744 = vunpack.c.h.b16 %v3672
        %v3745 = vpack.c.b16 %v3699, %v3697
        %v3746 = vpack.c.b16 %v3700, %v3698
        %v3747 = vpack.c.b16 %v3703, %v3701
        %v3748 = vpack.c.b16 %v3704, %v3702
        %v3749 = vpack.c.b16 %v3707, %v3705
        %v3750 = vpack.c.b16 %v3708, %v3706
        %v3751 = vpack.c.b16 %v3711, %v3709
        %v3752 = vpack.c.b16 %v3712, %v3710
        %v3753 = vpack.c.b16 %v3715, %v3713
        %v3754 = vpack.c.b16 %v3716, %v3714
        %v3755 = vpack.c.b16 %v3719, %v3717
        %v3756 = vpack.c.b16 %v3720, %v3718
        %v3757 = vpack.c.b16 %v3723, %v3721
        %v3758 = vpack.c.b16 %v3724, %v3722
        %v3759 = vpack.c.b16 %v3727, %v3725
        %v3760 = vpack.c.b16 %v3728, %v3726
        %v3761 = vpack.c.b16 %v3731, %v3729
        %v3762 = vpack.c.b16 %v3732, %v3730
        %v3763 = vpack.c.b16 %v3735, %v3733
        %v3764 = vpack.c.b16 %v3736, %v3734
        %v3765 = vpack.c.b16 %v3739, %v3737
        %v3766 = vpack.c.b16 %v3740, %v3738
        %v3767 = vpack.c.b16 %v3743, %v3741
        %v3768 = vpack.c.b16 %v3744, %v3742
        %v3794 = vsel %vm3379, %v3647, 0
        %3796 = vmatprep.subr.bf16.mxu0 %v3746
        %3797 = vmatpush1.bf16.msra.mxu0 %v3745
        %3798 = vmatprep.subr.bf16.mxu0 %v3748
        %3799 = vmatpush1.bf16.msra.mxu0 %v3747
        %3800 = vmatprep.subr.bf16.mxu0 %v3750
        %3801 = vmatpush1.bf16.msra.mxu0 %v3749
        %3802 = vmatprep.subr.bf16.mxu0 %v3752
        %3803 = vmatpush1.bf16.msra.mxu0 %v3751
        %3804 = vmatprep.subr.bf16.mxu0 %v3754
        %3805 = vmatpush1.bf16.msra.mxu0 %v3753
        %3806 = vmatprep.subr.bf16.mxu0 %v3756
        %3807 = vmatpush1.bf16.msra.mxu0 %v3755
        %3808 = vmatprep.subr.bf16.mxu0 %v3758
        %3809 = vmatpush1.bf16.msra.mxu0 %v3757
        %3810 = vmatprep.subr.bf16.mxu0 %v3760
        %3811 = vmatpush1.bf16.msra.mxu0 %v3759
        %3812 = vmatprep.subr.bf16.mxu0 %v3762
        %3813 = vmatpush1.bf16.msra.mxu0 %v3761
        %3814 = vmatprep.subr.bf16.mxu0 %v3764
        %3815 = vmatpush1.bf16.msra.mxu0 %v3763
        %3816 = vmatprep.subr.bf16.mxu0 %v3766
        %3817 = vmatpush1.bf16.msra.mxu0 %v3765
        %3818 = vmatprep.subr.bf16.mxu0 %v3768
        %3819 = vmatpush1.bf16.msra.mxu0 %v3767
        %3820 = vmatprep.subr.bf16.mxu0 0
        %3821 = vmatpush1.bf16.msra.mxu0 0
        %3822 = vmatprep.subr.bf16.mxu0 0
        %3823 = vmatpush1.bf16.msra.mxu0 0
        %3824 = vmatprep.subr.bf16.mxu0 0
        %3825 = vmatpush1.bf16.msra.mxu0 0
        %3826 = vmatprep.subr.bf16.mxu0 0
        %3827 = vmatpush1.bf16.msra.mxu0 0
        %3828 = vmatprep.mubr.bf16.mxu0 %v3794
        %3829 = vmatmul.mubr.bf16.gmra.mrb[0].mxu0 %v3646
        %v3830 = vpop.f32.mrb[0].mxu0
        %v3831 = vadd.f32 0.0, %v3830
        %v3832 = vpop.f32.mrb[0].mxu0
        %v3833 = vadd.f32 0.0, %v3832
        %v3834 = vpop.f32.mrb[0].mxu0
        %v3835 = vadd.f32 0.0, %v3834
        %v3836 = vpop.f32.mrb[0].mxu0
        %v3837 = vadd.f32 0.0, %v3836
        %3838 = vdwg.mxu0
        %v3839 = vadd.f32 %v3584, %v3831
        %v3840 = vadd.f32 %v3586, %v3833
        %v3841 = vadd.f32 %v3588, %v3835
        %v3842 = vadd.f32 %v3590, %v3837
        %v3843 = vld [vmem:[%s8] sm:$0x3]
        %v3845 = vlaneseq
        %v3846 = vshrl.u32 %v3845, 7
        %v3847 = vsub.s32 0, %v3846
        %v3848 = vrot.slane %v3843, %v3847
        %v3849 = vlaneseq
        %v3850 = vshrl.u32 %v3849, 7
        %v3851 = vsub.s32 1, %v3850
        %v3852 = vrot.slane %v3843, %v3851
        %v3855 = vadd.f32 %v3839, %v3848
        %v3856 = vadd.f32 %v3840, %v3852
        %v3857 = vadd.f32 %v3841, %v3848
        %v3858 = vadd.f32 %v3842, %v3852
        %v3859 = vmax.f32 %v3855, 0.0
        %v3860 = vmax.f32 %v3856, 0.0
        %v3861 = vmax.f32 %v3857, 0.0
        %v3862 = vmax.f32 %v3858, 0.0
        %v3863 = vpack.c.bf16 %v3861, %v3859
        %v3864 = vpack.c.bf16 %v3862, %v3860
        %v3866 = vsel %vm975, %v3863, 0
        %v3869 = vsel %vm975, %v3864, 0
        %3871 = vmatprep.subr.bf16.mxu0 %v3869
        %3872 = vmatpush1.bf16.msra.mxu0 %v3866
        %3873 = vmatprep.subr.bf16.mxu0 0
        %3874 = vmatpush1.bf16.msra.mxu0 0
        %3875 = vmatprep.subr.bf16.mxu0 0
        %3876 = vmatpush1.bf16.msra.mxu0 0
        %3877 = vmatprep.subr.bf16.mxu0 0
        %3878 = vmatpush1.bf16.msra.mxu0 0
        %3879 = vmatprep.subr.bf16.mxu0 0
        %3880 = vmatpush1.bf16.msra.mxu0 0
        %3881 = vmatprep.subr.bf16.mxu0 0
        %3882 = vmatpush1.bf16.msra.mxu0 0
        %3883 = vmatprep.subr.bf16.mxu0 0
        %3884 = vmatpush1.bf16.msra.mxu0 0
        %3885 = vmatprep.subr.bf16.mxu0 0
        %3886 = vmatpush1.bf16.msra.mxu0 0
        %3887 = vmatprep.subr.bf16.mxu0 0
        %3888 = vmatpush1.bf16.msra.mxu0 0
        %3889 = vmatprep.subr.bf16.mxu0 0
        %3890 = vmatpush1.bf16.msra.mxu0 0
        %3891 = vmatprep.subr.bf16.mxu0 0
        %3892 = vmatpush1.bf16.msra.mxu0 0
        %3893 = vmatprep.subr.bf16.mxu0 0
        %3894 = vmatpush1.bf16.msra.mxu0 0
        %3895 = vmatprep.subr.bf16.mxu0 0
        %3896 = vmatpush1.bf16.msra.mxu0 0
        %3897 = vmatprep.subr.bf16.mxu0 0
        %3898 = vmatpush1.bf16.msra.mxu0 0
        %3899 = vmatprep.subr.bf16.mxu0 0
        %3900 = vmatpush1.bf16.msra.mxu0 0
        %3901 = vmatprep.subr.bf16.mxu0 0
        %3902 = vmatpush1.bf16.msra.mxu0 0
        %3903 = vmatprep.mubr.bf16.mxu0 0
        %3904 = vmatmul.mubr.bf16.gmra.mrb[0].mxu0 %v3101
        %v3905 = vpop.f32.mrb[0].mxu0
        %v3906 = vadd.f32 0.0, %v3905
        %v3907 = vpop.f32.mrb[0].mxu0
        %v3908 = vadd.f32 0.0, %v3907
        %v3909 = vpop.f32.mrb[0].mxu0
        %v3910 = vadd.f32 0.0, %v3909
        %v3911 = vpop.f32.mrb[0].mxu0
        %v3912 = vadd.f32 0.0, %v3911
        %3913 = vdwg.mxu0
        %v3914 = vpack.c.bf16 %v3910, %v3906
        %v3915 = vpack.c.bf16 %v3912, %v3908
        %v3916 = vld [vmem:[#allocation10] sm:$0xff]
        %v3917 = vld [vmem:[#allocation10 + $0x8] sm:$0xff]
        %v3918 = vld [vmem:[#allocation10 + $0x10] sm:$0xff]
        %v3919 = vld [vmem:[#allocation10 + $0x18] sm:$0xff]
        %v3920 = vld [vmem:[#allocation10 + $0x20] sm:$0xff]
        %v3921 = vld [vmem:[#allocation10 + $0x28] sm:$0xff]
        %v3922 = vld [vmem:[#allocation10 + $0x30] sm:$0xff]
        %v3923 = vld [vmem:[#allocation10 + $0x38] sm:$0xff]
        %v3924 = vld [vmem:[#allocation10 + $0x40] sm:$0xff]
        %v3925 = vld [vmem:[#allocation10 + $0x48] sm:$0xff]
        %v3926 = vld [vmem:[#allocation10 + $0x50] sm:$0xff]
        %v3927 = vld [vmem:[#allocation10 + $0x58] sm:$0xff]
        %v3928 = vld [vmem:[#allocation10 + $0x60] sm:$0xff]
        %v3929 = vld [vmem:[#allocation10 + $0x68] sm:$0xff]
        %v3930 = vld [vmem:[#allocation10 + $0x70] sm:$0xff]
        %v3931 = vld [vmem:[#allocation10 + $0x78] sm:$0xff]
        %v3932 = vld [vmem:[#allocation10 + $0x80] sm:$0xff]
        %v3933 = vld [vmem:[#allocation10 + $0x88] sm:$0xff]
        %v3934 = vld [vmem:[#allocation10 + $0x90] sm:$0xff]
        %v3935 = vld [vmem:[#allocation10 + $0x98] sm:$0xff]
        %v3936 = vld [vmem:[#allocation10 + $0xa0] sm:$0xff]
        %v3937 = vld [vmem:[#allocation10 + $0xa8] sm:$0xff]
        %v3938 = vld [vmem:[#allocation10 + $0xb0] sm:$0xff]
        %v3939 = vld [vmem:[#allocation10 + $0xb8] sm:$0xff]
        %3940 = vmatprep.subr.bf16.mxu0 %v3869
        %3941 = vmatpush1.bf16.msra.mxu0 %v3866
        %3942 = vmatprep.subr.bf16.mxu0 0
        %3943 = vmatpush1.bf16.msra.mxu0 0
        %3944 = vmatprep.subr.bf16.mxu0 0
        %3945 = vmatpush1.bf16.msra.mxu0 0
        %3946 = vmatprep.subr.bf16.mxu0 0
        %3947 = vmatpush1.bf16.msra.mxu0 0
        %3948 = vmatprep.subr.bf16.mxu0 0
        %3949 = vmatpush1.bf16.msra.mxu0 0
        %3950 = vmatprep.subr.bf16.mxu0 0
        %3951 = vmatpush1.bf16.msra.mxu0 0
        %3952 = vmatprep.subr.bf16.mxu0 0
        %3953 = vmatpush1.bf16.msra.mxu0 0
        %3954 = vmatprep.subr.bf16.mxu0 0
        %3955 = vmatpush1.bf16.msra.mxu0 0
        %3956 = vmatprep.subr.bf16.mxu0 0
        %3957 = vmatpush1.bf16.msra.mxu0 0
        %3958 = vmatprep.subr.bf16.mxu0 0
        %3959 = vmatpush1.bf16.msra.mxu0 0
        %3960 = vmatprep.subr.bf16.mxu0 0
        %3961 = vmatpush1.bf16.msra.mxu0 0
        %3962 = vmatprep.subr.bf16.mxu0 0
        %3963 = vmatpush1.bf16.msra.mxu0 0
        %3964 = vmatprep.subr.bf16.mxu0 0
        %3965 = vmatpush1.bf16.msra.mxu0 0
        %3966 = vmatprep.subr.bf16.mxu0 0
        %3967 = vmatpush1.bf16.msra.mxu0 0
        %3968 = vmatprep.subr.bf16.mxu0 0
        %3969 = vmatpush1.bf16.msra.mxu0 0
        %3970 = vmatprep.subr.bf16.mxu0 0
        %3971 = vmatpush1.bf16.msra.mxu0 0
        %3972 = vmatprep.mubr.bf16.mxu0 0
        %3973 = vmatmul.mubr.bf16.gmra.mrb[0].mxu0 %v3187
        %v3974 = vpop.f32.mrb[0].mxu0
        %v3975 = vadd.f32 0.0, %v3974
        %v3976 = vpop.f32.mrb[0].mxu0
        %v3977 = vadd.f32 0.0, %v3976
        %v3978 = vpop.f32.mrb[0].mxu0
        %v3979 = vadd.f32 0.0, %v3978
        %v3980 = vpop.f32.mrb[0].mxu0
        %v3981 = vadd.f32 0.0, %v3980
        %3982 = vdwg.mxu0
        %v3983 = vpack.c.bf16 %v3979, %v3975
        %v3984 = vpack.c.bf16 %v3981, %v3977
        %s3985 = scalar_lea.vmem [#allocation10], 192
        %v3986 = vld [vmem:[%s3985] sm:$0xff]
        %v3987 = vld [vmem:[%s3985 + $0x8] sm:$0xff]
        %v3988 = vld [vmem:[%s3985 + $0x10] sm:$0xff]
        %v3989 = vld [vmem:[%s3985 + $0x18] sm:$0xff]
        %v3990 = vld [vmem:[%s3985 + $0x20] sm:$0xff]
        %v3991 = vld [vmem:[%s3985 + $0x28] sm:$0xff]
        %v3992 = vld [vmem:[%s3985 + $0x30] sm:$0xff]
        %v3993 = vld [vmem:[%s3985 + $0x38] sm:$0xff]
        %v3994 = vld [vmem:[%s3985 + $0x40] sm:$0xff]
        %v3995 = vld [vmem:[%s3985 + $0x48] sm:$0xff]
        %v3996 = vld [vmem:[%s3985 + $0x50] sm:$0xff]
        %v3997 = vld [vmem:[%s3985 + $0x58] sm:$0xff]
        %v3998 = vld [vmem:[%s3985 + $0x60] sm:$0xff]
        %v3999 = vld [vmem:[%s3985 + $0x68] sm:$0xff]
        %v4000 = vld [vmem:[%s3985 + $0x70] sm:$0xff]
        %v4001 = vld [vmem:[%s3985 + $0x78] sm:$0xff]
        %v4002 = vld [vmem:[%s3985 + $0x80] sm:$0xff]
        %v4003 = vld [vmem:[%s3985 + $0x88] sm:$0xff]
        %v4004 = vld [vmem:[%s3985 + $0x90] sm:$0xff]
        %v4005 = vld [vmem:[%s3985 + $0x98] sm:$0xff]
        %v4006 = vld [vmem:[%s3985 + $0xa0] sm:$0xff]
        %v4007 = vld [vmem:[%s3985 + $0xa8] sm:$0xff]
        %v4008 = vld [vmem:[%s3985 + $0xb0] sm:$0xff]
        %v4009 = vld [vmem:[%s3985 + $0xb8] sm:$0xff]
        %v4034 = vunpack.c.l.b16 %v3986
        %v4035 = vunpack.c.h.b16 %v3986
        %v4036 = vunpack.c.l.b16 %v3987
        %v4037 = vunpack.c.h.b16 %v3987
        %v4038 = vunpack.c.l.b16 %v3988
        %v4039 = vunpack.c.h.b16 %v3988
        %v4040 = vunpack.c.l.b16 %v3989
        %v4041 = vunpack.c.h.b16 %v3989
        %v4042 = vunpack.c.l.b16 %v3990
        %v4043 = vunpack.c.h.b16 %v3990
        %v4044 = vunpack.c.l.b16 %v3991
        %v4045 = vunpack.c.h.b16 %v3991
        %v4046 = vunpack.c.l.b16 %v3992
        %v4047 = vunpack.c.h.b16 %v3992
        %v4048 = vunpack.c.l.b16 %v3993
        %v4049 = vunpack.c.h.b16 %v3993
        %v4050 = vunpack.c.l.b16 %v3994
        %v4051 = vunpack.c.h.b16 %v3994
        %v4052 = vunpack.c.l.b16 %v3995
        %v4053 = vunpack.c.h.b16 %v3995
        %v4054 = vunpack.c.l.b16 %v3996
        %v4055 = vunpack.c.h.b16 %v3996
        %v4056 = vunpack.c.l.b16 %v3997
        %v4057 = vunpack.c.h.b16 %v3997
        %v4058 = vunpack.c.l.b16 %v3998
        %v4059 = vunpack.c.h.b16 %v3998
        %v4060 = vunpack.c.l.b16 %v3999
        %v4061 = vunpack.c.h.b16 %v3999
        %v4062 = vunpack.c.l.b16 %v4000
        %v4063 = vunpack.c.h.b16 %v4000
        %v4064 = vunpack.c.l.b16 %v4001
        %v4065 = vunpack.c.h.b16 %v4001
        %v4066 = vunpack.c.l.b16 %v4002
        %v4067 = vunpack.c.h.b16 %v4002
        %v4068 = vunpack.c.l.b16 %v4003
        %v4069 = vunpack.c.h.b16 %v4003
        %v4070 = vunpack.c.l.b16 %v4004
        %v4071 = vunpack.c.h.b16 %v4004
        %v4072 = vunpack.c.l.b16 %v4005
        %v4073 = vunpack.c.h.b16 %v4005
        %v4074 = vunpack.c.l.b16 %v4006
        %v4075 = vunpack.c.h.b16 %v4006
        %v4076 = vunpack.c.l.b16 %v4007
        %v4077 = vunpack.c.h.b16 %v4007
        %v4078 = vunpack.c.l.b16 %v4008
        %v4079 = vunpack.c.h.b16 %v4008
        %v4080 = vunpack.c.l.b16 %v4009
        %v4081 = vunpack.c.h.b16 %v4009
        %v4082 = vpack.c.b16 %v4036, %v4034
        %v4083 = vpack.c.b16 %v4037, %v4035
        %v4084 = vpack.c.b16 %v4040, %v4038
        %v4085 = vpack.c.b16 %v4041, %v4039
        %v4086 = vpack.c.b16 %v4044, %v4042
        %v4087 = vpack.c.b16 %v4045, %v4043
        %v4088 = vpack.c.b16 %v4048, %v4046
        %v4089 = vpack.c.b16 %v4049, %v4047
        %v4090 = vpack.c.b16 %v4052, %v4050
        %v4091 = vpack.c.b16 %v4053, %v4051
        %v4092 = vpack.c.b16 %v4056, %v4054
        %v4093 = vpack.c.b16 %v4057, %v4055
        %v4094 = vpack.c.b16 %v4060, %v4058
        %v4095 = vpack.c.b16 %v4061, %v4059
        %v4096 = vpack.c.b16 %v4064, %v4062
        %v4097 = vpack.c.b16 %v4065, %v4063
        %v4098 = vpack.c.b16 %v4068, %v4066
        %v4099 = vpack.c.b16 %v4069, %v4067
        %v4100 = vpack.c.b16 %v4072, %v4070
        %v4101 = vpack.c.b16 %v4073, %v4071
        %v4102 = vpack.c.b16 %v4076, %v4074
        %v4103 = vpack.c.b16 %v4077, %v4075
        %v4104 = vpack.c.b16 %v4080, %v4078
        %v4105 = vpack.c.b16 %v4081, %v4079
        %v4131 = vsel %vm3379, %v3984, 0
        %4133 = vmatprep.subr.bf16.mxu0 %v4083
        %4134 = vmatpush1.bf16.msra.mxu0 %v4082
        %4135 = vmatprep.subr.bf16.mxu0 %v4085
        %4136 = vmatpush1.bf16.msra.mxu0 %v4084
        %4137 = vmatprep.subr.bf16.mxu0 %v4087
        %4138 = vmatpush1.bf16.msra.mxu0 %v4086
        %4139 = vmatprep.subr.bf16.mxu0 %v4089
        %4140 = vmatpush1.bf16.msra.mxu0 %v4088
        %4141 = vmatprep.subr.bf16.mxu0 %v4091
        %4142 = vmatpush1.bf16.msra.mxu0 %v4090
        %4143 = vmatprep.subr.bf16.mxu0 %v4093
        %4144 = vmatpush1.bf16.msra.mxu0 %v4092
        %4145 = vmatprep.subr.bf16.mxu0 %v4095
        %4146 = vmatpush1.bf16.msra.mxu0 %v4094
        %4147 = vmatprep.subr.bf16.mxu0 %v4097
        %4148 = vmatpush1.bf16.msra.mxu0 %v4096
        %4149 = vmatprep.subr.bf16.mxu0 %v4099
        %4150 = vmatpush1.bf16.msra.mxu0 %v4098
        %4151 = vmatprep.subr.bf16.mxu0 %v4101
        %4152 = vmatpush1.bf16.msra.mxu0 %v4100
        %4153 = vmatprep.subr.bf16.mxu0 %v4103
        %4154 = vmatpush1.bf16.msra.mxu0 %v4102
        %4155 = vmatprep.subr.bf16.mxu0 %v4105
        %4156 = vmatpush1.bf16.msra.mxu0 %v4104
        %4157 = vmatprep.subr.bf16.mxu0 0
        %4158 = vmatpush1.bf16.msra.mxu0 0
        %4159 = vmatprep.subr.bf16.mxu0 0
        %4160 = vmatpush1.bf16.msra.mxu0 0
        %4161 = vmatprep.subr.bf16.mxu0 0
        %4162 = vmatpush1.bf16.msra.mxu0 0
        %4163 = vmatprep.subr.bf16.mxu0 0
        %4164 = vmatpush1.bf16.msra.mxu0 0
        %4165 = vmatprep.mubr.bf16.mxu0 %v4131
        %4166 = vmatmul.mubr.bf16.gmra.mrb[0].mxu0 %v3983
        %v4167 = vpop.f32.mrb[0].mxu0
        %v4168 = vadd.f32 0.0, %v4167
        %v4169 = vpop.f32.mrb[0].mxu0
        %v4170 = vadd.f32 0.0, %v4169
        %v4171 = vpop.f32.mrb[0].mxu0
        %v4172 = vadd.f32 0.0, %v4171
        %v4173 = vpop.f32.mrb[0].mxu0
        %v4174 = vadd.f32 0.0, %v4173
        %4175 = vdwg.mxu0
        %v4200 = vunpack.c.l.b16 %v3916
        %v4201 = vunpack.c.h.b16 %v3916
        %v4202 = vunpack.c.l.b16 %v3917
        %v4203 = vunpack.c.h.b16 %v3917
        %v4204 = vunpack.c.l.b16 %v3918
        %v4205 = vunpack.c.h.b16 %v3918
        %v4206 = vunpack.c.l.b16 %v3919
        %v4207 = vunpack.c.h.b16 %v3919
        %v4208 = vunpack.c.l.b16 %v3920
        %v4209 = vunpack.c.h.b16 %v3920
        %v4210 = vunpack.c.l.b16 %v3921
        %v4211 = vunpack.c.h.b16 %v3921
        %v4212 = vunpack.c.l.b16 %v3922
        %v4213 = vunpack.c.h.b16 %v3922
        %v4214 = vunpack.c.l.b16 %v3923
        %v4215 = vunpack.c.h.b16 %v3923
        %v4216 = vunpack.c.l.b16 %v3924
        %v4217 = vunpack.c.h.b16 %v3924
        %v4218 = vunpack.c.l.b16 %v3925
        %v4219 = vunpack.c.h.b16 %v3925
        %v4220 = vunpack.c.l.b16 %v3926
        %v4221 = vunpack.c.h.b16 %v3926
        %v4222 = vunpack.c.l.b16 %v3927
        %v4223 = vunpack.c.h.b16 %v3927
        %v4224 = vunpack.c.l.b16 %v3928
        %v4225 = vunpack.c.h.b16 %v3928
        %v4226 = vunpack.c.l.b16 %v3929
        %v4227 = vunpack.c.h.b16 %v3929
        %v4228 = vunpack.c.l.b16 %v3930
        %v4229 = vunpack.c.h.b16 %v3930
        %v4230 = vunpack.c.l.b16 %v3931
        %v4231 = vunpack.c.h.b16 %v3931
        %v4232 = vunpack.c.l.b16 %v3932
        %v4233 = vunpack.c.h.b16 %v3932
        %v4234 = vunpack.c.l.b16 %v3933
        %v4235 = vunpack.c.h.b16 %v3933
        %v4236 = vunpack.c.l.b16 %v3934
        %v4237 = vunpack.c.h.b16 %v3934
        %v4238 = vunpack.c.l.b16 %v3935
        %v4239 = vunpack.c.h.b16 %v3935
        %v4240 = vunpack.c.l.b16 %v3936
        %v4241 = vunpack.c.h.b16 %v3936
        %v4242 = vunpack.c.l.b16 %v3937
        %v4243 = vunpack.c.h.b16 %v3937
        %v4244 = vunpack.c.l.b16 %v3938
        %v4245 = vunpack.c.h.b16 %v3938
        %v4246 = vunpack.c.l.b16 %v3939
        %v4247 = vunpack.c.h.b16 %v3939
        %v4248 = vpack.c.b16 %v4202, %v4200
        %v4249 = vpack.c.b16 %v4203, %v4201
        %v4250 = vpack.c.b16 %v4206, %v4204
        %v4251 = vpack.c.b16 %v4207, %v4205
        %v4252 = vpack.c.b16 %v4210, %v4208
        %v4253 = vpack.c.b16 %v4211, %v4209
        %v4254 = vpack.c.b16 %v4214, %v4212
        %v4255 = vpack.c.b16 %v4215, %v4213
        %v4256 = vpack.c.b16 %v4218, %v4216
        %v4257 = vpack.c.b16 %v4219, %v4217
        %v4258 = vpack.c.b16 %v4222, %v4220
        %v4259 = vpack.c.b16 %v4223, %v4221
        %v4260 = vpack.c.b16 %v4226, %v4224
        %v4261 = vpack.c.b16 %v4227, %v4225
        %v4262 = vpack.c.b16 %v4230, %v4228
        %v4263 = vpack.c.b16 %v4231, %v4229
        %v4264 = vpack.c.b16 %v4234, %v4232
        %v4265 = vpack.c.b16 %v4235, %v4233
        %v4266 = vpack.c.b16 %v4238, %v4236
        %v4267 = vpack.c.b16 %v4239, %v4237
        %v4268 = vpack.c.b16 %v4242, %v4240
        %v4269 = vpack.c.b16 %v4243, %v4241
        %v4270 = vpack.c.b16 %v4246, %v4244
        %v4271 = vpack.c.b16 %v4247, %v4245
        %v4297 = vsel %vm3379, %v3915, 0
        %4299 = vmatprep.subr.bf16.mxu0 %v4249
        %4300 = vmatpush1.bf16.msra.mxu0 %v4248
        %4301 = vmatprep.subr.bf16.mxu0 %v4251
        %4302 = vmatpush1.bf16.msra.mxu0 %v4250
        %4303 = vmatprep.subr.bf16.mxu0 %v4253
        %4304 = vmatpush1.bf16.msra.mxu0 %v4252
        %4305 = vmatprep.subr.bf16.mxu0 %v4255
        %4306 = vmatpush1.bf16.msra.mxu0 %v4254
        %4307 = vmatprep.subr.bf16.mxu0 %v4257
        %4308 = vmatpush1.bf16.msra.mxu0 %v4256
        %4309 = vmatprep.subr.bf16.mxu0 %v4259
        %4310 = vmatpush1.bf16.msra.mxu0 %v4258
        %4311 = vmatprep.subr.bf16.mxu0 %v4261
        %4312 = vmatpush1.bf16.msra.mxu0 %v4260
        %4313 = vmatprep.subr.bf16.mxu0 %v4263
        %4314 = vmatpush1.bf16.msra.mxu0 %v4262
        %4315 = vmatprep.subr.bf16.mxu0 %v4265
        %4316 = vmatpush1.bf16.msra.mxu0 %v4264
        %4317 = vmatprep.subr.bf16.mxu0 %v4267
        %4318 = vmatpush1.bf16.msra.mxu0 %v4266
        %4319 = vmatprep.subr.bf16.mxu0 %v4269
        %4320 = vmatpush1.bf16.msra.mxu0 %v4268
        %4321 = vmatprep.subr.bf16.mxu0 %v4271
        %4322 = vmatpush1.bf16.msra.mxu0 %v4270
        %4323 = vmatprep.subr.bf16.mxu0 0
        %4324 = vmatpush1.bf16.msra.mxu0 0
        %4325 = vmatprep.subr.bf16.mxu0 0
        %4326 = vmatpush1.bf16.msra.mxu0 0
        %4327 = vmatprep.subr.bf16.mxu0 0
        %4328 = vmatpush1.bf16.msra.mxu0 0
        %4329 = vmatprep.subr.bf16.mxu0 0
        %4330 = vmatpush1.bf16.msra.mxu0 0
        %4331 = vmatprep.mubr.bf16.mxu0 %v4297
        %4332 = vmatmul.mubr.bf16.gmra.mrb[0].mxu0 %v3914
        %v4333 = vpop.f32.mrb[0].mxu0
        %v4334 = vadd.f32 %v4168, %v4333
        %v4335 = vpop.f32.mrb[0].mxu0
        %v4336 = vadd.f32 %v4170, %v4335
        %v4337 = vpop.f32.mrb[0].mxu0
        %v4338 = vadd.f32 %v4172, %v4337
        %v4339 = vpop.f32.mrb[0].mxu0
        %v4340 = vadd.f32 %v4174, %v4339
        %4341 = vdwg.mxu0
        %4342 = vmatprep.subr.bf16.mxu0 %v3869
        %4343 = vmatpush1.bf16.msra.mxu0 %v3866
        %4344 = vmatprep.subr.bf16.mxu0 0
        %4345 = vmatpush1.bf16.msra.mxu0 0
        %4346 = vmatprep.subr.bf16.mxu0 0
        %4347 = vmatpush1.bf16.msra.mxu0 0
        %4348 = vmatprep.subr.bf16.mxu0 0
        %4349 = vmatpush1.bf16.msra.mxu0 0
        %4350 = vmatprep.subr.bf16.mxu0 0
        %4351 = vmatpush1.bf16.msra.mxu0 0
        %4352 = vmatprep.subr.bf16.mxu0 0
        %4353 = vmatpush1.bf16.msra.mxu0 0
        %4354 = vmatprep.subr.bf16.mxu0 0
        %4355 = vmatpush1.bf16.msra.mxu0 0
        %4356 = vmatprep.subr.bf16.mxu0 0
        %4357 = vmatpush1.bf16.msra.mxu0 0
        %4358 = vmatprep.subr.bf16.mxu0 0
        %4359 = vmatpush1.bf16.msra.mxu0 0
        %4360 = vmatprep.subr.bf16.mxu0 0
        %4361 = vmatpush1.bf16.msra.mxu0 0
        %4362 = vmatprep.subr.bf16.mxu0 0
        %4363 = vmatpush1.bf16.msra.mxu0 0
        %4364 = vmatprep.subr.bf16.mxu0 0
        %4365 = vmatpush1.bf16.msra.mxu0 0
        %4366 = vmatprep.subr.bf16.mxu0 0
        %4367 = vmatpush1.bf16.msra.mxu0 0
        %4368 = vmatprep.subr.bf16.mxu0 0
        %4369 = vmatpush1.bf16.msra.mxu0 0
        %4370 = vmatprep.subr.bf16.mxu0 0
        %4371 = vmatpush1.bf16.msra.mxu0 0
        %4372 = vmatprep.subr.bf16.mxu0 0
        %4373 = vmatpush1.bf16.msra.mxu0 0
        %4374 = vmatprep.mubr.bf16.mxu0 0
        %4375 = vmatmul.mubr.bf16.gmra.mrb[0].mxu0 %v3601
        %v4376 = vpop.f32.mrb[0].mxu0
        %v4377 = vadd.f32 0.0, %v4376
        %v4378 = vpop.f32.mrb[0].mxu0
        %v4379 = vadd.f32 0.0, %v4378
        %v4380 = vpop.f32.mrb[0].mxu0
        %v4381 = vadd.f32 0.0, %v4380
        %v4382 = vpop.f32.mrb[0].mxu0
        %v4383 = vadd.f32 0.0, %v4382
        %4384 = vdwg.mxu0
        %v4385 = vpack.c.bf16 %v4381, %v4377
        %v4386 = vpack.c.bf16 %v4383, %v4379
        %s4387 = scalar_lea.vmem [#allocation10], 384
        %v4388 = vld [vmem:[%s4387] sm:$0xff]
        %v4389 = vld [vmem:[%s4387 + $0x8] sm:$0xff]
        %v4390 = vld [vmem:[%s4387 + $0x10] sm:$0xff]
        %v4391 = vld [vmem:[%s4387 + $0x18] sm:$0xff]
        %v4392 = vld [vmem:[%s4387 + $0x20] sm:$0xff]
        %v4393 = vld [vmem:[%s4387 + $0x28] sm:$0xff]
        %v4394 = vld [vmem:[%s4387 + $0x30] sm:$0xff]
        %v4395 = vld [vmem:[%s4387 + $0x38] sm:$0xff]
        %v4396 = vld [vmem:[%s4387 + $0x40] sm:$0xff]
        %v4397 = vld [vmem:[%s4387 + $0x48] sm:$0xff]
        %v4398 = vld [vmem:[%s4387 + $0x50] sm:$0xff]
        %v4399 = vld [vmem:[%s4387 + $0x58] sm:$0xff]
        %v4400 = vld [vmem:[%s4387 + $0x60] sm:$0xff]
        %v4401 = vld [vmem:[%s4387 + $0x68] sm:$0xff]
        %v4402 = vld [vmem:[%s4387 + $0x70] sm:$0xff]
        %v4403 = vld [vmem:[%s4387 + $0x78] sm:$0xff]
        %v4404 = vld [vmem:[%s4387 + $0x80] sm:$0xff]
        %v4405 = vld [vmem:[%s4387 + $0x88] sm:$0xff]
        %v4406 = vld [vmem:[%s4387 + $0x90] sm:$0xff]
        %v4407 = vld [vmem:[%s4387 + $0x98] sm:$0xff]
        %v4408 = vld [vmem:[%s4387 + $0xa0] sm:$0xff]
        %v4409 = vld [vmem:[%s4387 + $0xa8] sm:$0xff]
        %v4410 = vld [vmem:[%s4387 + $0xb0] sm:$0xff]
        %v4411 = vld [vmem:[%s4387 + $0xb8] sm:$0xff]
        %v4436 = vunpack.c.l.b16 %v4388
        %v4437 = vunpack.c.h.b16 %v4388
        %v4438 = vunpack.c.l.b16 %v4389
        %v4439 = vunpack.c.h.b16 %v4389
        %v4440 = vunpack.c.l.b16 %v4390
        %v4441 = vunpack.c.h.b16 %v4390
        %v4442 = vunpack.c.l.b16 %v4391
        %v4443 = vunpack.c.h.b16 %v4391
        %v4444 = vunpack.c.l.b16 %v4392
        %v4445 = vunpack.c.h.b16 %v4392
        %v4446 = vunpack.c.l.b16 %v4393
        %v4447 = vunpack.c.h.b16 %v4393
        %v4448 = vunpack.c.l.b16 %v4394
        %v4449 = vunpack.c.h.b16 %v4394
        %v4450 = vunpack.c.l.b16 %v4395
        %v4451 = vunpack.c.h.b16 %v4395
        %v4452 = vunpack.c.l.b16 %v4396
        %v4453 = vunpack.c.h.b16 %v4396
        %v4454 = vunpack.c.l.b16 %v4397
        %v4455 = vunpack.c.h.b16 %v4397
        %v4456 = vunpack.c.l.b16 %v4398
        %v4457 = vunpack.c.h.b16 %v4398
        %v4458 = vunpack.c.l.b16 %v4399
        %v4459 = vunpack.c.h.b16 %v4399
        %v4460 = vunpack.c.l.b16 %v4400
        %v4461 = vunpack.c.h.b16 %v4400
        %v4462 = vunpack.c.l.b16 %v4401
        %v4463 = vunpack.c.h.b16 %v4401
        %v4464 = vunpack.c.l.b16 %v4402
        %v4465 = vunpack.c.h.b16 %v4402
        %v4466 = vunpack.c.l.b16 %v4403
        %v4467 = vunpack.c.h.b16 %v4403
        %v4468 = vunpack.c.l.b16 %v4404
        %v4469 = vunpack.c.h.b16 %v4404
        %v4470 = vunpack.c.l.b16 %v4405
        %v4471 = vunpack.c.h.b16 %v4405
        %v4472 = vunpack.c.l.b16 %v4406
        %v4473 = vunpack.c.h.b16 %v4406
        %v4474 = vunpack.c.l.b16 %v4407
        %v4475 = vunpack.c.h.b16 %v4407
        %v4476 = vunpack.c.l.b16 %v4408
        %v4477 = vunpack.c.h.b16 %v4408
        %v4478 = vunpack.c.l.b16 %v4409
        %v4479 = vunpack.c.h.b16 %v4409
        %v4480 = vunpack.c.l.b16 %v4410
        %v4481 = vunpack.c.h.b16 %v4410
        %v4482 = vunpack.c.l.b16 %v4411
        %v4483 = vunpack.c.h.b16 %v4411
        %v4484 = vpack.c.b16 %v4438, %v4436
        %v4485 = vpack.c.b16 %v4439, %v4437
        %v4486 = vpack.c.b16 %v4442, %v4440
        %v4487 = vpack.c.b16 %v4443, %v4441
        %v4488 = vpack.c.b16 %v4446, %v4444
        %v4489 = vpack.c.b16 %v4447, %v4445
        %v4490 = vpack.c.b16 %v4450, %v4448
        %v4491 = vpack.c.b16 %v4451, %v4449
        %v4492 = vpack.c.b16 %v4454, %v4452
        %v4493 = vpack.c.b16 %v4455, %v4453
        %v4494 = vpack.c.b16 %v4458, %v4456
        %v4495 = vpack.c.b16 %v4459, %v4457
        %v4496 = vpack.c.b16 %v4462, %v4460
        %v4497 = vpack.c.b16 %v4463, %v4461
        %v4498 = vpack.c.b16 %v4466, %v4464
        %v4499 = vpack.c.b16 %v4467, %v4465
        %v4500 = vpack.c.b16 %v4470, %v4468
        %v4501 = vpack.c.b16 %v4471, %v4469
        %v4502 = vpack.c.b16 %v4474, %v4472
        %v4503 = vpack.c.b16 %v4475, %v4473
        %v4504 = vpack.c.b16 %v4478, %v4476
        %v4505 = vpack.c.b16 %v4479, %v4477
        %v4506 = vpack.c.b16 %v4482, %v4480
        %v4507 = vpack.c.b16 %v4483, %v4481
        %v4533 = vsel %vm3379, %v4386, 0
        %4535 = vmatprep.subr.bf16.mxu0 %v4485
        %4536 = vmatpush1.bf16.msra.mxu0 %v4484
        %4537 = vmatprep.subr.bf16.mxu0 %v4487
        %4538 = vmatpush1.bf16.msra.mxu0 %v4486
        %4539 = vmatprep.subr.bf16.mxu0 %v4489
        %4540 = vmatpush1.bf16.msra.mxu0 %v4488
        %4541 = vmatprep.subr.bf16.mxu0 %v4491
        %4542 = vmatpush1.bf16.msra.mxu0 %v4490
        %4543 = vmatprep.subr.bf16.mxu0 %v4493
        %4544 = vmatpush1.bf16.msra.mxu0 %v4492
        %4545 = vmatprep.subr.bf16.mxu0 %v4495
        %4546 = vmatpush1.bf16.msra.mxu0 %v4494
        %4547 = vmatprep.subr.bf16.mxu0 %v4497
        %4548 = vmatpush1.bf16.msra.mxu0 %v4496
        %4549 = vmatprep.subr.bf16.mxu0 %v4499
        %4550 = vmatpush1.bf16.msra.mxu0 %v4498
        %4551 = vmatprep.subr.bf16.mxu0 %v4501
        %4552 = vmatpush1.bf16.msra.mxu0 %v4500
        %4553 = vmatprep.subr.bf16.mxu0 %v4503
        %4554 = vmatpush1.bf16.msra.mxu0 %v4502
        %4555 = vmatprep.subr.bf16.mxu0 %v4505
        %4556 = vmatpush1.bf16.msra.mxu0 %v4504
        %4557 = vmatprep.subr.bf16.mxu0 %v4507
        %4558 = vmatpush1.bf16.msra.mxu0 %v4506
        %4559 = vmatprep.subr.bf16.mxu0 0
        %4560 = vmatpush1.bf16.msra.mxu0 0
        %4561 = vmatprep.subr.bf16.mxu0 0
        %4562 = vmatpush1.bf16.msra.mxu0 0
        %4563 = vmatprep.subr.bf16.mxu0 0
        %4564 = vmatpush1.bf16.msra.mxu0 0
        %4565 = vmatprep.subr.bf16.mxu0 0
        %4566 = vmatpush1.bf16.msra.mxu0 0
        %4567 = vmatprep.mubr.bf16.mxu0 %v4533
        %4568 = vmatmul.mubr.bf16.gmra.mrb[0].mxu0 %v4385
        %v4569 = vpop.f32.mrb[0].mxu0
        %v4570 = vadd.f32 0.0, %v4569
        %v4571 = vpop.f32.mrb[0].mxu0
        %v4572 = vadd.f32 0.0, %v4571
        %v4573 = vpop.f32.mrb[0].mxu0
        %v4574 = vadd.f32 0.0, %v4573
        %v4575 = vpop.f32.mrb[0].mxu0
        %v4576 = vadd.f32 0.0, %v4575
        %4577 = vdwg.mxu0
        %v4578 = vadd.f32 %v4334, %v4570
        %v4579 = vadd.f32 %v4336, %v4572
        %v4580 = vadd.f32 %v4338, %v4574
        %v4581 = vadd.f32 %v4340, %v4576
        %v4582 = vld [vmem:[#allocation11] sm:$0x3]
        %v4584 = vlaneseq
        %v4585 = vshrl.u32 %v4584, 7
        %v4586 = vsub.s32 0, %v4585
        %v4587 = vrot.slane %v4582, %v4586
        %v4588 = vlaneseq
        %v4589 = vshrl.u32 %v4588, 7
        %v4590 = vsub.s32 1, %v4589
        %v4591 = vrot.slane %v4582, %v4590
        %v4594 = vadd.f32 %v4578, %v4587
        %v4595 = vadd.f32 %v4579, %v4591
        %v4596 = vadd.f32 %v4580, %v4587
        %v4597 = vadd.f32 %v4581, %v4591
        %v4598 = vadd.f32 %v4594, %v3086
        %v4599 = vadd.f32 %v4595, %v3087
        %v4600 = vadd.f32 %v4596, %v3088
        %v4601 = vadd.f32 %v4597, %v3089
        %v4602 = vmax.f32 %v4598, 0.0
        %v4603 = vmax.f32 %v4599, 0.0
        %v4604 = vmax.f32 %v4600, 0.0
        %v4605 = vmax.f32 %v4601, 0.0
        %v4606 = vpack.c.bf16 %v4604, %v4602
        %v4607 = vpack.c.bf16 %v4605, %v4603
        %v4608 = vld [vmem:[#allocation13] sm:$0xf]
        %v4610 = vsel %vm3099, %v4608, 0
        %v4613 = vsel %vm975, %v4606, 0
        %v4616 = vsel %vm975, %v4607, 0
        %4618 = vmatprep.subr.bf16.mxu0 %v4616
        %4619 = vmatpush1.bf16.msra.mxu0 %v4613
        %4620 = vmatprep.subr.bf16.mxu0 0
        %4621 = vmatpush1.bf16.msra.mxu0 0
        %4622 = vmatprep.subr.bf16.mxu0 0
        %4623 = vmatpush1.bf16.msra.mxu0 0
        %4624 = vmatprep.subr.bf16.mxu0 0
        %4625 = vmatpush1.bf16.msra.mxu0 0
        %4626 = vmatprep.subr.bf16.mxu0 0
        %4627 = vmatpush1.bf16.msra.mxu0 0
        %4628 = vmatprep.subr.bf16.mxu0 0
        %4629 = vmatpush1.bf16.msra.mxu0 0
        %4630 = vmatprep.subr.bf16.mxu0 0
        %4631 = vmatpush1.bf16.msra.mxu0 0
        %4632 = vmatprep.subr.bf16.mxu0 0
        %4633 = vmatpush1.bf16.msra.mxu0 0
        %4634 = vmatprep.subr.bf16.mxu0 0
        %4635 = vmatpush1.bf16.msra.mxu0 0
        %4636 = vmatprep.subr.bf16.mxu0 0
        %4637 = vmatpush1.bf16.msra.mxu0 0
        %4638 = vmatprep.subr.bf16.mxu0 0
        %4639 = vmatpush1.bf16.msra.mxu0 0
        %4640 = vmatprep.subr.bf16.mxu0 0
        %4641 = vmatpush1.bf16.msra.mxu0 0
        %4642 = vmatprep.subr.bf16.mxu0 0
        %4643 = vmatpush1.bf16.msra.mxu0 0
        %4644 = vmatprep.subr.bf16.mxu0 0
        %4645 = vmatpush1.bf16.msra.mxu0 0
        %4646 = vmatprep.subr.bf16.mxu0 0
        %4647 = vmatpush1.bf16.msra.mxu0 0
        %4648 = vmatprep.subr.bf16.mxu0 0
        %4649 = vmatpush1.bf16.msra.mxu0 0
        %4650 = vmatprep.mubr.bf16.mxu0 0
        %4651 = vmatmul.mubr.bf16.gmra.mrb[0].mxu0 %v4610
        %v4652 = vpop.f32.mrb[0].mxu0
        %v4653 = vadd.f32 0.0, %v4652
        %v4654 = vpop.f32.mrb[0].mxu0
        %v4655 = vadd.f32 0.0, %v4654
        %v4656 = vpop.f32.mrb[0].mxu0
        %v4657 = vpop.f32.mrb[0].mxu0
        %4658 = vdwg.mxu0
        %v4659 = vpack.c.bf16 %v4653, %v4653
        %v4660 = vpack.c.bf16 %v4655, %v4655
        %v4661 = vld [vmem:[%s12] sm:$0xff]
        %v4662 = vld [vmem:[%s12 + $0x8] sm:$0xff]
        %v4663 = vld [vmem:[%s12 + $0x10] sm:$0xff]
        %v4664 = vld [vmem:[%s12 + $0x18] sm:$0xff]
        %v4665 = vld [vmem:[%s12 + $0x20] sm:$0xff]
        %v4666 = vld [vmem:[%s12 + $0x28] sm:$0xff]
        %v4667 = vld [vmem:[%s12 + $0x30] sm:$0xff]
        %v4668 = vld [vmem:[%s12 + $0x38] sm:$0xff]
        %v4669 = vld [vmem:[%s12 + $0x40] sm:$0xff]
        %v4670 = vld [vmem:[%s12 + $0x48] sm:$0xff]
        %v4671 = vld [vmem:[%s12 + $0x50] sm:$0xff]
        %v4672 = vld [vmem:[%s12 + $0x58] sm:$0xff]
        %v4673 = vld [vmem:[%s12 + $0x60] sm:$0xff]
        %v4674 = vld [vmem:[%s12 + $0x68] sm:$0xff]
        %v4675 = vld [vmem:[%s12 + $0x70] sm:$0xff]
        %v4676 = vld [vmem:[%s12 + $0x78] sm:$0xff]
        %v4677 = vld [vmem:[%s12 + $0x80] sm:$0xff]
        %v4678 = vld [vmem:[%s12 + $0x88] sm:$0xff]
        %v4679 = vld [vmem:[%s12 + $0x90] sm:$0xff]
        %v4680 = vld [vmem:[%s12 + $0x98] sm:$0xff]
        %v4681 = vld [vmem:[%s12 + $0xa0] sm:$0xff]
        %v4682 = vld [vmem:[%s12 + $0xa8] sm:$0xff]
        %v4683 = vld [vmem:[%s12 + $0xb0] sm:$0xff]
        %v4684 = vld [vmem:[%s12 + $0xb8] sm:$0xff]
        %s4685 = scalar_lea.vmem [#allocation13], 4
        %v4686 = vld [vmem:[%s4685] sm:$0xf]
        %v4688 = vsel %vm3099, %v4686, 0
        %4690 = vmatprep.subr.bf16.mxu0 %v4616
        %4691 = vmatpush1.bf16.msra.mxu0 %v4613
        %4692 = vmatprep.subr.bf16.mxu0 0
        %4693 = vmatpush1.bf16.msra.mxu0 0
        %4694 = vmatprep.subr.bf16.mxu0 0
        %4695 = vmatpush1.bf16.msra.mxu0 0
        %4696 = vmatprep.subr.bf16.mxu0 0
        %4697 = vmatpush1.bf16.msra.mxu0 0
        %4698 = vmatprep.subr.bf16.mxu0 0
        %4699 = vmatpush1.bf16.msra.mxu0 0
        %4700 = vmatprep.subr.bf16.mxu0 0
        %4701 = vmatpush1.bf16.msra.mxu0 0
        %4702 = vmatprep.subr.bf16.mxu0 0
        %4703 = vmatpush1.bf16.msra.mxu0 0
        %4704 = vmatprep.subr.bf16.mxu0 0
        %4705 = vmatpush1.bf16.msra.mxu0 0
        %4706 = vmatprep.subr.bf16.mxu0 0
        %4707 = vmatpush1.bf16.msra.mxu0 0
        %4708 = vmatprep.subr.bf16.mxu0 0
        %4709 = vmatpush1.bf16.msra.mxu0 0
        %4710 = vmatprep.subr.bf16.mxu0 0
        %4711 = vmatpush1.bf16.msra.mxu0 0
        %4712 = vmatprep.subr.bf16.mxu0 0
        %4713 = vmatpush1.bf16.msra.mxu0 0
        %4714 = vmatprep.subr.bf16.mxu0 0
        %4715 = vmatpush1.bf16.msra.mxu0 0
        %4716 = vmatprep.subr.bf16.mxu0 0
        %4717 = vmatpush1.bf16.msra.mxu0 0
        %4718 = vmatprep.subr.bf16.mxu0 0
        %4719 = vmatpush1.bf16.msra.mxu0 0
        %4720 = vmatprep.subr.bf16.mxu0 0
        %4721 = vmatpush1.bf16.msra.mxu0 0
        %4722 = vmatprep.mubr.bf16.mxu0 0
        %4723 = vmatmul.mubr.bf16.gmra.mrb[0].mxu0 %v4688
        %v4724 = vpop.f32.mrb[0].mxu0
        %v4725 = vadd.f32 0.0, %v4724
        %v4726 = vpop.f32.mrb[0].mxu0
        %v4727 = vadd.f32 0.0, %v4726
        %v4728 = vpop.f32.mrb[0].mxu0
        %v4729 = vpop.f32.mrb[0].mxu0
        %4730 = vdwg.mxu0
        %v4731 = vpack.c.bf16 %v4725, %v4725
        %v4732 = vpack.c.bf16 %v4727, %v4727
        %s4733 = scalar_lea.vmem %s12, 192
        %v4734 = vld [vmem:[%s4733] sm:$0xff]
        %v4735 = vld [vmem:[%s4733 + $0x8] sm:$0xff]
        %v4736 = vld [vmem:[%s4733 + $0x10] sm:$0xff]
        %v4737 = vld [vmem:[%s4733 + $0x18] sm:$0xff]
        %v4738 = vld [vmem:[%s4733 + $0x20] sm:$0xff]
        %v4739 = vld [vmem:[%s4733 + $0x28] sm:$0xff]
        %v4740 = vld [vmem:[%s4733 + $0x30] sm:$0xff]
        %v4741 = vld [vmem:[%s4733 + $0x38] sm:$0xff]
        %v4742 = vld [vmem:[%s4733 + $0x40] sm:$0xff]
        %v4743 = vld [vmem:[%s4733 + $0x48] sm:$0xff]
        %v4744 = vld [vmem:[%s4733 + $0x50] sm:$0xff]
        %v4745 = vld [vmem:[%s4733 + $0x58] sm:$0xff]
        %v4746 = vld [vmem:[%s4733 + $0x60] sm:$0xff]
        %v4747 = vld [vmem:[%s4733 + $0x68] sm:$0xff]
        %v4748 = vld [vmem:[%s4733 + $0x70] sm:$0xff]
        %v4749 = vld [vmem:[%s4733 + $0x78] sm:$0xff]
        %v4750 = vld [vmem:[%s4733 + $0x80] sm:$0xff]
        %v4751 = vld [vmem:[%s4733 + $0x88] sm:$0xff]
        %v4752 = vld [vmem:[%s4733 + $0x90] sm:$0xff]
        %v4753 = vld [vmem:[%s4733 + $0x98] sm:$0xff]
        %v4754 = vld [vmem:[%s4733 + $0xa0] sm:$0xff]
        %v4755 = vld [vmem:[%s4733 + $0xa8] sm:$0xff]
        %v4756 = vld [vmem:[%s4733 + $0xb0] sm:$0xff]
        %v4757 = vld [vmem:[%s4733 + $0xb8] sm:$0xff]
        %v4782 = vunpack.c.l.b16 %v4734
        %v4783 = vunpack.c.h.b16 %v4734
        %v4784 = vunpack.c.l.b16 %v4735
        %v4785 = vunpack.c.h.b16 %v4735
        %v4786 = vunpack.c.l.b16 %v4736
        %v4787 = vunpack.c.h.b16 %v4736
        %v4788 = vunpack.c.l.b16 %v4737
        %v4789 = vunpack.c.h.b16 %v4737
        %v4790 = vunpack.c.l.b16 %v4738
        %v4791 = vunpack.c.h.b16 %v4738
        %v4792 = vunpack.c.l.b16 %v4739
        %v4793 = vunpack.c.h.b16 %v4739
        %v4794 = vunpack.c.l.b16 %v4740
        %v4795 = vunpack.c.h.b16 %v4740
        %v4796 = vunpack.c.l.b16 %v4741
        %v4797 = vunpack.c.h.b16 %v4741
        %v4798 = vunpack.c.l.b16 %v4742
        %v4799 = vunpack.c.h.b16 %v4742
        %v4800 = vunpack.c.l.b16 %v4743
        %v4801 = vunpack.c.h.b16 %v4743
        %v4802 = vunpack.c.l.b16 %v4744
        %v4803 = vunpack.c.h.b16 %v4744
        %v4804 = vunpack.c.l.b16 %v4745
        %v4805 = vunpack.c.h.b16 %v4745
        %v4806 = vunpack.c.l.b16 %v4746
        %v4807 = vunpack.c.h.b16 %v4746
        %v4808 = vunpack.c.l.b16 %v4747
        %v4809 = vunpack.c.h.b16 %v4747
        %v4810 = vunpack.c.l.b16 %v4748
        %v4811 = vunpack.c.h.b16 %v4748
        %v4812 = vunpack.c.l.b16 %v4749
        %v4813 = vunpack.c.h.b16 %v4749
        %v4814 = vunpack.c.l.b16 %v4750
        %v4815 = vunpack.c.h.b16 %v4750
        %v4816 = vunpack.c.l.b16 %v4751
        %v4817 = vunpack.c.h.b16 %v4751
        %v4818 = vunpack.c.l.b16 %v4752
        %v4819 = vunpack.c.h.b16 %v4752
        %v4820 = vunpack.c.l.b16 %v4753
        %v4821 = vunpack.c.h.b16 %v4753
        %v4822 = vunpack.c.l.b16 %v4754
        %v4823 = vunpack.c.h.b16 %v4754
        %v4824 = vunpack.c.l.b16 %v4755
        %v4825 = vunpack.c.h.b16 %v4755
        %v4826 = vunpack.c.l.b16 %v4756
        %v4827 = vunpack.c.h.b16 %v4756
        %v4828 = vunpack.c.l.b16 %v4757
        %v4829 = vunpack.c.h.b16 %v4757
        %v4830 = vpack.c.b16 %v4784, %v4782
        %v4831 = vpack.c.b16 %v4785, %v4783
        %v4832 = vpack.c.b16 %v4788, %v4786
        %v4833 = vpack.c.b16 %v4789, %v4787
        %v4834 = vpack.c.b16 %v4792, %v4790
        %v4835 = vpack.c.b16 %v4793, %v4791
        %v4836 = vpack.c.b16 %v4796, %v4794
        %v4837 = vpack.c.b16 %v4797, %v4795
        %v4838 = vpack.c.b16 %v4800, %v4798
        %v4839 = vpack.c.b16 %v4801, %v4799
        %v4840 = vpack.c.b16 %v4804, %v4802
        %v4841 = vpack.c.b16 %v4805, %v4803
        %v4842 = vpack.c.b16 %v4808, %v4806
        %v4843 = vpack.c.b16 %v4809, %v4807
        %v4844 = vpack.c.b16 %v4812, %v4810
        %v4845 = vpack.c.b16 %v4813, %v4811
        %v4846 = vpack.c.b16 %v4816, %v4814
        %v4847 = vpack.c.b16 %v4817, %v4815
        %v4848 = vpack.c.b16 %v4820, %v4818
        %v4849 = vpack.c.b16 %v4821, %v4819
        %v4850 = vpack.c.b16 %v4824, %v4822
        %v4851 = vpack.c.b16 %v4825, %v4823
        %v4852 = vpack.c.b16 %v4828, %v4826
        %v4853 = vpack.c.b16 %v4829, %v4827
        %v4879 = vsel %vm3379, %v4732, 0
        %4881 = vmatprep.subr.bf16.mxu0 %v4831
        %4882 = vmatpush1.bf16.msra.mxu0 %v4830
        %4883 = vmatprep.subr.bf16.mxu0 %v4833
        %4884 = vmatpush1.bf16.msra.mxu0 %v4832
        %4885 = vmatprep.subr.bf16.mxu0 %v4835
        %4886 = vmatpush1.bf16.msra.mxu0 %v4834
        %4887 = vmatprep.subr.bf16.mxu0 %v4837
        %4888 = vmatpush1.bf16.msra.mxu0 %v4836
        %4889 = vmatprep.subr.bf16.mxu0 %v4839
        %4890 = vmatpush1.bf16.msra.mxu0 %v4838
        %4891 = vmatprep.subr.bf16.mxu0 %v4841
        %4892 = vmatpush1.bf16.msra.mxu0 %v4840
        %4893 = vmatprep.subr.bf16.mxu0 %v4843
        %4894 = vmatpush1.bf16.msra.mxu0 %v4842
        %4895 = vmatprep.subr.bf16.mxu0 %v4845
        %4896 = vmatpush1.bf16.msra.mxu0 %v4844
        %4897 = vmatprep.subr.bf16.mxu0 %v4847
        %4898 = vmatpush1.bf16.msra.mxu0 %v4846
        %4899 = vmatprep.subr.bf16.mxu0 %v4849
        %4900 = vmatpush1.bf16.msra.mxu0 %v4848
        %4901 = vmatprep.subr.bf16.mxu0 %v4851
        %4902 = vmatpush1.bf16.msra.mxu0 %v4850
        %4903 = vmatprep.subr.bf16.mxu0 %v4853
        %4904 = vmatpush1.bf16.msra.mxu0 %v4852
        %4905 = vmatprep.subr.bf16.mxu0 0
        %4906 = vmatpush1.bf16.msra.mxu0 0
        %4907 = vmatprep.subr.bf16.mxu0 0
        %4908 = vmatpush1.bf16.msra.mxu0 0
        %4909 = vmatprep.subr.bf16.mxu0 0
        %4910 = vmatpush1.bf16.msra.mxu0 0
        %4911 = vmatprep.subr.bf16.mxu0 0
        %4912 = vmatpush1.bf16.msra.mxu0 0
        %4913 = vmatprep.mubr.bf16.mxu0 %v4879
        %4914 = vmatmul.mubr.bf16.gmra.mrb[0].mxu0 %v4731
        %v4915 = vpop.f32.mrb[0].mxu0
        %v4916 = vadd.f32 0.0, %v4915
        %v4917 = vpop.f32.mrb[0].mxu0
        %v4918 = vadd.f32 0.0, %v4917
        %v4919 = vpop.f32.mrb[0].mxu0
        %v4920 = vpop.f32.mrb[0].mxu0
        %4921 = vdwg.mxu0
        %v4946 = vunpack.c.l.b16 %v4661
        %v4947 = vunpack.c.h.b16 %v4661
        %v4948 = vunpack.c.l.b16 %v4662
        %v4949 = vunpack.c.h.b16 %v4662
        %v4950 = vunpack.c.l.b16 %v4663
        %v4951 = vunpack.c.h.b16 %v4663
        %v4952 = vunpack.c.l.b16 %v4664
        %v4953 = vunpack.c.h.b16 %v4664
        %v4954 = vunpack.c.l.b16 %v4665
        %v4955 = vunpack.c.h.b16 %v4665
        %v4956 = vunpack.c.l.b16 %v4666
        %v4957 = vunpack.c.h.b16 %v4666
        %v4958 = vunpack.c.l.b16 %v4667
        %v4959 = vunpack.c.h.b16 %v4667
        %v4960 = vunpack.c.l.b16 %v4668
        %v4961 = vunpack.c.h.b16 %v4668
        %v4962 = vunpack.c.l.b16 %v4669
        %v4963 = vunpack.c.h.b16 %v4669
        %v4964 = vunpack.c.l.b16 %v4670
        %v4965 = vunpack.c.h.b16 %v4670
        %v4966 = vunpack.c.l.b16 %v4671
        %v4967 = vunpack.c.h.b16 %v4671
        %v4968 = vunpack.c.l.b16 %v4672
        %v4969 = vunpack.c.h.b16 %v4672
        %v4970 = vunpack.c.l.b16 %v4673
        %v4971 = vunpack.c.h.b16 %v4673
        %v4972 = vunpack.c.l.b16 %v4674
        %v4973 = vunpack.c.h.b16 %v4674
        %v4974 = vunpack.c.l.b16 %v4675
        %v4975 = vunpack.c.h.b16 %v4675
        %v4976 = vunpack.c.l.b16 %v4676
        %v4977 = vunpack.c.h.b16 %v4676
        %v4978 = vunpack.c.l.b16 %v4677
        %v4979 = vunpack.c.h.b16 %v4677
        %v4980 = vunpack.c.l.b16 %v4678
        %v4981 = vunpack.c.h.b16 %v4678
        %v4982 = vunpack.c.l.b16 %v4679
        %v4983 = vunpack.c.h.b16 %v4679
        %v4984 = vunpack.c.l.b16 %v4680
        %v4985 = vunpack.c.h.b16 %v4680
        %v4986 = vunpack.c.l.b16 %v4681
        %v4987 = vunpack.c.h.b16 %v4681
        %v4988 = vunpack.c.l.b16 %v4682
        %v4989 = vunpack.c.h.b16 %v4682
        %v4990 = vunpack.c.l.b16 %v4683
        %v4991 = vunpack.c.h.b16 %v4683
        %v4992 = vunpack.c.l.b16 %v4684
        %v4993 = vunpack.c.h.b16 %v4684
        %v4994 = vpack.c.b16 %v4948, %v4946
        %v4995 = vpack.c.b16 %v4949, %v4947
        %v4996 = vpack.c.b16 %v4952, %v4950
        %v4997 = vpack.c.b16 %v4953, %v4951
        %v4998 = vpack.c.b16 %v4956, %v4954
        %v4999 = vpack.c.b16 %v4957, %v4955
        %v5000 = vpack.c.b16 %v4960, %v4958
        %v5001 = vpack.c.b16 %v4961, %v4959
        %v5002 = vpack.c.b16 %v4964, %v4962
        %v5003 = vpack.c.b16 %v4965, %v4963
        %v5004 = vpack.c.b16 %v4968, %v4966
        %v5005 = vpack.c.b16 %v4969, %v4967
        %v5006 = vpack.c.b16 %v4972, %v4970
        %v5007 = vpack.c.b16 %v4973, %v4971
        %v5008 = vpack.c.b16 %v4976, %v4974
        %v5009 = vpack.c.b16 %v4977, %v4975
        %v5010 = vpack.c.b16 %v4980, %v4978
        %v5011 = vpack.c.b16 %v4981, %v4979
        %v5012 = vpack.c.b16 %v4984, %v4982
        %v5013 = vpack.c.b16 %v4985, %v4983
        %v5014 = vpack.c.b16 %v4988, %v4986
        %v5015 = vpack.c.b16 %v4989, %v4987
        %v5016 = vpack.c.b16 %v4992, %v4990
        %v5017 = vpack.c.b16 %v4993, %v4991
        %v5043 = vsel %vm3379, %v4660, 0
        %5045 = vmatprep.subr.bf16.mxu0 %v4995
        %5046 = vmatpush1.bf16.msra.mxu0 %v4994
        %5047 = vmatprep.subr.bf16.mxu0 %v4997
        %5048 = vmatpush1.bf16.msra.mxu0 %v4996
        %5049 = vmatprep.subr.bf16.mxu0 %v4999
        %5050 = vmatpush1.bf16.msra.mxu0 %v4998
        %5051 = vmatprep.subr.bf16.mxu0 %v5001
        %5052 = vmatpush1.bf16.msra.mxu0 %v5000
        %5053 = vmatprep.subr.bf16.mxu0 %v5003
        %5054 = vmatpush1.bf16.msra.mxu0 %v5002
        %5055 = vmatprep.subr.bf16.mxu0 %v5005
        %5056 = vmatpush1.bf16.msra.mxu0 %v5004
        %5057 = vmatprep.subr.bf16.mxu0 %v5007
        %5058 = vmatpush1.bf16.msra.mxu0 %v5006
        %5059 = vmatprep.subr.bf16.mxu0 %v5009
        %5060 = vmatpush1.bf16.msra.mxu0 %v5008
        %5061 = vmatprep.subr.bf16.mxu0 %v5011
        %5062 = vmatpush1.bf16.msra.mxu0 %v5010
        %5063 = vmatprep.subr.bf16.mxu0 %v5013
        %5064 = vmatpush1.bf16.msra.mxu0 %v5012
        %5065 = vmatprep.subr.bf16.mxu0 %v5015
        %5066 = vmatpush1.bf16.msra.mxu0 %v5014
        %5067 = vmatprep.subr.bf16.mxu0 %v5017
        %5068 = vmatpush1.bf16.msra.mxu0 %v5016
        %5069 = vmatprep.subr.bf16.mxu0 0
        %5070 = vmatpush1.bf16.msra.mxu0 0
        %5071 = vmatprep.subr.bf16.mxu0 0
        %5072 = vmatpush1.bf16.msra.mxu0 0
        %5073 = vmatprep.subr.bf16.mxu0 0
        %5074 = vmatpush1.bf16.msra.mxu0 0
        %5075 = vmatprep.subr.bf16.mxu0 0
        %5076 = vmatpush1.bf16.msra.mxu0 0
        %5077 = vmatprep.mubr.bf16.mxu0 %v5043
        %5078 = vmatmul.mubr.bf16.gmra.mrb[0].mxu0 %v4659
        %v5079 = vpop.f32.mrb[0].mxu0
        %v5080 = vadd.f32 %v4916, %v5079
        %v5081 = vpop.f32.mrb[0].mxu0
        %v5082 = vadd.f32 %v4918, %v5081
        %v5083 = vpop.f32.mrb[0].mxu0
        %v5084 = vpop.f32.mrb[0].mxu0
        %5085 = vdwg.mxu0
        %s5086 = scalar_lea.vmem [#allocation13], 8
        %v5087 = vld [vmem:[%s5086] sm:$0xf]
        %v5089 = vsel %vm3099, %v5087, 0
        %5091 = vmatprep.subr.bf16.mxu0 %v4616
        %5092 = vmatpush1.bf16.msra.mxu0 %v4613
        %5093 = vmatprep.subr.bf16.mxu0 0
        %5094 = vmatpush1.bf16.msra.mxu0 0
        %5095 = vmatprep.subr.bf16.mxu0 0
        %5096 = vmatpush1.bf16.msra.mxu0 0
        %5097 = vmatprep.subr.bf16.mxu0 0
        %5098 = vmatpush1.bf16.msra.mxu0 0
        %5099 = vmatprep.subr.bf16.mxu0 0
        %5100 = vmatpush1.bf16.msra.mxu0 0
        %5101 = vmatprep.subr.bf16.mxu0 0
        %5102 = vmatpush1.bf16.msra.mxu0 0
        %5103 = vmatprep.subr.bf16.mxu0 0
        %5104 = vmatpush1.bf16.msra.mxu0 0
        %5105 = vmatprep.subr.bf16.mxu0 0
        %5106 = vmatpush1.bf16.msra.mxu0 0
        %5107 = vmatprep.subr.bf16.mxu0 0
        %5108 = vmatpush1.bf16.msra.mxu0 0
        %5109 = vmatprep.subr.bf16.mxu0 0
        %5110 = vmatpush1.bf16.msra.mxu0 0
        %5111 = vmatprep.subr.bf16.mxu0 0
        %5112 = vmatpush1.bf16.msra.mxu0 0
        %5113 = vmatprep.subr.bf16.mxu0 0
        %5114 = vmatpush1.bf16.msra.mxu0 0
        %5115 = vmatprep.subr.bf16.mxu0 0
        %5116 = vmatpush1.bf16.msra.mxu0 0
        %5117 = vmatprep.subr.bf16.mxu0 0
        %5118 = vmatpush1.bf16.msra.mxu0 0
        %5119 = vmatprep.subr.bf16.mxu0 0
        %5120 = vmatpush1.bf16.msra.mxu0 0
        %5121 = vmatprep.subr.bf16.mxu0 0
        %5122 = vmatpush1.bf16.msra.mxu0 0
        %5123 = vmatprep.mubr.bf16.mxu0 0
        %5124 = vmatmul.mubr.bf16.gmra.mrb[0].mxu0 %v5089
        %v5125 = vpop.f32.mrb[0].mxu0
        %v5126 = vadd.f32 0.0, %v5125
        %v5127 = vpop.f32.mrb[0].mxu0
        %v5128 = vadd.f32 0.0, %v5127
        %v5129 = vpop.f32.mrb[0].mxu0
        %v5130 = vpop.f32.mrb[0].mxu0
        %5131 = vdwg.mxu0
        %v5132 = vpack.c.bf16 %v5126, %v5126
        %v5133 = vpack.c.bf16 %v5128, %v5128
        %s5134 = scalar_lea.vmem %s12, 384
        %v5135 = vld [vmem:[%s5134] sm:$0xff]
        %v5136 = vld [vmem:[%s5134 + $0x8] sm:$0xff]
        %v5137 = vld [vmem:[%s5134 + $0x10] sm:$0xff]
        %v5138 = vld [vmem:[%s5134 + $0x18] sm:$0xff]
        %v5139 = vld [vmem:[%s5134 + $0x20] sm:$0xff]
        %v5140 = vld [vmem:[%s5134 + $0x28] sm:$0xff]
        %v5141 = vld [vmem:[%s5134 + $0x30] sm:$0xff]
        %v5142 = vld [vmem:[%s5134 + $0x38] sm:$0xff]
        %v5143 = vld [vmem:[%s5134 + $0x40] sm:$0xff]
        %v5144 = vld [vmem:[%s5134 + $0x48] sm:$0xff]
        %v5145 = vld [vmem:[%s5134 + $0x50] sm:$0xff]
        %v5146 = vld [vmem:[%s5134 + $0x58] sm:$0xff]
        %v5147 = vld [vmem:[%s5134 + $0x60] sm:$0xff]
        %v5148 = vld [vmem:[%s5134 + $0x68] sm:$0xff]
        %v5149 = vld [vmem:[%s5134 + $0x70] sm:$0xff]
        %v5150 = vld [vmem:[%s5134 + $0x78] sm:$0xff]
        %v5151 = vld [vmem:[%s5134 + $0x80] sm:$0xff]
        %v5152 = vld [vmem:[%s5134 + $0x88] sm:$0xff]
        %v5153 = vld [vmem:[%s5134 + $0x90] sm:$0xff]
        %v5154 = vld [vmem:[%s5134 + $0x98] sm:$0xff]
        %v5155 = vld [vmem:[%s5134 + $0xa0] sm:$0xff]
        %v5156 = vld [vmem:[%s5134 + $0xa8] sm:$0xff]
        %v5157 = vld [vmem:[%s5134 + $0xb0] sm:$0xff]
        %v5158 = vld [vmem:[%s5134 + $0xb8] sm:$0xff]
        %v5183 = vunpack.c.l.b16 %v5135
        %v5184 = vunpack.c.h.b16 %v5135
        %v5185 = vunpack.c.l.b16 %v5136
        %v5186 = vunpack.c.h.b16 %v5136
        %v5187 = vunpack.c.l.b16 %v5137
        %v5188 = vunpack.c.h.b16 %v5137
        %v5189 = vunpack.c.l.b16 %v5138
        %v5190 = vunpack.c.h.b16 %v5138
        %v5191 = vunpack.c.l.b16 %v5139
        %v5192 = vunpack.c.h.b16 %v5139
        %v5193 = vunpack.c.l.b16 %v5140
        %v5194 = vunpack.c.h.b16 %v5140
        %v5195 = vunpack.c.l.b16 %v5141
        %v5196 = vunpack.c.h.b16 %v5141
        %v5197 = vunpack.c.l.b16 %v5142
        %v5198 = vunpack.c.h.b16 %v5142
        %v5199 = vunpack.c.l.b16 %v5143
        %v5200 = vunpack.c.h.b16 %v5143
        %v5201 = vunpack.c.l.b16 %v5144
        %v5202 = vunpack.c.h.b16 %v5144
        %v5203 = vunpack.c.l.b16 %v5145
        %v5204 = vunpack.c.h.b16 %v5145
        %v5205 = vunpack.c.l.b16 %v5146
        %v5206 = vunpack.c.h.b16 %v5146
        %v5207 = vunpack.c.l.b16 %v5147
        %v5208 = vunpack.c.h.b16 %v5147
        %v5209 = vunpack.c.l.b16 %v5148
        %v5210 = vunpack.c.h.b16 %v5148
        %v5211 = vunpack.c.l.b16 %v5149
        %v5212 = vunpack.c.h.b16 %v5149
        %v5213 = vunpack.c.l.b16 %v5150
        %v5214 = vunpack.c.h.b16 %v5150
        %v5215 = vunpack.c.l.b16 %v5151
        %v5216 = vunpack.c.h.b16 %v5151
        %v5217 = vunpack.c.l.b16 %v5152
        %v5218 = vunpack.c.h.b16 %v5152
        %v5219 = vunpack.c.l.b16 %v5153
        %v5220 = vunpack.c.h.b16 %v5153
        %v5221 = vunpack.c.l.b16 %v5154
        %v5222 = vunpack.c.h.b16 %v5154
        %v5223 = vunpack.c.l.b16 %v5155
        %v5224 = vunpack.c.h.b16 %v5155
        %v5225 = vunpack.c.l.b16 %v5156
        %v5226 = vunpack.c.h.b16 %v5156
        %v5227 = vunpack.c.l.b16 %v5157
        %v5228 = vunpack.c.h.b16 %v5157
        %v5229 = vunpack.c.l.b16 %v5158
        %v5230 = vunpack.c.h.b16 %v5158
        %v5231 = vpack.c.b16 %v5185, %v5183
        %v5232 = vpack.c.b16 %v5186, %v5184
        %v5233 = vpack.c.b16 %v5189, %v5187
        %v5234 = vpack.c.b16 %v5190, %v5188
        %v5235 = vpack.c.b16 %v5193, %v5191
        %v5236 = vpack.c.b16 %v5194, %v5192
        %v5237 = vpack.c.b16 %v5197, %v5195
        %v5238 = vpack.c.b16 %v5198, %v5196
        %v5239 = vpack.c.b16 %v5201, %v5199
        %v5240 = vpack.c.b16 %v5202, %v5200
        %v5241 = vpack.c.b16 %v5205, %v5203
        %v5242 = vpack.c.b16 %v5206, %v5204
        %v5243 = vpack.c.b16 %v5209, %v5207
        %v5244 = vpack.c.b16 %v5210, %v5208
        %v5245 = vpack.c.b16 %v5213, %v5211
        %v5246 = vpack.c.b16 %v5214, %v5212
        %v5247 = vpack.c.b16 %v5217, %v5215
        %v5248 = vpack.c.b16 %v5218, %v5216
        %v5249 = vpack.c.b16 %v5221, %v5219
        %v5250 = vpack.c.b16 %v5222, %v5220
        %v5251 = vpack.c.b16 %v5225, %v5223
        %v5252 = vpack.c.b16 %v5226, %v5224
        %v5253 = vpack.c.b16 %v5229, %v5227
        %v5254 = vpack.c.b16 %v5230, %v5228
        %v5280 = vsel %vm3379, %v5133, 0
        %5282 = vmatprep.subr.bf16.mxu0 %v5232
        %5283 = vmatpush1.bf16.msra.mxu0 %v5231
        %5284 = vmatprep.subr.bf16.mxu0 %v5234
        %5285 = vmatpush1.bf16.msra.mxu0 %v5233
        %5286 = vmatprep.subr.bf16.mxu0 %v5236
        %5287 = vmatpush1.bf16.msra.mxu0 %v5235
        %5288 = vmatprep.subr.bf16.mxu0 %v5238
        %5289 = vmatpush1.bf16.msra.mxu0 %v5237
        %5290 = vmatprep.subr.bf16.mxu0 %v5240
        %5291 = vmatpush1.bf16.msra.mxu0 %v5239
        %5292 = vmatprep.subr.bf16.mxu0 %v5242
        %5293 = vmatpush1.bf16.msra.mxu0 %v5241
        %5294 = vmatprep.subr.bf16.mxu0 %v5244
        %5295 = vmatpush1.bf16.msra.mxu0 %v5243
        %5296 = vmatprep.subr.bf16.mxu0 %v5246
        %5297 = vmatpush1.bf16.msra.mxu0 %v5245
        %5298 = vmatprep.subr.bf16.mxu0 %v5248
        %5299 = vmatpush1.bf16.msra.mxu0 %v5247
        %5300 = vmatprep.subr.bf16.mxu0 %v5250
        %5301 = vmatpush1.bf16.msra.mxu0 %v5249
        %5302 = vmatprep.subr.bf16.mxu0 %v5252
        %5303 = vmatpush1.bf16.msra.mxu0 %v5251
        %5304 = vmatprep.subr.bf16.mxu0 %v5254
        %5305 = vmatpush1.bf16.msra.mxu0 %v5253
        %5306 = vmatprep.subr.bf16.mxu0 0
        %5307 = vmatpush1.bf16.msra.mxu0 0
        %5308 = vmatprep.subr.bf16.mxu0 0
        %5309 = vmatpush1.bf16.msra.mxu0 0
        %5310 = vmatprep.subr.bf16.mxu0 0
        %5311 = vmatpush1.bf16.msra.mxu0 0
        %5312 = vmatprep.subr.bf16.mxu0 0
        %5313 = vmatpush1.bf16.msra.mxu0 0
        %5314 = vmatprep.mubr.bf16.mxu0 %v5280
        %5315 = vmatmul.mubr.bf16.gmra.mrb[0].mxu0 %v5132
        %v5316 = vpop.f32.mrb[0].mxu0
        %v5317 = vadd.f32 0.0, %v5316
        %v5318 = vpop.f32.mrb[0].mxu0
        %v5319 = vadd.f32 0.0, %v5318
        %v5320 = vpop.f32.mrb[0].mxu0
        %v5321 = vpop.f32.mrb[0].mxu0
        %5322 = vdwg.mxu0
        %v5323 = vadd.f32 %v5080, %v5317
        %v5324 = vadd.f32 %v5082, %v5319
        %s5325 = scalar_lea.vmem [#allocation13], 12
        %v5326 = vld [vmem:[%s5325] sm:$0xf]
        %v5328 = vsel %vm3099, %v5326, 0
        %5330 = vmatprep.subr.bf16.mxu0 %v4616
        %5331 = vmatpush1.bf16.msra.mxu0 %v4613
        %5332 = vmatprep.subr.bf16.mxu0 0
        %5333 = vmatpush1.bf16.msra.mxu0 0
        %5334 = vmatprep.subr.bf16.mxu0 0
        %5335 = vmatpush1.bf16.msra.mxu0 0
        %5336 = vmatprep.subr.bf16.mxu0 0
        %5337 = vmatpush1.bf16.msra.mxu0 0
        %5338 = vmatprep.subr.bf16.mxu0 0
        %5339 = vmatpush1.bf16.msra.mxu0 0
        %5340 = vmatprep.subr.bf16.mxu0 0
        %5341 = vmatpush1.bf16.msra.mxu0 0
        %5342 = vmatprep.subr.bf16.mxu0 0
        %5343 = vmatpush1.bf16.msra.mxu0 0
        %5344 = vmatprep.subr.bf16.mxu0 0
        %5345 = vmatpush1.bf16.msra.mxu0 0
        %5346 = vmatprep.subr.bf16.mxu0 0
        %5347 = vmatpush1.bf16.msra.mxu0 0
        %5348 = vmatprep.subr.bf16.mxu0 0
        %5349 = vmatpush1.bf16.msra.mxu0 0
        %5350 = vmatprep.subr.bf16.mxu0 0
        %5351 = vmatpush1.bf16.msra.mxu0 0
        %5352 = vmatprep.subr.bf16.mxu0 0
        %5353 = vmatpush1.bf16.msra.mxu0 0
        %5354 = vmatprep.subr.bf16.mxu0 0
        %5355 = vmatpush1.bf16.msra.mxu0 0
        %5356 = vmatprep.subr.bf16.mxu0 0
        %5357 = vmatpush1.bf16.msra.mxu0 0
        %5358 = vmatprep.subr.bf16.mxu0 0
        %5359 = vmatpush1.bf16.msra.mxu0 0
        %5360 = vmatprep.subr.bf16.mxu0 0
        %5361 = vmatpush1.bf16.msra.mxu0 0
        %5362 = vmatprep.mubr.bf16.mxu0 0
        %5363 = vmatmul.mubr.bf16.gmra.mrb[0].mxu0 %v5328
        %v5364 = vpop.f32.mrb[0].mxu0
        %v5365 = vadd.f32 0.0, %v5364
        %v5366 = vpop.f32.mrb[0].mxu0
        %v5367 = vadd.f32 0.0, %v5366
        %v5368 = vpop.f32.mrb[0].mxu0
        %v5369 = vpop.f32.mrb[0].mxu0
        %5370 = vdwg.mxu0
        %v5371 = vpack.c.bf16 %v5365, %v5365
        %v5372 = vpack.c.bf16 %v5367, %v5367
        %s5373 = scalar_lea.vmem %s12, 576
        %v5374 = vld [vmem:[%s5373] sm:$0xff]
        %v5375 = vld [vmem:[%s5373 + $0x8] sm:$0xff]
        %v5376 = vld [vmem:[%s5373 + $0x10] sm:$0xff]
        %v5377 = vld [vmem:[%s5373 + $0x18] sm:$0xff]
        %v5378 = vld [vmem:[%s5373 + $0x20] sm:$0xff]
        %v5379 = vld [vmem:[%s5373 + $0x28] sm:$0xff]
        %v5380 = vld [vmem:[%s5373 + $0x30] sm:$0xff]
        %v5381 = vld [vmem:[%s5373 + $0x38] sm:$0xff]
        %v5382 = vld [vmem:[%s5373 + $0x40] sm:$0xff]
        %v5383 = vld [vmem:[%s5373 + $0x48] sm:$0xff]
        %v5384 = vld [vmem:[%s5373 + $0x50] sm:$0xff]
        %v5385 = vld [vmem:[%s5373 + $0x58] sm:$0xff]
        %v5386 = vld [vmem:[%s5373 + $0x60] sm:$0xff]
        %v5387 = vld [vmem:[%s5373 + $0x68] sm:$0xff]
        %v5388 = vld [vmem:[%s5373 + $0x70] sm:$0xff]
        %v5389 = vld [vmem:[%s5373 + $0x78] sm:$0xff]
        %v5390 = vld [vmem:[%s5373 + $0x80] sm:$0xff]
        %v5391 = vld [vmem:[%s5373 + $0x88] sm:$0xff]
        %v5392 = vld [vmem:[%s5373 + $0x90] sm:$0xff]
        %v5393 = vld [vmem:[%s5373 + $0x98] sm:$0xff]
        %v5394 = vld [vmem:[%s5373 + $0xa0] sm:$0xff]
        %v5395 = vld [vmem:[%s5373 + $0xa8] sm:$0xff]
        %v5396 = vld [vmem:[%s5373 + $0xb0] sm:$0xff]
        %v5397 = vld [vmem:[%s5373 + $0xb8] sm:$0xff]
        %v5422 = vunpack.c.l.b16 %v5374
        %v5423 = vunpack.c.h.b16 %v5374
        %v5424 = vunpack.c.l.b16 %v5375
        %v5425 = vunpack.c.h.b16 %v5375
        %v5426 = vunpack.c.l.b16 %v5376
        %v5427 = vunpack.c.h.b16 %v5376
        %v5428 = vunpack.c.l.b16 %v5377
        %v5429 = vunpack.c.h.b16 %v5377
        %v5430 = vunpack.c.l.b16 %v5378
        %v5431 = vunpack.c.h.b16 %v5378
        %v5432 = vunpack.c.l.b16 %v5379
        %v5433 = vunpack.c.h.b16 %v5379
        %v5434 = vunpack.c.l.b16 %v5380
        %v5435 = vunpack.c.h.b16 %v5380
        %v5436 = vunpack.c.l.b16 %v5381
        %v5437 = vunpack.c.h.b16 %v5381
        %v5438 = vunpack.c.l.b16 %v5382
        %v5439 = vunpack.c.h.b16 %v5382
        %v5440 = vunpack.c.l.b16 %v5383
        %v5441 = vunpack.c.h.b16 %v5383
        %v5442 = vunpack.c.l.b16 %v5384
        %v5443 = vunpack.c.h.b16 %v5384
        %v5444 = vunpack.c.l.b16 %v5385
        %v5445 = vunpack.c.h.b16 %v5385
        %v5446 = vunpack.c.l.b16 %v5386
        %v5447 = vunpack.c.h.b16 %v5386
        %v5448 = vunpack.c.l.b16 %v5387
        %v5449 = vunpack.c.h.b16 %v5387
        %v5450 = vunpack.c.l.b16 %v5388
        %v5451 = vunpack.c.h.b16 %v5388
        %v5452 = vunpack.c.l.b16 %v5389
        %v5453 = vunpack.c.h.b16 %v5389
        %v5454 = vunpack.c.l.b16 %v5390
        %v5455 = vunpack.c.h.b16 %v5390
        %v5456 = vunpack.c.l.b16 %v5391
        %v5457 = vunpack.c.h.b16 %v5391
        %v5458 = vunpack.c.l.b16 %v5392
        %v5459 = vunpack.c.h.b16 %v5392
        %v5460 = vunpack.c.l.b16 %v5393
        %v5461 = vunpack.c.h.b16 %v5393
        %v5462 = vunpack.c.l.b16 %v5394
        %v5463 = vunpack.c.h.b16 %v5394
        %v5464 = vunpack.c.l.b16 %v5395
        %v5465 = vunpack.c.h.b16 %v5395
        %v5466 = vunpack.c.l.b16 %v5396
        %v5467 = vunpack.c.h.b16 %v5396
        %v5468 = vunpack.c.l.b16 %v5397
        %v5469 = vunpack.c.h.b16 %v5397
        %v5470 = vpack.c.b16 %v5424, %v5422
        %v5471 = vpack.c.b16 %v5425, %v5423
        %v5472 = vpack.c.b16 %v5428, %v5426
        %v5473 = vpack.c.b16 %v5429, %v5427
        %v5474 = vpack.c.b16 %v5432, %v5430
        %v5475 = vpack.c.b16 %v5433, %v5431
        %v5476 = vpack.c.b16 %v5436, %v5434
        %v5477 = vpack.c.b16 %v5437, %v5435
        %v5478 = vpack.c.b16 %v5440, %v5438
        %v5479 = vpack.c.b16 %v5441, %v5439
        %v5480 = vpack.c.b16 %v5444, %v5442
        %v5481 = vpack.c.b16 %v5445, %v5443
        %v5482 = vpack.c.b16 %v5448, %v5446
        %v5483 = vpack.c.b16 %v5449, %v5447
        %v5484 = vpack.c.b16 %v5452, %v5450
        %v5485 = vpack.c.b16 %v5453, %v5451
        %v5486 = vpack.c.b16 %v5456, %v5454
        %v5487 = vpack.c.b16 %v5457, %v5455
        %v5488 = vpack.c.b16 %v5460, %v5458
        %v5489 = vpack.c.b16 %v5461, %v5459
        %v5490 = vpack.c.b16 %v5464, %v5462
        %v5491 = vpack.c.b16 %v5465, %v5463
        %v5492 = vpack.c.b16 %v5468, %v5466
        %v5493 = vpack.c.b16 %v5469, %v5467
        %v5519 = vsel %vm3379, %v5372, 0
        %5521 = vmatprep.subr.bf16.mxu0 %v5471
        %5522 = vmatpush1.bf16.msra.mxu0 %v5470
        %5523 = vmatprep.subr.bf16.mxu0 %v5473
        %5524 = vmatpush1.bf16.msra.mxu0 %v5472
        %5525 = vmatprep.subr.bf16.mxu0 %v5475
        %5526 = vmatpush1.bf16.msra.mxu0 %v5474
        %5527 = vmatprep.subr.bf16.mxu0 %v5477
        %5528 = vmatpush1.bf16.msra.mxu0 %v5476
        %5529 = vmatprep.subr.bf16.mxu0 %v5479
        %5530 = vmatpush1.bf16.msra.mxu0 %v5478
        %5531 = vmatprep.subr.bf16.mxu0 %v5481
        %5532 = vmatpush1.bf16.msra.mxu0 %v5480
        %5533 = vmatprep.subr.bf16.mxu0 %v5483
        %5534 = vmatpush1.bf16.msra.mxu0 %v5482
        %5535 = vmatprep.subr.bf16.mxu0 %v5485
        %5536 = vmatpush1.bf16.msra.mxu0 %v5484
        %5537 = vmatprep.subr.bf16.mxu0 %v5487
        %5538 = vmatpush1.bf16.msra.mxu0 %v5486
        %5539 = vmatprep.subr.bf16.mxu0 %v5489
        %5540 = vmatpush1.bf16.msra.mxu0 %v5488
        %5541 = vmatprep.subr.bf16.mxu0 %v5491
        %5542 = vmatpush1.bf16.msra.mxu0 %v5490
        %5543 = vmatprep.subr.bf16.mxu0 %v5493
        %5544 = vmatpush1.bf16.msra.mxu0 %v5492
        %5545 = vmatprep.subr.bf16.mxu0 0
        %5546 = vmatpush1.bf16.msra.mxu0 0
        %5547 = vmatprep.subr.bf16.mxu0 0
        %5548 = vmatpush1.bf16.msra.mxu0 0
        %5549 = vmatprep.subr.bf16.mxu0 0
        %5550 = vmatpush1.bf16.msra.mxu0 0
        %5551 = vmatprep.subr.bf16.mxu0 0
        %5552 = vmatpush1.bf16.msra.mxu0 0
        %5553 = vmatprep.mubr.bf16.mxu0 %v5519
        %5554 = vmatmul.mubr.bf16.gmra.mrb[0].mxu0 %v5371
        %v5555 = vpop.f32.mrb[0].mxu0
        %v5556 = vadd.f32 0.0, %v5555
        %v5557 = vpop.f32.mrb[0].mxu0
        %v5558 = vadd.f32 0.0, %v5557
        %v5559 = vpop.f32.mrb[0].mxu0
        %v5560 = vpop.f32.mrb[0].mxu0
        %5561 = vdwg.mxu0
        %v5562 = vadd.f32 %v5323, %v5556
        %v5563 = vadd.f32 %v5324, %v5558
        %s5564 = scalar_lea.vmem [#allocation13], 16
        %v5565 = vld [vmem:[%s5564] sm:$0xf]
        %v5567 = vsel %vm3099, %v5565, 0
        %5569 = vmatprep.subr.bf16.mxu0 %v4616
        %5570 = vmatpush1.bf16.msra.mxu0 %v4613
        %5571 = vmatprep.subr.bf16.mxu0 0
        %5572 = vmatpush1.bf16.msra.mxu0 0
        %5573 = vmatprep.subr.bf16.mxu0 0
        %5574 = vmatpush1.bf16.msra.mxu0 0
        %5575 = vmatprep.subr.bf16.mxu0 0
        %5576 = vmatpush1.bf16.msra.mxu0 0
        %5577 = vmatprep.subr.bf16.mxu0 0
        %5578 = vmatpush1.bf16.msra.mxu0 0
        %5579 = vmatprep.subr.bf16.mxu0 0
        %5580 = vmatpush1.bf16.msra.mxu0 0
        %5581 = vmatprep.subr.bf16.mxu0 0
        %5582 = vmatpush1.bf16.msra.mxu0 0
        %5583 = vmatprep.subr.bf16.mxu0 0
        %5584 = vmatpush1.bf16.msra.mxu0 0
        %5585 = vmatprep.subr.bf16.mxu0 0
        %5586 = vmatpush1.bf16.msra.mxu0 0
        %5587 = vmatprep.subr.bf16.mxu0 0
        %5588 = vmatpush1.bf16.msra.mxu0 0
        %5589 = vmatprep.subr.bf16.mxu0 0
        %5590 = vmatpush1.bf16.msra.mxu0 0
        %5591 = vmatprep.subr.bf16.mxu0 0
        %5592 = vmatpush1.bf16.msra.mxu0 0
        %5593 = vmatprep.subr.bf16.mxu0 0
        %5594 = vmatpush1.bf16.msra.mxu0 0
        %5595 = vmatprep.subr.bf16.mxu0 0
        %5596 = vmatpush1.bf16.msra.mxu0 0
        %5597 = vmatprep.subr.bf16.mxu0 0
        %5598 = vmatpush1.bf16.msra.mxu0 0
        %5599 = vmatprep.subr.bf16.mxu0 0
        %5600 = vmatpush1.bf16.msra.mxu0 0
        %5601 = vmatprep.mubr.bf16.mxu0 0
        %5602 = vmatmul.mubr.bf16.gmra.mrb[0].mxu0 %v5567
        %v5603 = vpop.f32.mrb[0].mxu0
        %v5604 = vadd.f32 0.0, %v5603
        %v5605 = vpop.f32.mrb[0].mxu0
        %v5606 = vadd.f32 0.0, %v5605
        %v5607 = vpop.f32.mrb[0].mxu0
        %v5608 = vpop.f32.mrb[0].mxu0
        %5609 = vdwg.mxu0
        %v5610 = vpack.c.bf16 %v5604, %v5604
        %v5611 = vpack.c.bf16 %v5606, %v5606
        %s5612 = scalar_lea.vmem %s12, 768
        %v5613 = vld [vmem:[%s5612] sm:$0xff]
        %v5614 = vld [vmem:[%s5612 + $0x8] sm:$0xff]
        %v5615 = vld [vmem:[%s5612 + $0x10] sm:$0xff]
        %v5616 = vld [vmem:[%s5612 + $0x18] sm:$0xff]
        %v5617 = vld [vmem:[%s5612 + $0x20] sm:$0xff]
        %v5618 = vld [vmem:[%s5612 + $0x28] sm:$0xff]
        %v5619 = vld [vmem:[%s5612 + $0x30] sm:$0xff]
        %v5620 = vld [vmem:[%s5612 + $0x38] sm:$0xff]
        %v5621 = vld [vmem:[%s5612 + $0x40] sm:$0xff]
        %v5622 = vld [vmem:[%s5612 + $0x48] sm:$0xff]
        %v5623 = vld [vmem:[%s5612 + $0x50] sm:$0xff]
        %v5624 = vld [vmem:[%s5612 + $0x58] sm:$0xff]
        %v5625 = vld [vmem:[%s5612 + $0x60] sm:$0xff]
        %v5626 = vld [vmem:[%s5612 + $0x68] sm:$0xff]
        %v5627 = vld [vmem:[%s5612 + $0x70] sm:$0xff]
        %v5628 = vld [vmem:[%s5612 + $0x78] sm:$0xff]
        %v5629 = vld [vmem:[%s5612 + $0x80] sm:$0xff]
        %v5630 = vld [vmem:[%s5612 + $0x88] sm:$0xff]
        %v5631 = vld [vmem:[%s5612 + $0x90] sm:$0xff]
        %v5632 = vld [vmem:[%s5612 + $0x98] sm:$0xff]
        %v5633 = vld [vmem:[%s5612 + $0xa0] sm:$0xff]
        %v5634 = vld [vmem:[%s5612 + $0xa8] sm:$0xff]
        %v5635 = vld [vmem:[%s5612 + $0xb0] sm:$0xff]
        %v5636 = vld [vmem:[%s5612 + $0xb8] sm:$0xff]
        %v5661 = vunpack.c.l.b16 %v5613
        %v5662 = vunpack.c.h.b16 %v5613
        %v5663 = vunpack.c.l.b16 %v5614
        %v5664 = vunpack.c.h.b16 %v5614
        %v5665 = vunpack.c.l.b16 %v5615
        %v5666 = vunpack.c.h.b16 %v5615
        %v5667 = vunpack.c.l.b16 %v5616
        %v5668 = vunpack.c.h.b16 %v5616
        %v5669 = vunpack.c.l.b16 %v5617
        %v5670 = vunpack.c.h.b16 %v5617
        %v5671 = vunpack.c.l.b16 %v5618
        %v5672 = vunpack.c.h.b16 %v5618
        %v5673 = vunpack.c.l.b16 %v5619
        %v5674 = vunpack.c.h.b16 %v5619
        %v5675 = vunpack.c.l.b16 %v5620
        %v5676 = vunpack.c.h.b16 %v5620
        %v5677 = vunpack.c.l.b16 %v5621
        %v5678 = vunpack.c.h.b16 %v5621
        %v5679 = vunpack.c.l.b16 %v5622
        %v5680 = vunpack.c.h.b16 %v5622
        %v5681 = vunpack.c.l.b16 %v5623
        %v5682 = vunpack.c.h.b16 %v5623
        %v5683 = vunpack.c.l.b16 %v5624
        %v5684 = vunpack.c.h.b16 %v5624
        %v5685 = vunpack.c.l.b16 %v5625
        %v5686 = vunpack.c.h.b16 %v5625
        %v5687 = vunpack.c.l.b16 %v5626
        %v5688 = vunpack.c.h.b16 %v5626
        %v5689 = vunpack.c.l.b16 %v5627
        %v5690 = vunpack.c.h.b16 %v5627
        %v5691 = vunpack.c.l.b16 %v5628
        %v5692 = vunpack.c.h.b16 %v5628
        %v5693 = vunpack.c.l.b16 %v5629
        %v5694 = vunpack.c.h.b16 %v5629
        %v5695 = vunpack.c.l.b16 %v5630
        %v5696 = vunpack.c.h.b16 %v5630
        %v5697 = vunpack.c.l.b16 %v5631
        %v5698 = vunpack.c.h.b16 %v5631
        %v5699 = vunpack.c.l.b16 %v5632
        %v5700 = vunpack.c.h.b16 %v5632
        %v5701 = vunpack.c.l.b16 %v5633
        %v5702 = vunpack.c.h.b16 %v5633
        %v5703 = vunpack.c.l.b16 %v5634
        %v5704 = vunpack.c.h.b16 %v5634
        %v5705 = vunpack.c.l.b16 %v5635
        %v5706 = vunpack.c.h.b16 %v5635
        %v5707 = vunpack.c.l.b16 %v5636
        %v5708 = vunpack.c.h.b16 %v5636
        %v5709 = vpack.c.b16 %v5663, %v5661
        %v5710 = vpack.c.b16 %v5664, %v5662
        %v5711 = vpack.c.b16 %v5667, %v5665
        %v5712 = vpack.c.b16 %v5668, %v5666
        %v5713 = vpack.c.b16 %v5671, %v5669
        %v5714 = vpack.c.b16 %v5672, %v5670
        %v5715 = vpack.c.b16 %v5675, %v5673
        %v5716 = vpack.c.b16 %v5676, %v5674
        %v5717 = vpack.c.b16 %v5679, %v5677
        %v5718 = vpack.c.b16 %v5680, %v5678
        %v5719 = vpack.c.b16 %v5683, %v5681
        %v5720 = vpack.c.b16 %v5684, %v5682
        %v5721 = vpack.c.b16 %v5687, %v5685
        %v5722 = vpack.c.b16 %v5688, %v5686
        %v5723 = vpack.c.b16 %v5691, %v5689
        %v5724 = vpack.c.b16 %v5692, %v5690
        %v5725 = vpack.c.b16 %v5695, %v5693
        %v5726 = vpack.c.b16 %v5696, %v5694
        %v5727 = vpack.c.b16 %v5699, %v5697
        %v5728 = vpack.c.b16 %v5700, %v5698
        %v5729 = vpack.c.b16 %v5703, %v5701
        %v5730 = vpack.c.b16 %v5704, %v5702
        %v5731 = vpack.c.b16 %v5707, %v5705
        %v5732 = vpack.c.b16 %v5708, %v5706
        %v5758 = vsel %vm3379, %v5611, 0
        %5760 = vmatprep.subr.bf16.mxu0 %v5710
        %5761 = vmatpush1.bf16.msra.mxu0 %v5709
        %5762 = vmatprep.subr.bf16.mxu0 %v5712
        %5763 = vmatpush1.bf16.msra.mxu0 %v5711
        %5764 = vmatprep.subr.bf16.mxu0 %v5714
        %5765 = vmatpush1.bf16.msra.mxu0 %v5713
        %5766 = vmatprep.subr.bf16.mxu0 %v5716
        %5767 = vmatpush1.bf16.msra.mxu0 %v5715
        %5768 = vmatprep.subr.bf16.mxu0 %v5718
        %5769 = vmatpush1.bf16.msra.mxu0 %v5717
        %5770 = vmatprep.subr.bf16.mxu0 %v5720
        %5771 = vmatpush1.bf16.msra.mxu0 %v5719
        %5772 = vmatprep.subr.bf16.mxu0 %v5722
        %5773 = vmatpush1.bf16.msra.mxu0 %v5721
        %5774 = vmatprep.subr.bf16.mxu0 %v5724
        %5775 = vmatpush1.bf16.msra.mxu0 %v5723
        %5776 = vmatprep.subr.bf16.mxu0 %v5726
        %5777 = vmatpush1.bf16.msra.mxu0 %v5725
        %5778 = vmatprep.subr.bf16.mxu0 %v5728
        %5779 = vmatpush1.bf16.msra.mxu0 %v5727
        %5780 = vmatprep.subr.bf16.mxu0 %v5730
        %5781 = vmatpush1.bf16.msra.mxu0 %v5729
        %5782 = vmatprep.subr.bf16.mxu0 %v5732
        %5783 = vmatpush1.bf16.msra.mxu0 %v5731
        %5784 = vmatprep.subr.bf16.mxu0 0
        %5785 = vmatpush1.bf16.msra.mxu0 0
        %5786 = vmatprep.subr.bf16.mxu0 0
        %5787 = vmatpush1.bf16.msra.mxu0 0
        %5788 = vmatprep.subr.bf16.mxu0 0
        %5789 = vmatpush1.bf16.msra.mxu0 0
        %5790 = vmatprep.subr.bf16.mxu0 0
        %5791 = vmatpush1.bf16.msra.mxu0 0
        %5792 = vmatprep.mubr.bf16.mxu0 %v5758
        %5793 = vmatmul.mubr.bf16.gmra.mrb[0].mxu0 %v5610
        %v5794 = vpop.f32.mrb[0].mxu0
        %v5795 = vadd.f32 0.0, %v5794
        %v5796 = vpop.f32.mrb[0].mxu0
        %v5797 = vadd.f32 0.0, %v5796
        %v5798 = vpop.f32.mrb[0].mxu0
        %v5799 = vpop.f32.mrb[0].mxu0
        %5800 = vdwg.mxu0
        %v5801 = vadd.f32 %v5562, %v5795
        %v5802 = vadd.f32 %v5563, %v5797
        %v5803 = vld [vmem:[#allocation14] sm:$0x3]
        %v5805 = vlaneseq
        %v5806 = vshrl.u32 %v5805, 7
        %v5807 = vsub.s32 0, %v5806
        %v5808 = vrot.slane %v5803, %v5807
        %v5809 = vlaneseq
        %v5810 = vshrl.u32 %v5809, 7
        %v5811 = vsub.s32 1, %v5810
        %v5812 = vrot.slane %v5803, %v5811
        %v5815 = vadd.f32 %v5801, %v5808
        %v5816 = vadd.f32 %v5802, %v5812
        %v5817 = vmax.f32 %v5815, 0.0
        %v5818 = vmax.f32 %v5816, 0.0
        %v5819 = vpack.c.bf16 %v5817, %v5817
        %v5820 = vpack.c.bf16 %v5818, %v5818
        %v5821 = vld [vmem:[#allocation16] sm:$0x3]
        %vm5822 = vcmask 64512
        %v5824 = vsel %vm5822, %v5821, 0
        %v5827 = vsel %vm2139, %v5819, 0
        %v5830 = vsel %vm2139, %v5820, 0
        %5832 = vmatprep.subr.bf16.mxu0 %v5830
        %5833 = vmatpush1.bf16.msra.mxu0 %v5827
        %5834 = vmatprep.subr.bf16.mxu0 0
        %5835 = vmatpush1.bf16.msra.mxu0 0
        %5836 = vmatprep.subr.bf16.mxu0 0
        %5837 = vmatpush1.bf16.msra.mxu0 0
        %5838 = vmatprep.subr.bf16.mxu0 0
        %5839 = vmatpush1.bf16.msra.mxu0 0
        %5840 = vmatprep.subr.bf16.mxu0 0
        %5841 = vmatpush1.bf16.msra.mxu0 0
        %5842 = vmatprep.subr.bf16.mxu0 0
        %5843 = vmatpush1.bf16.msra.mxu0 0
        %5844 = vmatprep.subr.bf16.mxu0 0
        %5845 = vmatpush1.bf16.msra.mxu0 0
        %5846 = vmatprep.subr.bf16.mxu0 0
        %5847 = vmatpush1.bf16.msra.mxu0 0
        %5848 = vmatprep.subr.bf16.mxu0 0
        %5849 = vmatpush1.bf16.msra.mxu0 0
        %5850 = vmatprep.subr.bf16.mxu0 0
        %5851 = vmatpush1.bf16.msra.mxu0 0
        %5852 = vmatprep.subr.bf16.mxu0 0
        %5853 = vmatpush1.bf16.msra.mxu0 0
        %5854 = vmatprep.subr.bf16.mxu0 0
        %5855 = vmatpush1.bf16.msra.mxu0 0
        %5856 = vmatprep.subr.bf16.mxu0 0
        %5857 = vmatpush1.bf16.msra.mxu0 0
        %5858 = vmatprep.subr.bf16.mxu0 0
        %5859 = vmatpush1.bf16.msra.mxu0 0
        %5860 = vmatprep.subr.bf16.mxu0 0
        %5861 = vmatpush1.bf16.msra.mxu0 0
        %5862 = vmatprep.subr.bf16.mxu0 0
        %5863 = vmatpush1.bf16.msra.mxu0 0
        %5864 = vmatprep.mubr.bf16.mxu0 0
        %5865 = vmatmul.mubr.bf16.gmra.mrb[0].mxu0 %v5824
        %v5866 = vpop.f32.mrb[0].mxu0
        %v5867 = vadd.f32 0.0, %v5866
        %v5868 = vpop.f32.mrb[0].mxu0
        %v5869 = vadd.f32 0.0, %v5868
        %v5870 = vpop.f32.mrb[0].mxu0
        %v5871 = vpop.f32.mrb[0].mxu0
        %5872 = vdwg.mxu0
        %s5873 = scalar_lea.vmem [#allocation16], 2
        %v5874 = vld [vmem:[%s5873] sm:$0x3]
        %v5876 = vsel %vm5822, %v5874, 0
        %5878 = vmatprep.subr.bf16.mxu0 %v5830
        %5879 = vmatpush1.bf16.msra.mxu0 %v5827
        %5880 = vmatprep.subr.bf16.mxu0 0
        %5881 = vmatpush1.bf16.msra.mxu0 0
        %5882 = vmatprep.subr.bf16.mxu0 0
        %5883 = vmatpush1.bf16.msra.mxu0 0
        %5884 = vmatprep.subr.bf16.mxu0 0
        %5885 = vmatpush1.bf16.msra.mxu0 0
        %5886 = vmatprep.subr.bf16.mxu0 0
        %5887 = vmatpush1.bf16.msra.mxu0 0
        %5888 = vmatprep.subr.bf16.mxu0 0
        %5889 = vmatpush1.bf16.msra.mxu0 0
        %5890 = vmatprep.subr.bf16.mxu0 0
        %5891 = vmatpush1.bf16.msra.mxu0 0
        %5892 = vmatprep.subr.bf16.mxu0 0
        %5893 = vmatpush1.bf16.msra.mxu0 0
        %5894 = vmatprep.subr.bf16.mxu0 0
        %5895 = vmatpush1.bf16.msra.mxu0 0
        %5896 = vmatprep.subr.bf16.mxu0 0
        %5897 = vmatpush1.bf16.msra.mxu0 0
        %5898 = vmatprep.subr.bf16.mxu0 0
        %5899 = vmatpush1.bf16.msra.mxu0 0
        %5900 = vmatprep.subr.bf16.mxu0 0
        %5901 = vmatpush1.bf16.msra.mxu0 0
        %5902 = vmatprep.subr.bf16.mxu0 0
        %5903 = vmatpush1.bf16.msra.mxu0 0
        %5904 = vmatprep.subr.bf16.mxu0 0
        %5905 = vmatpush1.bf16.msra.mxu0 0
        %5906 = vmatprep.subr.bf16.mxu0 0
        %5907 = vmatpush1.bf16.msra.mxu0 0
        %5908 = vmatprep.subr.bf16.mxu0 0
        %5909 = vmatpush1.bf16.msra.mxu0 0
        %5910 = vmatprep.mubr.bf16.mxu0 0
        %5911 = vmatmul.mubr.bf16.gmra.mrb[0].mxu0 %v5876
        %v5912 = vpop.f32.mrb[0].mxu0
        %v5913 = vadd.f32 0.0, %v5912
        %v5914 = vpop.f32.mrb[0].mxu0
        %v5915 = vadd.f32 0.0, %v5914
        %v5916 = vpop.f32.mrb[0].mxu0
        %v5917 = vpop.f32.mrb[0].mxu0
        %5918 = vdwg.mxu0
        %v5919 = vmax.f32 %v5867, %v5913
        %v5920 = vmax.f32 %v5869, %v5915
        %v5921 = vpack.c.bf16 %v5919, %v5919
        %v5922 = vpack.c.bf16 %v5920, %v5920
        %v5923 = vld [vmem:[%s15] sm:$0xf]
        %v5924 = vld [vmem:[%s15 + $0x4] sm:$0xf]
        %v5925 = vld [vmem:[%s15 + $0x8] sm:$0xf]
        %v5926 = vld [vmem:[%s15 + $0xc] sm:$0xf]
        %v5927 = vld [vmem:[%s15 + $0x10] sm:$0xf]
        %v5928 = vld [vmem:[%s15 + $0x14] sm:$0xf]
        %v5929 = vld [vmem:[%s15 + $0x18] sm:$0xf]
        %v5930 = vld [vmem:[%s15 + $0x1c] sm:$0xf]
        %v5931 = vld [vmem:[%s15 + $0x20] sm:$0xf]
        %v5932 = vld [vmem:[%s15 + $0x24] sm:$0xf]
        %v5933 = vld [vmem:[%s15 + $0x28] sm:$0xf]
        %v5934 = vld [vmem:[%s15 + $0x2c] sm:$0xf]
        %v5935 = vld [vmem:[%s15 + $0x30] sm:$0xf]
        %v5936 = vld [vmem:[%s15 + $0x34] sm:$0xf]
        %v5937 = vld [vmem:[%s15 + $0x38] sm:$0xf]
        %v5938 = vld [vmem:[%s15 + $0x3c] sm:$0xf]
        %v5939 = vld [vmem:[%s15 + $0x40] sm:$0xf]
        %v5940 = vld [vmem:[%s15 + $0x44] sm:$0xf]
        %v5941 = vld [vmem:[%s15 + $0x48] sm:$0xf]
        %v5942 = vld [vmem:[%s15 + $0x4c] sm:$0xf]
        %v5943 = vld [vmem:[%s15 + $0x50] sm:$0xf]
        %v5944 = vld [vmem:[%s15 + $0x54] sm:$0xf]
        %v5945 = vld [vmem:[%s15 + $0x58] sm:$0xf]
        %v5946 = vld [vmem:[%s15 + $0x5c] sm:$0xf]
        %v5947 = vld [vmem:[%s15 + $0x60] sm:$0xf]
        %v5948 = vld [vmem:[%s15 + $0x64] sm:$0xf]
        %v5949 = vld [vmem:[%s15 + $0x68] sm:$0xf]
        %v5950 = vld [vmem:[%s15 + $0x6c] sm:$0xf]
        %v5951 = vld [vmem:[%s15 + $0x70] sm:$0xf]
        %v5952 = vld [vmem:[%s15 + $0x74] sm:$0xf]
        %v5953 = vld [vmem:[%s15 + $0x78] sm:$0xf]
        %v5954 = vld [vmem:[%s15 + $0x7c] sm:$0xf]
        %v5987 = vunpack.c.l.b16 %v5923
        %v5988 = vunpack.c.l.b16 %v5924
        %v5989 = vunpack.c.l.b16 %v5925
        %v5990 = vunpack.c.l.b16 %v5926
        %v5991 = vunpack.c.l.b16 %v5927
        %v5992 = vunpack.c.l.b16 %v5928
        %v5993 = vunpack.c.l.b16 %v5929
        %v5994 = vunpack.c.l.b16 %v5930
        %v5995 = vunpack.c.l.b16 %v5931
        %v5996 = vunpack.c.l.b16 %v5932
        %v5997 = vunpack.c.l.b16 %v5933
        %v5998 = vunpack.c.l.b16 %v5934
        %v5999 = vunpack.c.l.b16 %v5935
        %v6000 = vunpack.c.l.b16 %v5936
        %v6001 = vunpack.c.l.b16 %v5937
        %v6002 = vunpack.c.l.b16 %v5938
        %v6003 = vunpack.c.l.b16 %v5939
        %v6004 = vunpack.c.l.b16 %v5940
        %v6005 = vunpack.c.l.b16 %v5941
        %v6006 = vunpack.c.l.b16 %v5942
        %v6007 = vunpack.c.l.b16 %v5943
        %v6008 = vunpack.c.l.b16 %v5944
        %v6009 = vunpack.c.l.b16 %v5945
        %v6010 = vunpack.c.l.b16 %v5946
        %v6011 = vunpack.c.l.b16 %v5947
        %v6012 = vunpack.c.l.b16 %v5948
        %v6013 = vunpack.c.l.b16 %v5949
        %v6014 = vunpack.c.l.b16 %v5950
        %v6015 = vunpack.c.l.b16 %v5951
        %v6016 = vunpack.c.l.b16 %v5952
        %v6017 = vunpack.c.l.b16 %v5953
        %v6018 = vunpack.c.l.b16 %v5954
        %v6019 = vpack.c.b16 %v5988, %v5987
        %v6020 = vpack.c.b16 %v5990, %v5989
        %v6021 = vpack.c.b16 %v5992, %v5991
        %v6022 = vpack.c.b16 %v5994, %v5993
        %v6023 = vpack.c.b16 %v5996, %v5995
        %v6024 = vpack.c.b16 %v5998, %v5997
        %v6025 = vpack.c.b16 %v6000, %v5999
        %v6026 = vpack.c.b16 %v6002, %v6001
        %v6027 = vpack.c.b16 %v6004, %v6003
        %v6028 = vpack.c.b16 %v6006, %v6005
        %v6029 = vpack.c.b16 %v6008, %v6007
        %v6030 = vpack.c.b16 %v6010, %v6009
        %v6031 = vpack.c.b16 %v6012, %v6011
        %v6032 = vpack.c.b16 %v6014, %v6013
        %v6033 = vpack.c.b16 %v6016, %v6015
        %v6034 = vpack.c.b16 %v6018, %v6017
        %6051 = vmatprep.subr.bf16.mxu0 0
        %6052 = vmatpush1.bf16.msra.mxu0 %v6019
        %6053 = vmatprep.subr.bf16.mxu0 0
        %6054 = vmatpush1.bf16.msra.mxu0 %v6020
        %6055 = vmatprep.subr.bf16.mxu0 0
        %6056 = vmatpush1.bf16.msra.mxu0 %v6021
        %6057 = vmatprep.subr.bf16.mxu0 0
        %6058 = vmatpush1.bf16.msra.mxu0 %v6022
        %6059 = vmatprep.subr.bf16.mxu0 0
        %6060 = vmatpush1.bf16.msra.mxu0 %v6023
        %6061 = vmatprep.subr.bf16.mxu0 0
        %6062 = vmatpush1.bf16.msra.mxu0 %v6024
        %6063 = vmatprep.subr.bf16.mxu0 0
        %6064 = vmatpush1.bf16.msra.mxu0 %v6025
        %6065 = vmatprep.subr.bf16.mxu0 0
        %6066 = vmatpush1.bf16.msra.mxu0 %v6026
        %6067 = vmatprep.subr.bf16.mxu0 0
        %6068 = vmatpush1.bf16.msra.mxu0 %v6027
        %6069 = vmatprep.subr.bf16.mxu0 0
        %6070 = vmatpush1.bf16.msra.mxu0 %v6028
        %6071 = vmatprep.subr.bf16.mxu0 0
        %6072 = vmatpush1.bf16.msra.mxu0 %v6029
        %6073 = vmatprep.subr.bf16.mxu0 0
        %6074 = vmatpush1.bf16.msra.mxu0 %v6030
        %6075 = vmatprep.subr.bf16.mxu0 0
        %6076 = vmatpush1.bf16.msra.mxu0 %v6031
        %6077 = vmatprep.subr.bf16.mxu0 0
        %6078 = vmatpush1.bf16.msra.mxu0 %v6032
        %6079 = vmatprep.subr.bf16.mxu0 0
        %6080 = vmatpush1.bf16.msra.mxu0 %v6033
        %6081 = vmatprep.subr.bf16.mxu0 0
        %6082 = vmatpush1.bf16.msra.mxu0 %v6034
        %6083 = vmatprep.mubr.bf16.mxu0 %v5922
        %6084 = vmatmul.mubr.bf16.gmra.mrb[0].mxu0 %v5921
        %v6085 = vpop.f32.mrb[0].mxu0
        %v6086 = vadd.f32 0.0, %v6085
        %v6087 = vpop.f32.mrb[0].mxu0
        %v6088 = vpop.f32.mrb[0].mxu0
        %v6089 = vpop.f32.mrb[0].mxu0
        %6090 = vdwg.mxu0
        %s6091 = scalar_lea.vmem %s15, 128
        %v6092 = vld [vmem:[%s6091] sm:$0xf]
        %v6093 = vld [vmem:[%s6091 + $0x4] sm:$0xf]
        %v6094 = vld [vmem:[%s6091 + $0x8] sm:$0xf]
        %v6095 = vld [vmem:[%s6091 + $0xc] sm:$0xf]
        %v6096 = vld [vmem:[%s6091 + $0x10] sm:$0xf]
        %v6097 = vld [vmem:[%s6091 + $0x14] sm:$0xf]
        %v6098 = vld [vmem:[%s6091 + $0x18] sm:$0xf]
        %v6099 = vld [vmem:[%s6091 + $0x1c] sm:$0xf]
        %v6100 = vld [vmem:[%s6091 + $0x20] sm:$0xf]
        %v6101 = vld [vmem:[%s6091 + $0x24] sm:$0xf]
        %v6102 = vld [vmem:[%s6091 + $0x28] sm:$0xf]
        %v6103 = vld [vmem:[%s6091 + $0x2c] sm:$0xf]
        %v6104 = vld [vmem:[%s6091 + $0x30] sm:$0xf]
        %v6105 = vld [vmem:[%s6091 + $0x34] sm:$0xf]
        %v6106 = vld [vmem:[%s6091 + $0x38] sm:$0xf]
        %v6107 = vld [vmem:[%s6091 + $0x3c] sm:$0xf]
        %v6108 = vld [vmem:[%s6091 + $0x40] sm:$0xf]
        %v6109 = vld [vmem:[%s6091 + $0x44] sm:$0xf]
        %v6110 = vld [vmem:[%s6091 + $0x48] sm:$0xf]
        %v6111 = vld [vmem:[%s6091 + $0x4c] sm:$0xf]
        %v6112 = vld [vmem:[%s6091 + $0x50] sm:$0xf]
        %v6113 = vld [vmem:[%s6091 + $0x54] sm:$0xf]
        %v6114 = vld [vmem:[%s6091 + $0x58] sm:$0xf]
        %v6115 = vld [vmem:[%s6091 + $0x5c] sm:$0xf]
        %v6116 = vld [vmem:[%s6091 + $0x60] sm:$0xf]
        %v6117 = vld [vmem:[%s6091 + $0x64] sm:$0xf]
        %v6118 = vld [vmem:[%s6091 + $0x68] sm:$0xf]
        %v6119 = vld [vmem:[%s6091 + $0x6c] sm:$0xf]
        %v6120 = vld [vmem:[%s6091 + $0x70] sm:$0xf]
        %v6121 = vld [vmem:[%s6091 + $0x74] sm:$0xf]
        %v6122 = vld [vmem:[%s6091 + $0x78] sm:$0xf]
        %v6123 = vld [vmem:[%s6091 + $0x7c] sm:$0xf]
        %v6156 = vunpack.c.l.b16 %v6092
        %v6157 = vunpack.c.l.b16 %v6093
        %v6158 = vunpack.c.l.b16 %v6094
        %v6159 = vunpack.c.l.b16 %v6095
        %v6160 = vunpack.c.l.b16 %v6096
        %v6161 = vunpack.c.l.b16 %v6097
        %v6162 = vunpack.c.l.b16 %v6098
        %v6163 = vunpack.c.l.b16 %v6099
        %v6164 = vunpack.c.l.b16 %v6100
        %v6165 = vunpack.c.l.b16 %v6101
        %v6166 = vunpack.c.l.b16 %v6102
        %v6167 = vunpack.c.l.b16 %v6103
        %v6168 = vunpack.c.l.b16 %v6104
        %v6169 = vunpack.c.l.b16 %v6105
        %v6170 = vunpack.c.l.b16 %v6106
        %v6171 = vunpack.c.l.b16 %v6107
        %v6172 = vunpack.c.l.b16 %v6108
        %v6173 = vunpack.c.l.b16 %v6109
        %v6174 = vunpack.c.l.b16 %v6110
        %v6175 = vunpack.c.l.b16 %v6111
        %v6176 = vunpack.c.l.b16 %v6112
        %v6177 = vunpack.c.l.b16 %v6113
        %v6178 = vunpack.c.l.b16 %v6114
        %v6179 = vunpack.c.l.b16 %v6115
        %v6180 = vunpack.c.l.b16 %v6116
        %v6181 = vunpack.c.l.b16 %v6117
        %v6182 = vunpack.c.l.b16 %v6118
        %v6183 = vunpack.c.l.b16 %v6119
        %v6184 = vunpack.c.l.b16 %v6120
        %v6185 = vunpack.c.l.b16 %v6121
        %v6186 = vunpack.c.l.b16 %v6122
        %v6187 = vunpack.c.l.b16 %v6123
        %v6188 = vpack.c.b16 %v6157, %v6156
        %v6189 = vpack.c.b16 %v6159, %v6158
        %v6190 = vpack.c.b16 %v6161, %v6160
        %v6191 = vpack.c.b16 %v6163, %v6162
        %v6192 = vpack.c.b16 %v6165, %v6164
        %v6193 = vpack.c.b16 %v6167, %v6166
        %v6194 = vpack.c.b16 %v6169, %v6168
        %v6195 = vpack.c.b16 %v6171, %v6170
        %v6196 = vpack.c.b16 %v6173, %v6172
        %v6197 = vpack.c.b16 %v6175, %v6174
        %v6198 = vpack.c.b16 %v6177, %v6176
        %v6199 = vpack.c.b16 %v6179, %v6178
        %v6200 = vpack.c.b16 %v6181, %v6180
        %v6201 = vpack.c.b16 %v6183, %v6182
        %v6202 = vpack.c.b16 %v6185, %v6184
        %v6203 = vpack.c.b16 %v6187, %v6186
        %6220 = vmatprep.subr.bf16.mxu0 0
        %6221 = vmatpush1.bf16.msra.mxu0 %v6188
        %6222 = vmatprep.subr.bf16.mxu0 0
        %6223 = vmatpush1.bf16.msra.mxu0 %v6189
        %6224 = vmatprep.subr.bf16.mxu0 0
        %6225 = vmatpush1.bf16.msra.mxu0 %v6190
        %6226 = vmatprep.subr.bf16.mxu0 0
        %6227 = vmatpush1.bf16.msra.mxu0 %v6191
        %6228 = vmatprep.subr.bf16.mxu0 0
        %6229 = vmatpush1.bf16.msra.mxu0 %v6192
        %6230 = vmatprep.subr.bf16.mxu0 0
        %6231 = vmatpush1.bf16.msra.mxu0 %v6193
        %6232 = vmatprep.subr.bf16.mxu0 0
        %6233 = vmatpush1.bf16.msra.mxu0 %v6194
        %6234 = vmatprep.subr.bf16.mxu0 0
        %6235 = vmatpush1.bf16.msra.mxu0 %v6195
        %6236 = vmatprep.subr.bf16.mxu0 0
        %6237 = vmatpush1.bf16.msra.mxu0 %v6196
        %6238 = vmatprep.subr.bf16.mxu0 0
        %6239 = vmatpush1.bf16.msra.mxu0 %v6197
        %6240 = vmatprep.subr.bf16.mxu0 0
        %6241 = vmatpush1.bf16.msra.mxu0 %v6198
        %6242 = vmatprep.subr.bf16.mxu0 0
        %6243 = vmatpush1.bf16.msra.mxu0 %v6199
        %6244 = vmatprep.subr.bf16.mxu0 0
        %6245 = vmatpush1.bf16.msra.mxu0 %v6200
        %6246 = vmatprep.subr.bf16.mxu0 0
        %6247 = vmatpush1.bf16.msra.mxu0 %v6201
        %6248 = vmatprep.subr.bf16.mxu0 0
        %6249 = vmatpush1.bf16.msra.mxu0 %v6202
        %6250 = vmatprep.subr.bf16.mxu0 0
        %6251 = vmatpush1.bf16.msra.mxu0 %v6203
        %6252 = vmatprep.mubr.bf16.mxu0 %v5922
        %6253 = vmatmul.mubr.bf16.gmra.mrb[0].mxu0 %v5921
        %v6254 = vpop.f32.mrb[0].mxu0
        %v6255 = vadd.f32 0.0, %v6254
        %v6256 = vpop.f32.mrb[0].mxu0
        %v6257 = vpop.f32.mrb[0].mxu0
        %v6258 = vpop.f32.mrb[0].mxu0
        %6259 = vdwg.mxu0
        %v6260 = vmax.f32 %v6086, %v6255
        %v6261 = vpack.c.bf16 %v6260, %v6260
        %v6262 = vld [vmem:[#allocation17] sm:$0x3]
        %vm6263 = vcmask 31744
        %v6265 = vsel %vm6263, %v6262, 0
        %vm6267 = vcmask 1041408
        %v6269 = vsel %vm6267, %v6261, 0
        %6271 = vmatprep.subr.bf16.mxu0 0
        %6272 = vmatpush1.bf16.msra.mxu0 %v6269
        %6273 = vmatprep.subr.bf16.mxu0 0
        %6274 = vmatpush1.bf16.msra.mxu0 0
        %6275 = vmatprep.subr.bf16.mxu0 0
        %6276 = vmatpush1.bf16.msra.mxu0 0
        %6277 = vmatprep.subr.bf16.mxu0 0
        %6278 = vmatpush1.bf16.msra.mxu0 0
        %6279 = vmatprep.subr.bf16.mxu0 0
        %6280 = vmatpush1.bf16.msra.mxu0 0
        %6281 = vmatprep.subr.bf16.mxu0 0
        %6282 = vmatpush1.bf16.msra.mxu0 0
        %6283 = vmatprep.subr.bf16.mxu0 0
        %6284 = vmatpush1.bf16.msra.mxu0 0
        %6285 = vmatprep.subr.bf16.mxu0 0
        %6286 = vmatpush1.bf16.msra.mxu0 0
        %6287 = vmatprep.subr.bf16.mxu0 0
        %6288 = vmatpush1.bf16.msra.mxu0 0
        %6289 = vmatprep.subr.bf16.mxu0 0
        %6290 = vmatpush1.bf16.msra.mxu0 0
        %6291 = vmatprep.subr.bf16.mxu0 0
        %6292 = vmatpush1.bf16.msra.mxu0 0
        %6293 = vmatprep.subr.bf16.mxu0 0
        %6294 = vmatpush1.bf16.msra.mxu0 0
        %6295 = vmatprep.subr.bf16.mxu0 0
        %6296 = vmatpush1.bf16.msra.mxu0 0
        %6297 = vmatprep.subr.bf16.mxu0 0
        %6298 = vmatpush1.bf16.msra.mxu0 0
        %6299 = vmatprep.subr.bf16.mxu0 0
        %6300 = vmatpush1.bf16.msra.mxu0 0
        %6301 = vmatprep.subr.bf16.mxu0 0
        %6302 = vmatpush1.bf16.msra.mxu0 0
        %6303 = vmatprep.mubr.bf16.mxu0 0
        %6304 = vmatmul.mubr.bf16.gmra.mrb[0].mxu0 %v6265
        %v6305 = vpop.f32.mrb[0].mxu0
        %v6306 = vadd.f32 0.0, %v6305
        %v6307 = vpop.f32.mrb[0].mxu0
        %v6308 = vpop.f32.mrb[0].mxu0
        %v6309 = vpop.f32.mrb[0].mxu0
        %6310 = vdwg.mxu0
        %v6311 = vpack.c.bf16 %v6306, %v6306
        %v6312 = vld [vmem:[#allocation19] sm:$0xf]
        %v6313 = vld [vmem:[#allocation19 + $0x4] sm:$0xf]
        %v6314 = vld [vmem:[#allocation19 + $0x8] sm:$0xf]
        %v6315 = vld [vmem:[#allocation19 + $0xc] sm:$0xf]
        %v6316 = vld [vmem:[#allocation19 + $0x10] sm:$0xf]
        %v6317 = vld [vmem:[#allocation19 + $0x14] sm:$0xf]
        %v6318 = vld [vmem:[#allocation19 + $0x18] sm:$0xf]
        %v6319 = vld [vmem:[#allocation19 + $0x1c] sm:$0xf]
        %v6320 = vld [vmem:[#allocation19 + $0x20] sm:$0xf]
        %v6321 = vld [vmem:[#allocation19 + $0x24] sm:$0xf]
        %v6322 = vld [vmem:[#allocation19 + $0x28] sm:$0xf]
        %v6323 = vld [vmem:[#allocation19 + $0x2c] sm:$0xf]
        %v6324 = vld [vmem:[#allocation19 + $0x30] sm:$0xf]
        %v6325 = vld [vmem:[#allocation19 + $0x34] sm:$0xf]
        %v6326 = vld [vmem:[#allocation19 + $0x38] sm:$0xf]
        %v6327 = vld [vmem:[#allocation19 + $0x3c] sm:$0xf]
        %s6328 = scalar_lea.vmem [#allocation17], 2
        %v6329 = vld [vmem:[%s6328] sm:$0x3]
        %v6331 = vsel %vm6263, %v6329, 0
        %6333 = vmatprep.subr.bf16.mxu0 0
        %6334 = vmatpush1.bf16.msra.mxu0 %v6269
        %6335 = vmatprep.subr.bf16.mxu0 0
        %6336 = vmatpush1.bf16.msra.mxu0 0
        %6337 = vmatprep.subr.bf16.mxu0 0
        %6338 = vmatpush1.bf16.msra.mxu0 0
        %6339 = vmatprep.subr.bf16.mxu0 0
        %6340 = vmatpush1.bf16.msra.mxu0 0
        %6341 = vmatprep.subr.bf16.mxu0 0
        %6342 = vmatpush1.bf16.msra.mxu0 0
        %6343 = vmatprep.subr.bf16.mxu0 0
        %6344 = vmatpush1.bf16.msra.mxu0 0
        %6345 = vmatprep.subr.bf16.mxu0 0
        %6346 = vmatpush1.bf16.msra.mxu0 0
        %6347 = vmatprep.subr.bf16.mxu0 0
        %6348 = vmatpush1.bf16.msra.mxu0 0
        %6349 = vmatprep.subr.bf16.mxu0 0
        %6350 = vmatpush1.bf16.msra.mxu0 0
        %6351 = vmatprep.subr.bf16.mxu0 0
        %6352 = vmatpush1.bf16.msra.mxu0 0
        %6353 = vmatprep.subr.bf16.mxu0 0
        %6354 = vmatpush1.bf16.msra.mxu0 0
        %6355 = vmatprep.subr.bf16.mxu0 0
        %6356 = vmatpush1.bf16.msra.mxu0 0
        %6357 = vmatprep.subr.bf16.mxu0 0
        %6358 = vmatpush1.bf16.msra.mxu0 0
        %6359 = vmatprep.subr.bf16.mxu0 0
        %6360 = vmatpush1.bf16.msra.mxu0 0
        %6361 = vmatprep.subr.bf16.mxu0 0
        %6362 = vmatpush1.bf16.msra.mxu0 0
        %6363 = vmatprep.subr.bf16.mxu0 0
        %6364 = vmatpush1.bf16.msra.mxu0 0
        %6365 = vmatprep.mubr.bf16.mxu0 0
        %6366 = vmatmul.mubr.bf16.gmra.mrb[0].mxu0 %v6331
        %v6367 = vpop.f32.mrb[0].mxu0
        %v6368 = vadd.f32 0.0, %v6367
        %v6369 = vpop.f32.mrb[0].mxu0
        %v6370 = vpop.f32.mrb[0].mxu0
        %v6371 = vpop.f32.mrb[0].mxu0
        %6372 = vdwg.mxu0
        %v6373 = vpack.c.bf16 %v6368, %v6368
        %s6374 = scalar_lea.vmem [#allocation19], 64
        %v6375 = vld [vmem:[%s6374] sm:$0xf]
        %v6376 = vld [vmem:[%s6374 + $0x4] sm:$0xf]
        %v6377 = vld [vmem:[%s6374 + $0x8] sm:$0xf]
        %v6378 = vld [vmem:[%s6374 + $0xc] sm:$0xf]
        %v6379 = vld [vmem:[%s6374 + $0x10] sm:$0xf]
        %v6380 = vld [vmem:[%s6374 + $0x14] sm:$0xf]
        %v6381 = vld [vmem:[%s6374 + $0x18] sm:$0xf]
        %v6382 = vld [vmem:[%s6374 + $0x1c] sm:$0xf]
        %v6383 = vld [vmem:[%s6374 + $0x20] sm:$0xf]
        %v6384 = vld [vmem:[%s6374 + $0x24] sm:$0xf]
        %v6385 = vld [vmem:[%s6374 + $0x28] sm:$0xf]
        %v6386 = vld [vmem:[%s6374 + $0x2c] sm:$0xf]
        %v6387 = vld [vmem:[%s6374 + $0x30] sm:$0xf]
        %v6388 = vld [vmem:[%s6374 + $0x34] sm:$0xf]
        %v6389 = vld [vmem:[%s6374 + $0x38] sm:$0xf]
        %v6390 = vld [vmem:[%s6374 + $0x3c] sm:$0xf]
        %v6407 = vunpack.c.l.b16 %v6375
        %v6408 = vunpack.c.l.b16 %v6376
        %v6409 = vunpack.c.l.b16 %v6377
        %v6410 = vunpack.c.l.b16 %v6378
        %v6411 = vunpack.c.l.b16 %v6379
        %v6412 = vunpack.c.l.b16 %v6380
        %v6413 = vunpack.c.l.b16 %v6381
        %v6414 = vunpack.c.l.b16 %v6382
        %v6415 = vunpack.c.l.b16 %v6383
        %v6416 = vunpack.c.l.b16 %v6384
        %v6417 = vunpack.c.l.b16 %v6385
        %v6418 = vunpack.c.l.b16 %v6386
        %v6419 = vunpack.c.l.b16 %v6387
        %v6420 = vunpack.c.l.b16 %v6388
        %v6421 = vunpack.c.l.b16 %v6389
        %v6422 = vunpack.c.l.b16 %v6390
        %v6423 = vpack.c.b16 %v6408, %v6407
        %v6424 = vpack.c.b16 %v6410, %v6409
        %v6425 = vpack.c.b16 %v6412, %v6411
        %v6426 = vpack.c.b16 %v6414, %v6413
        %v6427 = vpack.c.b16 %v6416, %v6415
        %v6428 = vpack.c.b16 %v6418, %v6417
        %v6429 = vpack.c.b16 %v6420, %v6419
        %v6430 = vpack.c.b16 %v6422, %v6421
        %6439 = vmatprep.subr.bf16.mxu0 0
        %6440 = vmatpush1.bf16.msra.mxu0 %v6423
        %6441 = vmatprep.subr.bf16.mxu0 0
        %6442 = vmatpush1.bf16.msra.mxu0 %v6424
        %6443 = vmatprep.subr.bf16.mxu0 0
        %6444 = vmatpush1.bf16.msra.mxu0 %v6425
        %6445 = vmatprep.subr.bf16.mxu0 0
        %6446 = vmatpush1.bf16.msra.mxu0 %v6426
        %6447 = vmatprep.subr.bf16.mxu0 0
        %6448 = vmatpush1.bf16.msra.mxu0 %v6427
        %6449 = vmatprep.subr.bf16.mxu0 0
        %6450 = vmatpush1.bf16.msra.mxu0 %v6428
        %6451 = vmatprep.subr.bf16.mxu0 0
        %6452 = vmatpush1.bf16.msra.mxu0 %v6429
        %6453 = vmatprep.subr.bf16.mxu0 0
        %6454 = vmatpush1.bf16.msra.mxu0 %v6430
        %6455 = vmatprep.subr.bf16.mxu0 0
        %6456 = vmatpush1.bf16.msra.mxu0 0
        %6457 = vmatprep.subr.bf16.mxu0 0
        %6458 = vmatpush1.bf16.msra.mxu0 0
        %6459 = vmatprep.subr.bf16.mxu0 0
        %6460 = vmatpush1.bf16.msra.mxu0 0
        %6461 = vmatprep.subr.bf16.mxu0 0
        %6462 = vmatpush1.bf16.msra.mxu0 0
        %6463 = vmatprep.subr.bf16.mxu0 0
        %6464 = vmatpush1.bf16.msra.mxu0 0
        %6465 = vmatprep.subr.bf16.mxu0 0
        %6466 = vmatpush1.bf16.msra.mxu0 0
        %6467 = vmatprep.subr.bf16.mxu0 0
        %6468 = vmatpush1.bf16.msra.mxu0 0
        %6469 = vmatprep.subr.bf16.mxu0 0
        %6470 = vmatpush1.bf16.msra.mxu0 0
        %6471 = vmatprep.mubr.bf16.mxu0 0
        %6472 = vmatmul.mubr.bf16.gmra.mrb[0].mxu0 %v6373
        %v6473 = vpop.f32.mrb[0].mxu0
        %v6474 = vadd.f32 0.0, %v6473
        %v6475 = vpop.f32.mrb[0].mxu0
        %v6476 = vpop.f32.mrb[0].mxu0
        %v6477 = vpop.f32.mrb[0].mxu0
        %6478 = vdwg.mxu0
        %v6495 = vunpack.c.l.b16 %v6312
        %v6496 = vunpack.c.l.b16 %v6313
        %v6497 = vunpack.c.l.b16 %v6314
        %v6498 = vunpack.c.l.b16 %v6315
        %v6499 = vunpack.c.l.b16 %v6316
        %v6500 = vunpack.c.l.b16 %v6317
        %v6501 = vunpack.c.l.b16 %v6318
        %v6502 = vunpack.c.l.b16 %v6319
        %v6503 = vunpack.c.l.b16 %v6320
        %v6504 = vunpack.c.l.b16 %v6321
        %v6505 = vunpack.c.l.b16 %v6322
        %v6506 = vunpack.c.l.b16 %v6323
        %v6507 = vunpack.c.l.b16 %v6324
        %v6508 = vunpack.c.l.b16 %v6325
        %v6509 = vunpack.c.l.b16 %v6326
        %v6510 = vunpack.c.l.b16 %v6327
        %v6511 = vpack.c.b16 %v6496, %v6495
        %v6512 = vpack.c.b16 %v6498, %v6497
        %v6513 = vpack.c.b16 %v6500, %v6499
        %v6514 = vpack.c.b16 %v6502, %v6501
        %v6515 = vpack.c.b16 %v6504, %v6503
        %v6516 = vpack.c.b16 %v6506, %v6505
        %v6517 = vpack.c.b16 %v6508, %v6507
        %v6518 = vpack.c.b16 %v6510, %v6509
        %6527 = vmatprep.subr.bf16.mxu0 0
        %6528 = vmatpush1.bf16.msra.mxu0 %v6511
        %6529 = vmatprep.subr.bf16.mxu0 0
        %6530 = vmatpush1.bf16.msra.mxu0 %v6512
        %6531 = vmatprep.subr.bf16.mxu0 0
        %6532 = vmatpush1.bf16.msra.mxu0 %v6513
        %6533 = vmatprep.subr.bf16.mxu0 0
        %6534 = vmatpush1.bf16.msra.mxu0 %v6514
        %6535 = vmatprep.subr.bf16.mxu0 0
        %6536 = vmatpush1.bf16.msra.mxu0 %v6515
        %6537 = vmatprep.subr.bf16.mxu0 0
        %6538 = vmatpush1.bf16.msra.mxu0 %v6516
        %6539 = vmatprep.subr.bf16.mxu0 0
        %6540 = vmatpush1.bf16.msra.mxu0 %v6517
        %6541 = vmatprep.subr.bf16.mxu0 0
        %6542 = vmatpush1.bf16.msra.mxu0 %v6518
        %6543 = vmatprep.subr.bf16.mxu0 0
        %6544 = vmatpush1.bf16.msra.mxu0 0
        %6545 = vmatprep.subr.bf16.mxu0 0
        %6546 = vmatpush1.bf16.msra.mxu0 0
        %6547 = vmatprep.subr.bf16.mxu0 0
        %6548 = vmatpush1.bf16.msra.mxu0 0
        %6549 = vmatprep.subr.bf16.mxu0 0
        %6550 = vmatpush1.bf16.msra.mxu0 0
        %6551 = vmatprep.subr.bf16.mxu0 0
        %6552 = vmatpush1.bf16.msra.mxu0 0
        %6553 = vmatprep.subr.bf16.mxu0 0
        %6554 = vmatpush1.bf16.msra.mxu0 0
        %6555 = vmatprep.subr.bf16.mxu0 0
        %6556 = vmatpush1.bf16.msra.mxu0 0
        %6557 = vmatprep.subr.bf16.mxu0 0
        %6558 = vmatpush1.bf16.msra.mxu0 0
        %6559 = vmatprep.mubr.bf16.mxu0 0
        %6560 = vmatmul.mubr.bf16.gmra.mrb[0].mxu0 %v6311
        %v6561 = vpop.f32.mrb[0].mxu0
        %v6562 = vadd.f32 %v6474, %v6561
        %v6563 = vpop.f32.mrb[0].mxu0
        %v6564 = vpop.f32.mrb[0].mxu0
        %v6565 = vpop.f32.mrb[0].mxu0
        %6566 = vdwg.mxu0
        %s6567 = scalar_lea.vmem [#allocation17], 4
        %v6568 = vld [vmem:[%s6567] sm:$0x3]
        %v6570 = vsel %vm6263, %v6568, 0
        %6572 = vmatprep.subr.bf16.mxu0 0
        %6573 = vmatpush1.bf16.msra.mxu0 %v6269
        %6574 = vmatprep.subr.bf16.mxu0 0
        %6575 = vmatpush1.bf16.msra.mxu0 0
        %6576 = vmatprep.subr.bf16.mxu0 0
        %6577 = vmatpush1.bf16.msra.mxu0 0
        %6578 = vmatprep.subr.bf16.mxu0 0
        %6579 = vmatpush1.bf16.msra.mxu0 0
        %6580 = vmatprep.subr.bf16.mxu0 0
        %6581 = vmatpush1.bf16.msra.mxu0 0
        %6582 = vmatprep.subr.bf16.mxu0 0
        %6583 = vmatpush1.bf16.msra.mxu0 0
        %6584 = vmatprep.subr.bf16.mxu0 0
        %6585 = vmatpush1.bf16.msra.mxu0 0
        %6586 = vmatprep.subr.bf16.mxu0 0
        %6587 = vmatpush1.bf16.msra.mxu0 0
        %6588 = vmatprep.subr.bf16.mxu0 0
        %6589 = vmatpush1.bf16.msra.mxu0 0
        %6590 = vmatprep.subr.bf16.mxu0 0
        %6591 = vmatpush1.bf16.msra.mxu0 0
        %6592 = vmatprep.subr.bf16.mxu0 0
        %6593 = vmatpush1.bf16.msra.mxu0 0
        %6594 = vmatprep.subr.bf16.mxu0 0
        %6595 = vmatpush1.bf16.msra.mxu0 0
        %6596 = vmatprep.subr.bf16.mxu0 0
        %6597 = vmatpush1.bf16.msra.mxu0 0
        %6598 = vmatprep.subr.bf16.mxu0 0
        %6599 = vmatpush1.bf16.msra.mxu0 0
        %6600 = vmatprep.subr.bf16.mxu0 0
        %6601 = vmatpush1.bf16.msra.mxu0 0
        %6602 = vmatprep.subr.bf16.mxu0 0
        %6603 = vmatpush1.bf16.msra.mxu0 0
        %6604 = vmatprep.mubr.bf16.mxu0 0
        %6605 = vmatmul.mubr.bf16.gmra.mrb[0].mxu0 %v6570
        %v6606 = vpop.f32.mrb[0].mxu0
        %v6607 = vadd.f32 0.0, %v6606
        %v6608 = vpop.f32.mrb[0].mxu0
        %v6609 = vpop.f32.mrb[0].mxu0
        %v6610 = vpop.f32.mrb[0].mxu0
        %6611 = vdwg.mxu0
        %v6612 = vpack.c.bf16 %v6607, %v6607
        %s6613 = scalar_lea.vmem [#allocation19], 128
        %v6614 = vld [vmem:[%s6613] sm:$0xf]
        %v6615 = vld [vmem:[%s6613 + $0x4] sm:$0xf]
        %v6616 = vld [vmem:[%s6613 + $0x8] sm:$0xf]
        %v6617 = vld [vmem:[%s6613 + $0xc] sm:$0xf]
        %v6618 = vld [vmem:[%s6613 + $0x10] sm:$0xf]
        %v6619 = vld [vmem:[%s6613 + $0x14] sm:$0xf]
        %v6620 = vld [vmem:[%s6613 + $0x18] sm:$0xf]
        %v6621 = vld [vmem:[%s6613 + $0x1c] sm:$0xf]
        %v6622 = vld [vmem:[%s6613 + $0x20] sm:$0xf]
        %v6623 = vld [vmem:[%s6613 + $0x24] sm:$0xf]
        %v6624 = vld [vmem:[%s6613 + $0x28] sm:$0xf]
        %v6625 = vld [vmem:[%s6613 + $0x2c] sm:$0xf]
        %v6626 = vld [vmem:[%s6613 + $0x30] sm:$0xf]
        %v6627 = vld [vmem:[%s6613 + $0x34] sm:$0xf]
        %v6628 = vld [vmem:[%s6613 + $0x38] sm:$0xf]
        %v6629 = vld [vmem:[%s6613 + $0x3c] sm:$0xf]
        %v6646 = vunpack.c.l.b16 %v6614
        %v6647 = vunpack.c.l.b16 %v6615
        %v6648 = vunpack.c.l.b16 %v6616
        %v6649 = vunpack.c.l.b16 %v6617
        %v6650 = vunpack.c.l.b16 %v6618
        %v6651 = vunpack.c.l.b16 %v6619
        %v6652 = vunpack.c.l.b16 %v6620
        %v6653 = vunpack.c.l.b16 %v6621
        %v6654 = vunpack.c.l.b16 %v6622
        %v6655 = vunpack.c.l.b16 %v6623
        %v6656 = vunpack.c.l.b16 %v6624
        %v6657 = vunpack.c.l.b16 %v6625
        %v6658 = vunpack.c.l.b16 %v6626
        %v6659 = vunpack.c.l.b16 %v6627
        %v6660 = vunpack.c.l.b16 %v6628
        %v6661 = vunpack.c.l.b16 %v6629
        %v6662 = vpack.c.b16 %v6647, %v6646
        %v6663 = vpack.c.b16 %v6649, %v6648
        %v6664 = vpack.c.b16 %v6651, %v6650
        %v6665 = vpack.c.b16 %v6653, %v6652
        %v6666 = vpack.c.b16 %v6655, %v6654
        %v6667 = vpack.c.b16 %v6657, %v6656
        %v6668 = vpack.c.b16 %v6659, %v6658
        %v6669 = vpack.c.b16 %v6661, %v6660
        %6678 = vmatprep.subr.bf16.mxu0 0
        %6679 = vmatpush1.bf16.msra.mxu0 %v6662
        %6680 = vmatprep.subr.bf16.mxu0 0
        %6681 = vmatpush1.bf16.msra.mxu0 %v6663
        %6682 = vmatprep.subr.bf16.mxu0 0
        %6683 = vmatpush1.bf16.msra.mxu0 %v6664
        %6684 = vmatprep.subr.bf16.mxu0 0
        %6685 = vmatpush1.bf16.msra.mxu0 %v6665
        %6686 = vmatprep.subr.bf16.mxu0 0
        %6687 = vmatpush1.bf16.msra.mxu0 %v6666
        %6688 = vmatprep.subr.bf16.mxu0 0
        %6689 = vmatpush1.bf16.msra.mxu0 %v6667
        %6690 = vmatprep.subr.bf16.mxu0 0
        %6691 = vmatpush1.bf16.msra.mxu0 %v6668
        %6692 = vmatprep.subr.bf16.mxu0 0
        %6693 = vmatpush1.bf16.msra.mxu0 %v6669
        %6694 = vmatprep.subr.bf16.mxu0 0
        %6695 = vmatpush1.bf16.msra.mxu0 0
        %6696 = vmatprep.subr.bf16.mxu0 0
        %6697 = vmatpush1.bf16.msra.mxu0 0
        %6698 = vmatprep.subr.bf16.mxu0 0
        %6699 = vmatpush1.bf16.msra.mxu0 0
        %6700 = vmatprep.subr.bf16.mxu0 0
        %6701 = vmatpush1.bf16.msra.mxu0 0
        %6702 = vmatprep.subr.bf16.mxu0 0
        %6703 = vmatpush1.bf16.msra.mxu0 0
        %6704 = vmatprep.subr.bf16.mxu0 0
        %6705 = vmatpush1.bf16.msra.mxu0 0
        %6706 = vmatprep.subr.bf16.mxu0 0
        %6707 = vmatpush1.bf16.msra.mxu0 0
        %6708 = vmatprep.subr.bf16.mxu0 0
        %6709 = vmatpush1.bf16.msra.mxu0 0
        %6710 = vmatprep.mubr.bf16.mxu0 0
        %6711 = vmatmul.mubr.bf16.gmra.mrb[0].mxu0 %v6612
        %v6712 = vpop.f32.mrb[0].mxu0
        %v6713 = vadd.f32 0.0, %v6712
        %v6714 = vpop.f32.mrb[0].mxu0
        %v6715 = vpop.f32.mrb[0].mxu0
        %v6716 = vpop.f32.mrb[0].mxu0
        %6717 = vdwg.mxu0
        %v6718 = vadd.f32 %v6562, %v6713
        %v6719 = vld [vmem:[#allocation20] sm:$0x1]
        %v6721 = vlaneseq
        %v6722 = vshrl.u32 %v6721, 7
        %v6723 = vsub.s32 0, %v6722
        %v6724 = vrot.slane %v6719, %v6723
        %v6726 = vadd.f32 %v6718, %v6724
        %v6727 = vmax.f32 %v6726, 0.0
        %v6728 = vpack.c.bf16 %v6727, %v6727
        %v6730 = vsel %vm6267, %v6728, 0
        %6732 = vmatprep.subr.bf16.mxu0 0
        %6733 = vmatpush1.bf16.msra.mxu0 %v6730
        %6734 = vmatprep.subr.bf16.mxu0 0
        %6735 = vmatpush1.bf16.msra.mxu0 0
        %6736 = vmatprep.subr.bf16.mxu0 0
        %6737 = vmatpush1.bf16.msra.mxu0 0
        %6738 = vmatprep.subr.bf16.mxu0 0
        %6739 = vmatpush1.bf16.msra.mxu0 0
        %6740 = vmatprep.subr.bf16.mxu0 0
        %6741 = vmatpush1.bf16.msra.mxu0 0
        %6742 = vmatprep.subr.bf16.mxu0 0
        %6743 = vmatpush1.bf16.msra.mxu0 0
        %6744 = vmatprep.subr.bf16.mxu0 0
        %6745 = vmatpush1.bf16.msra.mxu0 0
        %6746 = vmatprep.subr.bf16.mxu0 0
        %6747 = vmatpush1.bf16.msra.mxu0 0
        %6748 = vmatprep.subr.bf16.mxu0 0
        %6749 = vmatpush1.bf16.msra.mxu0 0
        %6750 = vmatprep.subr.bf16.mxu0 0
        %6751 = vmatpush1.bf16.msra.mxu0 0
        %6752 = vmatprep.subr.bf16.mxu0 0
        %6753 = vmatpush1.bf16.msra.mxu0 0
        %6754 = vmatprep.subr.bf16.mxu0 0
        %6755 = vmatpush1.bf16.msra.mxu0 0
        %6756 = vmatprep.subr.bf16.mxu0 0
        %6757 = vmatpush1.bf16.msra.mxu0 0
        %6758 = vmatprep.subr.bf16.mxu0 0
        %6759 = vmatpush1.bf16.msra.mxu0 0
        %6760 = vmatprep.subr.bf16.mxu0 0
        %6761 = vmatpush1.bf16.msra.mxu0 0
        %6762 = vmatprep.subr.bf16.mxu0 0
        %6763 = vmatpush1.bf16.msra.mxu0 0
        %6764 = vmatprep.mubr.bf16.mxu0 0
        %6765 = vmatmul.mubr.bf16.gmra.mrb[0].mxu0 %v6265
        %v6766 = vpop.f32.mrb[0].mxu0
        %v6767 = vadd.f32 0.0, %v6766
        %v6768 = vpop.f32.mrb[0].mxu0
        %v6769 = vpop.f32.mrb[0].mxu0
        %v6770 = vpop.f32.mrb[0].mxu0
        %6771 = vdwg.mxu0
        %v6772 = vpack.c.bf16 %v6767, %v6767
        %v6773 = vld [vmem:[#allocation22] sm:$0xf]
        %v6774 = vld [vmem:[#allocation22 + $0x4] sm:$0xf]
        %v6775 = vld [vmem:[#allocation22 + $0x8] sm:$0xf]
        %v6776 = vld [vmem:[#allocation22 + $0xc] sm:$0xf]
        %v6777 = vld [vmem:[#allocation22 + $0x10] sm:$0xf]
        %v6778 = vld [vmem:[#allocation22 + $0x14] sm:$0xf]
        %v6779 = vld [vmem:[#allocation22 + $0x18] sm:$0xf]
        %v6780 = vld [vmem:[#allocation22 + $0x1c] sm:$0xf]
        %v6781 = vld [vmem:[#allocation22 + $0x20] sm:$0xf]
        %v6782 = vld [vmem:[#allocation22 + $0x24] sm:$0xf]
        %v6783 = vld [vmem:[#allocation22 + $0x28] sm:$0xf]
        %v6784 = vld [vmem:[#allocation22 + $0x2c] sm:$0xf]
        %v6785 = vld [vmem:[#allocation22 + $0x30] sm:$0xf]
        %v6786 = vld [vmem:[#allocation22 + $0x34] sm:$0xf]
        %v6787 = vld [vmem:[#allocation22 + $0x38] sm:$0xf]
        %v6788 = vld [vmem:[#allocation22 + $0x3c] sm:$0xf]
        %6789 = vmatprep.subr.bf16.mxu0 0
        %6790 = vmatpush1.bf16.msra.mxu0 %v6730
        %6791 = vmatprep.subr.bf16.mxu0 0
        %6792 = vmatpush1.bf16.msra.mxu0 0
        %6793 = vmatprep.subr.bf16.mxu0 0
        %6794 = vmatpush1.bf16.msra.mxu0 0
        %6795 = vmatprep.subr.bf16.mxu0 0
        %6796 = vmatpush1.bf16.msra.mxu0 0
        %6797 = vmatprep.subr.bf16.mxu0 0
        %6798 = vmatpush1.bf16.msra.mxu0 0
        %6799 = vmatprep.subr.bf16.mxu0 0
        %6800 = vmatpush1.bf16.msra.mxu0 0
        %6801 = vmatprep.subr.bf16.mxu0 0
        %6802 = vmatpush1.bf16.msra.mxu0 0
        %6803 = vmatprep.subr.bf16.mxu0 0
        %6804 = vmatpush1.bf16.msra.mxu0 0
        %6805 = vmatprep.subr.bf16.mxu0 0
        %6806 = vmatpush1.bf16.msra.mxu0 0
        %6807 = vmatprep.subr.bf16.mxu0 0
        %6808 = vmatpush1.bf16.msra.mxu0 0
        %6809 = vmatprep.subr.bf16.mxu0 0
        %6810 = vmatpush1.bf16.msra.mxu0 0
        %6811 = vmatprep.subr.bf16.mxu0 0
        %6812 = vmatpush1.bf16.msra.mxu0 0
        %6813 = vmatprep.subr.bf16.mxu0 0
        %6814 = vmatpush1.bf16.msra.mxu0 0
        %6815 = vmatprep.subr.bf16.mxu0 0
        %6816 = vmatpush1.bf16.msra.mxu0 0
        %6817 = vmatprep.subr.bf16.mxu0 0
        %6818 = vmatpush1.bf16.msra.mxu0 0
        %6819 = vmatprep.subr.bf16.mxu0 0
        %6820 = vmatpush1.bf16.msra.mxu0 0
        %6821 = vmatprep.mubr.bf16.mxu0 0
        %6822 = vmatmul.mubr.bf16.gmra.mrb[0].mxu0 %v6331
        %v6823 = vpop.f32.mrb[0].mxu0
        %v6824 = vadd.f32 0.0, %v6823
        %v6825 = vpop.f32.mrb[0].mxu0
        %v6826 = vpop.f32.mrb[0].mxu0
        %v6827 = vpop.f32.mrb[0].mxu0
        %6828 = vdwg.mxu0
        %v6829 = vpack.c.bf16 %v6824, %v6824
        %s6830 = scalar_lea.vmem [#allocation22], 64
        %v6831 = vld [vmem:[%s6830] sm:$0xf]
        %v6832 = vld [vmem:[%s6830 + $0x4] sm:$0xf]
        %v6833 = vld [vmem:[%s6830 + $0x8] sm:$0xf]
        %v6834 = vld [vmem:[%s6830 + $0xc] sm:$0xf]
        %v6835 = vld [vmem:[%s6830 + $0x10] sm:$0xf]
        %v6836 = vld [vmem:[%s6830 + $0x14] sm:$0xf]
        %v6837 = vld [vmem:[%s6830 + $0x18] sm:$0xf]
        %v6838 = vld [vmem:[%s6830 + $0x1c] sm:$0xf]
        %v6839 = vld [vmem:[%s6830 + $0x20] sm:$0xf]
        %v6840 = vld [vmem:[%s6830 + $0x24] sm:$0xf]
        %v6841 = vld [vmem:[%s6830 + $0x28] sm:$0xf]
        %v6842 = vld [vmem:[%s6830 + $0x2c] sm:$0xf]
        %v6843 = vld [vmem:[%s6830 + $0x30] sm:$0xf]
        %v6844 = vld [vmem:[%s6830 + $0x34] sm:$0xf]
        %v6845 = vld [vmem:[%s6830 + $0x38] sm:$0xf]
        %v6846 = vld [vmem:[%s6830 + $0x3c] sm:$0xf]
        %v6863 = vunpack.c.l.b16 %v6831
        %v6864 = vunpack.c.l.b16 %v6832
        %v6865 = vunpack.c.l.b16 %v6833
        %v6866 = vunpack.c.l.b16 %v6834
        %v6867 = vunpack.c.l.b16 %v6835
        %v6868 = vunpack.c.l.b16 %v6836
        %v6869 = vunpack.c.l.b16 %v6837
        %v6870 = vunpack.c.l.b16 %v6838
        %v6871 = vunpack.c.l.b16 %v6839
        %v6872 = vunpack.c.l.b16 %v6840
        %v6873 = vunpack.c.l.b16 %v6841
        %v6874 = vunpack.c.l.b16 %v6842
        %v6875 = vunpack.c.l.b16 %v6843
        %v6876 = vunpack.c.l.b16 %v6844
        %v6877 = vunpack.c.l.b16 %v6845
        %v6878 = vunpack.c.l.b16 %v6846
        %v6879 = vpack.c.b16 %v6864, %v6863
        %v6880 = vpack.c.b16 %v6866, %v6865
        %v6881 = vpack.c.b16 %v6868, %v6867
        %v6882 = vpack.c.b16 %v6870, %v6869
        %v6883 = vpack.c.b16 %v6872, %v6871
        %v6884 = vpack.c.b16 %v6874, %v6873
        %v6885 = vpack.c.b16 %v6876, %v6875
        %v6886 = vpack.c.b16 %v6878, %v6877
        %6895 = vmatprep.subr.bf16.mxu0 0
        %6896 = vmatpush1.bf16.msra.mxu0 %v6879
        %6897 = vmatprep.subr.bf16.mxu0 0
        %6898 = vmatpush1.bf16.msra.mxu0 %v6880
        %6899 = vmatprep.subr.bf16.mxu0 0
        %6900 = vmatpush1.bf16.msra.mxu0 %v6881
        %6901 = vmatprep.subr.bf16.mxu0 0
        %6902 = vmatpush1.bf16.msra.mxu0 %v6882
        %6903 = vmatprep.subr.bf16.mxu0 0
        %6904 = vmatpush1.bf16.msra.mxu0 %v6883
        %6905 = vmatprep.subr.bf16.mxu0 0
        %6906 = vmatpush1.bf16.msra.mxu0 %v6884
        %6907 = vmatprep.subr.bf16.mxu0 0
        %6908 = vmatpush1.bf16.msra.mxu0 %v6885
        %6909 = vmatprep.subr.bf16.mxu0 0
        %6910 = vmatpush1.bf16.msra.mxu0 %v6886
        %6911 = vmatprep.subr.bf16.mxu0 0
        %6912 = vmatpush1.bf16.msra.mxu0 0
        %6913 = vmatprep.subr.bf16.mxu0 0
        %6914 = vmatpush1.bf16.msra.mxu0 0
        %6915 = vmatprep.subr.bf16.mxu0 0
        %6916 = vmatpush1.bf16.msra.mxu0 0
        %6917 = vmatprep.subr.bf16.mxu0 0
        %6918 = vmatpush1.bf16.msra.mxu0 0
        %6919 = vmatprep.subr.bf16.mxu0 0
        %6920 = vmatpush1.bf16.msra.mxu0 0
        %6921 = vmatprep.subr.bf16.mxu0 0
        %6922 = vmatpush1.bf16.msra.mxu0 0
        %6923 = vmatprep.subr.bf16.mxu0 0
        %6924 = vmatpush1.bf16.msra.mxu0 0
        %6925 = vmatprep.subr.bf16.mxu0 0
        %6926 = vmatpush1.bf16.msra.mxu0 0
        %6927 = vmatprep.mubr.bf16.mxu0 0
        %6928 = vmatmul.mubr.bf16.gmra.mrb[0].mxu0 %v6829
        %v6929 = vpop.f32.mrb[0].mxu0
        %v6930 = vadd.f32 0.0, %v6929
        %v6931 = vpop.f32.mrb[0].mxu0
        %v6932 = vpop.f32.mrb[0].mxu0
        %v6933 = vpop.f32.mrb[0].mxu0
        %6934 = vdwg.mxu0
        %v6951 = vunpack.c.l.b16 %v6773
        %v6952 = vunpack.c.l.b16 %v6774
        %v6953 = vunpack.c.l.b16 %v6775
        %v6954 = vunpack.c.l.b16 %v6776
        %v6955 = vunpack.c.l.b16 %v6777
        %v6956 = vunpack.c.l.b16 %v6778
        %v6957 = vunpack.c.l.b16 %v6779
        %v6958 = vunpack.c.l.b16 %v6780
        %v6959 = vunpack.c.l.b16 %v6781
        %v6960 = vunpack.c.l.b16 %v6782
        %v6961 = vunpack.c.l.b16 %v6783
        %v6962 = vunpack.c.l.b16 %v6784
        %v6963 = vunpack.c.l.b16 %v6785
        %v6964 = vunpack.c.l.b16 %v6786
        %v6965 = vunpack.c.l.b16 %v6787
        %v6966 = vunpack.c.l.b16 %v6788
        %v6967 = vpack.c.b16 %v6952, %v6951
        %v6968 = vpack.c.b16 %v6954, %v6953
        %v6969 = vpack.c.b16 %v6956, %v6955
        %v6970 = vpack.c.b16 %v6958, %v6957
        %v6971 = vpack.c.b16 %v6960, %v6959
        %v6972 = vpack.c.b16 %v6962, %v6961
        %v6973 = vpack.c.b16 %v6964, %v6963
        %v6974 = vpack.c.b16 %v6966, %v6965
        %6983 = vmatprep.subr.bf16.mxu0 0
        %6984 = vmatpush1.bf16.msra.mxu0 %v6967
        %6985 = vmatprep.subr.bf16.mxu0 0
        %6986 = vmatpush1.bf16.msra.mxu0 %v6968
        %6987 = vmatprep.subr.bf16.mxu0 0
        %6988 = vmatpush1.bf16.msra.mxu0 %v6969
        %6989 = vmatprep.subr.bf16.mxu0 0
        %6990 = vmatpush1.bf16.msra.mxu0 %v6970
        %6991 = vmatprep.subr.bf16.mxu0 0
        %6992 = vmatpush1.bf16.msra.mxu0 %v6971
        %6993 = vmatprep.subr.bf16.mxu0 0
        %6994 = vmatpush1.bf16.msra.mxu0 %v6972
        %6995 = vmatprep.subr.bf16.mxu0 0
        %6996 = vmatpush1.bf16.msra.mxu0 %v6973
        %6997 = vmatprep.subr.bf16.mxu0 0
        %6998 = vmatpush1.bf16.msra.mxu0 %v6974
        %6999 = vmatprep.subr.bf16.mxu0 0
        %7000 = vmatpush1.bf16.msra.mxu0 0
        %7001 = vmatprep.subr.bf16.mxu0 0
        %7002 = vmatpush1.bf16.msra.mxu0 0
        %7003 = vmatprep.subr.bf16.mxu0 0
        %7004 = vmatpush1.bf16.msra.mxu0 0
        %7005 = vmatprep.subr.bf16.mxu0 0
        %7006 = vmatpush1.bf16.msra.mxu0 0
        %7007 = vmatprep.subr.bf16.mxu0 0
        %7008 = vmatpush1.bf16.msra.mxu0 0
        %7009 = vmatprep.subr.bf16.mxu0 0
        %7010 = vmatpush1.bf16.msra.mxu0 0
        %7011 = vmatprep.subr.bf16.mxu0 0
        %7012 = vmatpush1.bf16.msra.mxu0 0
        %7013 = vmatprep.subr.bf16.mxu0 0
        %7014 = vmatpush1.bf16.msra.mxu0 0
        %7015 = vmatprep.mubr.bf16.mxu0 0
        %7016 = vmatmul.mubr.bf16.gmra.mrb[0].mxu0 %v6772
        %v7017 = vpop.f32.mrb[0].mxu0
        %v7018 = vadd.f32 %v6930, %v7017
        %v7019 = vpop.f32.mrb[0].mxu0
        %v7020 = vpop.f32.mrb[0].mxu0
        %v7021 = vpop.f32.mrb[0].mxu0
        %7022 = vdwg.mxu0
        %7023 = vmatprep.subr.bf16.mxu0 0
        %7024 = vmatpush1.bf16.msra.mxu0 %v6730
        %7025 = vmatprep.subr.bf16.mxu0 0
        %7026 = vmatpush1.bf16.msra.mxu0 0
        %7027 = vmatprep.subr.bf16.mxu0 0
        %7028 = vmatpush1.bf16.msra.mxu0 0
        %7029 = vmatprep.subr.bf16.mxu0 0
        %7030 = vmatpush1.bf16.msra.mxu0 0
        %7031 = vmatprep.subr.bf16.mxu0 0
        %7032 = vmatpush1.bf16.msra.mxu0 0
        %7033 = vmatprep.subr.bf16.mxu0 0
        %7034 = vmatpush1.bf16.msra.mxu0 0
        %7035 = vmatprep.subr.bf16.mxu0 0
        %7036 = vmatpush1.bf16.msra.mxu0 0
        %7037 = vmatprep.subr.bf16.mxu0 0
        %7038 = vmatpush1.bf16.msra.mxu0 0
        %7039 = vmatprep.subr.bf16.mxu0 0
        %7040 = vmatpush1.bf16.msra.mxu0 0
        %7041 = vmatprep.subr.bf16.mxu0 0
        %7042 = vmatpush1.bf16.msra.mxu0 0
        %7043 = vmatprep.subr.bf16.mxu0 0
        %7044 = vmatpush1.bf16.msra.mxu0 0
        %7045 = vmatprep.subr.bf16.mxu0 0
        %7046 = vmatpush1.bf16.msra.mxu0 0
        %7047 = vmatprep.subr.bf16.mxu0 0
        %7048 = vmatpush1.bf16.msra.mxu0 0
        %7049 = vmatprep.subr.bf16.mxu0 0
        %7050 = vmatpush1.bf16.msra.mxu0 0
        %7051 = vmatprep.subr.bf16.mxu0 0
        %7052 = vmatpush1.bf16.msra.mxu0 0
        %7053 = vmatprep.subr.bf16.mxu0 0
        %7054 = vmatpush1.bf16.msra.mxu0 0
        %7055 = vmatprep.mubr.bf16.mxu0 0
        %7056 = vmatmul.mubr.bf16.gmra.mrb[0].mxu0 %v6570
        %v7057 = vpop.f32.mrb[0].mxu0
        %v7058 = vadd.f32 0.0, %v7057
        %v7059 = vpop.f32.mrb[0].mxu0
        %v7060 = vpop.f32.mrb[0].mxu0
        %v7061 = vpop.f32.mrb[0].mxu0
        %7062 = vdwg.mxu0
        %v7063 = vpack.c.bf16 %v7058, %v7058
        %s7064 = scalar_lea.vmem [#allocation22], 128
        %v7065 = vld [vmem:[%s7064] sm:$0xf]
        %v7066 = vld [vmem:[%s7064 + $0x4] sm:$0xf]
        %v7067 = vld [vmem:[%s7064 + $0x8] sm:$0xf]
        %v7068 = vld [vmem:[%s7064 + $0xc] sm:$0xf]
        %v7069 = vld [vmem:[%s7064 + $0x10] sm:$0xf]
        %v7070 = vld [vmem:[%s7064 + $0x14] sm:$0xf]
        %v7071 = vld [vmem:[%s7064 + $0x18] sm:$0xf]
        %v7072 = vld [vmem:[%s7064 + $0x1c] sm:$0xf]
        %v7073 = vld [vmem:[%s7064 + $0x20] sm:$0xf]
        %v7074 = vld [vmem:[%s7064 + $0x24] sm:$0xf]
        %v7075 = vld [vmem:[%s7064 + $0x28] sm:$0xf]
        %v7076 = vld [vmem:[%s7064 + $0x2c] sm:$0xf]
        %v7077 = vld [vmem:[%s7064 + $0x30] sm:$0xf]
        %v7078 = vld [vmem:[%s7064 + $0x34] sm:$0xf]
        %v7079 = vld [vmem:[%s7064 + $0x38] sm:$0xf]
        %v7080 = vld [vmem:[%s7064 + $0x3c] sm:$0xf]
        %v7097 = vunpack.c.l.b16 %v7065
        %v7098 = vunpack.c.l.b16 %v7066
        %v7099 = vunpack.c.l.b16 %v7067
        %v7100 = vunpack.c.l.b16 %v7068
        %v7101 = vunpack.c.l.b16 %v7069
        %v7102 = vunpack.c.l.b16 %v7070
        %v7103 = vunpack.c.l.b16 %v7071
        %v7104 = vunpack.c.l.b16 %v7072
        %v7105 = vunpack.c.l.b16 %v7073
        %v7106 = vunpack.c.l.b16 %v7074
        %v7107 = vunpack.c.l.b16 %v7075
        %v7108 = vunpack.c.l.b16 %v7076
        %v7109 = vunpack.c.l.b16 %v7077
        %v7110 = vunpack.c.l.b16 %v7078
        %v7111 = vunpack.c.l.b16 %v7079
        %v7112 = vunpack.c.l.b16 %v7080
        %v7113 = vpack.c.b16 %v7098, %v7097
        %v7114 = vpack.c.b16 %v7100, %v7099
        %v7115 = vpack.c.b16 %v7102, %v7101
        %v7116 = vpack.c.b16 %v7104, %v7103
        %v7117 = vpack.c.b16 %v7106, %v7105
        %v7118 = vpack.c.b16 %v7108, %v7107
        %v7119 = vpack.c.b16 %v7110, %v7109
        %v7120 = vpack.c.b16 %v7112, %v7111
        %7129 = vmatprep.subr.bf16.mxu0 0
        %7130 = vmatpush1.bf16.msra.mxu0 %v7113
        %7131 = vmatprep.subr.bf16.mxu0 0
        %7132 = vmatpush1.bf16.msra.mxu0 %v7114
        %7133 = vmatprep.subr.bf16.mxu0 0
        %7134 = vmatpush1.bf16.msra.mxu0 %v7115
        %7135 = vmatprep.subr.bf16.mxu0 0
        %7136 = vmatpush1.bf16.msra.mxu0 %v7116
        %7137 = vmatprep.subr.bf16.mxu0 0
        %7138 = vmatpush1.bf16.msra.mxu0 %v7117
        %7139 = vmatprep.subr.bf16.mxu0 0
        %7140 = vmatpush1.bf16.msra.mxu0 %v7118
        %7141 = vmatprep.subr.bf16.mxu0 0
        %7142 = vmatpush1.bf16.msra.mxu0 %v7119
        %7143 = vmatprep.subr.bf16.mxu0 0
        %7144 = vmatpush1.bf16.msra.mxu0 %v7120
        %7145 = vmatprep.subr.bf16.mxu0 0
        %7146 = vmatpush1.bf16.msra.mxu0 0
        %7147 = vmatprep.subr.bf16.mxu0 0
        %7148 = vmatpush1.bf16.msra.mxu0 0
        %7149 = vmatprep.subr.bf16.mxu0 0
        %7150 = vmatpush1.bf16.msra.mxu0 0
        %7151 = vmatprep.subr.bf16.mxu0 0
        %7152 = vmatpush1.bf16.msra.mxu0 0
        %7153 = vmatprep.subr.bf16.mxu0 0
        %7154 = vmatpush1.bf16.msra.mxu0 0
        %7155 = vmatprep.subr.bf16.mxu0 0
        %7156 = vmatpush1.bf16.msra.mxu0 0
        %7157 = vmatprep.subr.bf16.mxu0 0
        %7158 = vmatpush1.bf16.msra.mxu0 0
        %7159 = vmatprep.subr.bf16.mxu0 0
        %7160 = vmatpush1.bf16.msra.mxu0 0
        %7161 = vmatprep.mubr.bf16.mxu0 0
        %7162 = vmatmul.mubr.bf16.gmra.mrb[0].mxu0 %v7063
        %v7163 = vpop.f32.mrb[0].mxu0
        %v7164 = vadd.f32 0.0, %v7163
        %v7165 = vpop.f32.mrb[0].mxu0
        %v7166 = vpop.f32.mrb[0].mxu0
        %v7167 = vpop.f32.mrb[0].mxu0
        %7168 = vdwg.mxu0
        %v7169 = vadd.f32 %v7018, %v7164
        %v7170 = vld [vmem:[#allocation23] sm:$0x1]
        %v7172 = vlaneseq
        %v7173 = vshrl.u32 %v7172, 7
        %v7174 = vsub.s32 0, %v7173
        %v7175 = vrot.slane %v7170, %v7174
        %v7177 = vadd.f32 %v7169, %v7175
        %v7178 = vadd.f32 %v7177, %v6260
        %v7179 = vmax.f32 %v7178, 0.0
        %v7180 = vpack.c.bf16 %v7179, %v7179
        %v7181 = vld [vmem:[%s21] sm:$0x1]
        %v7183 = vsel %vm6263, %v7181, 0
        %v7186 = vsel %vm6267, %v7180, 0
        %7188 = vmatprep.subr.bf16.mxu0 0
        %7189 = vmatpush1.bf16.msra.mxu0 %v7186
        %7190 = vmatprep.subr.bf16.mxu0 0
        %7191 = vmatpush1.bf16.msra.mxu0 0
        %7192 = vmatprep.subr.bf16.mxu0 0
        %7193 = vmatpush1.bf16.msra.mxu0 0
        %7194 = vmatprep.subr.bf16.mxu0 0
        %7195 = vmatpush1.bf16.msra.mxu0 0
        %7196 = vmatprep.subr.bf16.mxu0 0
        %7197 = vmatpush1.bf16.msra.mxu0 0
        %7198 = vmatprep.subr.bf16.mxu0 0
        %7199 = vmatpush1.bf16.msra.mxu0 0
        %7200 = vmatprep.subr.bf16.mxu0 0
        %7201 = vmatpush1.bf16.msra.mxu0 0
        %7202 = vmatprep.subr.bf16.mxu0 0
        %7203 = vmatpush1.bf16.msra.mxu0 0
        %7204 = vmatprep.subr.bf16.mxu0 0
        %7205 = vmatpush1.bf16.msra.mxu0 0
        %7206 = vmatprep.subr.bf16.mxu0 0
        %7207 = vmatpush1.bf16.msra.mxu0 0
        %7208 = vmatprep.subr.bf16.mxu0 0
        %7209 = vmatpush1.bf16.msra.mxu0 0
        %7210 = vmatprep.subr.bf16.mxu0 0
        %7211 = vmatpush1.bf16.msra.mxu0 0
        %7212 = vmatprep.subr.bf16.mxu0 0
        %7213 = vmatpush1.bf16.msra.mxu0 0
        %7214 = vmatprep.subr.bf16.mxu0 0
        %7215 = vmatpush1.bf16.msra.mxu0 0
        %7216 = vmatprep.subr.bf16.mxu0 0
        %7217 = vmatpush1.bf16.msra.mxu0 0
        %7218 = vmatprep.subr.bf16.mxu0 0
        %7219 = vmatpush1.bf16.msra.mxu0 0
        %7220 = vmatprep.mubr.bf16.mxu0 0
        %7221 = vmatmul.mubr.bf16.gmra.mrb[0].mxu0 %v7183
        %v7222 = vpop.f32.mrb[0].mxu0
        %v7223 = vadd.f32 0.0, %v7222
        %v7224 = vpop.f32.mrb[0].mxu0
        %v7225 = vpop.f32.mrb[0].mxu0
        %v7226 = vpop.f32.mrb[0].mxu0
        %7227 = vdwg.mxu0
        %v7228 = vpack.c.bf16 %v7223, %v7223
        %v7229 = vld [vmem:[%s22] sm:$0xf]
        %v7230 = vld [vmem:[%s22 + $0x4] sm:$0xf]
        %v7231 = vld [vmem:[%s22 + $0x8] sm:$0xf]
        %v7232 = vld [vmem:[%s22 + $0xc] sm:$0xf]
        %v7233 = vld [vmem:[%s22 + $0x10] sm:$0xf]
        %v7234 = vld [vmem:[%s22 + $0x14] sm:$0xf]
        %v7235 = vld [vmem:[%s22 + $0x18] sm:$0xf]
        %v7236 = vld [vmem:[%s22 + $0x1c] sm:$0xf]
        %v7237 = vld [vmem:[%s22 + $0x20] sm:$0xf]
        %v7238 = vld [vmem:[%s22 + $0x24] sm:$0xf]
        %v7239 = vld [vmem:[%s22 + $0x28] sm:$0xf]
        %v7240 = vld [vmem:[%s22 + $0x2c] sm:$0xf]
        %v7241 = vld [vmem:[%s22 + $0x30] sm:$0xf]
        %v7242 = vld [vmem:[%s22 + $0x34] sm:$0xf]
        %v7243 = vld [vmem:[%s22 + $0x38] sm:$0xf]
        %v7244 = vld [vmem:[%s22 + $0x3c] sm:$0xf]
        %s7245 = scalar_lea.vmem %s21, 1
        %v7246 = vld [vmem:[%s7245] sm:$0x1]
        %v7248 = vsel %vm6263, %v7246, 0
        %7250 = vmatprep.subr.bf16.mxu0 0
        %7251 = vmatpush1.bf16.msra.mxu0 %v7186
        %7252 = vmatprep.subr.bf16.mxu0 0
        %7253 = vmatpush1.bf16.msra.mxu0 0
        %7254 = vmatprep.subr.bf16.mxu0 0
        %7255 = vmatpush1.bf16.msra.mxu0 0
        %7256 = vmatprep.subr.bf16.mxu0 0
        %7257 = vmatpush1.bf16.msra.mxu0 0
        %7258 = vmatprep.subr.bf16.mxu0 0
        %7259 = vmatpush1.bf16.msra.mxu0 0
        %7260 = vmatprep.subr.bf16.mxu0 0
        %7261 = vmatpush1.bf16.msra.mxu0 0
        %7262 = vmatprep.subr.bf16.mxu0 0
        %7263 = vmatpush1.bf16.msra.mxu0 0
        %7264 = vmatprep.subr.bf16.mxu0 0
        %7265 = vmatpush1.bf16.msra.mxu0 0
        %7266 = vmatprep.subr.bf16.mxu0 0
        %7267 = vmatpush1.bf16.msra.mxu0 0
        %7268 = vmatprep.subr.bf16.mxu0 0
        %7269 = vmatpush1.bf16.msra.mxu0 0
        %7270 = vmatprep.subr.bf16.mxu0 0
        %7271 = vmatpush1.bf16.msra.mxu0 0
        %7272 = vmatprep.subr.bf16.mxu0 0
        %7273 = vmatpush1.bf16.msra.mxu0 0
        %7274 = vmatprep.subr.bf16.mxu0 0
        %7275 = vmatpush1.bf16.msra.mxu0 0
        %7276 = vmatprep.subr.bf16.mxu0 0
        %7277 = vmatpush1.bf16.msra.mxu0 0
        %7278 = vmatprep.subr.bf16.mxu0 0
        %7279 = vmatpush1.bf16.msra.mxu0 0
        %7280 = vmatprep.subr.bf16.mxu0 0
        %7281 = vmatpush1.bf16.msra.mxu0 0
        %7282 = vmatprep.mubr.bf16.mxu0 0
        %7283 = vmatmul.mubr.bf16.gmra.mrb[0].mxu0 %v7248
        %v7284 = vpop.f32.mrb[0].mxu0
        %v7285 = vadd.f32 0.0, %v7284
        %v7286 = vpop.f32.mrb[0].mxu0
        %v7287 = vpop.f32.mrb[0].mxu0
        %v7288 = vpop.f32.mrb[0].mxu0
        %7289 = vdwg.mxu0
        %v7290 = vpack.c.bf16 %v7285, %v7285
        %s7291 = scalar_lea.vmem %s22, 64
        %v7292 = vld [vmem:[%s7291] sm:$0xf]
        %v7293 = vld [vmem:[%s7291 + $0x4] sm:$0xf]
        %v7294 = vld [vmem:[%s7291 + $0x8] sm:$0xf]
        %v7295 = vld [vmem:[%s7291 + $0xc] sm:$0xf]
        %v7296 = vld [vmem:[%s7291 + $0x10] sm:$0xf]
        %v7297 = vld [vmem:[%s7291 + $0x14] sm:$0xf]
        %v7298 = vld [vmem:[%s7291 + $0x18] sm:$0xf]
        %v7299 = vld [vmem:[%s7291 + $0x1c] sm:$0xf]
        %v7300 = vld [vmem:[%s7291 + $0x20] sm:$0xf]
        %v7301 = vld [vmem:[%s7291 + $0x24] sm:$0xf]
        %v7302 = vld [vmem:[%s7291 + $0x28] sm:$0xf]
        %v7303 = vld [vmem:[%s7291 + $0x2c] sm:$0xf]
        %v7304 = vld [vmem:[%s7291 + $0x30] sm:$0xf]
        %v7305 = vld [vmem:[%s7291 + $0x34] sm:$0xf]
        %v7306 = vld [vmem:[%s7291 + $0x38] sm:$0xf]
        %v7307 = vld [vmem:[%s7291 + $0x3c] sm:$0xf]
        %v7324 = vunpack.c.l.b16 %v7292
        %v7325 = vunpack.c.l.b16 %v7293
        %v7326 = vunpack.c.l.b16 %v7294
        %v7327 = vunpack.c.l.b16 %v7295
        %v7328 = vunpack.c.l.b16 %v7296
        %v7329 = vunpack.c.l.b16 %v7297
        %v7330 = vunpack.c.l.b16 %v7298
        %v7331 = vunpack.c.l.b16 %v7299
        %v7332 = vunpack.c.l.b16 %v7300
        %v7333 = vunpack.c.l.b16 %v7301
        %v7334 = vunpack.c.l.b16 %v7302
        %v7335 = vunpack.c.l.b16 %v7303
        %v7336 = vunpack.c.l.b16 %v7304
        %v7337 = vunpack.c.l.b16 %v7305
        %v7338 = vunpack.c.l.b16 %v7306
        %v7339 = vunpack.c.l.b16 %v7307
        %v7340 = vpack.c.b16 %v7325, %v7324
        %v7341 = vpack.c.b16 %v7327, %v7326
        %v7342 = vpack.c.b16 %v7329, %v7328
        %v7343 = vpack.c.b16 %v7331, %v7330
        %v7344 = vpack.c.b16 %v7333, %v7332
        %v7345 = vpack.c.b16 %v7335, %v7334
        %v7346 = vpack.c.b16 %v7337, %v7336
        %v7347 = vpack.c.b16 %v7339, %v7338
        %7356 = vmatprep.subr.bf16.mxu0 0
        %7357 = vmatpush1.bf16.msra.mxu0 %v7340
        %7358 = vmatprep.subr.bf16.mxu0 0
        %7359 = vmatpush1.bf16.msra.mxu0 %v7341
        %7360 = vmatprep.subr.bf16.mxu0 0
        %7361 = vmatpush1.bf16.msra.mxu0 %v7342
        %7362 = vmatprep.subr.bf16.mxu0 0
        %7363 = vmatpush1.bf16.msra.mxu0 %v7343
        %7364 = vmatprep.subr.bf16.mxu0 0
        %7365 = vmatpush1.bf16.msra.mxu0 %v7344
        %7366 = vmatprep.subr.bf16.mxu0 0
        %7367 = vmatpush1.bf16.msra.mxu0 %v7345
        %7368 = vmatprep.subr.bf16.mxu0 0
        %7369 = vmatpush1.bf16.msra.mxu0 %v7346
        %7370 = vmatprep.subr.bf16.mxu0 0
        %7371 = vmatpush1.bf16.msra.mxu0 %v7347
        %7372 = vmatprep.subr.bf16.mxu0 0
        %7373 = vmatpush1.bf16.msra.mxu0 0
        %7374 = vmatprep.subr.bf16.mxu0 0
        %7375 = vmatpush1.bf16.msra.mxu0 0
        %7376 = vmatprep.subr.bf16.mxu0 0
        %7377 = vmatpush1.bf16.msra.mxu0 0
        %7378 = vmatprep.subr.bf16.mxu0 0
        %7379 = vmatpush1.bf16.msra.mxu0 0
        %7380 = vmatprep.subr.bf16.mxu0 0
        %7381 = vmatpush1.bf16.msra.mxu0 0
        %7382 = vmatprep.subr.bf16.mxu0 0
        %7383 = vmatpush1.bf16.msra.mxu0 0
        %7384 = vmatprep.subr.bf16.mxu0 0
        %7385 = vmatpush1.bf16.msra.mxu0 0
        %7386 = vmatprep.subr.bf16.mxu0 0
        %7387 = vmatpush1.bf16.msra.mxu0 0
        %7388 = vmatprep.mubr.bf16.mxu0 0
        %7389 = vmatmul.mubr.bf16.gmra.mrb[0].mxu0 %v7290
        %v7390 = vpop.f32.mrb[0].mxu0
        %v7391 = vadd.f32 0.0, %v7390
        %v7392 = vpop.f32.mrb[0].mxu0
        %v7393 = vpop.f32.mrb[0].mxu0
        %v7394 = vpop.f32.mrb[0].mxu0
        %7395 = vdwg.mxu0
        %v7412 = vunpack.c.l.b16 %v7229
        %v7413 = vunpack.c.l.b16 %v7230
        %v7414 = vunpack.c.l.b16 %v7231
        %v7415 = vunpack.c.l.b16 %v7232
        %v7416 = vunpack.c.l.b16 %v7233
        %v7417 = vunpack.c.l.b16 %v7234
        %v7418 = vunpack.c.l.b16 %v7235
        %v7419 = vunpack.c.l.b16 %v7236
        %v7420 = vunpack.c.l.b16 %v7237
        %v7421 = vunpack.c.l.b16 %v7238
        %v7422 = vunpack.c.l.b16 %v7239
        %v7423 = vunpack.c.l.b16 %v7240
        %v7424 = vunpack.c.l.b16 %v7241
        %v7425 = vunpack.c.l.b16 %v7242
        %v7426 = vunpack.c.l.b16 %v7243
        %v7427 = vunpack.c.l.b16 %v7244
        %v7428 = vpack.c.b16 %v7413, %v7412
        %v7429 = vpack.c.b16 %v7415, %v7414
        %v7430 = vpack.c.b16 %v7417, %v7416
        %v7431 = vpack.c.b16 %v7419, %v7418
        %v7432 = vpack.c.b16 %v7421, %v7420
        %v7433 = vpack.c.b16 %v7423, %v7422
        %v7434 = vpack.c.b16 %v7425, %v7424
        %v7435 = vpack.c.b16 %v7427, %v7426
        %7444 = vmatprep.subr.bf16.mxu0 0
        %7445 = vmatpush1.bf16.msra.mxu0 %v7428
        %7446 = vmatprep.subr.bf16.mxu0 0
        %7447 = vmatpush1.bf16.msra.mxu0 %v7429
        %7448 = vmatprep.subr.bf16.mxu0 0
        %7449 = vmatpush1.bf16.msra.mxu0 %v7430
        %7450 = vmatprep.subr.bf16.mxu0 0
        %7451 = vmatpush1.bf16.msra.mxu0 %v7431
        %7452 = vmatprep.subr.bf16.mxu0 0
        %7453 = vmatpush1.bf16.msra.mxu0 %v7432
        %7454 = vmatprep.subr.bf16.mxu0 0
        %7455 = vmatpush1.bf16.msra.mxu0 %v7433
        %7456 = vmatprep.subr.bf16.mxu0 0
        %7457 = vmatpush1.bf16.msra.mxu0 %v7434
        %7458 = vmatprep.subr.bf16.mxu0 0
        %7459 = vmatpush1.bf16.msra.mxu0 %v7435
        %7460 = vmatprep.subr.bf16.mxu0 0
        %7461 = vmatpush1.bf16.msra.mxu0 0
        %7462 = vmatprep.subr.bf16.mxu0 0
        %7463 = vmatpush1.bf16.msra.mxu0 0
        %7464 = vmatprep.subr.bf16.mxu0 0
        %7465 = vmatpush1.bf16.msra.mxu0 0
        %7466 = vmatprep.subr.bf16.mxu0 0
        %7467 = vmatpush1.bf16.msra.mxu0 0
        %7468 = vmatprep.subr.bf16.mxu0 0
        %7469 = vmatpush1.bf16.msra.mxu0 0
        %7470 = vmatprep.subr.bf16.mxu0 0
        %7471 = vmatpush1.bf16.msra.mxu0 0
        %7472 = vmatprep.subr.bf16.mxu0 0
        %7473 = vmatpush1.bf16.msra.mxu0 0
        %7474 = vmatprep.subr.bf16.mxu0 0
        %7475 = vmatpush1.bf16.msra.mxu0 0
        %7476 = vmatprep.mubr.bf16.mxu0 0
        %7477 = vmatmul.mubr.bf16.gmra.mrb[0].mxu0 %v7228
        %v7478 = vpop.f32.mrb[0].mxu0
        %v7479 = vadd.f32 %v7391, %v7478
        %v7480 = vpop.f32.mrb[0].mxu0
        %v7481 = vpop.f32.mrb[0].mxu0
        %v7482 = vpop.f32.mrb[0].mxu0
        %7483 = vdwg.mxu0
        %s7484 = scalar_lea.vmem %s21, 2
        %v7485 = vld [vmem:[%s7484] sm:$0x1]
        %v7487 = vsel %vm6263, %v7485, 0
        %7489 = vmatprep.subr.bf16.mxu0 0
        %7490 = vmatpush1.bf16.msra.mxu0 %v7186
        %7491 = vmatprep.subr.bf16.mxu0 0
        %7492 = vmatpush1.bf16.msra.mxu0 0
        %7493 = vmatprep.subr.bf16.mxu0 0
        %7494 = vmatpush1.bf16.msra.mxu0 0
        %7495 = vmatprep.subr.bf16.mxu0 0
        %7496 = vmatpush1.bf16.msra.mxu0 0
        %7497 = vmatprep.subr.bf16.mxu0 0
        %7498 = vmatpush1.bf16.msra.mxu0 0
        %7499 = vmatprep.subr.bf16.mxu0 0
        %7500 = vmatpush1.bf16.msra.mxu0 0
        %7501 = vmatprep.subr.bf16.mxu0 0
        %7502 = vmatpush1.bf16.msra.mxu0 0
        %7503 = vmatprep.subr.bf16.mxu0 0
        %7504 = vmatpush1.bf16.msra.mxu0 0
        %7505 = vmatprep.subr.bf16.mxu0 0
        %7506 = vmatpush1.bf16.msra.mxu0 0
        %7507 = vmatprep.subr.bf16.mxu0 0
        %7508 = vmatpush1.bf16.msra.mxu0 0
        %7509 = vmatprep.subr.bf16.mxu0 0
        %7510 = vmatpush1.bf16.msra.mxu0 0
        %7511 = vmatprep.subr.bf16.mxu0 0
        %7512 = vmatpush1.bf16.msra.mxu0 0
        %7513 = vmatprep.subr.bf16.mxu0 0
        %7514 = vmatpush1.bf16.msra.mxu0 0
        %7515 = vmatprep.subr.bf16.mxu0 0
        %7516 = vmatpush1.bf16.msra.mxu0 0
        %7517 = vmatprep.subr.bf16.mxu0 0
        %7518 = vmatpush1.bf16.msra.mxu0 0
        %7519 = vmatprep.subr.bf16.mxu0 0
        %7520 = vmatpush1.bf16.msra.mxu0 0
        %7521 = vmatprep.mubr.bf16.mxu0 0
        %7522 = vmatmul.mubr.bf16.gmra.mrb[0].mxu0 %v7487
        %v7523 = vpop.f32.mrb[0].mxu0
        %v7524 = vadd.f32 0.0, %v7523
        %v7525 = vpop.f32.mrb[0].mxu0
        %v7526 = vpop.f32.mrb[0].mxu0
        %v7527 = vpop.f32.mrb[0].mxu0
        %7528 = vdwg.mxu0
        %v7529 = vpack.c.bf16 %v7524, %v7524
        %s7530 = scalar_lea.vmem %s22, 128
        %v7531 = vld [vmem:[%s7530] sm:$0xf]
        %v7532 = vld [vmem:[%s7530 + $0x4] sm:$0xf]
        %v7533 = vld [vmem:[%s7530 + $0x8] sm:$0xf]
        %v7534 = vld [vmem:[%s7530 + $0xc] sm:$0xf]
        %v7535 = vld [vmem:[%s7530 + $0x10] sm:$0xf]
        %v7536 = vld [vmem:[%s7530 + $0x14] sm:$0xf]
        %v7537 = vld [vmem:[%s7530 + $0x18] sm:$0xf]
        %v7538 = vld [vmem:[%s7530 + $0x1c] sm:$0xf]
        %v7539 = vld [vmem:[%s7530 + $0x20] sm:$0xf]
        %v7540 = vld [vmem:[%s7530 + $0x24] sm:$0xf]
        %v7541 = vld [vmem:[%s7530 + $0x28] sm:$0xf]
        %v7542 = vld [vmem:[%s7530 + $0x2c] sm:$0xf]
        %v7543 = vld [vmem:[%s7530 + $0x30] sm:$0xf]
        %v7544 = vld [vmem:[%s7530 + $0x34] sm:$0xf]
        %v7545 = vld [vmem:[%s7530 + $0x38] sm:$0xf]
        %v7546 = vld [vmem:[%s7530 + $0x3c] sm:$0xf]
        %v7563 = vunpack.c.l.b16 %v7531
        %v7564 = vunpack.c.l.b16 %v7532
        %v7565 = vunpack.c.l.b16 %v7533
        %v7566 = vunpack.c.l.b16 %v7534
        %v7567 = vunpack.c.l.b16 %v7535
        %v7568 = vunpack.c.l.b16 %v7536
        %v7569 = vunpack.c.l.b16 %v7537
        %v7570 = vunpack.c.l.b16 %v7538
        %v7571 = vunpack.c.l.b16 %v7539
        %v7572 = vunpack.c.l.b16 %v7540
        %v7573 = vunpack.c.l.b16 %v7541
        %v7574 = vunpack.c.l.b16 %v7542
        %v7575 = vunpack.c.l.b16 %v7543
        %v7576 = vunpack.c.l.b16 %v7544
        %v7577 = vunpack.c.l.b16 %v7545
        %v7578 = vunpack.c.l.b16 %v7546
        %v7579 = vpack.c.b16 %v7564, %v7563
        %v7580 = vpack.c.b16 %v7566, %v7565
        %v7581 = vpack.c.b16 %v7568, %v7567
        %v7582 = vpack.c.b16 %v7570, %v7569
        %v7583 = vpack.c.b16 %v7572, %v7571
        %v7584 = vpack.c.b16 %v7574, %v7573
        %v7585 = vpack.c.b16 %v7576, %v7575
        %v7586 = vpack.c.b16 %v7578, %v7577
        %7595 = vmatprep.subr.bf16.mxu0 0
        %7596 = vmatpush1.bf16.msra.mxu0 %v7579
        %7597 = vmatprep.subr.bf16.mxu0 0
        %7598 = vmatpush1.bf16.msra.mxu0 %v7580
        %7599 = vmatprep.subr.bf16.mxu0 0
        %7600 = vmatpush1.bf16.msra.mxu0 %v7581
        %7601 = vmatprep.subr.bf16.mxu0 0
        %7602 = vmatpush1.bf16.msra.mxu0 %v7582
        %7603 = vmatprep.subr.bf16.mxu0 0
        %7604 = vmatpush1.bf16.msra.mxu0 %v7583
        %7605 = vmatprep.subr.bf16.mxu0 0
        %7606 = vmatpush1.bf16.msra.mxu0 %v7584
        %7607 = vmatprep.subr.bf16.mxu0 0
        %7608 = vmatpush1.bf16.msra.mxu0 %v7585
        %7609 = vmatprep.subr.bf16.mxu0 0
        %7610 = vmatpush1.bf16.msra.mxu0 %v7586
        %7611 = vmatprep.subr.bf16.mxu0 0
        %7612 = vmatpush1.bf16.msra.mxu0 0
        %7613 = vmatprep.subr.bf16.mxu0 0
        %7614 = vmatpush1.bf16.msra.mxu0 0
        %7615 = vmatprep.subr.bf16.mxu0 0
        %7616 = vmatpush1.bf16.msra.mxu0 0
        %7617 = vmatprep.subr.bf16.mxu0 0
        %7618 = vmatpush1.bf16.msra.mxu0 0
        %7619 = vmatprep.subr.bf16.mxu0 0
        %7620 = vmatpush1.bf16.msra.mxu0 0
        %7621 = vmatprep.subr.bf16.mxu0 0
        %7622 = vmatpush1.bf16.msra.mxu0 0
        %7623 = vmatprep.subr.bf16.mxu0 0
        %7624 = vmatpush1.bf16.msra.mxu0 0
        %7625 = vmatprep.subr.bf16.mxu0 0
        %7626 = vmatpush1.bf16.msra.mxu0 0
        %7627 = vmatprep.mubr.bf16.mxu0 0
        %7628 = vmatmul.mubr.bf16.gmra.mrb[0].mxu0 %v7529
        %v7629 = vpop.f32.mrb[0].mxu0
        %v7630 = vadd.f32 0.0, %v7629
        %v7631 = vpop.f32.mrb[0].mxu0
        %v7632 = vpop.f32.mrb[0].mxu0
        %v7633 = vpop.f32.mrb[0].mxu0
        %7634 = vdwg.mxu0
        %v7635 = vadd.f32 %v7479, %v7630
        %s7636 = scalar_lea.vmem %s21, 3
        %v7637 = vld [vmem:[%s7636] sm:$0x1]
        %v7639 = vsel %vm6263, %v7637, 0
        %7641 = vmatprep.subr.bf16.mxu0 0
        %7642 = vmatpush1.bf16.msra.mxu0 %v7186
        %7643 = vmatprep.subr.bf16.mxu0 0
        %7644 = vmatpush1.bf16.msra.mxu0 0
        %7645 = vmatprep.subr.bf16.mxu0 0
        %7646 = vmatpush1.bf16.msra.mxu0 0
        %7647 = vmatprep.subr.bf16.mxu0 0
        %7648 = vmatpush1.bf16.msra.mxu0 0
        %7649 = vmatprep.subr.bf16.mxu0 0
        %7650 = vmatpush1.bf16.msra.mxu0 0
        %7651 = vmatprep.subr.bf16.mxu0 0
        %7652 = vmatpush1.bf16.msra.mxu0 0
        %7653 = vmatprep.subr.bf16.mxu0 0
        %7654 = vmatpush1.bf16.msra.mxu0 0
        %7655 = vmatprep.subr.bf16.mxu0 0
        %7656 = vmatpush1.bf16.msra.mxu0 0
        %7657 = vmatprep.subr.bf16.mxu0 0
        %7658 = vmatpush1.bf16.msra.mxu0 0
        %7659 = vmatprep.subr.bf16.mxu0 0
        %7660 = vmatpush1.bf16.msra.mxu0 0
        %7661 = vmatprep.subr.bf16.mxu0 0
        %7662 = vmatpush1.bf16.msra.mxu0 0
        %7663 = vmatprep.subr.bf16.mxu0 0
        %7664 = vmatpush1.bf16.msra.mxu0 0
        %7665 = vmatprep.subr.bf16.mxu0 0
        %7666 = vmatpush1.bf16.msra.mxu0 0
        %7667 = vmatprep.subr.bf16.mxu0 0
        %7668 = vmatpush1.bf16.msra.mxu0 0
        %7669 = vmatprep.subr.bf16.mxu0 0
        %7670 = vmatpush1.bf16.msra.mxu0 0
        %7671 = vmatprep.subr.bf16.mxu0 0
        %7672 = vmatpush1.bf16.msra.mxu0 0
        %7673 = vmatprep.mubr.bf16.mxu0 0
        %7674 = vmatmul.mubr.bf16.gmra.mrb[0].mxu0 %v7639
        %v7675 = vpop.f32.mrb[0].mxu0
        %v7676 = vadd.f32 0.0, %v7675
        %v7677 = vpop.f32.mrb[0].mxu0
        %v7678 = vpop.f32.mrb[0].mxu0
        %v7679 = vpop.f32.mrb[0].mxu0
        %7680 = vdwg.mxu0
        %v7681 = vpack.c.bf16 %v7676, %v7676
        %s7682 = scalar_lea.vmem %s22, 192
        %v7683 = vld [vmem:[%s7682] sm:$0xf]
        %v7684 = vld [vmem:[%s7682 + $0x4] sm:$0xf]
        %v7685 = vld [vmem:[%s7682 + $0x8] sm:$0xf]
        %v7686 = vld [vmem:[%s7682 + $0xc] sm:$0xf]
        %v7687 = vld [vmem:[%s7682 + $0x10] sm:$0xf]
        %v7688 = vld [vmem:[%s7682 + $0x14] sm:$0xf]
        %v7689 = vld [vmem:[%s7682 + $0x18] sm:$0xf]
        %v7690 = vld [vmem:[%s7682 + $0x1c] sm:$0xf]
        %v7691 = vld [vmem:[%s7682 + $0x20] sm:$0xf]
        %v7692 = vld [vmem:[%s7682 + $0x24] sm:$0xf]
        %v7693 = vld [vmem:[%s7682 + $0x28] sm:$0xf]
        %v7694 = vld [vmem:[%s7682 + $0x2c] sm:$0xf]
        %v7695 = vld [vmem:[%s7682 + $0x30] sm:$0xf]
        %v7696 = vld [vmem:[%s7682 + $0x34] sm:$0xf]
        %v7697 = vld [vmem:[%s7682 + $0x38] sm:$0xf]
        %v7698 = vld [vmem:[%s7682 + $0x3c] sm:$0xf]
        %v7715 = vunpack.c.l.b16 %v7683
        %v7716 = vunpack.c.l.b16 %v7684
        %v7717 = vunpack.c.l.b16 %v7685
        %v7718 = vunpack.c.l.b16 %v7686
        %v7719 = vunpack.c.l.b16 %v7687
        %v7720 = vunpack.c.l.b16 %v7688
        %v7721 = vunpack.c.l.b16 %v7689
        %v7722 = vunpack.c.l.b16 %v7690
        %v7723 = vunpack.c.l.b16 %v7691
        %v7724 = vunpack.c.l.b16 %v7692
        %v7725 = vunpack.c.l.b16 %v7693
        %v7726 = vunpack.c.l.b16 %v7694
        %v7727 = vunpack.c.l.b16 %v7695
        %v7728 = vunpack.c.l.b16 %v7696
        %v7729 = vunpack.c.l.b16 %v7697
        %v7730 = vunpack.c.l.b16 %v7698
        %v7731 = vpack.c.b16 %v7716, %v7715
        %v7732 = vpack.c.b16 %v7718, %v7717
        %v7733 = vpack.c.b16 %v7720, %v7719
        %v7734 = vpack.c.b16 %v7722, %v7721
        %v7735 = vpack.c.b16 %v7724, %v7723
        %v7736 = vpack.c.b16 %v7726, %v7725
        %v7737 = vpack.c.b16 %v7728, %v7727
        %v7738 = vpack.c.b16 %v7730, %v7729
        %7747 = vmatprep.subr.bf16.mxu0 0
        %7748 = vmatpush1.bf16.msra.mxu0 %v7731
        %7749 = vmatprep.subr.bf16.mxu0 0
        %7750 = vmatpush1.bf16.msra.mxu0 %v7732
        %7751 = vmatprep.subr.bf16.mxu0 0
        %7752 = vmatpush1.bf16.msra.mxu0 %v7733
        %7753 = vmatprep.subr.bf16.mxu0 0
        %7754 = vmatpush1.bf16.msra.mxu0 %v7734
        %7755 = vmatprep.subr.bf16.mxu0 0
        %7756 = vmatpush1.bf16.msra.mxu0 %v7735
        %7757 = vmatprep.subr.bf16.mxu0 0
        %7758 = vmatpush1.bf16.msra.mxu0 %v7736
        %7759 = vmatprep.subr.bf16.mxu0 0
        %7760 = vmatpush1.bf16.msra.mxu0 %v7737
        %7761 = vmatprep.subr.bf16.mxu0 0
        %7762 = vmatpush1.bf16.msra.mxu0 %v7738
        %7763 = vmatprep.subr.bf16.mxu0 0
        %7764 = vmatpush1.bf16.msra.mxu0 0
        %7765 = vmatprep.subr.bf16.mxu0 0
        %7766 = vmatpush1.bf16.msra.mxu0 0
        %7767 = vmatprep.subr.bf16.mxu0 0
        %7768 = vmatpush1.bf16.msra.mxu0 0
        %7769 = vmatprep.subr.bf16.mxu0 0
        %7770 = vmatpush1.bf16.msra.mxu0 0
        %7771 = vmatprep.subr.bf16.mxu0 0
        %7772 = vmatpush1.bf16.msra.mxu0 0
        %7773 = vmatprep.subr.bf16.mxu0 0
        %7774 = vmatpush1.bf16.msra.mxu0 0
        %7775 = vmatprep.subr.bf16.mxu0 0
        %7776 = vmatpush1.bf16.msra.mxu0 0
        %7777 = vmatprep.subr.bf16.mxu0 0
        %7778 = vmatpush1.bf16.msra.mxu0 0
        %7779 = vmatprep.mubr.bf16.mxu0 0
        %7780 = vmatmul.mubr.bf16.gmra.mrb[0].mxu0 %v7681
        %v7781 = vpop.f32.mrb[0].mxu0
        %v7782 = vadd.f32 0.0, %v7781
        %v7783 = vpop.f32.mrb[0].mxu0
        %v7784 = vpop.f32.mrb[0].mxu0
        %v7785 = vpop.f32.mrb[0].mxu0
        %7786 = vdwg.mxu0
        %v7787 = vadd.f32 %v7635, %v7782
        %v7788 = vld [vmem:[#allocation25] sm:$0x1]
        %v7789 = vadd.f32 %v7787, %v7788
        %7790 = vst [vmem:[%s935] sm:$0x1] %v7789
        %s7791 = sand.u32 %s563, 1
        %s7792 = scalar_lea.sflag [#allocation4], %s7791
        %s7793 = sand.u32 %s563, 1
        %s7794 = scalar_lea.vmem [#allocation26], %s7793
        // Predicated region
        $region177: #{resnet_forward.1} parent=115 // pred_check
          %p7795 = pneg %p573
        $region178: #{resnet_forward.1} parent=115 // pred_check_branch
          %7797 = sbr.rel (%p7795) target = $region180
        $region179: #{resnet_forward.1} parent=115 // pred_region
          %s7799 = ssub.s32 16, 16
          %7800 = vsyncadd %s7792, %s7799
          %s7801 = smul.addr %s46, 16
          %s7802 = scalar_lea.hbm %s24, %s7801
          %s7804 = sshll.u32 %s7794, 4
          %s7805 = int_to_ptr.vmem [resolvable:$true] %s7804
          %7807 = dma.vmem_to_hbm [thread:$0]  %s7805, 16, %s7802, %s7792
        $region180: #{resnet_forward.1} parent=115 // pred_fallthru
          _
      $region116: #{resnet_forward.1} parent=5 // pred_fallthru
        _
      %p7808 = scmp.le.s32.totalorder 2, %s41
      // Predicated region
      $region181: #{resnet_forward.1} parent=5 // pred_check
        %p7809 = pneg %p7808
      $region182: #{resnet_forward.1} parent=5 // pred_check_branch
        %7811 = sbr.rel (%p7809) target = $region184
      $region183: #{resnet_forward.1} parent=5 // pred_region
        %s7812 = ssub.s32 %s41, 2
        // Predicated region
        $region185: #{resnet_forward.1} parent=183 // pred_check
          %p7813 = pneg %p579
        $region186: #{resnet_forward.1} parent=183 // pred_check_branch
          %7815 = sbr.rel (%p7813) target = $region188
        $region187: #{resnet_forward.1} parent=183 // pred_region
          %s7816 = sand.u32 %s564, 1
          %s7817 = scalar_lea.sflag [#allocation4], %s7816
          %s7818 = sand.u32 %s564, 1
          %s7819 = scalar_lea.vmem [#allocation26], %s7818
          %7820 = dma.done %s7817, 16
        $region188: #{resnet_forward.1} parent=183 // pred_fallthru
          _
      $region184: #{resnet_forward.1} parent=5 // pred_fallthru
        _
    $region6: #{resnet_forward.1} parent=1 // loop_footer
      %s45 = sadd.s32 1, %s41
    $region7: #{resnet_forward.1} parent=1 // loop_footer_branch
      %40 = sbr.rel target = $region3
    $region8: #{resnet_forward.1} parent=1 // loop_exit
      _
    %7821 = vsyncpa [#allocation3], 1
    %s7822 = scalar_lea.sflag [#allocation3], 1
    %7823 = vsyncpa %s7822, 1
    %7824 = vsyncpa [#allocation6], 1
    %7825 = vsyncpa [#allocation9], 1
    %7826 = vsyncpa [#allocation12], 1
    %7827 = vsyncpa [#allocation15], 1
    %7828 = vsyncpa [#allocation18], 1
    %7829 = vsyncpa [#allocation21], 1
    %7830 = vsyncpa [#allocation24], 1
    %7831 = vsyncpa [#allocation4], 1
    %s7832 = scalar_lea.sflag [#allocation4], 1
    %7833 = vsyncpa %s7832, 1

</llo_original>
